<compile_context>
chip_gen: v7x
topology: tpu7x:2x2x1
jax: 0.10.0
libtpu: 0.0.40
codegen_flags: <defaults>
</compile_context>

<pallas_src>
import jax
import jax.numpy as jnp
from jax.experimental import pallas as pl
from jax.experimental.pallas import tpu as pltpu

C_IN = 4            # image channels
C_HID = 8           # autoencoder hidden channels
C_MODEL = 8         # classifier hidden channels
NUM_CLASSES = 10
PATCH = 8           # denoiser patch size
IMG = 16            # image height/width
N_SIDE = IMG // PATCH   # 2x2 patches per image

_HI = jax.lax.Precision.HIGHEST


# ------------------------------ fused kernel ---------------------------------

def _edge_masks(m, s):
    """(m, 1) f32 masks that zero the first / last row of every s-row group."""
    row = jax.lax.broadcasted_iota(jnp.int32, (m, 1), 0)
    hh = row % s
    top = (hh != 0).astype(jnp.float32)       # kills the h-1 tap on the top row
    bot = (hh != s - 1).astype(jnp.float32)   # kills the h+1 tap on the bottom row
    return top, bot


def _tconv(x, t_ref, b_ref, top, bot):
    """3x3 'same' conv as 3 banded (Toeplitz) MXU matmuls.

    x     : (M, S*Cin)        rows = (image, h), lanes = (w, cin)
    t_ref : (3, S*Cin, S*Cout) host-precomputed banded weights, one per kh tap
    b_ref : (1, S*Cout)        bias broadcast row
    top/bot : (M, 1) masks implementing the H-direction zero padding
    """
    m = x.shape[0]
    x_up = pltpu.roll(x, 1, axis=0) * top          # row r sees row r-1 (kh = 0)
    x_dn = pltpu.roll(x, m - 1, axis=0) * bot      # row r sees row r+1 (kh = 2)
    acc = jnp.dot(x_up, t_ref[0], preferred_element_type=jnp.float32, precision=_HI)
    acc = acc + jnp.dot(x, t_ref[1], preferred_element_type=jnp.float32, precision=_HI)
    acc = acc + jnp.dot(x_dn, t_ref[2], preferred_element_type=jnp.float32, precision=_HI)
    return acc + b_ref[...]


def _fused_kernel(x_ref, te_ref, be_ref, td_ref, bd_ref,
                  t1_ref, b1_ref, t2_ref, b2_ref, wfc_ref, bfc_ref,
                  comb_ref, logits_ref):
    """Denoiser + classifier for B_BLK images per grid step, all in VMEM.

    x_ref      : (B_BLK, 32, 32)  patch-major input: rows=(pw,ph,hh), lanes=(ww,c)
    te/be      : enc conv   Toeplitz (3,32,64)  + bias row (1,64)
    td/bd      : dec conv   Toeplitz (3,64,32)  + bias row (1,32)
    t1/b1      : cls conv1  Toeplitz (3,64,128) + bias row (1,128)
    t2/b2      : cls conv2  Toeplitz (3,128,128)+ bias row (1,128)
    wfc        : (128, 10) avg-pool (1/256, W-sum) folded into the FC weights
    bfc        : (1, 10) FC bias
    comb_ref   : (B_BLK, 16, 64) combined image, lanes = (w, c)      [output]
    logits_ref : (B_BLK, 1, 10)  classifier logits                   [output]
    """
    b_blk = x_ref.shape[0]
    m_d = b_blk * N_SIDE * N_SIDE * PATCH          # patch rows per step
    m_c = b_blk * IMG                              # image rows per step

    d_top, d_bot = _edge_masks(m_d, PATCH)
    c_top, c_bot = _edge_masks(m_c, IMG)

    # ---- denoiser (per 8x8 patch): conv -> ReLU -> conv ---------------------
    xp = x_ref[...].reshape(m_d, PATCH * C_IN)                       # (M_d, 32)
    h = jnp.maximum(_tconv(xp, te_ref, be_ref, d_top, d_bot), 0.0)   # (M_d, 64)
    rec = _tconv(h, td_ref, bd_ref, d_top, d_bot)                    # (M_d, 32)

    # ---- merge the pw halves along lanes -> combined image ------------------
    # rows are (b, pw, ph, hh); the two pw halves are contiguous 16-row blocks,
    # so the merge is a single lane concat of two aligned 32-wide pieces.
    rec4 = rec.reshape(b_blk, N_SIDE, IMG, PATCH * C_IN)
    comb3 = jnp.concatenate([rec4[:, j] for j in range(N_SIDE)], axis=-1)
    comb_ref[...] = comb3                                            # lane-dense store
    comb = comb3.reshape(m_c, IMG * C_IN)                            # (M_c, 64)

    # ---- classifier: conv -> ReLU -> conv -> ReLU -> pooled linear ----------
    h1 = jnp.maximum(_tconv(comb, t1_ref, b1_ref, c_top, c_bot), 0.0)   # (M_c, 128)
    h2 = jnp.maximum(_tconv(h1, t2_ref, b2_ref, c_top, c_bot), 0.0)     # (M_c, 128)

    # avg-pool over (h, w) + linear head: W-sum and 1/256 are inside wfc (MXU),
    # the remaining per-image H-sum is a tiny 16-row reduction.
    z = jnp.dot(h2, wfc_ref[...], preferred_element_type=jnp.float32,
                precision=_HI)                                           # (M_c, 10)
    logits = z.reshape(b_blk, IMG, NUM_CLASSES).sum(axis=1) + bfc_ref[...]
    logits_ref[:, 0, :] = logits


# ------------------------------ host-side prep -------------------------------

def _toeplitz(w, s):
    """(3,3,Cin,Cout) HWIO conv weights -> (3, s*Cin, s*Cout) banded matrices.

    T[kh][wi*Cin+ci, wo*Cout+co] = w[kh, wi-wo+1, ci, co] when |wi-wo|<=1 else 0,
    so  out[h] = sum_kh  x[h+kh-1] @ T[kh]  reproduces the zero-padded 3x3 conv.
    """
    mats = []
    for kh in range(3):
        t = sum(jnp.kron(jnp.eye(s, s, k=-(kw - 1), dtype=jnp.float32), w[kh, kw])
                for kw in range(3))
        mats.append(t)
    return jnp.stack(mats)


def _bias_row(b, s):
    """(Cout,) bias -> (1, s*Cout) row matching the (w, c) lane flattening."""
    return jnp.tile(b, (s,))[None, :]


def _pick_b_blk(n):
    """Largest divisor of n that is <= min(32, max(1, n // 2)).

    Amortizes per-step overhead while keeping >=2 grid steps when n >= 2 so
    both v7x TensorCores get work under 'parallel' semantics."""
    target = min(32, max(1, n // 2))
    for b in range(target, 0, -1):
        if n % b == 0:
            return b
    return 1


def complex_conv_net_denoise(x_nchw, p):
    """Forward pass mirroring ComplexConvNetDenoise.forward (one pallas_call)."""
    N, C, H, W = x_nchw.shape
    assert C == C_IN and H == IMG and W == IMG
    x_nhwc = jnp.transpose(x_nchw, (0, 2, 3, 1))

    # Patch-major input slab: rows = (n, pw, ph, hh), lanes = (ww, c).
    xp = (x_nhwc.reshape(N, N_SIDE, PATCH, N_SIDE, PATCH, C)
          .transpose(0, 3, 1, 2, 4, 5)
          .reshape(N, N_SIDE * N_SIDE * PATCH, PATCH * C))            # (N, 32, 32)

    te = _toeplitz(p["enc_w"], PATCH); be = _bias_row(p["enc_b"], PATCH)   # (3,32,64)/(1,64)
    td = _toeplitz(p["dec_w"], PATCH); bd = _bias_row(p["dec_b"], PATCH)   # (3,64,32)/(1,32)
    t1 = _toeplitz(p["m1_w"], IMG);    b1 = _bias_row(p["m1_b"], IMG)      # (3,64,128)/(1,128)
    t2 = _toeplitz(p["m2_w"], IMG);    b2 = _bias_row(p["m2_b"], IMG)      # (3,128,128)/(1,128)
    # Fold the 1/(16*16) average-pool scale and the W-sum into the FC weights.
    wfc = jnp.tile(p["fc_w"], (IMG, 1)) / float(IMG * IMG)                 # (128, 10)
    bfc = p["fc_b"][None, :]                                               # (1, 10)

    b_blk = _pick_b_blk(N)
    grid = (N // b_blk,)
    rows = N_SIDE * N_SIDE * PATCH                                         # 32

    def const_spec(arr):
        zeros = (0,) * arr.ndim
        return pl.BlockSpec(arr.shape, lambda i, z=zeros: z)

    comb_out, logits3 = pl.pallas_call(
        _fused_kernel,
        out_shape=(
            jax.ShapeDtypeStruct((N, IMG, IMG * C_IN), jnp.float32),   # lane-dense comb
            jax.ShapeDtypeStruct((N, 1, NUM_CLASSES), jnp.float32),
        ),
        grid=grid,
        in_specs=[
            pl.BlockSpec((b_blk, rows, PATCH * C_IN), lambda i: (i, 0, 0)),
            const_spec(te), const_spec(be), const_spec(td), const_spec(bd),
            const_spec(t1), const_spec(b1), const_spec(t2), const_spec(b2),
            const_spec(wfc), const_spec(bfc),
        ],
        out_specs=(
            pl.BlockSpec((b_blk, IMG, IMG * C_IN), lambda i: (i, 0, 0)),
            pl.BlockSpec((b_blk, 1, NUM_CLASSES), lambda i: (i, 0, 0)),
        ),
        compiler_params=pltpu.CompilerParams(
            dimension_semantics=("parallel",)),
    )(xp, te, be, td, bd, t1, b1, t2, b2, wfc, bfc)

    logits = logits3.reshape(N, NUM_CLASSES)
    combined_nhwc = comb_out.reshape(N, IMG, IMG, C_IN)      # free: same row-major bytes
    combined_nchw = jnp.transpose(combined_nhwc, (0, 3, 1, 2))
    # patches tensor (N, n_patches, C, P, P) — same data as combined_image.
    patches = (combined_nhwc
               .reshape(N, N_SIDE, PATCH, N_SIDE, PATCH, C_IN)
               .transpose(0, 1, 3, 5, 2, 4)
               .reshape(N, N_SIDE * N_SIDE, C_IN, PATCH, PATCH))
    return logits, combined_nchw, patches


# ------------------------------ parameters ------------------------------------

def init_params(key):
    ks = jax.random.split(key, 5)
    s = 0.1
    return {
        "enc_w": s * jax.random.normal(ks[0], (3, 3, C_IN, C_HID), jnp.float32),
        "enc_b": jnp.zeros((C_HID,), jnp.float32),
        "dec_w": s * jax.random.normal(ks[1], (3, 3, C_HID, C_IN), jnp.float32),
        "dec_b": jnp.zeros((C_IN,), jnp.float32),
        "m1_w": s * jax.random.normal(ks[2], (3, 3, C_IN, C_MODEL), jnp.float32),
        "m1_b": jnp.zeros((C_MODEL,), jnp.float32),
        "m2_w": s * jax.random.normal(ks[3], (3, 3, C_MODEL, C_MODEL), jnp.float32),
        "m2_b": jnp.zeros((C_MODEL,), jnp.float32),
        "fc_w": s * jax.random.normal(ks[4], (C_MODEL, NUM_CLASSES), jnp.float32),
        "fc_b": jnp.zeros((NUM_CLASSES,), jnp.float32),
    }


# -------------------------- pure-JAX reference ---------------------------------

def _ref_conv3x3(x, w, b):
    B, S1, S2, _ = x.shape
    xp = jnp.pad(x, ((0, 0), (1, 1), (1, 1), (0, 0)))
    out = jnp.zeros((B, S1, S2, w.shape[-1]), jnp.float32) + b
    for kh in range(3):
        for kw in range(3):
            out = out + jnp.einsum("bijc,co->bijo",
                                   xp[:, kh:kh + S1, kw:kw + S2, :], w[kh, kw],
                                   precision=_HI)
    return out


def _ref_forward(x_nchw, p):
    N, C, H, W = x_nchw.shape
    ns = H // PATCH
    x = jnp.transpose(x_nchw, (0, 2, 3, 1))
    xp = (x.reshape(N, ns, PATCH, ns, PATCH, C)
          .transpose(0, 1, 3, 2, 4, 5)
          .reshape(N * ns * ns, PATCH, PATCH, C))
    h = jax.nn.relu(_ref_conv3x3(xp, p["enc_w"], p["enc_b"]))
    rec = _ref_conv3x3(h, p["dec_w"], p["dec_b"])
    rec6 = rec.reshape(N, ns, ns, PATCH, PATCH, C)
    combined = rec6.transpose(0, 1, 3, 2, 4, 5).reshape(N, H, W, C)
    h1 = jax.nn.relu(_ref_conv3x3(combined, p["m1_w"], p["m1_b"]))
    h2 = jax.nn.relu(_ref_conv3x3(h1, p["m2_w"], p["m2_b"]))
    logits = jnp.dot(h2.mean(axis=(1, 2)), p["fc_w"], precision=_HI) + p["fc_b"]
    patches = jnp.transpose(rec6.reshape(N, ns * ns, PATCH, PATCH, C),
                            (0, 1, 4, 2, 3))
    return logits, jnp.transpose(combined, (0, 3, 1, 2)), patches


# ---------------------------------- main ----------------------------------------

if __name__ == "__main__":
    key = jax.random.PRNGKey(0)
    kx, kp = jax.random.split(key)
    x = jax.random.normal(kx, (2, C_IN, IMG, IMG), jnp.float32)   # NCHW, like PyTorch
    params = init_params(kp)

    fwd = jax.jit(complex_conv_net_denoise)
    logits, combined, patches = fwd(x, params)
    jax.block_until_ready((logits, combined, patches))

    assert logits.shape == (2, NUM_CLASSES)
    assert combined.shape == x.shape
    assert patches.shape == (2, N_SIDE * N_SIDE, C_IN, PATCH, PATCH)

    # tight validation vs. a highest-precision pure-JAX reference.
    r_logits, r_combined, r_patches = jax.jit(_ref_forward)(x, params)
    for name, got, ref in (("logits", logits, r_logits),
                           ("combined", combined, r_combined),
                           ("patches", patches, r_patches)):
        err = float(jnp.max(jnp.abs(got - ref)))
        assert err < 1e-3, f"{name} mismatch vs reference: max abs err {err}"

    print("KERNEL_OK")
</pallas_src>

<mosaic_0001>
module attributes {stable_mosaic.version = 11 : i64} {
  func.func @_fused_kernel(%arg0: i32, %arg1: memref<1x32x32xf32, #tpu.memory_space<vmem>>, %arg2: memref<3x32x64xf32, #tpu.memory_space<vmem>>, %arg3: memref<1x64xf32, #tpu.memory_space<vmem>>, %arg4: memref<3x64x32xf32, #tpu.memory_space<vmem>>, %arg5: memref<1x32xf32, #tpu.memory_space<vmem>>, %arg6: memref<3x64x128xf32, #tpu.memory_space<vmem>>, %arg7: memref<1x128xf32, #tpu.memory_space<vmem>>, %arg8: memref<3x128x128xf32, #tpu.memory_space<vmem>>, %arg9: memref<1x128xf32, #tpu.memory_space<vmem>>, %arg10: memref<128x10xf32, #tpu.memory_space<vmem>>, %arg11: memref<1x10xf32, #tpu.memory_space<vmem>>, %arg12: memref<1x16x64xf32, #tpu.memory_space<vmem>>, %arg13: memref<1x1x10xf32, #tpu.memory_space<vmem>>) attributes {dimension_semantics = [#tpu.dimension_semantics<parallel>], iteration_bounds = array<i64: 2>, scalar_prefetch = 0 : i64, scratch_operands = 0 : i64, tpu.core_type = #tpu.core_type<tc>, window_params = [{transform_indices = @transform_0, window_bounds = array<i64: 1, 32, 32>}, {pipeline_mode = #tpu.pipeline_mode<synchronous>, transform_indices = @transform_1, window_bounds = array<i64: 3, 32, 64>}, {pipeline_mode = #tpu.pipeline_mode<synchronous>, transform_indices = @transform_2, window_bounds = array<i64: 1, 64>}, {pipeline_mode = #tpu.pipeline_mode<synchronous>, transform_indices = @transform_3, window_bounds = array<i64: 3, 64, 32>}, {pipeline_mode = #tpu.pipeline_mode<synchronous>, transform_indices = @transform_4, window_bounds = array<i64: 1, 32>}, {pipeline_mode = #tpu.pipeline_mode<synchronous>, transform_indices = @transform_5, window_bounds = array<i64: 3, 64, 128>}, {pipeline_mode = #tpu.pipeline_mode<synchronous>, transform_indices = @transform_6, window_bounds = array<i64: 1, 128>}, {pipeline_mode = #tpu.pipeline_mode<synchronous>, transform_indices = @transform_7, window_bounds = array<i64: 3, 128, 128>}, {pipeline_mode = #tpu.pipeline_mode<synchronous>, transform_indices = @transform_8, window_bounds = array<i64: 1, 128>}, {pipeline_mode = #tpu.pipeline_mode<synchronous>, transform_indices = @transform_9, window_bounds = array<i64: 128, 10>}, {pipeline_mode = #tpu.pipeline_mode<synchronous>, transform_indices = @transform_10, window_bounds = array<i64: 1, 10>}, {transform_indices = @transform_11, window_bounds = array<i64: 1, 16, 64>}, {transform_indices = @transform_12, window_bounds = array<i64: 1, 1, 10>}]} {
    %0 = tpu.iota {dimensions = array<i32: 0>} : vector<32x1xi32>
    %c8_i32 = arith.constant 8 : i32
    %c0_i32 = arith.constant 0 : i32
    %1 = arith.cmpi eq, %c8_i32, %c0_i32 : i32
    %c1_i32 = arith.constant 1 : i32
    %2 = arith.select %1, %c1_i32, %c8_i32 : i32
    %3 = vector.broadcast %2 : i32 to vector<32x1xi32>
    %4 = arith.remsi %0, %3 : vector<32x1xi32>
    %c0_i32_0 = arith.constant 0 : i32
    %5 = vector.broadcast %c0_i32_0 : i32 to vector<32x1xi32>
    %6 = arith.cmpi ne, %4, %5 : vector<32x1xi32>
    %c0_i32_1 = arith.constant 0 : i32
    %7 = vector.broadcast %c0_i32_1 : i32 to vector<32x1xi32>
    %8 = arith.cmpi slt, %4, %7 : vector<32x1xi32>
    %c0_i32_2 = arith.constant 0 : i32
    %9 = arith.cmpi slt, %2, %c0_i32_2 : i32
    %10 = vector.broadcast %9 : i1 to vector<32x1xi1>
    %11 = vector.broadcast %10 : vector<32x1xi1> to vector<32x1xi1>
    %12 = arith.xori %8, %11 : vector<32x1xi1>
    %13 = arith.andi %12, %6 : vector<32x1xi1>
    %14 = vector.broadcast %2 : i32 to vector<32x1xi32>
    %15 = arith.addi %4, %14 : vector<32x1xi32>
    %16 = arith.select %13, %15, %4 : vector<32x1xi1>, vector<32x1xi32>
    %c0_i32_3 = arith.constant 0 : i32
    %17 = vector.broadcast %c0_i32_3 : i32 to vector<32x1xi32>
    %18 = arith.cmpi ne, %16, %17 : vector<32x1xi32>
    %19 = arith.extui %18 : vector<32x1xi1> to vector<32x1xi32>
    %20 = arith.sitofp %19 : vector<32x1xi32> to vector<32x1xf32>
    %c7_i32 = arith.constant 7 : i32
    %21 = vector.broadcast %c7_i32 : i32 to vector<32x1xi32>
    %22 = arith.cmpi ne, %16, %21 : vector<32x1xi32>
    %23 = arith.extui %22 : vector<32x1xi1> to vector<32x1xi32>
    %24 = arith.sitofp %23 : vector<32x1xi32> to vector<32x1xf32>
    %25 = tpu.iota {dimensions = array<i32: 0>} : vector<16x1xi32>
    %c16_i32 = arith.constant 16 : i32
    %c0_i32_4 = arith.constant 0 : i32
    %26 = arith.cmpi eq, %c16_i32, %c0_i32_4 : i32
    %c1_i32_5 = arith.constant 1 : i32
    %27 = arith.select %26, %c1_i32_5, %c16_i32 : i32
    %28 = vector.broadcast %27 : i32 to vector<16x1xi32>
    %29 = arith.remsi %25, %28 : vector<16x1xi32>
    %c0_i32_6 = arith.constant 0 : i32
    %30 = vector.broadcast %c0_i32_6 : i32 to vector<16x1xi32>
    %31 = arith.cmpi ne, %29, %30 : vector<16x1xi32>
    %c0_i32_7 = arith.constant 0 : i32
    %32 = vector.broadcast %c0_i32_7 : i32 to vector<16x1xi32>
    %33 = arith.cmpi slt, %29, %32 : vector<16x1xi32>
    %c0_i32_8 = arith.constant 0 : i32
    %34 = arith.cmpi slt, %27, %c0_i32_8 : i32
    %35 = vector.broadcast %34 : i1 to vector<16x1xi1>
    %36 = vector.broadcast %35 : vector<16x1xi1> to vector<16x1xi1>
    %37 = arith.xori %33, %36 : vector<16x1xi1>
    %38 = arith.andi %37, %31 : vector<16x1xi1>
    %39 = vector.broadcast %27 : i32 to vector<16x1xi32>
    %40 = arith.addi %29, %39 : vector<16x1xi32>
    %41 = arith.select %38, %40, %29 : vector<16x1xi1>, vector<16x1xi32>
    %c0_i32_9 = arith.constant 0 : i32
    %42 = vector.broadcast %c0_i32_9 : i32 to vector<16x1xi32>
    %43 = arith.cmpi ne, %41, %42 : vector<16x1xi32>
    %44 = arith.extui %43 : vector<16x1xi1> to vector<16x1xi32>
    %45 = arith.sitofp %44 : vector<16x1xi32> to vector<16x1xf32>
    %c15_i32 = arith.constant 15 : i32
    %46 = vector.broadcast %c15_i32 : i32 to vector<16x1xi32>
    %47 = arith.cmpi ne, %41, %46 : vector<16x1xi32>
    %48 = arith.extui %47 : vector<16x1xi1> to vector<16x1xi32>
    %49 = arith.sitofp %48 : vector<16x1xi32> to vector<16x1xf32>
    %c0 = arith.constant 0 : index
    %c0_10 = arith.constant 0 : index
    %c0_11 = arith.constant 0 : index
    %50 = vector.load %arg1[%c0, %c0_10, %c0_11] : memref<1x32x32xf32, #tpu.memory_space<vmem>>, vector<1x32x32xf32>
    %51 = vector.shape_cast %50 : vector<1x32x32xf32> to vector<32x32xf32>
    %c1_i32_12 = arith.constant 1 : i32
    %52 = tpu.dynamic_rotate %51 by %c1_i32_12 dim 0 : vector<32x32xf32>, i32 -> vector<32x32xf32>
    %53 = vector.broadcast %20 : vector<32x1xf32> to vector<32x32xf32>
    %54 = arith.mulf %52, %53 : vector<32x32xf32>
    %c31_i32 = arith.constant 31 : i32
    %55 = tpu.dynamic_rotate %51 by %c31_i32 dim 0 : vector<32x32xf32>, i32 -> vector<32x32xf32>
    %56 = vector.broadcast %24 : vector<32x1xf32> to vector<32x32xf32>
    %57 = arith.mulf %55, %56 : vector<32x32xf32>
    %c0_13 = arith.constant 0 : index
    %c0_14 = arith.constant 0 : index
    %c0_15 = arith.constant 0 : index
    %58 = vector.load %arg2[%c0_13, %c0_14, %c0_15] : memref<3x32x64xf32, #tpu.memory_space<vmem>>, vector<1x32x64xf32>
    %59 = vector.shape_cast %58 : vector<1x32x64xf32> to vector<32x64xf32>
    %cst = arith.constant dense<0.000000e+00> : vector<32x64xf32>
    %60 = tpu.matmul %54, %59, %cst {dimension_numbers = #tpu.dot_dimension_numbers<[1], [0], [0], [1], [0, 0, 1, 1], [], []>, precision = #tpu.contract_precision<fp32>} : vector<32x32xf32>, vector<32x64xf32>, vector<32x64xf32> -> vector<32x64xf32>
    %c1 = arith.constant 1 : index
    %c0_16 = arith.constant 0 : index
    %c0_17 = arith.constant 0 : index
    %61 = vector.load %arg2[%c1, %c0_16, %c0_17] : memref<3x32x64xf32, #tpu.memory_space<vmem>>, vector<1x32x64xf32>
    %62 = vector.shape_cast %61 : vector<1x32x64xf32> to vector<32x64xf32>
    %cst_18 = arith.constant dense<0.000000e+00> : vector<32x64xf32>
    %63 = tpu.matmul %51, %62, %cst_18 {dimension_numbers = #tpu.dot_dimension_numbers<[1], [0], [0], [1], [0, 0, 1, 1], [], []>, precision = #tpu.contract_precision<fp32>} : vector<32x32xf32>, vector<32x64xf32>, vector<32x64xf32> -> vector<32x64xf32>
    %64 = arith.addf %60, %63 : vector<32x64xf32>
    %c2 = arith.constant 2 : index
    %c0_19 = arith.constant 0 : index
    %c0_20 = arith.constant 0 : index
    %65 = vector.load %arg2[%c2, %c0_19, %c0_20] : memref<3x32x64xf32, #tpu.memory_space<vmem>>, vector<1x32x64xf32>
    %66 = vector.shape_cast %65 : vector<1x32x64xf32> to vector<32x64xf32>
    %cst_21 = arith.constant dense<0.000000e+00> : vector<32x64xf32>
    %67 = tpu.matmul %57, %66, %cst_21 {dimension_numbers = #tpu.dot_dimension_numbers<[1], [0], [0], [1], [0, 0, 1, 1], [], []>, precision = #tpu.contract_precision<fp32>} : vector<32x32xf32>, vector<32x64xf32>, vector<32x64xf32> -> vector<32x64xf32>
    %68 = arith.addf %64, %67 : vector<32x64xf32>
    %c0_22 = arith.constant 0 : index
    %c0_23 = arith.constant 0 : index
    %69 = vector.load %arg3[%c0_22, %c0_23] : memref<1x64xf32, #tpu.memory_space<vmem>>, vector<1x64xf32>
    %70 = vector.broadcast %69 : vector<1x64xf32> to vector<32x64xf32>
    %71 = arith.addf %68, %70 : vector<32x64xf32>
    %cst_24 = arith.constant 0.000000e+00 : f32
    %72 = vector.broadcast %cst_24 : f32 to vector<32x64xf32>
    %73 = arith.maximumf %71, %72 : vector<32x64xf32>
    %c1_i32_25 = arith.constant 1 : i32
    %74 = tpu.dynamic_rotate %73 by %c1_i32_25 dim 0 : vector<32x64xf32>, i32 -> vector<32x64xf32>
    %75 = vector.broadcast %20 : vector<32x1xf32> to vector<32x64xf32>
    %76 = arith.mulf %74, %75 : vector<32x64xf32>
    %c31_i32_26 = arith.constant 31 : i32
    %77 = tpu.dynamic_rotate %73 by %c31_i32_26 dim 0 : vector<32x64xf32>, i32 -> vector<32x64xf32>
    %78 = vector.broadcast %24 : vector<32x1xf32> to vector<32x64xf32>
    %79 = arith.mulf %77, %78 : vector<32x64xf32>
    %c0_27 = arith.constant 0 : index
    %c0_28 = arith.constant 0 : index
    %c0_29 = arith.constant 0 : index
    %80 = vector.load %arg4[%c0_27, %c0_28, %c0_29] : memref<3x64x32xf32, #tpu.memory_space<vmem>>, vector<1x64x32xf32>
    %81 = vector.shape_cast %80 : vector<1x64x32xf32> to vector<64x32xf32>
    %cst_30 = arith.constant dense<0.000000e+00> : vector<32x32xf32>
    %82 = tpu.matmul %76, %81, %cst_30 {dimension_numbers = #tpu.dot_dimension_numbers<[1], [0], [0], [1], [0, 0, 1, 1], [], []>, precision = #tpu.contract_precision<fp32>} : vector<32x64xf32>, vector<64x32xf32>, vector<32x32xf32> -> vector<32x32xf32>
    %c1_31 = arith.constant 1 : index
    %c0_32 = arith.constant 0 : index
    %c0_33 = arith.constant 0 : index
    %83 = vector.load %arg4[%c1_31, %c0_32, %c0_33] : memref<3x64x32xf32, #tpu.memory_space<vmem>>, vector<1x64x32xf32>
    %84 = vector.shape_cast %83 : vector<1x64x32xf32> to vector<64x32xf32>
    %cst_34 = arith.constant dense<0.000000e+00> : vector<32x32xf32>
    %85 = tpu.matmul %73, %84, %cst_34 {dimension_numbers = #tpu.dot_dimension_numbers<[1], [0], [0], [1], [0, 0, 1, 1], [], []>, precision = #tpu.contract_precision<fp32>} : vector<32x64xf32>, vector<64x32xf32>, vector<32x32xf32> -> vector<32x32xf32>
    %86 = arith.addf %82, %85 : vector<32x32xf32>
    %c2_35 = arith.constant 2 : index
    %c0_36 = arith.constant 0 : index
    %c0_37 = arith.constant 0 : index
    %87 = vector.load %arg4[%c2_35, %c0_36, %c0_37] : memref<3x64x32xf32, #tpu.memory_space<vmem>>, vector<1x64x32xf32>
    %88 = vector.shape_cast %87 : vector<1x64x32xf32> to vector<64x32xf32>
    %cst_38 = arith.constant dense<0.000000e+00> : vector<32x32xf32>
    %89 = tpu.matmul %79, %88, %cst_38 {dimension_numbers = #tpu.dot_dimension_numbers<[1], [0], [0], [1], [0, 0, 1, 1], [], []>, precision = #tpu.contract_precision<fp32>} : vector<32x64xf32>, vector<64x32xf32>, vector<32x32xf32> -> vector<32x32xf32>
    %90 = arith.addf %86, %89 : vector<32x32xf32>
    %c0_39 = arith.constant 0 : index
    %c0_40 = arith.constant 0 : index
    %91 = vector.load %arg5[%c0_39, %c0_40] : memref<1x32xf32, #tpu.memory_space<vmem>>, vector<1x32xf32>
    %92 = vector.broadcast %91 : vector<1x32xf32> to vector<32x32xf32>
    %93 = arith.addf %90, %92 : vector<32x32xf32>
    %94 = vector.shape_cast %93 : vector<32x32xf32> to vector<1x2x16x32xf32>
    %95 = vector.extract_strided_slice %94 {offsets = [0, 0, 0, 0], sizes = [1, 1, 16, 32], strides = [1, 1, 1, 1]} : vector<1x2x16x32xf32> to vector<1x1x16x32xf32>
    %96 = vector.shape_cast %95 : vector<1x1x16x32xf32> to vector<1x16x32xf32>
    %97 = vector.extract_strided_slice %94 {offsets = [0, 1, 0, 0], sizes = [1, 1, 16, 32], strides = [1, 1, 1, 1]} : vector<1x2x16x32xf32> to vector<1x1x16x32xf32>
    %98 = vector.shape_cast %97 : vector<1x1x16x32xf32> to vector<1x16x32xf32>
    %99 = tpu.concatenate %96, %98 in 2 : vector<1x16x32xf32>, vector<1x16x32xf32> -> vector<1x16x64xf32>
    %c0_41 = arith.constant 0 : index
    %c0_42 = arith.constant 0 : index
    %c0_43 = arith.constant 0 : index
    %100 = vector.load %arg12[%c0_41, %c0_42, %c0_43] : memref<1x16x64xf32, #tpu.memory_space<vmem>>, vector<1x16x64xf32>
    tpu.vector_store %arg12[%c0_41, %c0_42, %c0_43], %99 {strides = array<i32>} : memref<1x16x64xf32, #tpu.memory_space<vmem>>, vector<1x16x64xf32>,
    %101 = vector.shape_cast %99 : vector<1x16x64xf32> to vector<16x64xf32>
    %c1_i32_44 = arith.constant 1 : i32
    %102 = tpu.dynamic_rotate %101 by %c1_i32_44 dim 0 : vector<16x64xf32>, i32 -> vector<16x64xf32>
    %103 = vector.broadcast %45 : vector<16x1xf32> to vector<16x64xf32>
    %104 = arith.mulf %102, %103 : vector<16x64xf32>
    %c15_i32_45 = arith.constant 15 : i32
    %105 = tpu.dynamic_rotate %101 by %c15_i32_45 dim 0 : vector<16x64xf32>, i32 -> vector<16x64xf32>
    %106 = vector.broadcast %49 : vector<16x1xf32> to vector<16x64xf32>
    %107 = arith.mulf %105, %106 : vector<16x64xf32>
    %c0_46 = arith.constant 0 : index
    %c0_47 = arith.constant 0 : index
    %c0_48 = arith.constant 0 : index
    %108 = vector.load %arg6[%c0_46, %c0_47, %c0_48] : memref<3x64x128xf32, #tpu.memory_space<vmem>>, vector<1x64x128xf32>
    %109 = vector.shape_cast %108 : vector<1x64x128xf32> to vector<64x128xf32>
    %cst_49 = arith.constant dense<0.000000e+00> : vector<16x128xf32>
    %110 = tpu.matmul %104, %109, %cst_49 {dimension_numbers = #tpu.dot_dimension_numbers<[1], [0], [0], [1], [0, 0, 1, 1], [], []>, precision = #tpu.contract_precision<fp32>} : vector<16x64xf32>, vector<64x128xf32>, vector<16x128xf32> -> vector<16x128xf32>
    %c1_50 = arith.constant 1 : index
    %c0_51 = arith.constant 0 : index
    %c0_52 = arith.constant 0 : index
    %111 = vector.load %arg6[%c1_50, %c0_51, %c0_52] : memref<3x64x128xf32, #tpu.memory_space<vmem>>, vector<1x64x128xf32>
    %112 = vector.shape_cast %111 : vector<1x64x128xf32> to vector<64x128xf32>
    %cst_53 = arith.constant dense<0.000000e+00> : vector<16x128xf32>
    %113 = tpu.matmul %101, %112, %cst_53 {dimension_numbers = #tpu.dot_dimension_numbers<[1], [0], [0], [1], [0, 0, 1, 1], [], []>, precision = #tpu.contract_precision<fp32>} : vector<16x64xf32>, vector<64x128xf32>, vector<16x128xf32> -> vector<16x128xf32>
    %114 = arith.addf %110, %113 : vector<16x128xf32>
    %c2_54 = arith.constant 2 : index
    %c0_55 = arith.constant 0 : index
    %c0_56 = arith.constant 0 : index
    %115 = vector.load %arg6[%c2_54, %c0_55, %c0_56] : memref<3x64x128xf32, #tpu.memory_space<vmem>>, vector<1x64x128xf32>
    %116 = vector.shape_cast %115 : vector<1x64x128xf32> to vector<64x128xf32>
    %cst_57 = arith.constant dense<0.000000e+00> : vector<16x128xf32>
    %117 = tpu.matmul %107, %116, %cst_57 {dimension_numbers = #tpu.dot_dimension_numbers<[1], [0], [0], [1], [0, 0, 1, 1], [], []>, precision = #tpu.contract_precision<fp32>} : vector<16x64xf32>, vector<64x128xf32>, vector<16x128xf32> -> vector<16x128xf32>
    %118 = arith.addf %114, %117 : vector<16x128xf32>
    %c0_58 = arith.constant 0 : index
    %c0_59 = arith.constant 0 : index
    %119 = vector.load %arg7[%c0_58, %c0_59] : memref<1x128xf32, #tpu.memory_space<vmem>>, vector<1x128xf32>
    %120 = vector.broadcast %119 : vector<1x128xf32> to vector<16x128xf32>
    %121 = arith.addf %118, %120 : vector<16x128xf32>
    %cst_60 = arith.constant 0.000000e+00 : f32
    %122 = vector.broadcast %cst_60 : f32 to vector<16x128xf32>
    %123 = arith.maximumf %121, %122 : vector<16x128xf32>
    %c1_i32_61 = arith.constant 1 : i32
    %124 = tpu.dynamic_rotate %123 by %c1_i32_61 dim 0 : vector<16x128xf32>, i32 -> vector<16x128xf32>
    %125 = vector.broadcast %45 : vector<16x1xf32> to vector<16x128xf32>
    %126 = arith.mulf %124, %125 : vector<16x128xf32>
    %c15_i32_62 = arith.constant 15 : i32
    %127 = tpu.dynamic_rotate %123 by %c15_i32_62 dim 0 : vector<16x128xf32>, i32 -> vector<16x128xf32>
    %128 = vector.broadcast %49 : vector<16x1xf32> to vector<16x128xf32>
    %129 = arith.mulf %127, %128 : vector<16x128xf32>
    %c0_63 = arith.constant 0 : index
    %c0_64 = arith.constant 0 : index
    %c0_65 = arith.constant 0 : index
    %130 = vector.load %arg8[%c0_63, %c0_64, %c0_65] : memref<3x128x128xf32, #tpu.memory_space<vmem>>, vector<1x128x128xf32>
    %131 = vector.shape_cast %130 : vector<1x128x128xf32> to vector<128x128xf32>
    %cst_66 = arith.constant dense<0.000000e+00> : vector<16x128xf32>
    %132 = tpu.matmul %126, %131, %cst_66 {dimension_numbers = #tpu.dot_dimension_numbers<[1], [0], [0], [1], [0, 0, 1, 1], [], []>, precision = #tpu.contract_precision<fp32>} : vector<16x128xf32>, vector<128x128xf32>, vector<16x128xf32> -> vector<16x128xf32>
    %c1_67 = arith.constant 1 : index
    %c0_68 = arith.constant 0 : index
    %c0_69 = arith.constant 0 : index
    %133 = vector.load %arg8[%c1_67, %c0_68, %c0_69] : memref<3x128x128xf32, #tpu.memory_space<vmem>>, vector<1x128x128xf32>
    %134 = vector.shape_cast %133 : vector<1x128x128xf32> to vector<128x128xf32>
    %cst_70 = arith.constant dense<0.000000e+00> : vector<16x128xf32>
    %135 = tpu.matmul %123, %134, %cst_70 {dimension_numbers = #tpu.dot_dimension_numbers<[1], [0], [0], [1], [0, 0, 1, 1], [], []>, precision = #tpu.contract_precision<fp32>} : vector<16x128xf32>, vector<128x128xf32>, vector<16x128xf32> -> vector<16x128xf32>
    %136 = arith.addf %132, %135 : vector<16x128xf32>
    %c2_71 = arith.constant 2 : index
    %c0_72 = arith.constant 0 : index
    %c0_73 = arith.constant 0 : index
    %137 = vector.load %arg8[%c2_71, %c0_72, %c0_73] : memref<3x128x128xf32, #tpu.memory_space<vmem>>, vector<1x128x128xf32>
    %138 = vector.shape_cast %137 : vector<1x128x128xf32> to vector<128x128xf32>
    %cst_74 = arith.constant dense<0.000000e+00> : vector<16x128xf32>
    %139 = tpu.matmul %129, %138, %cst_74 {dimension_numbers = #tpu.dot_dimension_numbers<[1], [0], [0], [1], [0, 0, 1, 1], [], []>, precision = #tpu.contract_precision<fp32>} : vector<16x128xf32>, vector<128x128xf32>, vector<16x128xf32> -> vector<16x128xf32>
    %140 = arith.addf %136, %139 : vector<16x128xf32>
    %c0_75 = arith.constant 0 : index
    %c0_76 = arith.constant 0 : index
    %141 = vector.load %arg9[%c0_75, %c0_76] : memref<1x128xf32, #tpu.memory_space<vmem>>, vector<1x128xf32>
    %142 = vector.broadcast %141 : vector<1x128xf32> to vector<16x128xf32>
    %143 = arith.addf %140, %142 : vector<16x128xf32>
    %cst_77 = arith.constant 0.000000e+00 : f32
    %144 = vector.broadcast %cst_77 : f32 to vector<16x128xf32>
    %145 = arith.maximumf %143, %144 : vector<16x128xf32>
    %c0_78 = arith.constant 0 : index
    %c0_79 = arith.constant 0 : index
    %146 = vector.load %arg10[%c0_78, %c0_79] : memref<128x10xf32, #tpu.memory_space<vmem>>, vector<128x10xf32>
    %cst_80 = arith.constant dense<0.000000e+00> : vector<16x10xf32>
    %147 = tpu.matmul %145, %146, %cst_80 {dimension_numbers = #tpu.dot_dimension_numbers<[1], [0], [0], [1], [0, 0, 1, 1], [], []>, precision = #tpu.contract_precision<fp32>} : vector<16x128xf32>, vector<128x10xf32>, vector<16x10xf32> -> vector<16x10xf32>
    %148 = vector.shape_cast %147 : vector<16x10xf32> to vector<1x16x10xf32>
    %cst_81 = arith.constant dense<0.000000e+00> : vector<1x10xf32>
    %149 = vector.multi_reduction <add>, %148, %cst_81 [1] : vector<1x16x10xf32> to vector<1x10xf32>
    %c0_82 = arith.constant 0 : index
    %c0_83 = arith.constant 0 : index
    %150 = vector.load %arg11[%c0_82, %c0_83] : memref<1x10xf32, #tpu.memory_space<vmem>>, vector<1x10xf32>
    %151 = arith.addf %149, %150 : vector<1x10xf32>
    %c0_84 = arith.constant 0 : index
    %c0_85 = arith.constant 0 : index
    %c0_86 = arith.constant 0 : index
    %152 = vector.load %arg13[%c0_84, %c0_85, %c0_86] : memref<1x1x10xf32, #tpu.memory_space<vmem>>, vector<1x1x10xf32>
    %153 = vector.shape_cast %152 : vector<1x1x10xf32> to vector<1x10xf32>
    %154 = vector.shape_cast %151 : vector<1x10xf32> to vector<1x1x10xf32>
    tpu.vector_store %arg13[%c0_84, %c0_85, %c0_86], %154 {strides = array<i32>} : memref<1x1x10xf32, #tpu.memory_space<vmem>>, vector<1x1x10xf32>,
    return
  }
  func.func @transform_0(%arg0: i32) -> (i32, i32, i32) {
    %c0_i32 = arith.constant 0 : i32
    %c0_i32_0 = arith.constant 0 : i32
    %c0_i32_1 = arith.constant 0 : i32
    return %arg0, %c0_i32, %c0_i32_0 : i32, i32, i32
  }
  func.func @transform_1(%arg0: i32) -> (i32, i32, i32) {
    %c0_i32 = arith.constant 0 : i32
    %c0_i32_0 = arith.constant 0 : i32
    %c0_i32_1 = arith.constant 0 : i32
    %c0_i32_2 = arith.constant 0 : i32
    return %c0_i32, %c0_i32_0, %c0_i32_1 : i32, i32, i32
  }
  func.func @transform_2(%arg0: i32) -> (i32, i32) {
    %c0_i32 = arith.constant 0 : i32
    %c0_i32_0 = arith.constant 0 : i32
    %c0_i32_1 = arith.constant 0 : i32
    return %c0_i32, %c0_i32_0 : i32, i32
  }
  func.func @transform_3(%arg0: i32) -> (i32, i32, i32) {
    %c0_i32 = arith.constant 0 : i32
    %c0_i32_0 = arith.constant 0 : i32
    %c0_i32_1 = arith.constant 0 : i32
    %c0_i32_2 = arith.constant 0 : i32
    return %c0_i32, %c0_i32_0, %c0_i32_1 : i32, i32, i32
  }
  func.func @transform_4(%arg0: i32) -> (i32, i32) {
    %c0_i32 = arith.constant 0 : i32
    %c0_i32_0 = arith.constant 0 : i32
    %c0_i32_1 = arith.constant 0 : i32
    return %c0_i32, %c0_i32_0 : i32, i32
  }
  func.func @transform_5(%arg0: i32) -> (i32, i32, i32) {
    %c0_i32 = arith.constant 0 : i32
    %c0_i32_0 = arith.constant 0 : i32
    %c0_i32_1 = arith.constant 0 : i32
    %c0_i32_2 = arith.constant 0 : i32
    return %c0_i32, %c0_i32_0, %c0_i32_1 : i32, i32, i32
  }
  func.func @transform_6(%arg0: i32) -> (i32, i32) {
    %c0_i32 = arith.constant 0 : i32
    %c0_i32_0 = arith.constant 0 : i32
    %c0_i32_1 = arith.constant 0 : i32
    return %c0_i32, %c0_i32_0 : i32, i32
  }
  func.func @transform_7(%arg0: i32) -> (i32, i32, i32) {
    %c0_i32 = arith.constant 0 : i32
    %c0_i32_0 = arith.constant 0 : i32
    %c0_i32_1 = arith.constant 0 : i32
    %c0_i32_2 = arith.constant 0 : i32
    return %c0_i32, %c0_i32_0, %c0_i32_1 : i32, i32, i32
  }
  func.func @transform_8(%arg0: i32) -> (i32, i32) {
    %c0_i32 = arith.constant 0 : i32
    %c0_i32_0 = arith.constant 0 : i32
    %c0_i32_1 = arith.constant 0 : i32
    return %c0_i32, %c0_i32_0 : i32, i32
  }
  func.func @transform_9(%arg0: i32) -> (i32, i32) {
    %c0_i32 = arith.constant 0 : i32
    %c0_i32_0 = arith.constant 0 : i32
    %c0_i32_1 = arith.constant 0 : i32
    return %c0_i32, %c0_i32_0 : i32, i32
  }
  func.func @transform_10(%arg0: i32) -> (i32, i32) {
    %c0_i32 = arith.constant 0 : i32
    %c0_i32_0 = arith.constant 0 : i32
    %c0_i32_1 = arith.constant 0 : i32
    return %c0_i32, %c0_i32_0 : i32, i32
  }
  func.func @transform_11(%arg0: i32) -> (i32, i32, i32) {
    %c0_i32 = arith.constant 0 : i32
    %c0_i32_0 = arith.constant 0 : i32
    %c0_i32_1 = arith.constant 0 : i32
    return %arg0, %c0_i32, %c0_i32_0 : i32, i32, i32
  }
  func.func @transform_12(%arg0: i32) -> (i32, i32, i32) {
    %c0_i32 = arith.constant 0 : i32
    %c0_i32_0 = arith.constant 0 : i32
    %c0_i32_1 = arith.constant 0 : i32
    return %arg0, %c0_i32, %c0_i32_0 : i32, i32, i32
  }
}

</mosaic_0001>

<llo_original>
// kernel: tile.38
$region0: #{tile.38}
  #allocation0 [shape = 's32[1]{0}', space=sflag, size = 0x4, scoped, tag = 'scoped memory for tile.38']
  %s0 = inlined_call_operand.vmem [shape: f32[8], index: 0, kind: input, shape index: {}]
  %s1 = inlined_call_operand.vmem [shape: f32[16,8], index: 1, kind: output, shape index: {}]
  // Predicated region
  $region2: #{tile.38} parent=0 // pred_check
    _
  $region3: #{tile.38} parent=0 // pred_check_branch
    %3 = sbr.rel (0) target = $region5
  $region4: #{tile.38} parent=0 // pred_region
    _
  $region5: #{tile.38} parent=0 // pred_fallthru
    _
  %v4 = vld [vmem:[%s0] ss:$0 sm:$0xff]
  %5 = vst [vmem:[%s1] sm:$0xff] %v4
  %s6 = scalar_lea.vmem %s1, 8
  %7 = vst [vmem:[%s6] sm:$0xff] %v4

// kernel: tile.39
$region0: #{tile.39}
  %s0 = inlined_call_operand.vmem [shape: f32[16,8], index: 0, kind: input, shape index: {}]
  %s1 = inlined_call_operand.vmem [shape: f32[1,128], index: 1, kind: output, shape index: {}]
  $region1: #{tile.39} parent=0
    #allocation0 [shape = 'u8[4096]{0}', space=vmem, size = 0x1000, scoped, tag = 'scoped mem for output reshape']
    %v2 = vld [vmem:[%s0] sm:$0x1]
    %vm3 = vcmask 64512
    %4 = vst.msk [vmem:[#allocation0] sm:$0x1] %vm3, %v2
    %s5 = scalar_lea.vmem %s0, 15
    %v6 = vld [vmem:[%s5] sm:$0x1]
    %7 = vrot.lane.b32.xlu0 %v6, 120
    %v8 = vpop.permute.xlu0 %7
    %vm9 = vcmask 1048512
    %10 = vst.msk [vmem:[#allocation0] sm:$0x1] %vm9, %v8
    %s11 = scalar_lea.vmem %s0, 14
    %v12 = vld [vmem:[%s11] sm:$0x1]
    %13 = vrot.lane.b32.xlu0 %v12, 112
    %v14 = vpop.permute.xlu0 %13
    %vm15 = vcmask 982912
    %16 = vst.msk [vmem:[#allocation0] sm:$0x1] %vm15, %v14
    %s17 = scalar_lea.vmem %s0, 13
    %v18 = vld [vmem:[%s17] sm:$0x1]
    %19 = vrot.lane.b32.xlu0 %v18, 104
    %v20 = vpop.permute.xlu0 %19
    %vm21 = vcmask 917312
    %22 = vst.msk [vmem:[#allocation0] sm:$0x1] %vm21, %v20
    %s23 = scalar_lea.vmem %s0, 12
    %v24 = vld [vmem:[%s23] sm:$0x1]
    %25 = vrot.lane.b32.xlu0 %v24, 96
    %v26 = vpop.permute.xlu0 %25
    %vm27 = vcmask 851712
    %28 = vst.msk [vmem:[#allocation0] sm:$0x1] %vm27, %v26
    %s29 = scalar_lea.vmem %s0, 11
    %v30 = vld [vmem:[%s29] sm:$0x1]
    %31 = vrot.lane.b32.xlu0 %v30, 88
    %v32 = vpop.permute.xlu0 %31
    %vm33 = vcmask 786112
    %34 = vst.msk [vmem:[#allocation0] sm:$0x1] %vm33, %v32
    %s35 = scalar_lea.vmem %s0, 10
    %v36 = vld [vmem:[%s35] sm:$0x1]
    %37 = vrot.lane.b32.xlu0 %v36, 80
    %v38 = vpop.permute.xlu0 %37
    %vm39 = vcmask 720512
    %40 = vst.msk [vmem:[#allocation0] sm:$0x1] %vm39, %v38
    %s41 = scalar_lea.vmem %s0, 9
    %v42 = vld [vmem:[%s41] sm:$0x1]
    %43 = vrot.lane.b32.xlu0 %v42, 72
    %v44 = vpop.permute.xlu0 %43
    %vm45 = vcmask 654912
    %46 = vst.msk [vmem:[#allocation0] sm:$0x1] %vm45, %v44
    %s47 = scalar_lea.vmem %s0, 8
    %v48 = vld [vmem:[%s47] sm:$0x1]
    %49 = vrot.lane.b32.xlu0 %v48, 64
    %v50 = vpop.permute.xlu0 %49
    %vm51 = vcmask 589312
    %52 = vst.msk [vmem:[#allocation0] sm:$0x1] %vm51, %v50
    %s53 = scalar_lea.vmem %s0, 7
    %v54 = vld [vmem:[%s53] sm:$0x1]
    %55 = vrot.lane.b32.xlu0 %v54, 56
    %v56 = vpop.permute.xlu0 %55
    %vm57 = vcmask 523712
    %58 = vst.msk [vmem:[#allocation0] sm:$0x1] %vm57, %v56
    %s59 = scalar_lea.vmem %s0, 6
    %v60 = vld [vmem:[%s59] sm:$0x1]
    %61 = vrot.lane.b32.xlu0 %v60, 48
    %v62 = vpop.permute.xlu0 %61
    %vm63 = vcmask 458112
    %64 = vst.msk [vmem:[#allocation0] sm:$0x1] %vm63, %v62
    %s65 = scalar_lea.vmem %s0, 5
    %v66 = vld [vmem:[%s65] sm:$0x1]
    %67 = vrot.lane.b32.xlu0 %v66, 40
    %v68 = vpop.permute.xlu0 %67
    %vm69 = vcmask 392512
    %70 = vst.msk [vmem:[#allocation0] sm:$0x1] %vm69, %v68
    %s71 = scalar_lea.vmem %s0, 4
    %v72 = vld [vmem:[%s71] sm:$0x1]
    %73 = vrot.lane.b32.xlu0 %v72, 32
    %v74 = vpop.permute.xlu0 %73
    %vm75 = vcmask 326912
    %76 = vst.msk [vmem:[#allocation0] sm:$0x1] %vm75, %v74
    %s77 = scalar_lea.vmem %s0, 3
    %v78 = vld [vmem:[%s77] sm:$0x1]
    %79 = vrot.lane.b32.xlu0 %v78, 24
    %v80 = vpop.permute.xlu0 %79
    %vm81 = vcmask 261312
    %82 = vst.msk [vmem:[#allocation0] sm:$0x1] %vm81, %v80
    %s83 = scalar_lea.vmem %s0, 2
    %v84 = vld [vmem:[%s83] sm:$0x1]
    %85 = vrot.lane.b32.xlu0 %v84, 16
    %v86 = vpop.permute.xlu0 %85
    %vm87 = vcmask 195712
    %88 = vst.msk [vmem:[#allocation0] sm:$0x1] %vm87, %v86
    %s89 = scalar_lea.vmem %s0, 1
    %v90 = vld [vmem:[%s89] sm:$0x1]
    %91 = vrot.lane.b32.xlu0 %v90, 8
    %v92 = vpop.permute.xlu0 %91
    %vm93 = vcmask 130112
    %94 = vst.msk [vmem:[#allocation0] sm:$0x1] %vm93, %v92
    %s96 = sshllo.u32 0, 1
    %v98 = vld [vmem:[#allocation0] sm:%s96]
    %s99 = sshllo.u32 0, 1
    %100 = vst [vmem:[%s1] sm:%s99] %v98

// kernel: tile.28
$region0: #{tile.28}
  #allocation0 [shape = 's32[1]{0}', space=sflag, size = 0x4, scoped, tag = 'scoped memory for tile.28']
  %s0 = inlined_call_operand.vmem [shape: f32[8], index: 0, kind: input, shape index: {}]
  %s1 = inlined_call_operand.vmem [shape: f32[8,8], index: 1, kind: output, shape index: {}]
  // Predicated region
  $region2: #{tile.28} parent=0 // pred_check
    _
  $region3: #{tile.28} parent=0 // pred_check_branch
    %3 = sbr.rel (0) target = $region5
  $region4: #{tile.28} parent=0 // pred_region
    _
  $region5: #{tile.28} parent=0 // pred_fallthru
    _
  %v4 = vld [vmem:[%s0] ss:$0 sm:$0xff]
  %5 = vst [vmem:[%s1] sm:$0xff] %v4

// kernel: tile.29
$region0: #{tile.29}
  %s0 = inlined_call_operand.vmem [shape: f32[8,8], index: 0, kind: input, shape index: {}]
  %s1 = inlined_call_operand.vmem [shape: f32[1,64], index: 1, kind: output, shape index: {}]
  $region1: #{tile.29} parent=0
    #allocation0 [shape = 'u8[4096]{0}', space=vmem, size = 0x1000, scoped, tag = 'scoped mem for output reshape']
    %v2 = vld [vmem:[%s0] sm:$0x1]
    %vm3 = vcmask 64512
    %4 = vst.msk [vmem:[#allocation0] sm:$0x1] %vm3, %v2
    %s5 = scalar_lea.vmem %s0, 7
    %v6 = vld [vmem:[%s5] sm:$0x1]
    %7 = vrot.lane.b32.xlu0 %v6, 56
    %v8 = vpop.permute.xlu0 %7
    %vm9 = vcmask 523712
    %10 = vst.msk [vmem:[#allocation0] sm:$0x1] %vm9, %v8
    %s11 = scalar_lea.vmem %s0, 6
    %v12 = vld [vmem:[%s11] sm:$0x1]
    %13 = vrot.lane.b32.xlu0 %v12, 48
    %v14 = vpop.permute.xlu0 %13
    %vm15 = vcmask 458112
    %16 = vst.msk [vmem:[#allocation0] sm:$0x1] %vm15, %v14
    %s17 = scalar_lea.vmem %s0, 5
    %v18 = vld [vmem:[%s17] sm:$0x1]
    %19 = vrot.lane.b32.xlu0 %v18, 40
    %v20 = vpop.permute.xlu0 %19
    %vm21 = vcmask 392512
    %22 = vst.msk [vmem:[#allocation0] sm:$0x1] %vm21, %v20
    %s23 = scalar_lea.vmem %s0, 4
    %v24 = vld [vmem:[%s23] sm:$0x1]
    %25 = vrot.lane.b32.xlu0 %v24, 32
    %v26 = vpop.permute.xlu0 %25
    %vm27 = vcmask 326912
    %28 = vst.msk [vmem:[#allocation0] sm:$0x1] %vm27, %v26
    %s29 = scalar_lea.vmem %s0, 3
    %v30 = vld [vmem:[%s29] sm:$0x1]
    %31 = vrot.lane.b32.xlu0 %v30, 24
    %v32 = vpop.permute.xlu0 %31
    %vm33 = vcmask 261312
    %34 = vst.msk [vmem:[#allocation0] sm:$0x1] %vm33, %v32
    %s35 = scalar_lea.vmem %s0, 2
    %v36 = vld [vmem:[%s35] sm:$0x1]
    %37 = vrot.lane.b32.xlu0 %v36, 16
    %v38 = vpop.permute.xlu0 %37
    %vm39 = vcmask 195712
    %40 = vst.msk [vmem:[#allocation0] sm:$0x1] %vm39, %v38
    %s41 = scalar_lea.vmem %s0, 1
    %v42 = vld [vmem:[%s41] sm:$0x1]
    %43 = vrot.lane.b32.xlu0 %v42, 8
    %v44 = vpop.permute.xlu0 %43
    %vm45 = vcmask 130112
    %46 = vst.msk [vmem:[#allocation0] sm:$0x1] %vm45, %v44
    %s48 = sshllo.u32 0, 1
    %v50 = vld [vmem:[#allocation0] sm:%s48]
    %s51 = sshllo.u32 0, 1
    %52 = vst [vmem:[%s1] sm:%s51] %v50

// kernel: tile.33
$region0: #{tile.33}
  #allocation0 [shape = 's32[1]{0}', space=sflag, size = 0x4, scoped, tag = 'scoped memory for tile.33']
  %s0 = inlined_call_operand.vmem [shape: f32[4], index: 0, kind: input, shape index: {}]
  %s1 = inlined_call_operand.vmem [shape: f32[8,4], index: 1, kind: output, shape index: {}]
  // Predicated region
  $region2: #{tile.33} parent=0 // pred_check
    _
  $region3: #{tile.33} parent=0 // pred_check_branch
    %3 = sbr.rel (0) target = $region5
  $region4: #{tile.33} parent=0 // pred_region
    _
  $region5: #{tile.33} parent=0 // pred_fallthru
    _
  %v4 = vld [vmem:[%s0] ss:$0 sm:$0xff]
  %5 = vst [vmem:[%s1] sm:$0xff] %v4

// kernel: tile.34
$region0: #{tile.34}
  %s0 = inlined_call_operand.vmem [shape: f32[8,4], index: 0, kind: input, shape index: {}]
  %s1 = inlined_call_operand.vmem [shape: f32[1,32], index: 1, kind: output, shape index: {}]
  $region1: #{tile.34} parent=0
    #allocation0 [shape = 'u8[4096]{0}', space=vmem, size = 0x1000, scoped, tag = 'scoped mem for output reshape']
    %v2 = vld [vmem:[%s0] sm:$0x1]
    %vm3 = vcmask 31744
    %4 = vst.msk [vmem:[#allocation0] sm:$0x1] %vm3, %v2
    %s5 = scalar_lea.vmem %s0, 7
    %v6 = vld [vmem:[%s5] sm:$0x1]
    %7 = vrot.lane.b32.xlu0 %v6, 28
    %v8 = vpop.permute.xlu0 %7
    %vm9 = vcmask 261344
    %10 = vst.msk [vmem:[#allocation0] sm:$0x1] %vm9, %v8
    %s11 = scalar_lea.vmem %s0, 6
    %v12 = vld [vmem:[%s11] sm:$0x1]
    %13 = vrot.lane.b32.xlu0 %v12, 24
    %v14 = vpop.permute.xlu0 %13
    %vm15 = vcmask 228544
    %16 = vst.msk [vmem:[#allocation0] sm:$0x1] %vm15, %v14
    %s17 = scalar_lea.vmem %s0, 5
    %v18 = vld [vmem:[%s17] sm:$0x1]
    %19 = vrot.lane.b32.xlu0 %v18, 20
    %v20 = vpop.permute.xlu0 %19
    %vm21 = vcmask 195744
    %22 = vst.msk [vmem:[#allocation0] sm:$0x1] %vm21, %v20
    %s23 = scalar_lea.vmem %s0, 4
    %v24 = vld [vmem:[%s23] sm:$0x1]
    %25 = vrot.lane.b32.xlu0 %v24, 16
    %v26 = vpop.permute.xlu0 %25
    %vm27 = vcmask 162944
    %28 = vst.msk [vmem:[#allocation0] sm:$0x1] %vm27, %v26
    %s29 = scalar_lea.vmem %s0, 3
    %v30 = vld [vmem:[%s29] sm:$0x1]
    %31 = vrot.lane.b32.xlu0 %v30, 12
    %v32 = vpop.permute.xlu0 %31
    %vm33 = vcmask 130144
    %34 = vst.msk [vmem:[#allocation0] sm:$0x1] %vm33, %v32
    %s35 = scalar_lea.vmem %s0, 2
    %v36 = vld [vmem:[%s35] sm:$0x1]
    %37 = vrot.lane.b32.xlu0 %v36, 8
    %v38 = vpop.permute.xlu0 %37
    %vm39 = vcmask 97344
    %40 = vst.msk [vmem:[#allocation0] sm:$0x1] %vm39, %v38
    %s41 = scalar_lea.vmem %s0, 1
    %v42 = vld [vmem:[%s41] sm:$0x1]
    %43 = vrot.lane.b32.xlu0 %v42, 4
    %v44 = vpop.permute.xlu0 %43
    %vm45 = vcmask 64544
    %46 = vst.msk [vmem:[#allocation0] sm:$0x1] %vm45, %v44
    %s48 = sshllo.u32 0, 1
    %v50 = vld [vmem:[#allocation0] sm:%s48]
    %s51 = sshllo.u32 0, 1
    %52 = vst [vmem:[%s1] sm:%s51] %v50

// kernel: complex_conv_net_denoise.1
$region0: #{complex_conv_net_denoise.1}
  #allocation0 [shape = 'u32[]', space=smem, size = 0x4, offset = 0x4, fixed_abs, tag = 'smem constant byte address 0x4 - core index']
  #allocation1 [shape = 'u32[144,128]{1,0:T(1,128)}', space=vmem, size = 0x12000, scoped, tag = 'internal scratch']
  %s0 = inlined_call_operand.vmem [shape: f32[2,32,32], index: 0, kind: input, shape index: {}]
  %s1 = inlined_call_operand.vmem [shape: f32[3,32,64], index: 1, kind: input, shape index: {}]
  %s2 = inlined_call_operand.vmem [shape: f32[1,64], index: 2, kind: input, shape index: {}]
  %s3 = inlined_call_operand.vmem [shape: f32[3,64,32], index: 3, kind: input, shape index: {}]
  %s4 = inlined_call_operand.vmem [shape: f32[1,32], index: 4, kind: input, shape index: {}]
  %s5 = inlined_call_operand.vmem [shape: f32[3,64,128], index: 5, kind: input, shape index: {}]
  %s6 = inlined_call_operand.vmem [shape: f32[1,128], index: 6, kind: input, shape index: {}]
  %s7 = inlined_call_operand.vmem [shape: f32[3,128,128], index: 7, kind: input, shape index: {}]
  %s8 = inlined_call_operand.vmem [shape: f32[1,128], index: 8, kind: input, shape index: {}]
  %s9 = inlined_call_operand.vmem [shape: f32[128,10], index: 9, kind: input, shape index: {}]
  %s10 = inlined_call_operand.vmem [shape: f32[1,10], index: 10, kind: input, shape index: {}]
  %s11 = inlined_call_operand.vmem [shape: f32[2,16,64], index: 11, kind: output, shape index: {0}]
  %s12 = inlined_call_operand.hbm [shape: f32[2,1,10], index: 12, kind: output, shape index: {1}]
  %13 = xla_tuple %s11, %s12
  %s14 = sld [smem:[#allocation0]]
  $region85: #{complex_conv_net_denoise.1} parent=0
    _
  %s16 = ssub.s32 1, %s14
  %s17 = scalar_select 0, %s16, %s14
  $region1: #{complex_conv_net_denoise.1} parent=0
    #allocation2 [shape = 'u8[1024]{0}', space=vmem, size = 0x400, scoped, tag = 'output window, operand 1']
    #allocation3 [shape = 's32[2]{0}', space=sflag, size = 0x8, scoped, tag = 'scoped memory for complex_conv_net_denoise.1']
    %18 = vsyncpa [#allocation3], 0
    %s19 = scalar_lea.sflag [#allocation3], 1
    %20 = vsyncpa %s19, 0
    loop: start=0, step=1, limit=4
    $region2: #{complex_conv_net_denoise.1} parent=1 // loop_pre_header
      _
    $region3: #{complex_conv_net_denoise.1} parent=1 // loop_header
      %s22 = sphi 0, %s26
      %p23 = scmp.ge.s32.totalorder %s22, 4
      %s32 = sphi 0, %s34
      %s35 = sphi 0, %s32
      %s36 = sphi 0, %s35
      %s52 = sphi 0, %s36
      %s56 = sphi 0, %s56
      %s58 = sphi 0, %s56
      %s59 = sphi 0, %s58
      %s73 = sphi 0, %s59
      %s77 = sphi 0, %s77
      %s79 = sphi 0, %s77
      %s80 = sphi 0, %s79
      %s94 = sphi 0, %s80
      %s98 = sphi 0, %s98
      %s100 = sphi 0, %s98
      %s101 = sphi 0, %s100
      %s115 = sphi 0, %s101
      %s119 = sphi 0, %s119
      %s121 = sphi 0, %s119
      %s122 = sphi 0, %s121
      %s136 = sphi 0, %s122
      %s140 = sphi 0, %s140
      %s142 = sphi 0, %s140
      %s143 = sphi 0, %s142
      %s157 = sphi 0, %s143
      %s161 = sphi 0, %s161
      %s163 = sphi 0, %s161
      %s164 = sphi 0, %s163
      %s178 = sphi 0, %s164
      %s182 = sphi 0, %s182
      %s184 = sphi 0, %s182
      %s185 = sphi 0, %s184
      %s199 = sphi 0, %s185
      %s203 = sphi 0, %s203
      %s205 = sphi 0, %s203
      %s206 = sphi 0, %s205
      %s220 = sphi 0, %s206
      %s224 = sphi 0, %s224
      %s226 = sphi 0, %s224
      %s227 = sphi 0, %s226
      %s241 = sphi 0, %s227
      %s245 = sphi 0, %s245
      %s247 = sphi 0, %s245
      %s248 = sphi 0, %s247
      %s262 = sphi 0, %s248
      %s268 = sphi 0, %s270
      %s271 = sphi 0, %s268
      %s272 = sphi 0, %s271
      %s288 = sphi 0, %s272
      %s294 = sphi 0, %s296
      %s297 = sphi 0, %s294
      %s298 = sphi 0, %s297
      %s314 = sphi 0, %s298
    $region4: #{complex_conv_net_denoise.1} parent=1 // loop_header_branch
      %25 = sbr.rel (%p23) target = $region8
    $region5: #{complex_conv_net_denoise.1} parent=1 // loop_body
      %s27 = ssub.s32 %s22, 1
      %s28 = ssub.s32 %s22, 2
      %s29 = sadd.s32 %s22, 1
      %s30 = ssub.s32 %s22, %s29
      %p31 = scmp.eq.s32.totalorder %s30, 0
      %s33 = sadd.s32 %s32, 1
      %s34 = scalar_select %p31, %s32, %s33
      %p37 = pneg %p31
      %p38 = scmp.eq.s32.totalorder %s22, 1
      %p39 = por %p37, %p38
      %p40 = scmp.ne.s32.totalorder %s32, %s35
      %p41 = scmp.eq.s32.totalorder %s22, 0
      %p42 = por %p40, %p41
      %p43 = scmp.ne.s32.totalorder %s32, %s35
      %p44 = scmp.eq.s32.totalorder %s27, 1
      %p45 = por %p43, %p44
      %p46 = scmp.ne.s32.totalorder %s35, %s36
      %p47 = scmp.eq.s32.totalorder %s27, 0
      %p48 = por %p46, %p47
      %p49 = scmp.ne.s32.totalorder %s35, %s36
      %p50 = scmp.eq.s32.totalorder %s28, 1
      %p51 = por %p49, %p50
      %p53 = scmp.ne.s32.totalorder %s36, %s52
      %p54 = scmp.eq.s32.totalorder %s28, 0
      %p55 = por %p53, %p54
      %s57 = sadd.s32 %s56, 1
      %p60 = scmp.eq.s32.totalorder %s22, 1
      %p61 = scmp.ne.s32.totalorder %s56, %s58
      %p62 = scmp.eq.s32.totalorder %s22, 0
      %p63 = por %p61, %p62
      %p64 = scmp.ne.s32.totalorder %s56, %s58
      %p65 = scmp.eq.s32.totalorder %s27, 1
      %p66 = por %p64, %p65
      %p67 = scmp.ne.s32.totalorder %s58, %s59
      %p68 = scmp.eq.s32.totalorder %s27, 0
      %p69 = por %p67, %p68
      %p70 = scmp.ne.s32.totalorder %s58, %s59
      %p71 = scmp.eq.s32.totalorder %s28, 1
      %p72 = por %p70, %p71
      %p74 = scmp.ne.s32.totalorder %s59, %s73
      %p75 = scmp.eq.s32.totalorder %s28, 0
      %p76 = por %p74, %p75
      %s78 = sadd.s32 %s77, 1
      %p81 = scmp.eq.s32.totalorder %s22, 1
      %p82 = scmp.ne.s32.totalorder %s77, %s79
      %p83 = scmp.eq.s32.totalorder %s22, 0
      %p84 = por %p82, %p83
      %p85 = scmp.ne.s32.totalorder %s77, %s79
      %p86 = scmp.eq.s32.totalorder %s27, 1
      %p87 = por %p85, %p86
      %p88 = scmp.ne.s32.totalorder %s79, %s80
      %p89 = scmp.eq.s32.totalorder %s27, 0
      %p90 = por %p88, %p89
      %p91 = scmp.ne.s32.totalorder %s79, %s80
      %p92 = scmp.eq.s32.totalorder %s28, 1
      %p93 = por %p91, %p92
      %p95 = scmp.ne.s32.totalorder %s80, %s94
      %p96 = scmp.eq.s32.totalorder %s28, 0
      %p97 = por %p95, %p96
      %s99 = sadd.s32 %s98, 1
      %p102 = scmp.eq.s32.totalorder %s22, 1
      %p103 = scmp.ne.s32.totalorder %s98, %s100
      %p104 = scmp.eq.s32.totalorder %s22, 0
      %p105 = por %p103, %p104
      %p106 = scmp.ne.s32.totalorder %s98, %s100
      %p107 = scmp.eq.s32.totalorder %s27, 1
      %p108 = por %p106, %p107
      %p109 = scmp.ne.s32.totalorder %s100, %s101
      %p110 = scmp.eq.s32.totalorder %s27, 0
      %p111 = por %p109, %p110
      %p112 = scmp.ne.s32.totalorder %s100, %s101
      %p113 = scmp.eq.s32.totalorder %s28, 1
      %p114 = por %p112, %p113
      %p116 = scmp.ne.s32.totalorder %s101, %s115
      %p117 = scmp.eq.s32.totalorder %s28, 0
      %p118 = por %p116, %p117
      %s120 = sadd.s32 %s119, 1
      %p123 = scmp.eq.s32.totalorder %s22, 1
      %p124 = scmp.ne.s32.totalorder %s119, %s121
      %p125 = scmp.eq.s32.totalorder %s22, 0
      %p126 = por %p124, %p125
      %p127 = scmp.ne.s32.totalorder %s119, %s121
      %p128 = scmp.eq.s32.totalorder %s27, 1
      %p129 = por %p127, %p128
      %p130 = scmp.ne.s32.totalorder %s121, %s122
      %p131 = scmp.eq.s32.totalorder %s27, 0
      %p132 = por %p130, %p131
      %p133 = scmp.ne.s32.totalorder %s121, %s122
      %p134 = scmp.eq.s32.totalorder %s28, 1
      %p135 = por %p133, %p134
      %p137 = scmp.ne.s32.totalorder %s122, %s136
      %p138 = scmp.eq.s32.totalorder %s28, 0
      %p139 = por %p137, %p138
      %s141 = sadd.s32 %s140, 1
      %p144 = scmp.eq.s32.totalorder %s22, 1
      %p145 = scmp.ne.s32.totalorder %s140, %s142
      %p146 = scmp.eq.s32.totalorder %s22, 0
      %p147 = por %p145, %p146
      %p148 = scmp.ne.s32.totalorder %s140, %s142
      %p149 = scmp.eq.s32.totalorder %s27, 1
      %p150 = por %p148, %p149
      %p151 = scmp.ne.s32.totalorder %s142, %s143
      %p152 = scmp.eq.s32.totalorder %s27, 0
      %p153 = por %p151, %p152
      %p154 = scmp.ne.s32.totalorder %s142, %s143
      %p155 = scmp.eq.s32.totalorder %s28, 1
      %p156 = por %p154, %p155
      %p158 = scmp.ne.s32.totalorder %s143, %s157
      %p159 = scmp.eq.s32.totalorder %s28, 0
      %p160 = por %p158, %p159
      %s162 = sadd.s32 %s161, 1
      %p165 = scmp.eq.s32.totalorder %s22, 1
      %p166 = scmp.ne.s32.totalorder %s161, %s163
      %p167 = scmp.eq.s32.totalorder %s22, 0
      %p168 = por %p166, %p167
      %p169 = scmp.ne.s32.totalorder %s161, %s163
      %p170 = scmp.eq.s32.totalorder %s27, 1
      %p171 = por %p169, %p170
      %p172 = scmp.ne.s32.totalorder %s163, %s164
      %p173 = scmp.eq.s32.totalorder %s27, 0
      %p174 = por %p172, %p173
      %p175 = scmp.ne.s32.totalorder %s163, %s164
      %p176 = scmp.eq.s32.totalorder %s28, 1
      %p177 = por %p175, %p176
      %p179 = scmp.ne.s32.totalorder %s164, %s178
      %p180 = scmp.eq.s32.totalorder %s28, 0
      %p181 = por %p179, %p180
      %s183 = sadd.s32 %s182, 1
      %p186 = scmp.eq.s32.totalorder %s22, 1
      %p187 = scmp.ne.s32.totalorder %s182, %s184
      %p188 = scmp.eq.s32.totalorder %s22, 0
      %p189 = por %p187, %p188
      %p190 = scmp.ne.s32.totalorder %s182, %s184
      %p191 = scmp.eq.s32.totalorder %s27, 1
      %p192 = por %p190, %p191
      %p193 = scmp.ne.s32.totalorder %s184, %s185
      %p194 = scmp.eq.s32.totalorder %s27, 0
      %p195 = por %p193, %p194
      %p196 = scmp.ne.s32.totalorder %s184, %s185
      %p197 = scmp.eq.s32.totalorder %s28, 1
      %p198 = por %p196, %p197
      %p200 = scmp.ne.s32.totalorder %s185, %s199
      %p201 = scmp.eq.s32.totalorder %s28, 0
      %p202 = por %p200, %p201
      %s204 = sadd.s32 %s203, 1
      %p207 = scmp.eq.s32.totalorder %s22, 1
      %p208 = scmp.ne.s32.totalorder %s203, %s205
      %p209 = scmp.eq.s32.totalorder %s22, 0
      %p210 = por %p208, %p209
      %p211 = scmp.ne.s32.totalorder %s203, %s205
      %p212 = scmp.eq.s32.totalorder %s27, 1
      %p213 = por %p211, %p212
      %p214 = scmp.ne.s32.totalorder %s205, %s206
      %p215 = scmp.eq.s32.totalorder %s27, 0
      %p216 = por %p214, %p215
      %p217 = scmp.ne.s32.totalorder %s205, %s206
      %p218 = scmp.eq.s32.totalorder %s28, 1
      %p219 = por %p217, %p218
      %p221 = scmp.ne.s32.totalorder %s206, %s220
      %p222 = scmp.eq.s32.totalorder %s28, 0
      %p223 = por %p221, %p222
      %s225 = sadd.s32 %s224, 1
      %p228 = scmp.eq.s32.totalorder %s22, 1
      %p229 = scmp.ne.s32.totalorder %s224, %s226
      %p230 = scmp.eq.s32.totalorder %s22, 0
      %p231 = por %p229, %p230
      %p232 = scmp.ne.s32.totalorder %s224, %s226
      %p233 = scmp.eq.s32.totalorder %s27, 1
      %p234 = por %p232, %p233
      %p235 = scmp.ne.s32.totalorder %s226, %s227
      %p236 = scmp.eq.s32.totalorder %s27, 0
      %p237 = por %p235, %p236
      %p238 = scmp.ne.s32.totalorder %s226, %s227
      %p239 = scmp.eq.s32.totalorder %s28, 1
      %p240 = por %p238, %p239
      %p242 = scmp.ne.s32.totalorder %s227, %s241
      %p243 = scmp.eq.s32.totalorder %s28, 0
      %p244 = por %p242, %p243
      %s246 = sadd.s32 %s245, 1
      %p249 = scmp.eq.s32.totalorder %s22, 1
      %p250 = scmp.ne.s32.totalorder %s245, %s247
      %p251 = scmp.eq.s32.totalorder %s22, 0
      %p252 = por %p250, %p251
      %p253 = scmp.ne.s32.totalorder %s245, %s247
      %p254 = scmp.eq.s32.totalorder %s27, 1
      %p255 = por %p253, %p254
      %p256 = scmp.ne.s32.totalorder %s247, %s248
      %p257 = scmp.eq.s32.totalorder %s27, 0
      %p258 = por %p256, %p257
      %p259 = scmp.ne.s32.totalorder %s247, %s248
      %p260 = scmp.eq.s32.totalorder %s28, 1
      %p261 = por %p259, %p260
      %p263 = scmp.ne.s32.totalorder %s248, %s262
      %p264 = scmp.eq.s32.totalorder %s28, 0
      %p265 = por %p263, %p264
      %s266 = ssub.s32 %s22, %s29
      %p267 = scmp.eq.s32.totalorder %s266, 0
      %s269 = sadd.s32 %s268, 1
      %s270 = scalar_select %p267, %s268, %s269
      %p273 = pneg %p267
      %p274 = scmp.eq.s32.totalorder %s22, 1
      %p275 = por %p273, %p274
      %p276 = scmp.ne.s32.totalorder %s268, %s271
      %p277 = scmp.eq.s32.totalorder %s22, 0
      %p278 = por %p276, %p277
      %p279 = scmp.ne.s32.totalorder %s268, %s271
      %p280 = scmp.eq.s32.totalorder %s27, 1
      %p281 = por %p279, %p280
      %p282 = scmp.ne.s32.totalorder %s271, %s272
      %p283 = scmp.eq.s32.totalorder %s27, 0
      %p284 = por %p282, %p283
      %p285 = scmp.ne.s32.totalorder %s271, %s272
      %p286 = scmp.eq.s32.totalorder %s28, 1
      %p287 = por %p285, %p286
      %p289 = scmp.ne.s32.totalorder %s272, %s288
      %p290 = scmp.eq.s32.totalorder %s28, 0
      %p291 = por %p289, %p290
      %s292 = ssub.s32 %s22, %s29
      %p293 = scmp.eq.s32.totalorder %s292, 0
      %s295 = sadd.s32 %s294, 1
      %s296 = scalar_select %p293, %s294, %s295
      %p299 = pneg %p293
      %p300 = scmp.eq.s32.totalorder %s22, 1
      %p301 = por %p299, %p300
      %p302 = scmp.ne.s32.totalorder %s294, %s297
      %p303 = scmp.eq.s32.totalorder %s22, 0
      %p304 = por %p302, %p303
      %p305 = scmp.ne.s32.totalorder %s294, %s297
      %p306 = scmp.eq.s32.totalorder %s27, 1
      %p307 = por %p305, %p306
      %p308 = scmp.ne.s32.totalorder %s297, %s298
      %p309 = scmp.eq.s32.totalorder %s27, 0
      %p310 = por %p308, %p309
      %p311 = scmp.ne.s32.totalorder %s297, %s298
      %p312 = scmp.eq.s32.totalorder %s28, 1
      %p313 = por %p311, %p312
      %p315 = scmp.ne.s32.totalorder %s298, %s314
      %p316 = scmp.eq.s32.totalorder %s28, 0
      %p317 = por %p315, %p316
      %p318 = scmp.le.s32.totalorder 1, %s22
      %p319 = scmp.lt.s32.totalorder %s22, 3
      %p320 = pnand %p318, %p319
      %p321 = pneg %p320
      // Predicated region
      $region9: #{complex_conv_net_denoise.1} parent=5 // pred_check
        _
      $region10: #{complex_conv_net_denoise.1} parent=5 // pred_check_branch
        %323 = sbr.rel (%p320) target = $region12
      $region11: #{complex_conv_net_denoise.1} parent=5 // pred_region
        %s324 = ssub.s32 %s22, 1
        // Predicated region
        $region13: #{complex_conv_net_denoise.1} parent=11 // pred_check
          %p325 = pneg %p69
        $region14: #{complex_conv_net_denoise.1} parent=11 // pred_check_branch
          %327 = sbr.rel (%p325) target = $region16
        $region15: #{complex_conv_net_denoise.1} parent=11 // pred_region
          _
        $region16: #{complex_conv_net_denoise.1} parent=11 // pred_fallthru
          _
        // Predicated region
        $region17: #{complex_conv_net_denoise.1} parent=11 // pred_check
          %p328 = pneg %p90
        $region18: #{complex_conv_net_denoise.1} parent=11 // pred_check_branch
          %330 = sbr.rel (%p328) target = $region20
        $region19: #{complex_conv_net_denoise.1} parent=11 // pred_region
          _
        $region20: #{complex_conv_net_denoise.1} parent=11 // pred_fallthru
          _
        // Predicated region
        $region21: #{complex_conv_net_denoise.1} parent=11 // pred_check
          %p331 = pneg %p111
        $region22: #{complex_conv_net_denoise.1} parent=11 // pred_check_branch
          %333 = sbr.rel (%p331) target = $region24
        $region23: #{complex_conv_net_denoise.1} parent=11 // pred_region
          _
        $region24: #{complex_conv_net_denoise.1} parent=11 // pred_fallthru
          _
        // Predicated region
        $region25: #{complex_conv_net_denoise.1} parent=11 // pred_check
          %p334 = pneg %p132
        $region26: #{complex_conv_net_denoise.1} parent=11 // pred_check_branch
          %336 = sbr.rel (%p334) target = $region28
        $region27: #{complex_conv_net_denoise.1} parent=11 // pred_region
          _
        $region28: #{complex_conv_net_denoise.1} parent=11 // pred_fallthru
          _
        // Predicated region
        $region29: #{complex_conv_net_denoise.1} parent=11 // pred_check
          %p337 = pneg %p153
        $region30: #{complex_conv_net_denoise.1} parent=11 // pred_check_branch
          %339 = sbr.rel (%p337) target = $region32
        $region31: #{complex_conv_net_denoise.1} parent=11 // pred_region
          _
        $region32: #{complex_conv_net_denoise.1} parent=11 // pred_fallthru
          _
        // Predicated region
        $region33: #{complex_conv_net_denoise.1} parent=11 // pred_check
          %p340 = pneg %p174
        $region34: #{complex_conv_net_denoise.1} parent=11 // pred_check_branch
          %342 = sbr.rel (%p340) target = $region36
        $region35: #{complex_conv_net_denoise.1} parent=11 // pred_region
          _
        $region36: #{complex_conv_net_denoise.1} parent=11 // pred_fallthru
          _
        // Predicated region
        $region37: #{complex_conv_net_denoise.1} parent=11 // pred_check
          %p343 = pneg %p195
        $region38: #{complex_conv_net_denoise.1} parent=11 // pred_check_branch
          %345 = sbr.rel (%p343) target = $region40
        $region39: #{complex_conv_net_denoise.1} parent=11 // pred_region
          _
        $region40: #{complex_conv_net_denoise.1} parent=11 // pred_fallthru
          _
        // Predicated region
        $region41: #{complex_conv_net_denoise.1} parent=11 // pred_check
          %p346 = pneg %p216
        $region42: #{complex_conv_net_denoise.1} parent=11 // pred_check_branch
          %348 = sbr.rel (%p346) target = $region44
        $region43: #{complex_conv_net_denoise.1} parent=11 // pred_region
          _
        $region44: #{complex_conv_net_denoise.1} parent=11 // pred_fallthru
          _
        // Predicated region
        $region45: #{complex_conv_net_denoise.1} parent=11 // pred_check
          %p349 = pneg %p237
        $region46: #{complex_conv_net_denoise.1} parent=11 // pred_check_branch
          %351 = sbr.rel (%p349) target = $region48
        $region47: #{complex_conv_net_denoise.1} parent=11 // pred_region
          _
        $region48: #{complex_conv_net_denoise.1} parent=11 // pred_fallthru
          _
        // Predicated region
        $region49: #{complex_conv_net_denoise.1} parent=11 // pred_check
          %p352 = pneg %p258
        $region50: #{complex_conv_net_denoise.1} parent=11 // pred_check_branch
          %354 = sbr.rel (%p352) target = $region52
        $region51: #{complex_conv_net_denoise.1} parent=11 // pred_region
          _
        $region52: #{complex_conv_net_denoise.1} parent=11 // pred_fallthru
          _
      $region12: #{complex_conv_net_denoise.1} parent=5 // pred_fallthru
        _
      %p355 = scmp.lt.s32.totalorder %s22, 2
      // Predicated region
      $region53: #{complex_conv_net_denoise.1} parent=5 // pred_check
        %p356 = pneg %p355
      $region54: #{complex_conv_net_denoise.1} parent=5 // pred_check_branch
        %358 = sbr.rel (%p356) target = $region56
      $region55: #{complex_conv_net_denoise.1} parent=5 // pred_region
        // Predicated region
        $region57: #{complex_conv_net_denoise.1} parent=55 // pred_check
          %p359 = pneg %p42
        $region58: #{complex_conv_net_denoise.1} parent=55 // pred_check_branch
          %361 = sbr.rel (%p359) target = $region60
        $region59: #{complex_conv_net_denoise.1} parent=55 // pred_region
          %p362 = scmp.lt.s32.totalorder %s22, 1
          %s363 = scalar_select %p362, %s22, 1
          %s364 = smul.addr %s363, 4
          %s365 = smul.addr %s364, 8
          %s366 = scalar_lea.vmem %s0, %s365
        $region60: #{complex_conv_net_denoise.1} parent=55 // pred_fallthru
          _
      $region56: #{complex_conv_net_denoise.1} parent=5 // pred_fallthru
        _
      %p367 = scmp.le.s32.totalorder 1, %s22
      %p368 = scmp.lt.s32.totalorder %s22, 3
      %p369 = pnand %p367, %p368
      %p370 = pneg %p369
      // Predicated region
      $region61: #{complex_conv_net_denoise.1} parent=5 // pred_check
        _
      $region62: #{complex_conv_net_denoise.1} parent=5 // pred_check_branch
        %372 = sbr.rel (%p369) target = $region64
      $region63: #{complex_conv_net_denoise.1} parent=5 // pred_region
        %s373 = ssub.s32 %s22, 1
        %p374 = scmp.lt.s32.totalorder %s27, 1
        %s375 = scalar_select %p374, %s27, 1
        %s376 = smul.addr %s375, 4
        %s377 = smul.addr %s376, 8
        %s378 = scalar_lea.vmem %s0, %s377
        %p379 = pneg %p48
        %p380 = pneg %p45
        %p381 = pneg %p69
        %p382 = pneg %p66
        %p383 = pneg %p90
        %p384 = pneg %p87
        %p385 = pneg %p111
        %p386 = pneg %p108
        %p387 = pneg %p132
        %p388 = pneg %p129
        %p389 = pneg %p153
        %p390 = pneg %p150
        %p391 = pneg %p174
        %p392 = pneg %p171
        %p393 = pneg %p195
        %p394 = pneg %p192
        %p395 = pneg %p216
        %p396 = pneg %p213
        %p397 = pneg %p237
        %p398 = pneg %p234
        %p399 = pneg %p258
        %p400 = pneg %p255
        %p401 = pneg %p284
        %p402 = pneg %p281
        %p403 = scmp.lt.s32.totalorder %s27, 1
        %s404 = scalar_select %p403, %s27, 1
        %s405 = smul.addr %s404, 2
        %s406 = smul.addr %s405, 8
        %s407 = scalar_lea.vmem %s11, %s406
        %p408 = pneg %p310
        %p409 = pneg %p307
        %s410 = sand.u32 %s297, 1
        %s411 = scalar_lea.sflag [#allocation3], %s410
        %s412 = sand.u32 %s297, 1
        %s413 = scalar_lea.vmem [#allocation2], %s412
        %p414 = scmp.lt.s32.totalorder %s27, 1
        %s415 = scalar_select %p414, %s27, 1
        %s416 = smul.addr %s415, 4
        %s417 = smul.addr %s416, 8
        %s418 = scalar_lea.vmem %s0, %s417
        %p419 = scmp.lt.s32.totalorder %s27, 1
        %s420 = scalar_select %p419, %s27, 1
        %s421 = smul.addr %s420, 2
        %s422 = smul.addr %s421, 8
        %s423 = scalar_lea.vmem %s11, %s422
        %v424 = vlaneseq
        %v425 = vshrl.u32 %v424, 7
        %v426 = vadd.s32 %v425, 8
        %v427 = vadd.s32 %v425, 16
        %v428 = vadd.s32 %v425, 24
        %vm429 = vcmp.lt.s32.totalorder %v425, 0
        %v430 = vsub.s32 0, %v425
        %v431 = vsel %vm429, %v430, %v425
        %v432 = vshrl.u32 %v431, 3
        %v433 = vand.u32 %v431, 7
        %v434 = vsub.s32 0, %v433
        %v435 = vsel %vm429, %v434, %v433
        %vm436 = vcmp.lt.s32.totalorder %v426, 0
        %v437 = vsub.s32 0, %v426
        %v438 = vsel %vm436, %v437, %v426
        %v439 = vshrl.u32 %v438, 3
        %v440 = vand.u32 %v438, 7
        %v441 = vsub.s32 0, %v440
        %v442 = vsel %vm436, %v441, %v440
        %vm443 = vcmp.lt.s32.totalorder %v427, 0
        %v444 = vsub.s32 0, %v427
        %v445 = vsel %vm443, %v444, %v427
        %v446 = vshrl.u32 %v445, 3
        %v447 = vand.u32 %v445, 7
        %v448 = vsub.s32 0, %v447
        %v449 = vsel %vm443, %v448, %v447
        %vm450 = vcmp.lt.s32.totalorder %v428, 0
        %v451 = vsub.s32 0, %v428
        %v452 = vsel %vm450, %v451, %v428
        %v453 = vshrl.u32 %v452, 3
        %v454 = vand.u32 %v452, 7
        %v455 = vsub.s32 0, %v454
        %v456 = vsel %vm450, %v455, %v454
        %vm457 = vcmp.ne.s32.totalorder %v435, 0
        %vm458 = vcmp.ne.s32.totalorder %v442, 0
        %vm459 = vcmp.ne.s32.totalorder %v449, 0
        %vm460 = vcmp.ne.s32.totalorder %v456, 0
        %vm461 = vcmp.lt.s32.totalorder %v435, 0
        %vm462 = vcmp.lt.s32.totalorder %v442, 0
        %vm463 = vcmp.lt.s32.totalorder %v449, 0
        %vm464 = vcmp.lt.s32.totalorder %v456, 0
        %vm465 = vmand %vm461, %vm457
        %vm466 = vmand %vm462, %vm458
        %vm467 = vmand %vm463, %vm459
        %vm468 = vmand %vm464, %vm460
        %v469 = vadd.s32 %v435, 8
        %v470 = vadd.s32 %v442, 8
        %v471 = vadd.s32 %v449, 8
        %v472 = vadd.s32 %v456, 8
        %v473 = vsel %vm465, %v469, %v435
        %v474 = vsel %vm466, %v470, %v442
        %v475 = vsel %vm467, %v471, %v449
        %v476 = vsel %vm468, %v472, %v456
        %vm477 = vcmp.ne.s32.totalorder %v473, 0
        %vm478 = vcmp.ne.s32.totalorder %v474, 0
        %vm479 = vcmp.ne.s32.totalorder %v475, 0
        %vm480 = vcmp.ne.s32.totalorder %v476, 0
        %v481 = vsel %vm477, 1, 0
        %v482 = vsel %vm478, 1, 0
        %v483 = vsel %vm479, 1, 0
        %v484 = vsel %vm480, 1, 0
        %v485 = vcvt.s32.f32 %v481
        %v486 = vcvt.s32.f32 %v482
        %v487 = vcvt.s32.f32 %v483
        %v488 = vcvt.s32.f32 %v484
        %vm489 = vcmp.ne.s32.totalorder %v473, 7
        %vm490 = vcmp.ne.s32.totalorder %v474, 7
        %vm491 = vcmp.ne.s32.totalorder %v475, 7
        %vm492 = vcmp.ne.s32.totalorder %v476, 7
        %v493 = vsel %vm489, 1, 0
        %v494 = vsel %vm490, 1, 0
        %v495 = vsel %vm491, 1, 0
        %v496 = vsel %vm492, 1, 0
        %v497 = vcvt.s32.f32 %v493
        %v498 = vcvt.s32.f32 %v494
        %v499 = vcvt.s32.f32 %v495
        %v500 = vcvt.s32.f32 %v496
        %vm501 = vcmp.lt.s32.totalorder %v425, 0
        %v502 = vsub.s32 0, %v425
        %v503 = vsel %vm501, %v502, %v425
        %v504 = vshrl.u32 %v503, 4
        %v505 = vand.u32 %v503, 15
        %v506 = vsub.s32 0, %v505
        %v507 = vsel %vm501, %v506, %v505
        %vm508 = vcmp.lt.s32.totalorder %v426, 0
        %v509 = vsub.s32 0, %v426
        %v510 = vsel %vm508, %v509, %v426
        %v511 = vshrl.u32 %v510, 4
        %v512 = vand.u32 %v510, 15
        %v513 = vsub.s32 0, %v512
        %v514 = vsel %vm508, %v513, %v512
        %vm515 = vcmp.ne.s32.totalorder %v507, 0
        %vm516 = vcmp.ne.s32.totalorder %v514, 0
        %vm517 = vcmp.lt.s32.totalorder %v507, 0
        %vm518 = vcmp.lt.s32.totalorder %v514, 0
        %vm519 = vmand %vm517, %vm515
        %vm520 = vmand %vm518, %vm516
        %v521 = vadd.s32 %v507, 16
        %v522 = vadd.s32 %v514, 16
        %v523 = vsel %vm519, %v521, %v507
        %v524 = vsel %vm520, %v522, %v514
        %vm525 = vcmp.ne.s32.totalorder %v523, 0
        %vm526 = vcmp.ne.s32.totalorder %v524, 0
        %v527 = vsel %vm525, 1, 0
        %v528 = vsel %vm526, 1, 0
        %v529 = vcvt.s32.f32 %v527
        %v530 = vcvt.s32.f32 %v528
        %vm531 = vcmp.ne.s32.totalorder %v523, 15
        %vm532 = vcmp.ne.s32.totalorder %v524, 15
        %v533 = vsel %vm531, 1, 0
        %v534 = vsel %vm532, 1, 0
        %v535 = vcvt.s32.f32 %v533
        %v536 = vcvt.s32.f32 %v534
        %v537 = vld [vmem:[%s418] sm:$0xff]
        %v538 = vld [vmem:[%s418 + $0x8] sm:$0xff]
        %v539 = vld [vmem:[%s418 + $0x10] sm:$0xff]
        %v540 = vld [vmem:[%s418 + $0x18] sm:$0xff]
        %v541 = vrot.slane %v537, 7
        %v542 = vrot.slane %v538, 7
        %v543 = vrot.slane %v539, 7
        %v544 = vrot.slane %v540, 7
        %vm545 = vcmp.lt.s32.totalorder %v425, 1
        %v546 = vsel %vm545, %v543, %v544
        %v547 = vsel %vm545, %v542, %v543
        %v548 = vsel %vm545, %v541, %v542
        %v549 = vsel %vm545, %v544, %v541
        %v550 = vmul.f32 %v549, %v485
        %v551 = vmul.f32 %v548, %v486
        %v552 = vmul.f32 %v547, %v487
        %v553 = vmul.f32 %v546, %v488
        %v554 = vrot.slane %v537, 1
        %v555 = vrot.slane %v538, 1
        %v556 = vrot.slane %v539, 1
        %v557 = vrot.slane %v540, 1
        %vm558 = vcmp.lt.s32.totalorder %v425, 7
        %v559 = vsel %vm558, %v556, %v557
        %v560 = vsel %vm558, %v555, %v556
        %v561 = vsel %vm558, %v554, %v555
        %v562 = vsel %vm558, %v557, %v554
        %v563 = vmul.f32 %v561, %v497
        %v564 = vmul.f32 %v560, %v498
        %v565 = vmul.f32 %v559, %v499
        %v566 = vmul.f32 %v562, %v500
        %v567 = vld [vmem:[%s1] sm:$0xff]
        %v568 = vld [vmem:[%s1 + $0x8] sm:$0xff]
        %v569 = vld [vmem:[%s1 + $0x10] sm:$0xff]
        %v570 = vld [vmem:[%s1 + $0x18] sm:$0xff]
        %s571 = scalar_lea.vmem %s1, 32
        %v572 = vld [vmem:[%s571] sm:$0xff]
        %v573 = vld [vmem:[%s571 + $0x8] sm:$0xff]
        %v574 = vld [vmem:[%s571 + $0x10] sm:$0xff]
        %v575 = vld [vmem:[%s571 + $0x18] sm:$0xff]
        %vm576 = vcmask 261120
        %v578 = vsel %vm576, %v537, 0
        %v581 = vsel %vm576, %v538, 0
        %v584 = vsel %vm576, %v539, 0
        %v587 = vsel %vm576, %v540, 0
        %589 = vmatprep.subr.mxu0 0.0
        %v590 = vand.u32 %v572, 4294901760
        %591 = vmatpush1.msra.mxu0 %v590
        %592 = vmatprep.subr.mxu0 0.0
        %v593 = vand.u32 %v573, 4294901760
        %594 = vmatpush1.msra.mxu0 %v593
        %595 = vmatprep.subr.mxu0 0.0
        %v596 = vand.u32 %v574, 4294901760
        %597 = vmatpush1.msra.mxu0 %v596
        %598 = vmatprep.subr.mxu0 0.0
        %v599 = vand.u32 %v575, 4294901760
        %600 = vmatpush1.msra.mxu0 %v599
        %601 = vmatprep.subr.mxu0 0.0
        %602 = vmatpush1.msra.mxu0 0.0
        %603 = vmatprep.subr.mxu0 0.0
        %604 = vmatpush1.msra.mxu0 0.0
        %605 = vmatprep.subr.mxu0 0.0
        %606 = vmatpush1.msra.mxu0 0.0
        %607 = vmatprep.subr.mxu0 0.0
        %608 = vmatpush1.msra.mxu0 0.0
        %609 = vmatprep.subr.mxu0 0.0
        %610 = vmatpush1.msra.mxu0 0.0
        %611 = vmatprep.subr.mxu0 0.0
        %612 = vmatpush1.msra.mxu0 0.0
        %613 = vmatprep.subr.mxu0 0.0
        %614 = vmatpush1.msra.mxu0 0.0
        %615 = vmatprep.subr.mxu0 0.0
        %616 = vmatpush1.msra.mxu0 0.0
        %617 = vmatprep.subr.mxu0 0.0
        %618 = vmatpush1.msra.mxu0 0.0
        %619 = vmatprep.subr.mxu0 0.0
        %620 = vmatpush1.msra.mxu0 0.0
        %621 = vmatprep.subr.mxu0 0.0
        %622 = vmatpush1.msra.mxu0 0.0
        %623 = vmatprep.subr.mxu0 0.0
        %624 = vmatpush1.msra.mxu0 0.0
        %625 = vmatprep.subr.mxu0 0.0
        %626 = vmatpush1.msra.mxu0 0.0
        %627 = vmatprep.subr.mxu0 0.0
        %628 = vmatpush1.msra.mxu0 0.0
        %629 = vmatprep.subr.mxu0 0.0
        %630 = vmatpush1.msra.mxu0 0.0
        %631 = vmatprep.subr.mxu0 0.0
        %632 = vmatpush1.msra.mxu0 0.0
        %633 = vmatprep.subr.mxu0 0.0
        %634 = vmatpush1.msra.mxu0 0.0
        %635 = vmatprep.subr.mxu0 0.0
        %636 = vmatpush1.msra.mxu0 0.0
        %637 = vmatprep.subr.mxu0 0.0
        %638 = vmatpush1.msra.mxu0 0.0
        %639 = vmatprep.subr.mxu0 0.0
        %640 = vmatpush1.msra.mxu0 0.0
        %641 = vmatprep.subr.mxu0 0.0
        %642 = vmatpush1.msra.mxu0 0.0
        %643 = vmatprep.subr.mxu0 0.0
        %644 = vmatpush1.msra.mxu0 0.0
        %645 = vmatprep.subr.mxu0 0.0
        %646 = vmatpush1.msra.mxu0 0.0
        %647 = vmatprep.subr.mxu0 0.0
        %648 = vmatpush1.msra.mxu0 0.0
        %649 = vmatprep.subr.mxu0 0.0
        %650 = vmatpush1.msra.mxu0 0.0
        %651 = vmatprep.subr.mxu0 0.0
        %652 = vmatpush1.msra.mxu0 0.0
        %653 = vmatprep.subr.mxu0 0.0
        %654 = vmatpush1.msra.mxu0 0.0
        %655 = vmatprep.subr.mxu0 0.0
        %656 = vmatpush1.msra.mxu0 0.0
        %657 = vmatprep.mubr.f32.mxu0 0.0
        %v658 = vand.u32 %v578, 4294901760
        %v659 = vsub.f32 %v578, %v658
        %v660 = vand.u32 %v659, 4294901760
        %v661 = vsub.f32 %v659, %v660
        %v662 = vand.u32 %v661, 4294901760
        %663 = vmatmul.mubr.f32.gmra.mrb[0].mxu0 %v662
        %v664 = vpop.f32.mrb[0].mxu0
        %v665 = vadd.f32 0.0, %v664
        %v666 = vpop.f32.mrb[0].mxu0
        %667 = vmatprep.mubr.f32.mxu0 0.0
        %v668 = vand.u32 %v581, 4294901760
        %v669 = vsub.f32 %v581, %v668
        %v670 = vand.u32 %v669, 4294901760
        %v671 = vsub.f32 %v669, %v670
        %v672 = vand.u32 %v671, 4294901760
        %673 = vmatmul.mubr.f32.gmra.mrb[0].mxu0 %v672
        %v674 = vpop.f32.mrb[0].mxu0
        %v675 = vadd.f32 0.0, %v674
        %v676 = vpop.f32.mrb[0].mxu0
        %677 = vmatprep.mubr.f32.mxu0 0.0
        %v678 = vand.u32 %v584, 4294901760
        %v679 = vsub.f32 %v584, %v678
        %v680 = vand.u32 %v679, 4294901760
        %v681 = vsub.f32 %v679, %v680
        %v682 = vand.u32 %v681, 4294901760
        %683 = vmatmul.mubr.f32.gmra.mrb[0].mxu0 %v682
        %v684 = vpop.f32.mrb[0].mxu0
        %v685 = vadd.f32 0.0, %v684
        %v686 = vpop.f32.mrb[0].mxu0
        %687 = vmatprep.mubr.f32.mxu0 0.0
        %v688 = vand.u32 %v587, 4294901760
        %v689 = vsub.f32 %v587, %v688
        %v690 = vand.u32 %v689, 4294901760
        %v691 = vsub.f32 %v689, %v690
        %v692 = vand.u32 %v691, 4294901760
        %693 = vmatmul.mubr.f32.gmra.mrb[0].mxu0 %v692
        %v694 = vpop.f32.mrb[0].mxu0
        %v695 = vadd.f32 0.0, %v694
        %v696 = vpop.f32.mrb[0].mxu0
        %697 = vdwg.mxu0
        %698 = vmatprep.subr.mxu0 0.0
        %v699 = vand.u32 %v572, 4294901760
        %v700 = vsub.f32 %v572, %v699
        %v701 = vand.u32 %v700, 4294901760
        %v702 = vsub.f32 %v700, %v701
        %v703 = vand.u32 %v702, 4294901760
        %704 = vmatpush1.msra.mxu0 %v703
        %705 = vmatprep.subr.mxu0 0.0
        %v706 = vand.u32 %v573, 4294901760
        %v707 = vsub.f32 %v573, %v706
        %v708 = vand.u32 %v707, 4294901760
        %v709 = vsub.f32 %v707, %v708
        %v710 = vand.u32 %v709, 4294901760
        %711 = vmatpush1.msra.mxu0 %v710
        %712 = vmatprep.subr.mxu0 0.0
        %v713 = vand.u32 %v574, 4294901760
        %v714 = vsub.f32 %v574, %v713
        %v715 = vand.u32 %v714, 4294901760
        %v716 = vsub.f32 %v714, %v715
        %v717 = vand.u32 %v716, 4294901760
        %718 = vmatpush1.msra.mxu0 %v717
        %719 = vmatprep.subr.mxu0 0.0
        %v720 = vand.u32 %v575, 4294901760
        %v721 = vsub.f32 %v575, %v720
        %v722 = vand.u32 %v721, 4294901760
        %v723 = vsub.f32 %v721, %v722
        %v724 = vand.u32 %v723, 4294901760
        %725 = vmatpush1.msra.mxu0 %v724
        %726 = vmatprep.subr.mxu0 0.0
        %727 = vmatpush1.msra.mxu0 0.0
        %728 = vmatprep.subr.mxu0 0.0
        %729 = vmatpush1.msra.mxu0 0.0
        %730 = vmatprep.subr.mxu0 0.0
        %731 = vmatpush1.msra.mxu0 0.0
        %732 = vmatprep.subr.mxu0 0.0
        %733 = vmatpush1.msra.mxu0 0.0
        %734 = vmatprep.subr.mxu0 0.0
        %735 = vmatpush1.msra.mxu0 0.0
        %736 = vmatprep.subr.mxu0 0.0
        %737 = vmatpush1.msra.mxu0 0.0
        %738 = vmatprep.subr.mxu0 0.0
        %739 = vmatpush1.msra.mxu0 0.0
        %740 = vmatprep.subr.mxu0 0.0
        %741 = vmatpush1.msra.mxu0 0.0
        %742 = vmatprep.subr.mxu0 0.0
        %743 = vmatpush1.msra.mxu0 0.0
        %744 = vmatprep.subr.mxu0 0.0
        %745 = vmatpush1.msra.mxu0 0.0
        %746 = vmatprep.subr.mxu0 0.0
        %747 = vmatpush1.msra.mxu0 0.0
        %748 = vmatprep.subr.mxu0 0.0
        %749 = vmatpush1.msra.mxu0 0.0
        %750 = vmatprep.subr.mxu0 0.0
        %751 = vmatpush1.msra.mxu0 0.0
        %752 = vmatprep.subr.mxu0 0.0
        %753 = vmatpush1.msra.mxu0 0.0
        %754 = vmatprep.subr.mxu0 0.0
        %755 = vmatpush1.msra.mxu0 0.0
        %756 = vmatprep.subr.mxu0 0.0
        %757 = vmatpush1.msra.mxu0 0.0
        %758 = vmatprep.subr.mxu0 0.0
        %759 = vmatpush1.msra.mxu0 0.0
        %760 = vmatprep.subr.mxu0 0.0
        %761 = vmatpush1.msra.mxu0 0.0
        %762 = vmatprep.subr.mxu0 0.0
        %763 = vmatpush1.msra.mxu0 0.0
        %764 = vmatprep.subr.mxu0 0.0
        %765 = vmatpush1.msra.mxu0 0.0
        %766 = vmatprep.subr.mxu0 0.0
        %767 = vmatpush1.msra.mxu0 0.0
        %768 = vmatprep.subr.mxu0 0.0
        %769 = vmatpush1.msra.mxu0 0.0
        %770 = vmatprep.subr.mxu0 0.0
        %771 = vmatpush1.msra.mxu0 0.0
        %772 = vmatprep.subr.mxu0 0.0
        %773 = vmatpush1.msra.mxu0 0.0
        %774 = vmatprep.subr.mxu0 0.0
        %775 = vmatpush1.msra.mxu0 0.0
        %776 = vmatprep.subr.mxu0 0.0
        %777 = vmatpush1.msra.mxu0 0.0
        %778 = vmatprep.subr.mxu0 0.0
        %779 = vmatpush1.msra.mxu0 0.0
        %780 = vmatprep.subr.mxu0 0.0
        %781 = vmatpush1.msra.mxu0 0.0
        %782 = vmatprep.mubr.f32.mxu0 0.0
        %v783 = vand.u32 %v578, 4294901760
        %784 = vmatmul.mubr.f32.gmra.mrb[0].mxu0 %v783
        %v785 = vpop.f32.mrb[0].mxu0
        %v786 = vadd.f32 %v665, %v785
        %v787 = vpop.f32.mrb[0].mxu0
        %788 = vmatprep.mubr.f32.mxu0 0.0
        %v789 = vand.u32 %v581, 4294901760
        %790 = vmatmul.mubr.f32.gmra.mrb[0].mxu0 %v789
        %v791 = vpop.f32.mrb[0].mxu0
        %v792 = vadd.f32 %v675, %v791
        %v793 = vpop.f32.mrb[0].mxu0
        %794 = vmatprep.mubr.f32.mxu0 0.0
        %v795 = vand.u32 %v584, 4294901760
        %796 = vmatmul.mubr.f32.gmra.mrb[0].mxu0 %v795
        %v797 = vpop.f32.mrb[0].mxu0
        %v798 = vadd.f32 %v685, %v797
        %v799 = vpop.f32.mrb[0].mxu0
        %800 = vmatprep.mubr.f32.mxu0 0.0
        %v801 = vand.u32 %v587, 4294901760
        %802 = vmatmul.mubr.f32.gmra.mrb[0].mxu0 %v801
        %v803 = vpop.f32.mrb[0].mxu0
        %v804 = vadd.f32 %v695, %v803
        %v805 = vpop.f32.mrb[0].mxu0
        %806 = vdwg.mxu0
        %807 = vmatprep.subr.mxu0 0.0
        %v808 = vand.u32 %v572, 4294901760
        %v809 = vsub.f32 %v572, %v808
        %810 = vmatpush1.msra.mxu0 %v809
        %811 = vmatprep.subr.mxu0 0.0
        %v812 = vand.u32 %v573, 4294901760
        %v813 = vsub.f32 %v573, %v812
        %814 = vmatpush1.msra.mxu0 %v813
        %815 = vmatprep.subr.mxu0 0.0
        %v816 = vand.u32 %v574, 4294901760
        %v817 = vsub.f32 %v574, %v816
        %818 = vmatpush1.msra.mxu0 %v817
        %819 = vmatprep.subr.mxu0 0.0
        %v820 = vand.u32 %v575, 4294901760
        %v821 = vsub.f32 %v575, %v820
        %822 = vmatpush1.msra.mxu0 %v821
        %823 = vmatprep.subr.mxu0 0.0
        %824 = vmatpush1.msra.mxu0 0.0
        %825 = vmatprep.subr.mxu0 0.0
        %826 = vmatpush1.msra.mxu0 0.0
        %827 = vmatprep.subr.mxu0 0.0
        %828 = vmatpush1.msra.mxu0 0.0
        %829 = vmatprep.subr.mxu0 0.0
        %830 = vmatpush1.msra.mxu0 0.0
        %831 = vmatprep.subr.mxu0 0.0
        %832 = vmatpush1.msra.mxu0 0.0
        %833 = vmatprep.subr.mxu0 0.0
        %834 = vmatpush1.msra.mxu0 0.0
        %835 = vmatprep.subr.mxu0 0.0
        %836 = vmatpush1.msra.mxu0 0.0
        %837 = vmatprep.subr.mxu0 0.0
        %838 = vmatpush1.msra.mxu0 0.0
        %839 = vmatprep.subr.mxu0 0.0
        %840 = vmatpush1.msra.mxu0 0.0
        %841 = vmatprep.subr.mxu0 0.0
        %842 = vmatpush1.msra.mxu0 0.0
        %843 = vmatprep.subr.mxu0 0.0
        %844 = vmatpush1.msra.mxu0 0.0
        %845 = vmatprep.subr.mxu0 0.0
        %846 = vmatpush1.msra.mxu0 0.0
        %847 = vmatprep.subr.mxu0 0.0
        %848 = vmatpush1.msra.mxu0 0.0
        %849 = vmatprep.subr.mxu0 0.0
        %850 = vmatpush1.msra.mxu0 0.0
        %851 = vmatprep.subr.mxu0 0.0
        %852 = vmatpush1.msra.mxu0 0.0
        %853 = vmatprep.subr.mxu0 0.0
        %854 = vmatpush1.msra.mxu0 0.0
        %855 = vmatprep.subr.mxu0 0.0
        %856 = vmatpush1.msra.mxu0 0.0
        %857 = vmatprep.subr.mxu0 0.0
        %858 = vmatpush1.msra.mxu0 0.0
        %859 = vmatprep.subr.mxu0 0.0
        %860 = vmatpush1.msra.mxu0 0.0
        %861 = vmatprep.subr.mxu0 0.0
        %862 = vmatpush1.msra.mxu0 0.0
        %863 = vmatprep.subr.mxu0 0.0
        %864 = vmatpush1.msra.mxu0 0.0
        %865 = vmatprep.subr.mxu0 0.0
        %866 = vmatpush1.msra.mxu0 0.0
        %867 = vmatprep.subr.mxu0 0.0
        %868 = vmatpush1.msra.mxu0 0.0
        %869 = vmatprep.subr.mxu0 0.0
        %870 = vmatpush1.msra.mxu0 0.0
        %871 = vmatprep.subr.mxu0 0.0
        %872 = vmatpush1.msra.mxu0 0.0
        %873 = vmatprep.subr.mxu0 0.0
        %874 = vmatpush1.msra.mxu0 0.0
        %875 = vmatprep.subr.mxu0 0.0
        %876 = vmatpush1.msra.mxu0 0.0
        %877 = vmatprep.subr.mxu0 0.0
        %878 = vmatpush1.msra.mxu0 0.0
        %879 = vmatprep.mubr.f32.mxu0 0.0
        %v880 = vand.u32 %v578, 4294901760
        %v881 = vsub.f32 %v578, %v880
        %882 = vmatmul.mubr.f32.gmra.mrb[0].mxu0 %v881
        %v883 = vpop.f32.mrb[0].mxu0
        %v884 = vadd.f32 %v786, %v883
        %v885 = vpop.f32.mrb[0].mxu0
        %886 = vmatprep.mubr.f32.mxu0 0.0
        %v887 = vand.u32 %v581, 4294901760
        %v888 = vsub.f32 %v581, %v887
        %889 = vmatmul.mubr.f32.gmra.mrb[0].mxu0 %v888
        %v890 = vpop.f32.mrb[0].mxu0
        %v891 = vadd.f32 %v792, %v890
        %v892 = vpop.f32.mrb[0].mxu0
        %893 = vmatprep.mubr.f32.mxu0 0.0
        %v894 = vand.u32 %v584, 4294901760
        %v895 = vsub.f32 %v584, %v894
        %896 = vmatmul.mubr.f32.gmra.mrb[0].mxu0 %v895
        %v897 = vpop.f32.mrb[0].mxu0
        %v898 = vadd.f32 %v798, %v897
        %v899 = vpop.f32.mrb[0].mxu0
        %900 = vmatprep.mubr.f32.mxu0 0.0
        %v901 = vand.u32 %v587, 4294901760
        %v902 = vsub.f32 %v587, %v901
        %903 = vmatmul.mubr.f32.gmra.mrb[0].mxu0 %v902
        %v904 = vpop.f32.mrb[0].mxu0
        %v905 = vadd.f32 %v804, %v904
        %v906 = vpop.f32.mrb[0].mxu0
        %907 = vdwg.mxu0
        %908 = vmatprep.subr.mxu0 0.0
        %v909 = vand.u32 %v572, 4294901760
        %910 = vmatpush1.msra.mxu0 %v909
        %911 = vmatprep.subr.mxu0 0.0
        %v912 = vand.u32 %v573, 4294901760
        %913 = vmatpush1.msra.mxu0 %v912
        %914 = vmatprep.subr.mxu0 0.0
        %v915 = vand.u32 %v574, 4294901760
        %916 = vmatpush1.msra.mxu0 %v915
        %917 = vmatprep.subr.mxu0 0.0
        %v918 = vand.u32 %v575, 4294901760
        %919 = vmatpush1.msra.mxu0 %v918
        %920 = vmatprep.subr.mxu0 0.0
        %921 = vmatpush1.msra.mxu0 0.0
        %922 = vmatprep.subr.mxu0 0.0
        %923 = vmatpush1.msra.mxu0 0.0
        %924 = vmatprep.subr.mxu0 0.0
        %925 = vmatpush1.msra.mxu0 0.0
        %926 = vmatprep.subr.mxu0 0.0
        %927 = vmatpush1.msra.mxu0 0.0
        %928 = vmatprep.subr.mxu0 0.0
        %929 = vmatpush1.msra.mxu0 0.0
        %930 = vmatprep.subr.mxu0 0.0
        %931 = vmatpush1.msra.mxu0 0.0
        %932 = vmatprep.subr.mxu0 0.0
        %933 = vmatpush1.msra.mxu0 0.0
        %934 = vmatprep.subr.mxu0 0.0
        %935 = vmatpush1.msra.mxu0 0.0
        %936 = vmatprep.subr.mxu0 0.0
        %937 = vmatpush1.msra.mxu0 0.0
        %938 = vmatprep.subr.mxu0 0.0
        %939 = vmatpush1.msra.mxu0 0.0
        %940 = vmatprep.subr.mxu0 0.0
        %941 = vmatpush1.msra.mxu0 0.0
        %942 = vmatprep.subr.mxu0 0.0
        %943 = vmatpush1.msra.mxu0 0.0
        %944 = vmatprep.subr.mxu0 0.0
        %945 = vmatpush1.msra.mxu0 0.0
        %946 = vmatprep.subr.mxu0 0.0
        %947 = vmatpush1.msra.mxu0 0.0
        %948 = vmatprep.subr.mxu0 0.0
        %949 = vmatpush1.msra.mxu0 0.0
        %950 = vmatprep.subr.mxu0 0.0
        %951 = vmatpush1.msra.mxu0 0.0
        %952 = vmatprep.subr.mxu0 0.0
        %953 = vmatpush1.msra.mxu0 0.0
        %954 = vmatprep.subr.mxu0 0.0
        %955 = vmatpush1.msra.mxu0 0.0
        %956 = vmatprep.subr.mxu0 0.0
        %957 = vmatpush1.msra.mxu0 0.0
        %958 = vmatprep.subr.mxu0 0.0
        %959 = vmatpush1.msra.mxu0 0.0
        %960 = vmatprep.subr.mxu0 0.0
        %961 = vmatpush1.msra.mxu0 0.0
        %962 = vmatprep.subr.mxu0 0.0
        %963 = vmatpush1.msra.mxu0 0.0
        %964 = vmatprep.subr.mxu0 0.0
        %965 = vmatpush1.msra.mxu0 0.0
        %966 = vmatprep.subr.mxu0 0.0
        %967 = vmatpush1.msra.mxu0 0.0
        %968 = vmatprep.subr.mxu0 0.0
        %969 = vmatpush1.msra.mxu0 0.0
        %970 = vmatprep.subr.mxu0 0.0
        %971 = vmatpush1.msra.mxu0 0.0
        %972 = vmatprep.subr.mxu0 0.0
        %973 = vmatpush1.msra.mxu0 0.0
        %974 = vmatprep.subr.mxu0 0.0
        %975 = vmatpush1.msra.mxu0 0.0
        %976 = vmatprep.mubr.f32.mxu0 0.0
        %v977 = vand.u32 %v578, 4294901760
        %v978 = vsub.f32 %v578, %v977
        %v979 = vand.u32 %v978, 4294901760
        %980 = vmatmul.mubr.f32.gmra.mrb[0].mxu0 %v979
        %v981 = vpop.f32.mrb[0].mxu0
        %v982 = vadd.f32 %v884, %v981
        %v983 = vpop.f32.mrb[0].mxu0
        %984 = vmatprep.mubr.f32.mxu0 0.0
        %v985 = vand.u32 %v581, 4294901760
        %v986 = vsub.f32 %v581, %v985
        %v987 = vand.u32 %v986, 4294901760
        %988 = vmatmul.mubr.f32.gmra.mrb[0].mxu0 %v987
        %v989 = vpop.f32.mrb[0].mxu0
        %v990 = vadd.f32 %v891, %v989
        %v991 = vpop.f32.mrb[0].mxu0
        %992 = vmatprep.mubr.f32.mxu0 0.0
        %v993 = vand.u32 %v584, 4294901760
        %v994 = vsub.f32 %v584, %v993
        %v995 = vand.u32 %v994, 4294901760
        %996 = vmatmul.mubr.f32.gmra.mrb[0].mxu0 %v995
        %v997 = vpop.f32.mrb[0].mxu0
        %v998 = vadd.f32 %v898, %v997
        %v999 = vpop.f32.mrb[0].mxu0
        %1000 = vmatprep.mubr.f32.mxu0 0.0
        %v1001 = vand.u32 %v587, 4294901760
        %v1002 = vsub.f32 %v587, %v1001
        %v1003 = vand.u32 %v1002, 4294901760
        %1004 = vmatmul.mubr.f32.gmra.mrb[0].mxu0 %v1003
        %v1005 = vpop.f32.mrb[0].mxu0
        %v1006 = vadd.f32 %v905, %v1005
        %v1007 = vpop.f32.mrb[0].mxu0
        %1008 = vdwg.mxu0
        %1009 = vmatprep.subr.mxu0 0.0
        %v1010 = vand.u32 %v572, 4294901760
        %v1011 = vsub.f32 %v572, %v1010
        %v1012 = vand.u32 %v1011, 4294901760
        %1013 = vmatpush1.msra.mxu0 %v1012
        %1014 = vmatprep.subr.mxu0 0.0
        %v1015 = vand.u32 %v573, 4294901760
        %v1016 = vsub.f32 %v573, %v1015
        %v1017 = vand.u32 %v1016, 4294901760
        %1018 = vmatpush1.msra.mxu0 %v1017
        %1019 = vmatprep.subr.mxu0 0.0
        %v1020 = vand.u32 %v574, 4294901760
        %v1021 = vsub.f32 %v574, %v1020
        %v1022 = vand.u32 %v1021, 4294901760
        %1023 = vmatpush1.msra.mxu0 %v1022
        %1024 = vmatprep.subr.mxu0 0.0
        %v1025 = vand.u32 %v575, 4294901760
        %v1026 = vsub.f32 %v575, %v1025
        %v1027 = vand.u32 %v1026, 4294901760
        %1028 = vmatpush1.msra.mxu0 %v1027
        %1029 = vmatprep.subr.mxu0 0.0
        %1030 = vmatpush1.msra.mxu0 0.0
        %1031 = vmatprep.subr.mxu0 0.0
        %1032 = vmatpush1.msra.mxu0 0.0
        %1033 = vmatprep.subr.mxu0 0.0
        %1034 = vmatpush1.msra.mxu0 0.0
        %1035 = vmatprep.subr.mxu0 0.0
        %1036 = vmatpush1.msra.mxu0 0.0
        %1037 = vmatprep.subr.mxu0 0.0
        %1038 = vmatpush1.msra.mxu0 0.0
        %1039 = vmatprep.subr.mxu0 0.0
        %1040 = vmatpush1.msra.mxu0 0.0
        %1041 = vmatprep.subr.mxu0 0.0
        %1042 = vmatpush1.msra.mxu0 0.0
        %1043 = vmatprep.subr.mxu0 0.0
        %1044 = vmatpush1.msra.mxu0 0.0
        %1045 = vmatprep.subr.mxu0 0.0
        %1046 = vmatpush1.msra.mxu0 0.0
        %1047 = vmatprep.subr.mxu0 0.0
        %1048 = vmatpush1.msra.mxu0 0.0
        %1049 = vmatprep.subr.mxu0 0.0
        %1050 = vmatpush1.msra.mxu0 0.0
        %1051 = vmatprep.subr.mxu0 0.0
        %1052 = vmatpush1.msra.mxu0 0.0
        %1053 = vmatprep.subr.mxu0 0.0
        %1054 = vmatpush1.msra.mxu0 0.0
        %1055 = vmatprep.subr.mxu0 0.0
        %1056 = vmatpush1.msra.mxu0 0.0
        %1057 = vmatprep.subr.mxu0 0.0
        %1058 = vmatpush1.msra.mxu0 0.0
        %1059 = vmatprep.subr.mxu0 0.0
        %1060 = vmatpush1.msra.mxu0 0.0
        %1061 = vmatprep.subr.mxu0 0.0
        %1062 = vmatpush1.msra.mxu0 0.0
        %1063 = vmatprep.subr.mxu0 0.0
        %1064 = vmatpush1.msra.mxu0 0.0
        %1065 = vmatprep.subr.mxu0 0.0
        %1066 = vmatpush1.msra.mxu0 0.0
        %1067 = vmatprep.subr.mxu0 0.0
        %1068 = vmatpush1.msra.mxu0 0.0
        %1069 = vmatprep.subr.mxu0 0.0
        %1070 = vmatpush1.msra.mxu0 0.0
        %1071 = vmatprep.subr.mxu0 0.0
        %1072 = vmatpush1.msra.mxu0 0.0
        %1073 = vmatprep.subr.mxu0 0.0
        %1074 = vmatpush1.msra.mxu0 0.0
        %1075 = vmatprep.subr.mxu0 0.0
        %1076 = vmatpush1.msra.mxu0 0.0
        %1077 = vmatprep.subr.mxu0 0.0
        %1078 = vmatpush1.msra.mxu0 0.0
        %1079 = vmatprep.subr.mxu0 0.0
        %1080 = vmatpush1.msra.mxu0 0.0
        %1081 = vmatprep.subr.mxu0 0.0
        %1082 = vmatpush1.msra.mxu0 0.0
        %1083 = vmatprep.subr.mxu0 0.0
        %1084 = vmatpush1.msra.mxu0 0.0
        %1085 = vmatprep.mubr.f32.mxu0 0.0
        %v1086 = vand.u32 %v578, 4294901760
        %1087 = vmatmul.mubr.f32.gmra.mrb[0].mxu0 %v1086
        %v1088 = vpop.f32.mrb[0].mxu0
        %v1089 = vadd.f32 %v982, %v1088
        %v1090 = vpop.f32.mrb[0].mxu0
        %1091 = vmatprep.mubr.f32.mxu0 0.0
        %v1092 = vand.u32 %v581, 4294901760
        %1093 = vmatmul.mubr.f32.gmra.mrb[0].mxu0 %v1092
        %v1094 = vpop.f32.mrb[0].mxu0
        %v1095 = vadd.f32 %v990, %v1094
        %v1096 = vpop.f32.mrb[0].mxu0
        %1097 = vmatprep.mubr.f32.mxu0 0.0
        %v1098 = vand.u32 %v584, 4294901760
        %1099 = vmatmul.mubr.f32.gmra.mrb[0].mxu0 %v1098
        %v1100 = vpop.f32.mrb[0].mxu0
        %v1101 = vadd.f32 %v998, %v1100
        %v1102 = vpop.f32.mrb[0].mxu0
        %1103 = vmatprep.mubr.f32.mxu0 0.0
        %v1104 = vand.u32 %v587, 4294901760
        %1105 = vmatmul.mubr.f32.gmra.mrb[0].mxu0 %v1104
        %v1106 = vpop.f32.mrb[0].mxu0
        %v1107 = vadd.f32 %v1006, %v1106
        %v1108 = vpop.f32.mrb[0].mxu0
        %1109 = vdwg.mxu0
        %1110 = vmatprep.subr.mxu0 0.0
        %v1111 = vand.u32 %v572, 4294901760
        %1112 = vmatpush1.msra.mxu0 %v1111
        %1113 = vmatprep.subr.mxu0 0.0
        %v1114 = vand.u32 %v573, 4294901760
        %1115 = vmatpush1.msra.mxu0 %v1114
        %1116 = vmatprep.subr.mxu0 0.0
        %v1117 = vand.u32 %v574, 4294901760
        %1118 = vmatpush1.msra.mxu0 %v1117
        %1119 = vmatprep.subr.mxu0 0.0
        %v1120 = vand.u32 %v575, 4294901760
        %1121 = vmatpush1.msra.mxu0 %v1120
        %1122 = vmatprep.subr.mxu0 0.0
        %1123 = vmatpush1.msra.mxu0 0.0
        %1124 = vmatprep.subr.mxu0 0.0
        %1125 = vmatpush1.msra.mxu0 0.0
        %1126 = vmatprep.subr.mxu0 0.0
        %1127 = vmatpush1.msra.mxu0 0.0
        %1128 = vmatprep.subr.mxu0 0.0
        %1129 = vmatpush1.msra.mxu0 0.0
        %1130 = vmatprep.subr.mxu0 0.0
        %1131 = vmatpush1.msra.mxu0 0.0
        %1132 = vmatprep.subr.mxu0 0.0
        %1133 = vmatpush1.msra.mxu0 0.0
        %1134 = vmatprep.subr.mxu0 0.0
        %1135 = vmatpush1.msra.mxu0 0.0
        %1136 = vmatprep.subr.mxu0 0.0
        %1137 = vmatpush1.msra.mxu0 0.0
        %1138 = vmatprep.subr.mxu0 0.0
        %1139 = vmatpush1.msra.mxu0 0.0
        %1140 = vmatprep.subr.mxu0 0.0
        %1141 = vmatpush1.msra.mxu0 0.0
        %1142 = vmatprep.subr.mxu0 0.0
        %1143 = vmatpush1.msra.mxu0 0.0
        %1144 = vmatprep.subr.mxu0 0.0
        %1145 = vmatpush1.msra.mxu0 0.0
        %1146 = vmatprep.subr.mxu0 0.0
        %1147 = vmatpush1.msra.mxu0 0.0
        %1148 = vmatprep.subr.mxu0 0.0
        %1149 = vmatpush1.msra.mxu0 0.0
        %1150 = vmatprep.subr.mxu0 0.0
        %1151 = vmatpush1.msra.mxu0 0.0
        %1152 = vmatprep.subr.mxu0 0.0
        %1153 = vmatpush1.msra.mxu0 0.0
        %1154 = vmatprep.subr.mxu0 0.0
        %1155 = vmatpush1.msra.mxu0 0.0
        %1156 = vmatprep.subr.mxu0 0.0
        %1157 = vmatpush1.msra.mxu0 0.0
        %1158 = vmatprep.subr.mxu0 0.0
        %1159 = vmatpush1.msra.mxu0 0.0
        %1160 = vmatprep.subr.mxu0 0.0
        %1161 = vmatpush1.msra.mxu0 0.0
        %1162 = vmatprep.subr.mxu0 0.0
        %1163 = vmatpush1.msra.mxu0 0.0
        %1164 = vmatprep.subr.mxu0 0.0
        %1165 = vmatpush1.msra.mxu0 0.0
        %1166 = vmatprep.subr.mxu0 0.0
        %1167 = vmatpush1.msra.mxu0 0.0
        %1168 = vmatprep.subr.mxu0 0.0
        %1169 = vmatpush1.msra.mxu0 0.0
        %1170 = vmatprep.subr.mxu0 0.0
        %1171 = vmatpush1.msra.mxu0 0.0
        %1172 = vmatprep.subr.mxu0 0.0
        %1173 = vmatpush1.msra.mxu0 0.0
        %1174 = vmatprep.subr.mxu0 0.0
        %1175 = vmatpush1.msra.mxu0 0.0
        %1176 = vmatprep.subr.mxu0 0.0
        %1177 = vmatpush1.msra.mxu0 0.0
        %1178 = vmatprep.mubr.f32.mxu0 0.0
        %v1179 = vand.u32 %v578, 4294901760
        %1180 = vmatmul.mubr.f32.gmra.mrb[0].mxu0 %v1179
        %v1181 = vpop.f32.mrb[0].mxu0
        %v1182 = vadd.f32 %v1089, %v1181
        %v1183 = vpop.f32.mrb[0].mxu0
        %1184 = vmatprep.mubr.f32.mxu0 0.0
        %v1185 = vand.u32 %v581, 4294901760
        %1186 = vmatmul.mubr.f32.gmra.mrb[0].mxu0 %v1185
        %v1187 = vpop.f32.mrb[0].mxu0
        %v1188 = vadd.f32 %v1095, %v1187
        %v1189 = vpop.f32.mrb[0].mxu0
        %1190 = vmatprep.mubr.f32.mxu0 0.0
        %v1191 = vand.u32 %v584, 4294901760
        %1192 = vmatmul.mubr.f32.gmra.mrb[0].mxu0 %v1191
        %v1193 = vpop.f32.mrb[0].mxu0
        %v1194 = vadd.f32 %v1101, %v1193
        %v1195 = vpop.f32.mrb[0].mxu0
        %1196 = vmatprep.mubr.f32.mxu0 0.0
        %v1197 = vand.u32 %v587, 4294901760
        %1198 = vmatmul.mubr.f32.gmra.mrb[0].mxu0 %v1197
        %v1199 = vpop.f32.mrb[0].mxu0
        %v1200 = vadd.f32 %v1107, %v1199
        %v1201 = vpop.f32.mrb[0].mxu0
        %1202 = vdwg.mxu0
        %v1204 = vsel %vm576, %v550, 0
        %v1207 = vsel %vm576, %v551, 0
        %v1210 = vsel %vm576, %v552, 0
        %v1213 = vsel %vm576, %v553, 0
        %1215 = vmatprep.subr.mxu0 0.0
        %v1216 = vand.u32 %v567, 4294901760
        %1217 = vmatpush1.msra.mxu0 %v1216
        %1218 = vmatprep.subr.mxu0 0.0
        %v1219 = vand.u32 %v568, 4294901760
        %1220 = vmatpush1.msra.mxu0 %v1219
        %1221 = vmatprep.subr.mxu0 0.0
        %v1222 = vand.u32 %v569, 4294901760
        %1223 = vmatpush1.msra.mxu0 %v1222
        %1224 = vmatprep.subr.mxu0 0.0
        %v1225 = vand.u32 %v570, 4294901760
        %1226 = vmatpush1.msra.mxu0 %v1225
        %1227 = vmatprep.subr.mxu0 0.0
        %1228 = vmatpush1.msra.mxu0 0.0
        %1229 = vmatprep.subr.mxu0 0.0
        %1230 = vmatpush1.msra.mxu0 0.0
        %1231 = vmatprep.subr.mxu0 0.0
        %1232 = vmatpush1.msra.mxu0 0.0
        %1233 = vmatprep.subr.mxu0 0.0
        %1234 = vmatpush1.msra.mxu0 0.0
        %1235 = vmatprep.subr.mxu0 0.0
        %1236 = vmatpush1.msra.mxu0 0.0
        %1237 = vmatprep.subr.mxu0 0.0
        %1238 = vmatpush1.msra.mxu0 0.0
        %1239 = vmatprep.subr.mxu0 0.0
        %1240 = vmatpush1.msra.mxu0 0.0
        %1241 = vmatprep.subr.mxu0 0.0
        %1242 = vmatpush1.msra.mxu0 0.0
        %1243 = vmatprep.subr.mxu0 0.0
        %1244 = vmatpush1.msra.mxu0 0.0
        %1245 = vmatprep.subr.mxu0 0.0
        %1246 = vmatpush1.msra.mxu0 0.0
        %1247 = vmatprep.subr.mxu0 0.0
        %1248 = vmatpush1.msra.mxu0 0.0
        %1249 = vmatprep.subr.mxu0 0.0
        %1250 = vmatpush1.msra.mxu0 0.0
        %1251 = vmatprep.subr.mxu0 0.0
        %1252 = vmatpush1.msra.mxu0 0.0
        %1253 = vmatprep.subr.mxu0 0.0
        %1254 = vmatpush1.msra.mxu0 0.0
        %1255 = vmatprep.subr.mxu0 0.0
        %1256 = vmatpush1.msra.mxu0 0.0
        %1257 = vmatprep.subr.mxu0 0.0
        %1258 = vmatpush1.msra.mxu0 0.0
        %1259 = vmatprep.subr.mxu0 0.0
        %1260 = vmatpush1.msra.mxu0 0.0
        %1261 = vmatprep.subr.mxu0 0.0
        %1262 = vmatpush1.msra.mxu0 0.0
        %1263 = vmatprep.subr.mxu0 0.0
        %1264 = vmatpush1.msra.mxu0 0.0
        %1265 = vmatprep.subr.mxu0 0.0
        %1266 = vmatpush1.msra.mxu0 0.0
        %1267 = vmatprep.subr.mxu0 0.0
        %1268 = vmatpush1.msra.mxu0 0.0
        %1269 = vmatprep.subr.mxu0 0.0
        %1270 = vmatpush1.msra.mxu0 0.0
        %1271 = vmatprep.subr.mxu0 0.0
        %1272 = vmatpush1.msra.mxu0 0.0
        %1273 = vmatprep.subr.mxu0 0.0
        %1274 = vmatpush1.msra.mxu0 0.0
        %1275 = vmatprep.subr.mxu0 0.0
        %1276 = vmatpush1.msra.mxu0 0.0
        %1277 = vmatprep.subr.mxu0 0.0
        %1278 = vmatpush1.msra.mxu0 0.0
        %1279 = vmatprep.subr.mxu0 0.0
        %1280 = vmatpush1.msra.mxu0 0.0
        %1281 = vmatprep.subr.mxu0 0.0
        %1282 = vmatpush1.msra.mxu0 0.0
        %1283 = vmatprep.mubr.f32.mxu0 0.0
        %v1284 = vand.u32 %v1204, 4294901760
        %v1285 = vsub.f32 %v1204, %v1284
        %v1286 = vand.u32 %v1285, 4294901760
        %v1287 = vsub.f32 %v1285, %v1286
        %v1288 = vand.u32 %v1287, 4294901760
        %1289 = vmatmul.mubr.f32.gmra.mrb[0].mxu0 %v1288
        %v1290 = vpop.f32.mrb[0].mxu0
        %v1291 = vadd.f32 %v1182, %v1290
        %v1292 = vpop.f32.mrb[0].mxu0
        %1293 = vmatprep.mubr.f32.mxu0 0.0
        %v1294 = vand.u32 %v1207, 4294901760
        %v1295 = vsub.f32 %v1207, %v1294
        %v1296 = vand.u32 %v1295, 4294901760
        %v1297 = vsub.f32 %v1295, %v1296
        %v1298 = vand.u32 %v1297, 4294901760
        %1299 = vmatmul.mubr.f32.gmra.mrb[0].mxu0 %v1298
        %v1300 = vpop.f32.mrb[0].mxu0
        %v1301 = vadd.f32 %v1188, %v1300
        %v1302 = vpop.f32.mrb[0].mxu0
        %1303 = vmatprep.mubr.f32.mxu0 0.0
        %v1304 = vand.u32 %v1210, 4294901760
        %v1305 = vsub.f32 %v1210, %v1304
        %v1306 = vand.u32 %v1305, 4294901760
        %v1307 = vsub.f32 %v1305, %v1306
        %v1308 = vand.u32 %v1307, 4294901760
        %1309 = vmatmul.mubr.f32.gmra.mrb[0].mxu0 %v1308
        %v1310 = vpop.f32.mrb[0].mxu0
        %v1311 = vadd.f32 %v1194, %v1310
        %v1312 = vpop.f32.mrb[0].mxu0
        %1313 = vmatprep.mubr.f32.mxu0 0.0
        %v1314 = vand.u32 %v1213, 4294901760
        %v1315 = vsub.f32 %v1213, %v1314
        %v1316 = vand.u32 %v1315, 4294901760
        %v1317 = vsub.f32 %v1315, %v1316
        %v1318 = vand.u32 %v1317, 4294901760
        %1319 = vmatmul.mubr.f32.gmra.mrb[0].mxu0 %v1318
        %v1320 = vpop.f32.mrb[0].mxu0
        %v1321 = vadd.f32 %v1200, %v1320
        %v1322 = vpop.f32.mrb[0].mxu0
        %1323 = vdwg.mxu0
        %1324 = vmatprep.subr.mxu0 0.0
        %v1325 = vand.u32 %v567, 4294901760
        %v1326 = vsub.f32 %v567, %v1325
        %v1327 = vand.u32 %v1326, 4294901760
        %v1328 = vsub.f32 %v1326, %v1327
        %v1329 = vand.u32 %v1328, 4294901760
        %1330 = vmatpush1.msra.mxu0 %v1329
        %1331 = vmatprep.subr.mxu0 0.0
        %v1332 = vand.u32 %v568, 4294901760
        %v1333 = vsub.f32 %v568, %v1332
        %v1334 = vand.u32 %v1333, 4294901760
        %v1335 = vsub.f32 %v1333, %v1334
        %v1336 = vand.u32 %v1335, 4294901760
        %1337 = vmatpush1.msra.mxu0 %v1336
        %1338 = vmatprep.subr.mxu0 0.0
        %v1339 = vand.u32 %v569, 4294901760
        %v1340 = vsub.f32 %v569, %v1339
        %v1341 = vand.u32 %v1340, 4294901760
        %v1342 = vsub.f32 %v1340, %v1341
        %v1343 = vand.u32 %v1342, 4294901760
        %1344 = vmatpush1.msra.mxu0 %v1343
        %1345 = vmatprep.subr.mxu0 0.0
        %v1346 = vand.u32 %v570, 4294901760
        %v1347 = vsub.f32 %v570, %v1346
        %v1348 = vand.u32 %v1347, 4294901760
        %v1349 = vsub.f32 %v1347, %v1348
        %v1350 = vand.u32 %v1349, 4294901760
        %1351 = vmatpush1.msra.mxu0 %v1350
        %1352 = vmatprep.subr.mxu0 0.0
        %1353 = vmatpush1.msra.mxu0 0.0
        %1354 = vmatprep.subr.mxu0 0.0
        %1355 = vmatpush1.msra.mxu0 0.0
        %1356 = vmatprep.subr.mxu0 0.0
        %1357 = vmatpush1.msra.mxu0 0.0
        %1358 = vmatprep.subr.mxu0 0.0
        %1359 = vmatpush1.msra.mxu0 0.0
        %1360 = vmatprep.subr.mxu0 0.0
        %1361 = vmatpush1.msra.mxu0 0.0
        %1362 = vmatprep.subr.mxu0 0.0
        %1363 = vmatpush1.msra.mxu0 0.0
        %1364 = vmatprep.subr.mxu0 0.0
        %1365 = vmatpush1.msra.mxu0 0.0
        %1366 = vmatprep.subr.mxu0 0.0
        %1367 = vmatpush1.msra.mxu0 0.0
        %1368 = vmatprep.subr.mxu0 0.0
        %1369 = vmatpush1.msra.mxu0 0.0
        %1370 = vmatprep.subr.mxu0 0.0
        %1371 = vmatpush1.msra.mxu0 0.0
        %1372 = vmatprep.subr.mxu0 0.0
        %1373 = vmatpush1.msra.mxu0 0.0
        %1374 = vmatprep.subr.mxu0 0.0
        %1375 = vmatpush1.msra.mxu0 0.0
        %1376 = vmatprep.subr.mxu0 0.0
        %1377 = vmatpush1.msra.mxu0 0.0
        %1378 = vmatprep.subr.mxu0 0.0
        %1379 = vmatpush1.msra.mxu0 0.0
        %1380 = vmatprep.subr.mxu0 0.0
        %1381 = vmatpush1.msra.mxu0 0.0
        %1382 = vmatprep.subr.mxu0 0.0
        %1383 = vmatpush1.msra.mxu0 0.0
        %1384 = vmatprep.subr.mxu0 0.0
        %1385 = vmatpush1.msra.mxu0 0.0
        %1386 = vmatprep.subr.mxu0 0.0
        %1387 = vmatpush1.msra.mxu0 0.0
        %1388 = vmatprep.subr.mxu0 0.0
        %1389 = vmatpush1.msra.mxu0 0.0
        %1390 = vmatprep.subr.mxu0 0.0
        %1391 = vmatpush1.msra.mxu0 0.0
        %1392 = vmatprep.subr.mxu0 0.0
        %1393 = vmatpush1.msra.mxu0 0.0
        %1394 = vmatprep.subr.mxu0 0.0
        %1395 = vmatpush1.msra.mxu0 0.0
        %1396 = vmatprep.subr.mxu0 0.0
        %1397 = vmatpush1.msra.mxu0 0.0
        %1398 = vmatprep.subr.mxu0 0.0
        %1399 = vmatpush1.msra.mxu0 0.0
        %1400 = vmatprep.subr.mxu0 0.0
        %1401 = vmatpush1.msra.mxu0 0.0
        %1402 = vmatprep.subr.mxu0 0.0
        %1403 = vmatpush1.msra.mxu0 0.0
        %1404 = vmatprep.subr.mxu0 0.0
        %1405 = vmatpush1.msra.mxu0 0.0
        %1406 = vmatprep.subr.mxu0 0.0
        %1407 = vmatpush1.msra.mxu0 0.0
        %1408 = vmatprep.mubr.f32.mxu0 0.0
        %v1409 = vand.u32 %v1204, 4294901760
        %1410 = vmatmul.mubr.f32.gmra.mrb[0].mxu0 %v1409
        %v1411 = vpop.f32.mrb[0].mxu0
        %v1412 = vadd.f32 %v1291, %v1411
        %v1413 = vpop.f32.mrb[0].mxu0
        %1414 = vmatprep.mubr.f32.mxu0 0.0
        %v1415 = vand.u32 %v1207, 4294901760
        %1416 = vmatmul.mubr.f32.gmra.mrb[0].mxu0 %v1415
        %v1417 = vpop.f32.mrb[0].mxu0
        %v1418 = vadd.f32 %v1301, %v1417
        %v1419 = vpop.f32.mrb[0].mxu0
        %1420 = vmatprep.mubr.f32.mxu0 0.0
        %v1421 = vand.u32 %v1210, 4294901760
        %1422 = vmatmul.mubr.f32.gmra.mrb[0].mxu0 %v1421
        %v1423 = vpop.f32.mrb[0].mxu0
        %v1424 = vadd.f32 %v1311, %v1423
        %v1425 = vpop.f32.mrb[0].mxu0
        %1426 = vmatprep.mubr.f32.mxu0 0.0
        %v1427 = vand.u32 %v1213, 4294901760
        %1428 = vmatmul.mubr.f32.gmra.mrb[0].mxu0 %v1427
        %v1429 = vpop.f32.mrb[0].mxu0
        %v1430 = vadd.f32 %v1321, %v1429
        %v1431 = vpop.f32.mrb[0].mxu0
        %1432 = vdwg.mxu0
        %1433 = vmatprep.subr.mxu0 0.0
        %v1434 = vand.u32 %v567, 4294901760
        %v1435 = vsub.f32 %v567, %v1434
        %1436 = vmatpush1.msra.mxu0 %v1435
        %1437 = vmatprep.subr.mxu0 0.0
        %v1438 = vand.u32 %v568, 4294901760
        %v1439 = vsub.f32 %v568, %v1438
        %1440 = vmatpush1.msra.mxu0 %v1439
        %1441 = vmatprep.subr.mxu0 0.0
        %v1442 = vand.u32 %v569, 4294901760
        %v1443 = vsub.f32 %v569, %v1442
        %1444 = vmatpush1.msra.mxu0 %v1443
        %1445 = vmatprep.subr.mxu0 0.0
        %v1446 = vand.u32 %v570, 4294901760
        %v1447 = vsub.f32 %v570, %v1446
        %1448 = vmatpush1.msra.mxu0 %v1447
        %1449 = vmatprep.subr.mxu0 0.0
        %1450 = vmatpush1.msra.mxu0 0.0
        %1451 = vmatprep.subr.mxu0 0.0
        %1452 = vmatpush1.msra.mxu0 0.0
        %1453 = vmatprep.subr.mxu0 0.0
        %1454 = vmatpush1.msra.mxu0 0.0
        %1455 = vmatprep.subr.mxu0 0.0
        %1456 = vmatpush1.msra.mxu0 0.0
        %1457 = vmatprep.subr.mxu0 0.0
        %1458 = vmatpush1.msra.mxu0 0.0
        %1459 = vmatprep.subr.mxu0 0.0
        %1460 = vmatpush1.msra.mxu0 0.0
        %1461 = vmatprep.subr.mxu0 0.0
        %1462 = vmatpush1.msra.mxu0 0.0
        %1463 = vmatprep.subr.mxu0 0.0
        %1464 = vmatpush1.msra.mxu0 0.0
        %1465 = vmatprep.subr.mxu0 0.0
        %1466 = vmatpush1.msra.mxu0 0.0
        %1467 = vmatprep.subr.mxu0 0.0
        %1468 = vmatpush1.msra.mxu0 0.0
        %1469 = vmatprep.subr.mxu0 0.0
        %1470 = vmatpush1.msra.mxu0 0.0
        %1471 = vmatprep.subr.mxu0 0.0
        %1472 = vmatpush1.msra.mxu0 0.0
        %1473 = vmatprep.subr.mxu0 0.0
        %1474 = vmatpush1.msra.mxu0 0.0
        %1475 = vmatprep.subr.mxu0 0.0
        %1476 = vmatpush1.msra.mxu0 0.0
        %1477 = vmatprep.subr.mxu0 0.0
        %1478 = vmatpush1.msra.mxu0 0.0
        %1479 = vmatprep.subr.mxu0 0.0
        %1480 = vmatpush1.msra.mxu0 0.0
        %1481 = vmatprep.subr.mxu0 0.0
        %1482 = vmatpush1.msra.mxu0 0.0
        %1483 = vmatprep.subr.mxu0 0.0
        %1484 = vmatpush1.msra.mxu0 0.0
        %1485 = vmatprep.subr.mxu0 0.0
        %1486 = vmatpush1.msra.mxu0 0.0
        %1487 = vmatprep.subr.mxu0 0.0
        %1488 = vmatpush1.msra.mxu0 0.0
        %1489 = vmatprep.subr.mxu0 0.0
        %1490 = vmatpush1.msra.mxu0 0.0
        %1491 = vmatprep.subr.mxu0 0.0
        %1492 = vmatpush1.msra.mxu0 0.0
        %1493 = vmatprep.subr.mxu0 0.0
        %1494 = vmatpush1.msra.mxu0 0.0
        %1495 = vmatprep.subr.mxu0 0.0
        %1496 = vmatpush1.msra.mxu0 0.0
        %1497 = vmatprep.subr.mxu0 0.0
        %1498 = vmatpush1.msra.mxu0 0.0
        %1499 = vmatprep.subr.mxu0 0.0
        %1500 = vmatpush1.msra.mxu0 0.0
        %1501 = vmatprep.subr.mxu0 0.0
        %1502 = vmatpush1.msra.mxu0 0.0
        %1503 = vmatprep.subr.mxu0 0.0
        %1504 = vmatpush1.msra.mxu0 0.0
        %1505 = vmatprep.mubr.f32.mxu0 0.0
        %v1506 = vand.u32 %v1204, 4294901760
        %v1507 = vsub.f32 %v1204, %v1506
        %1508 = vmatmul.mubr.f32.gmra.mrb[0].mxu0 %v1507
        %v1509 = vpop.f32.mrb[0].mxu0
        %v1510 = vadd.f32 %v1412, %v1509
        %v1511 = vpop.f32.mrb[0].mxu0
        %1512 = vmatprep.mubr.f32.mxu0 0.0
        %v1513 = vand.u32 %v1207, 4294901760
        %v1514 = vsub.f32 %v1207, %v1513
        %1515 = vmatmul.mubr.f32.gmra.mrb[0].mxu0 %v1514
        %v1516 = vpop.f32.mrb[0].mxu0
        %v1517 = vadd.f32 %v1418, %v1516
        %v1518 = vpop.f32.mrb[0].mxu0
        %1519 = vmatprep.mubr.f32.mxu0 0.0
        %v1520 = vand.u32 %v1210, 4294901760
        %v1521 = vsub.f32 %v1210, %v1520
        %1522 = vmatmul.mubr.f32.gmra.mrb[0].mxu0 %v1521
        %v1523 = vpop.f32.mrb[0].mxu0
        %v1524 = vadd.f32 %v1424, %v1523
        %v1525 = vpop.f32.mrb[0].mxu0
        %1526 = vmatprep.mubr.f32.mxu0 0.0
        %v1527 = vand.u32 %v1213, 4294901760
        %v1528 = vsub.f32 %v1213, %v1527
        %1529 = vmatmul.mubr.f32.gmra.mrb[0].mxu0 %v1528
        %v1530 = vpop.f32.mrb[0].mxu0
        %v1531 = vadd.f32 %v1430, %v1530
        %v1532 = vpop.f32.mrb[0].mxu0
        %1533 = vdwg.mxu0
        %1534 = vmatprep.subr.mxu0 0.0
        %v1535 = vand.u32 %v567, 4294901760
        %1536 = vmatpush1.msra.mxu0 %v1535
        %1537 = vmatprep.subr.mxu0 0.0
        %v1538 = vand.u32 %v568, 4294901760
        %1539 = vmatpush1.msra.mxu0 %v1538
        %1540 = vmatprep.subr.mxu0 0.0
        %v1541 = vand.u32 %v569, 4294901760
        %1542 = vmatpush1.msra.mxu0 %v1541
        %1543 = vmatprep.subr.mxu0 0.0
        %v1544 = vand.u32 %v570, 4294901760
        %1545 = vmatpush1.msra.mxu0 %v1544
        %1546 = vmatprep.subr.mxu0 0.0
        %1547 = vmatpush1.msra.mxu0 0.0
        %1548 = vmatprep.subr.mxu0 0.0
        %1549 = vmatpush1.msra.mxu0 0.0
        %1550 = vmatprep.subr.mxu0 0.0
        %1551 = vmatpush1.msra.mxu0 0.0
        %1552 = vmatprep.subr.mxu0 0.0
        %1553 = vmatpush1.msra.mxu0 0.0
        %1554 = vmatprep.subr.mxu0 0.0
        %1555 = vmatpush1.msra.mxu0 0.0
        %1556 = vmatprep.subr.mxu0 0.0
        %1557 = vmatpush1.msra.mxu0 0.0
        %1558 = vmatprep.subr.mxu0 0.0
        %1559 = vmatpush1.msra.mxu0 0.0
        %1560 = vmatprep.subr.mxu0 0.0
        %1561 = vmatpush1.msra.mxu0 0.0
        %1562 = vmatprep.subr.mxu0 0.0
        %1563 = vmatpush1.msra.mxu0 0.0
        %1564 = vmatprep.subr.mxu0 0.0
        %1565 = vmatpush1.msra.mxu0 0.0
        %1566 = vmatprep.subr.mxu0 0.0
        %1567 = vmatpush1.msra.mxu0 0.0
        %1568 = vmatprep.subr.mxu0 0.0
        %1569 = vmatpush1.msra.mxu0 0.0
        %1570 = vmatprep.subr.mxu0 0.0
        %1571 = vmatpush1.msra.mxu0 0.0
        %1572 = vmatprep.subr.mxu0 0.0
        %1573 = vmatpush1.msra.mxu0 0.0
        %1574 = vmatprep.subr.mxu0 0.0
        %1575 = vmatpush1.msra.mxu0 0.0
        %1576 = vmatprep.subr.mxu0 0.0
        %1577 = vmatpush1.msra.mxu0 0.0
        %1578 = vmatprep.subr.mxu0 0.0
        %1579 = vmatpush1.msra.mxu0 0.0
        %1580 = vmatprep.subr.mxu0 0.0
        %1581 = vmatpush1.msra.mxu0 0.0
        %1582 = vmatprep.subr.mxu0 0.0
        %1583 = vmatpush1.msra.mxu0 0.0
        %1584 = vmatprep.subr.mxu0 0.0
        %1585 = vmatpush1.msra.mxu0 0.0
        %1586 = vmatprep.subr.mxu0 0.0
        %1587 = vmatpush1.msra.mxu0 0.0
        %1588 = vmatprep.subr.mxu0 0.0
        %1589 = vmatpush1.msra.mxu0 0.0
        %1590 = vmatprep.subr.mxu0 0.0
        %1591 = vmatpush1.msra.mxu0 0.0
        %1592 = vmatprep.subr.mxu0 0.0
        %1593 = vmatpush1.msra.mxu0 0.0
        %1594 = vmatprep.subr.mxu0 0.0
        %1595 = vmatpush1.msra.mxu0 0.0
        %1596 = vmatprep.subr.mxu0 0.0
        %1597 = vmatpush1.msra.mxu0 0.0
        %1598 = vmatprep.subr.mxu0 0.0
        %1599 = vmatpush1.msra.mxu0 0.0
        %1600 = vmatprep.subr.mxu0 0.0
        %1601 = vmatpush1.msra.mxu0 0.0
        %1602 = vmatprep.mubr.f32.mxu0 0.0
        %v1603 = vand.u32 %v1204, 4294901760
        %v1604 = vsub.f32 %v1204, %v1603
        %v1605 = vand.u32 %v1604, 4294901760
        %1606 = vmatmul.mubr.f32.gmra.mrb[0].mxu0 %v1605
        %v1607 = vpop.f32.mrb[0].mxu0
        %v1608 = vadd.f32 %v1510, %v1607
        %v1609 = vpop.f32.mrb[0].mxu0
        %1610 = vmatprep.mubr.f32.mxu0 0.0
        %v1611 = vand.u32 %v1207, 4294901760
        %v1612 = vsub.f32 %v1207, %v1611
        %v1613 = vand.u32 %v1612, 4294901760
        %1614 = vmatmul.mubr.f32.gmra.mrb[0].mxu0 %v1613
        %v1615 = vpop.f32.mrb[0].mxu0
        %v1616 = vadd.f32 %v1517, %v1615
        %v1617 = vpop.f32.mrb[0].mxu0
        %1618 = vmatprep.mubr.f32.mxu0 0.0
        %v1619 = vand.u32 %v1210, 4294901760
        %v1620 = vsub.f32 %v1210, %v1619
        %v1621 = vand.u32 %v1620, 4294901760
        %1622 = vmatmul.mubr.f32.gmra.mrb[0].mxu0 %v1621
        %v1623 = vpop.f32.mrb[0].mxu0
        %v1624 = vadd.f32 %v1524, %v1623
        %v1625 = vpop.f32.mrb[0].mxu0
        %1626 = vmatprep.mubr.f32.mxu0 0.0
        %v1627 = vand.u32 %v1213, 4294901760
        %v1628 = vsub.f32 %v1213, %v1627
        %v1629 = vand.u32 %v1628, 4294901760
        %1630 = vmatmul.mubr.f32.gmra.mrb[0].mxu0 %v1629
        %v1631 = vpop.f32.mrb[0].mxu0
        %v1632 = vadd.f32 %v1531, %v1631
        %v1633 = vpop.f32.mrb[0].mxu0
        %1634 = vdwg.mxu0
        %1635 = vmatprep.subr.mxu0 0.0
        %v1636 = vand.u32 %v567, 4294901760
        %v1637 = vsub.f32 %v567, %v1636
        %v1638 = vand.u32 %v1637, 4294901760
        %1639 = vmatpush1.msra.mxu0 %v1638
        %1640 = vmatprep.subr.mxu0 0.0
        %v1641 = vand.u32 %v568, 4294901760
        %v1642 = vsub.f32 %v568, %v1641
        %v1643 = vand.u32 %v1642, 4294901760
        %1644 = vmatpush1.msra.mxu0 %v1643
        %1645 = vmatprep.subr.mxu0 0.0
        %v1646 = vand.u32 %v569, 4294901760
        %v1647 = vsub.f32 %v569, %v1646
        %v1648 = vand.u32 %v1647, 4294901760
        %1649 = vmatpush1.msra.mxu0 %v1648
        %1650 = vmatprep.subr.mxu0 0.0
        %v1651 = vand.u32 %v570, 4294901760
        %v1652 = vsub.f32 %v570, %v1651
        %v1653 = vand.u32 %v1652, 4294901760
        %1654 = vmatpush1.msra.mxu0 %v1653
        %1655 = vmatprep.subr.mxu0 0.0
        %1656 = vmatpush1.msra.mxu0 0.0
        %1657 = vmatprep.subr.mxu0 0.0
        %1658 = vmatpush1.msra.mxu0 0.0
        %1659 = vmatprep.subr.mxu0 0.0
        %1660 = vmatpush1.msra.mxu0 0.0
        %1661 = vmatprep.subr.mxu0 0.0
        %1662 = vmatpush1.msra.mxu0 0.0
        %1663 = vmatprep.subr.mxu0 0.0
        %1664 = vmatpush1.msra.mxu0 0.0
        %1665 = vmatprep.subr.mxu0 0.0
        %1666 = vmatpush1.msra.mxu0 0.0
        %1667 = vmatprep.subr.mxu0 0.0
        %1668 = vmatpush1.msra.mxu0 0.0
        %1669 = vmatprep.subr.mxu0 0.0
        %1670 = vmatpush1.msra.mxu0 0.0
        %1671 = vmatprep.subr.mxu0 0.0
        %1672 = vmatpush1.msra.mxu0 0.0
        %1673 = vmatprep.subr.mxu0 0.0
        %1674 = vmatpush1.msra.mxu0 0.0
        %1675 = vmatprep.subr.mxu0 0.0
        %1676 = vmatpush1.msra.mxu0 0.0
        %1677 = vmatprep.subr.mxu0 0.0
        %1678 = vmatpush1.msra.mxu0 0.0
        %1679 = vmatprep.subr.mxu0 0.0
        %1680 = vmatpush1.msra.mxu0 0.0
        %1681 = vmatprep.subr.mxu0 0.0
        %1682 = vmatpush1.msra.mxu0 0.0
        %1683 = vmatprep.subr.mxu0 0.0
        %1684 = vmatpush1.msra.mxu0 0.0
        %1685 = vmatprep.subr.mxu0 0.0
        %1686 = vmatpush1.msra.mxu0 0.0
        %1687 = vmatprep.subr.mxu0 0.0
        %1688 = vmatpush1.msra.mxu0 0.0
        %1689 = vmatprep.subr.mxu0 0.0
        %1690 = vmatpush1.msra.mxu0 0.0
        %1691 = vmatprep.subr.mxu0 0.0
        %1692 = vmatpush1.msra.mxu0 0.0
        %1693 = vmatprep.subr.mxu0 0.0
        %1694 = vmatpush1.msra.mxu0 0.0
        %1695 = vmatprep.subr.mxu0 0.0
        %1696 = vmatpush1.msra.mxu0 0.0
        %1697 = vmatprep.subr.mxu0 0.0
        %1698 = vmatpush1.msra.mxu0 0.0
        %1699 = vmatprep.subr.mxu0 0.0
        %1700 = vmatpush1.msra.mxu0 0.0
        %1701 = vmatprep.subr.mxu0 0.0
        %1702 = vmatpush1.msra.mxu0 0.0
        %1703 = vmatprep.subr.mxu0 0.0
        %1704 = vmatpush1.msra.mxu0 0.0
        %1705 = vmatprep.subr.mxu0 0.0
        %1706 = vmatpush1.msra.mxu0 0.0
        %1707 = vmatprep.subr.mxu0 0.0
        %1708 = vmatpush1.msra.mxu0 0.0
        %1709 = vmatprep.subr.mxu0 0.0
        %1710 = vmatpush1.msra.mxu0 0.0
        %1711 = vmatprep.mubr.f32.mxu0 0.0
        %v1712 = vand.u32 %v1204, 4294901760
        %1713 = vmatmul.mubr.f32.gmra.mrb[0].mxu0 %v1712
        %v1714 = vpop.f32.mrb[0].mxu0
        %v1715 = vadd.f32 %v1608, %v1714
        %v1716 = vpop.f32.mrb[0].mxu0
        %1717 = vmatprep.mubr.f32.mxu0 0.0
        %v1718 = vand.u32 %v1207, 4294901760
        %1719 = vmatmul.mubr.f32.gmra.mrb[0].mxu0 %v1718
        %v1720 = vpop.f32.mrb[0].mxu0
        %v1721 = vadd.f32 %v1616, %v1720
        %v1722 = vpop.f32.mrb[0].mxu0
        %1723 = vmatprep.mubr.f32.mxu0 0.0
        %v1724 = vand.u32 %v1210, 4294901760
        %1725 = vmatmul.mubr.f32.gmra.mrb[0].mxu0 %v1724
        %v1726 = vpop.f32.mrb[0].mxu0
        %v1727 = vadd.f32 %v1624, %v1726
        %v1728 = vpop.f32.mrb[0].mxu0
        %1729 = vmatprep.mubr.f32.mxu0 0.0
        %v1730 = vand.u32 %v1213, 4294901760
        %1731 = vmatmul.mubr.f32.gmra.mrb[0].mxu0 %v1730
        %v1732 = vpop.f32.mrb[0].mxu0
        %v1733 = vadd.f32 %v1632, %v1732
        %v1734 = vpop.f32.mrb[0].mxu0
        %1735 = vdwg.mxu0
        %1736 = vmatprep.subr.mxu0 0.0
        %v1737 = vand.u32 %v567, 4294901760
        %1738 = vmatpush1.msra.mxu0 %v1737
        %1739 = vmatprep.subr.mxu0 0.0
        %v1740 = vand.u32 %v568, 4294901760
        %1741 = vmatpush1.msra.mxu0 %v1740
        %1742 = vmatprep.subr.mxu0 0.0
        %v1743 = vand.u32 %v569, 4294901760
        %1744 = vmatpush1.msra.mxu0 %v1743
        %1745 = vmatprep.subr.mxu0 0.0
        %v1746 = vand.u32 %v570, 4294901760
        %1747 = vmatpush1.msra.mxu0 %v1746
        %1748 = vmatprep.subr.mxu0 0.0
        %1749 = vmatpush1.msra.mxu0 0.0
        %1750 = vmatprep.subr.mxu0 0.0
        %1751 = vmatpush1.msra.mxu0 0.0
        %1752 = vmatprep.subr.mxu0 0.0
        %1753 = vmatpush1.msra.mxu0 0.0
        %1754 = vmatprep.subr.mxu0 0.0
        %1755 = vmatpush1.msra.mxu0 0.0
        %1756 = vmatprep.subr.mxu0 0.0
        %1757 = vmatpush1.msra.mxu0 0.0
        %1758 = vmatprep.subr.mxu0 0.0
        %1759 = vmatpush1.msra.mxu0 0.0
        %1760 = vmatprep.subr.mxu0 0.0
        %1761 = vmatpush1.msra.mxu0 0.0
        %1762 = vmatprep.subr.mxu0 0.0
        %1763 = vmatpush1.msra.mxu0 0.0
        %1764 = vmatprep.subr.mxu0 0.0
        %1765 = vmatpush1.msra.mxu0 0.0
        %1766 = vmatprep.subr.mxu0 0.0
        %1767 = vmatpush1.msra.mxu0 0.0
        %1768 = vmatprep.subr.mxu0 0.0
        %1769 = vmatpush1.msra.mxu0 0.0
        %1770 = vmatprep.subr.mxu0 0.0
        %1771 = vmatpush1.msra.mxu0 0.0
        %1772 = vmatprep.subr.mxu0 0.0
        %1773 = vmatpush1.msra.mxu0 0.0
        %1774 = vmatprep.subr.mxu0 0.0
        %1775 = vmatpush1.msra.mxu0 0.0
        %1776 = vmatprep.subr.mxu0 0.0
        %1777 = vmatpush1.msra.mxu0 0.0
        %1778 = vmatprep.subr.mxu0 0.0
        %1779 = vmatpush1.msra.mxu0 0.0
        %1780 = vmatprep.subr.mxu0 0.0
        %1781 = vmatpush1.msra.mxu0 0.0
        %1782 = vmatprep.subr.mxu0 0.0
        %1783 = vmatpush1.msra.mxu0 0.0
        %1784 = vmatprep.subr.mxu0 0.0
        %1785 = vmatpush1.msra.mxu0 0.0
        %1786 = vmatprep.subr.mxu0 0.0
        %1787 = vmatpush1.msra.mxu0 0.0
        %1788 = vmatprep.subr.mxu0 0.0
        %1789 = vmatpush1.msra.mxu0 0.0
        %1790 = vmatprep.subr.mxu0 0.0
        %1791 = vmatpush1.msra.mxu0 0.0
        %1792 = vmatprep.subr.mxu0 0.0
        %1793 = vmatpush1.msra.mxu0 0.0
        %1794 = vmatprep.subr.mxu0 0.0
        %1795 = vmatpush1.msra.mxu0 0.0
        %1796 = vmatprep.subr.mxu0 0.0
        %1797 = vmatpush1.msra.mxu0 0.0
        %1798 = vmatprep.subr.mxu0 0.0
        %1799 = vmatpush1.msra.mxu0 0.0
        %1800 = vmatprep.subr.mxu0 0.0
        %1801 = vmatpush1.msra.mxu0 0.0
        %1802 = vmatprep.subr.mxu0 0.0
        %1803 = vmatpush1.msra.mxu0 0.0
        %1804 = vmatprep.mubr.f32.mxu0 0.0
        %v1805 = vand.u32 %v1204, 4294901760
        %1806 = vmatmul.mubr.f32.gmra.mrb[0].mxu0 %v1805
        %v1807 = vpop.f32.mrb[0].mxu0
        %v1808 = vadd.f32 %v1715, %v1807
        %v1809 = vpop.f32.mrb[0].mxu0
        %1810 = vmatprep.mubr.f32.mxu0 0.0
        %v1811 = vand.u32 %v1207, 4294901760
        %1812 = vmatmul.mubr.f32.gmra.mrb[0].mxu0 %v1811
        %v1813 = vpop.f32.mrb[0].mxu0
        %v1814 = vadd.f32 %v1721, %v1813
        %v1815 = vpop.f32.mrb[0].mxu0
        %1816 = vmatprep.mubr.f32.mxu0 0.0
        %v1817 = vand.u32 %v1210, 4294901760
        %1818 = vmatmul.mubr.f32.gmra.mrb[0].mxu0 %v1817
        %v1819 = vpop.f32.mrb[0].mxu0
        %v1820 = vadd.f32 %v1727, %v1819
        %v1821 = vpop.f32.mrb[0].mxu0
        %1822 = vmatprep.mubr.f32.mxu0 0.0
        %v1823 = vand.u32 %v1213, 4294901760
        %1824 = vmatmul.mubr.f32.gmra.mrb[0].mxu0 %v1823
        %v1825 = vpop.f32.mrb[0].mxu0
        %v1826 = vadd.f32 %v1733, %v1825
        %v1827 = vpop.f32.mrb[0].mxu0
        %1828 = vdwg.mxu0
        %s1829 = scalar_lea.vmem %s1, 64
        %v1830 = vld [vmem:[%s1829] sm:$0xff]
        %v1831 = vld [vmem:[%s1829 + $0x8] sm:$0xff]
        %v1832 = vld [vmem:[%s1829 + $0x10] sm:$0xff]
        %v1833 = vld [vmem:[%s1829 + $0x18] sm:$0xff]
        %v1835 = vsel %vm576, %v563, 0
        %v1838 = vsel %vm576, %v564, 0
        %v1841 = vsel %vm576, %v565, 0
        %v1844 = vsel %vm576, %v566, 0
        %1846 = vmatprep.subr.mxu0 0.0
        %v1847 = vand.u32 %v1830, 4294901760
        %1848 = vmatpush1.msra.mxu0 %v1847
        %1849 = vmatprep.subr.mxu0 0.0
        %v1850 = vand.u32 %v1831, 4294901760
        %1851 = vmatpush1.msra.mxu0 %v1850
        %1852 = vmatprep.subr.mxu0 0.0
        %v1853 = vand.u32 %v1832, 4294901760
        %1854 = vmatpush1.msra.mxu0 %v1853
        %1855 = vmatprep.subr.mxu0 0.0
        %v1856 = vand.u32 %v1833, 4294901760
        %1857 = vmatpush1.msra.mxu0 %v1856
        %1858 = vmatprep.subr.mxu0 0.0
        %1859 = vmatpush1.msra.mxu0 0.0
        %1860 = vmatprep.subr.mxu0 0.0
        %1861 = vmatpush1.msra.mxu0 0.0
        %1862 = vmatprep.subr.mxu0 0.0
        %1863 = vmatpush1.msra.mxu0 0.0
        %1864 = vmatprep.subr.mxu0 0.0
        %1865 = vmatpush1.msra.mxu0 0.0
        %1866 = vmatprep.subr.mxu0 0.0
        %1867 = vmatpush1.msra.mxu0 0.0
        %1868 = vmatprep.subr.mxu0 0.0
        %1869 = vmatpush1.msra.mxu0 0.0
        %1870 = vmatprep.subr.mxu0 0.0
        %1871 = vmatpush1.msra.mxu0 0.0
        %1872 = vmatprep.subr.mxu0 0.0
        %1873 = vmatpush1.msra.mxu0 0.0
        %1874 = vmatprep.subr.mxu0 0.0
        %1875 = vmatpush1.msra.mxu0 0.0
        %1876 = vmatprep.subr.mxu0 0.0
        %1877 = vmatpush1.msra.mxu0 0.0
        %1878 = vmatprep.subr.mxu0 0.0
        %1879 = vmatpush1.msra.mxu0 0.0
        %1880 = vmatprep.subr.mxu0 0.0
        %1881 = vmatpush1.msra.mxu0 0.0
        %1882 = vmatprep.subr.mxu0 0.0
        %1883 = vmatpush1.msra.mxu0 0.0
        %1884 = vmatprep.subr.mxu0 0.0
        %1885 = vmatpush1.msra.mxu0 0.0
        %1886 = vmatprep.subr.mxu0 0.0
        %1887 = vmatpush1.msra.mxu0 0.0
        %1888 = vmatprep.subr.mxu0 0.0
        %1889 = vmatpush1.msra.mxu0 0.0
        %1890 = vmatprep.subr.mxu0 0.0
        %1891 = vmatpush1.msra.mxu0 0.0
        %1892 = vmatprep.subr.mxu0 0.0
        %1893 = vmatpush1.msra.mxu0 0.0
        %1894 = vmatprep.subr.mxu0 0.0
        %1895 = vmatpush1.msra.mxu0 0.0
        %1896 = vmatprep.subr.mxu0 0.0
        %1897 = vmatpush1.msra.mxu0 0.0
        %1898 = vmatprep.subr.mxu0 0.0
        %1899 = vmatpush1.msra.mxu0 0.0
        %1900 = vmatprep.subr.mxu0 0.0
        %1901 = vmatpush1.msra.mxu0 0.0
        %1902 = vmatprep.subr.mxu0 0.0
        %1903 = vmatpush1.msra.mxu0 0.0
        %1904 = vmatprep.subr.mxu0 0.0
        %1905 = vmatpush1.msra.mxu0 0.0
        %1906 = vmatprep.subr.mxu0 0.0
        %1907 = vmatpush1.msra.mxu0 0.0
        %1908 = vmatprep.subr.mxu0 0.0
        %1909 = vmatpush1.msra.mxu0 0.0
        %1910 = vmatprep.subr.mxu0 0.0
        %1911 = vmatpush1.msra.mxu0 0.0
        %1912 = vmatprep.subr.mxu0 0.0
        %1913 = vmatpush1.msra.mxu0 0.0
        %1914 = vmatprep.mubr.f32.mxu0 0.0
        %v1915 = vand.u32 %v1835, 4294901760
        %v1916 = vsub.f32 %v1835, %v1915
        %v1917 = vand.u32 %v1916, 4294901760
        %v1918 = vsub.f32 %v1916, %v1917
        %v1919 = vand.u32 %v1918, 4294901760
        %1920 = vmatmul.mubr.f32.gmra.mrb[0].mxu0 %v1919
        %v1921 = vpop.f32.mrb[0].mxu0
        %v1922 = vadd.f32 0.0, %v1921
        %v1923 = vpop.f32.mrb[0].mxu0
        %1924 = vmatprep.mubr.f32.mxu0 0.0
        %v1925 = vand.u32 %v1838, 4294901760
        %v1926 = vsub.f32 %v1838, %v1925
        %v1927 = vand.u32 %v1926, 4294901760
        %v1928 = vsub.f32 %v1926, %v1927
        %v1929 = vand.u32 %v1928, 4294901760
        %1930 = vmatmul.mubr.f32.gmra.mrb[0].mxu0 %v1929
        %v1931 = vpop.f32.mrb[0].mxu0
        %v1932 = vadd.f32 0.0, %v1931
        %v1933 = vpop.f32.mrb[0].mxu0
        %1934 = vmatprep.mubr.f32.mxu0 0.0
        %v1935 = vand.u32 %v1841, 4294901760
        %v1936 = vsub.f32 %v1841, %v1935
        %v1937 = vand.u32 %v1936, 4294901760
        %v1938 = vsub.f32 %v1936, %v1937
        %v1939 = vand.u32 %v1938, 4294901760
        %1940 = vmatmul.mubr.f32.gmra.mrb[0].mxu0 %v1939
        %v1941 = vpop.f32.mrb[0].mxu0
        %v1942 = vadd.f32 0.0, %v1941
        %v1943 = vpop.f32.mrb[0].mxu0
        %1944 = vmatprep.mubr.f32.mxu0 0.0
        %v1945 = vand.u32 %v1844, 4294901760
        %v1946 = vsub.f32 %v1844, %v1945
        %v1947 = vand.u32 %v1946, 4294901760
        %v1948 = vsub.f32 %v1946, %v1947
        %v1949 = vand.u32 %v1948, 4294901760
        %1950 = vmatmul.mubr.f32.gmra.mrb[0].mxu0 %v1949
        %v1951 = vpop.f32.mrb[0].mxu0
        %v1952 = vadd.f32 0.0, %v1951
        %v1953 = vpop.f32.mrb[0].mxu0
        %1954 = vdwg.mxu0
        %1955 = vmatprep.subr.mxu0 0.0
        %v1956 = vand.u32 %v1830, 4294901760
        %v1957 = vsub.f32 %v1830, %v1956
        %v1958 = vand.u32 %v1957, 4294901760
        %v1959 = vsub.f32 %v1957, %v1958
        %v1960 = vand.u32 %v1959, 4294901760
        %1961 = vmatpush1.msra.mxu0 %v1960
        %1962 = vmatprep.subr.mxu0 0.0
        %v1963 = vand.u32 %v1831, 4294901760
        %v1964 = vsub.f32 %v1831, %v1963
        %v1965 = vand.u32 %v1964, 4294901760
        %v1966 = vsub.f32 %v1964, %v1965
        %v1967 = vand.u32 %v1966, 4294901760
        %1968 = vmatpush1.msra.mxu0 %v1967
        %1969 = vmatprep.subr.mxu0 0.0
        %v1970 = vand.u32 %v1832, 4294901760
        %v1971 = vsub.f32 %v1832, %v1970
        %v1972 = vand.u32 %v1971, 4294901760
        %v1973 = vsub.f32 %v1971, %v1972
        %v1974 = vand.u32 %v1973, 4294901760
        %1975 = vmatpush1.msra.mxu0 %v1974
        %1976 = vmatprep.subr.mxu0 0.0
        %v1977 = vand.u32 %v1833, 4294901760
        %v1978 = vsub.f32 %v1833, %v1977
        %v1979 = vand.u32 %v1978, 4294901760
        %v1980 = vsub.f32 %v1978, %v1979
        %v1981 = vand.u32 %v1980, 4294901760
        %1982 = vmatpush1.msra.mxu0 %v1981
        %1983 = vmatprep.subr.mxu0 0.0
        %1984 = vmatpush1.msra.mxu0 0.0
        %1985 = vmatprep.subr.mxu0 0.0
        %1986 = vmatpush1.msra.mxu0 0.0
        %1987 = vmatprep.subr.mxu0 0.0
        %1988 = vmatpush1.msra.mxu0 0.0
        %1989 = vmatprep.subr.mxu0 0.0
        %1990 = vmatpush1.msra.mxu0 0.0
        %1991 = vmatprep.subr.mxu0 0.0
        %1992 = vmatpush1.msra.mxu0 0.0
        %1993 = vmatprep.subr.mxu0 0.0
        %1994 = vmatpush1.msra.mxu0 0.0
        %1995 = vmatprep.subr.mxu0 0.0
        %1996 = vmatpush1.msra.mxu0 0.0
        %1997 = vmatprep.subr.mxu0 0.0
        %1998 = vmatpush1.msra.mxu0 0.0
        %1999 = vmatprep.subr.mxu0 0.0
        %2000 = vmatpush1.msra.mxu0 0.0
        %2001 = vmatprep.subr.mxu0 0.0
        %2002 = vmatpush1.msra.mxu0 0.0
        %2003 = vmatprep.subr.mxu0 0.0
        %2004 = vmatpush1.msra.mxu0 0.0
        %2005 = vmatprep.subr.mxu0 0.0
        %2006 = vmatpush1.msra.mxu0 0.0
        %2007 = vmatprep.subr.mxu0 0.0
        %2008 = vmatpush1.msra.mxu0 0.0
        %2009 = vmatprep.subr.mxu0 0.0
        %2010 = vmatpush1.msra.mxu0 0.0
        %2011 = vmatprep.subr.mxu0 0.0
        %2012 = vmatpush1.msra.mxu0 0.0
        %2013 = vmatprep.subr.mxu0 0.0
        %2014 = vmatpush1.msra.mxu0 0.0
        %2015 = vmatprep.subr.mxu0 0.0
        %2016 = vmatpush1.msra.mxu0 0.0
        %2017 = vmatprep.subr.mxu0 0.0
        %2018 = vmatpush1.msra.mxu0 0.0
        %2019 = vmatprep.subr.mxu0 0.0
        %2020 = vmatpush1.msra.mxu0 0.0
        %2021 = vmatprep.subr.mxu0 0.0
        %2022 = vmatpush1.msra.mxu0 0.0
        %2023 = vmatprep.subr.mxu0 0.0
        %2024 = vmatpush1.msra.mxu0 0.0
        %2025 = vmatprep.subr.mxu0 0.0
        %2026 = vmatpush1.msra.mxu0 0.0
        %2027 = vmatprep.subr.mxu0 0.0
        %2028 = vmatpush1.msra.mxu0 0.0
        %2029 = vmatprep.subr.mxu0 0.0
        %2030 = vmatpush1.msra.mxu0 0.0
        %2031 = vmatprep.subr.mxu0 0.0
        %2032 = vmatpush1.msra.mxu0 0.0
        %2033 = vmatprep.subr.mxu0 0.0
        %2034 = vmatpush1.msra.mxu0 0.0
        %2035 = vmatprep.subr.mxu0 0.0
        %2036 = vmatpush1.msra.mxu0 0.0
        %2037 = vmatprep.subr.mxu0 0.0
        %2038 = vmatpush1.msra.mxu0 0.0
        %2039 = vmatprep.mubr.f32.mxu0 0.0
        %v2040 = vand.u32 %v1835, 4294901760
        %2041 = vmatmul.mubr.f32.gmra.mrb[0].mxu0 %v2040
        %v2042 = vpop.f32.mrb[0].mxu0
        %v2043 = vadd.f32 %v1922, %v2042
        %v2044 = vpop.f32.mrb[0].mxu0
        %2045 = vmatprep.mubr.f32.mxu0 0.0
        %v2046 = vand.u32 %v1838, 4294901760
        %2047 = vmatmul.mubr.f32.gmra.mrb[0].mxu0 %v2046
        %v2048 = vpop.f32.mrb[0].mxu0
        %v2049 = vadd.f32 %v1932, %v2048
        %v2050 = vpop.f32.mrb[0].mxu0
        %2051 = vmatprep.mubr.f32.mxu0 0.0
        %v2052 = vand.u32 %v1841, 4294901760
        %2053 = vmatmul.mubr.f32.gmra.mrb[0].mxu0 %v2052
        %v2054 = vpop.f32.mrb[0].mxu0
        %v2055 = vadd.f32 %v1942, %v2054
        %v2056 = vpop.f32.mrb[0].mxu0
        %2057 = vmatprep.mubr.f32.mxu0 0.0
        %v2058 = vand.u32 %v1844, 4294901760
        %2059 = vmatmul.mubr.f32.gmra.mrb[0].mxu0 %v2058
        %v2060 = vpop.f32.mrb[0].mxu0
        %v2061 = vadd.f32 %v1952, %v2060
        %v2062 = vpop.f32.mrb[0].mxu0
        %2063 = vdwg.mxu0
        %2064 = vmatprep.subr.mxu0 0.0
        %v2065 = vand.u32 %v1830, 4294901760
        %v2066 = vsub.f32 %v1830, %v2065
        %2067 = vmatpush1.msra.mxu0 %v2066
        %2068 = vmatprep.subr.mxu0 0.0
        %v2069 = vand.u32 %v1831, 4294901760
        %v2070 = vsub.f32 %v1831, %v2069
        %2071 = vmatpush1.msra.mxu0 %v2070
        %2072 = vmatprep.subr.mxu0 0.0
        %v2073 = vand.u32 %v1832, 4294901760
        %v2074 = vsub.f32 %v1832, %v2073
        %2075 = vmatpush1.msra.mxu0 %v2074
        %2076 = vmatprep.subr.mxu0 0.0
        %v2077 = vand.u32 %v1833, 4294901760
        %v2078 = vsub.f32 %v1833, %v2077
        %2079 = vmatpush1.msra.mxu0 %v2078
        %2080 = vmatprep.subr.mxu0 0.0
        %2081 = vmatpush1.msra.mxu0 0.0
        %2082 = vmatprep.subr.mxu0 0.0
        %2083 = vmatpush1.msra.mxu0 0.0
        %2084 = vmatprep.subr.mxu0 0.0
        %2085 = vmatpush1.msra.mxu0 0.0
        %2086 = vmatprep.subr.mxu0 0.0
        %2087 = vmatpush1.msra.mxu0 0.0
        %2088 = vmatprep.subr.mxu0 0.0
        %2089 = vmatpush1.msra.mxu0 0.0
        %2090 = vmatprep.subr.mxu0 0.0
        %2091 = vmatpush1.msra.mxu0 0.0
        %2092 = vmatprep.subr.mxu0 0.0
        %2093 = vmatpush1.msra.mxu0 0.0
        %2094 = vmatprep.subr.mxu0 0.0
        %2095 = vmatpush1.msra.mxu0 0.0
        %2096 = vmatprep.subr.mxu0 0.0
        %2097 = vmatpush1.msra.mxu0 0.0
        %2098 = vmatprep.subr.mxu0 0.0
        %2099 = vmatpush1.msra.mxu0 0.0
        %2100 = vmatprep.subr.mxu0 0.0
        %2101 = vmatpush1.msra.mxu0 0.0
        %2102 = vmatprep.subr.mxu0 0.0
        %2103 = vmatpush1.msra.mxu0 0.0
        %2104 = vmatprep.subr.mxu0 0.0
        %2105 = vmatpush1.msra.mxu0 0.0
        %2106 = vmatprep.subr.mxu0 0.0
        %2107 = vmatpush1.msra.mxu0 0.0
        %2108 = vmatprep.subr.mxu0 0.0
        %2109 = vmatpush1.msra.mxu0 0.0
        %2110 = vmatprep.subr.mxu0 0.0
        %2111 = vmatpush1.msra.mxu0 0.0
        %2112 = vmatprep.subr.mxu0 0.0
        %2113 = vmatpush1.msra.mxu0 0.0
        %2114 = vmatprep.subr.mxu0 0.0
        %2115 = vmatpush1.msra.mxu0 0.0
        %2116 = vmatprep.subr.mxu0 0.0
        %2117 = vmatpush1.msra.mxu0 0.0
        %2118 = vmatprep.subr.mxu0 0.0
        %2119 = vmatpush1.msra.mxu0 0.0
        %2120 = vmatprep.subr.mxu0 0.0
        %2121 = vmatpush1.msra.mxu0 0.0
        %2122 = vmatprep.subr.mxu0 0.0
        %2123 = vmatpush1.msra.mxu0 0.0
        %2124 = vmatprep.subr.mxu0 0.0
        %2125 = vmatpush1.msra.mxu0 0.0
        %2126 = vmatprep.subr.mxu0 0.0
        %2127 = vmatpush1.msra.mxu0 0.0
        %2128 = vmatprep.subr.mxu0 0.0
        %2129 = vmatpush1.msra.mxu0 0.0
        %2130 = vmatprep.subr.mxu0 0.0
        %2131 = vmatpush1.msra.mxu0 0.0
        %2132 = vmatprep.subr.mxu0 0.0
        %2133 = vmatpush1.msra.mxu0 0.0
        %2134 = vmatprep.subr.mxu0 0.0
        %2135 = vmatpush1.msra.mxu0 0.0
        %2136 = vmatprep.mubr.f32.mxu0 0.0
        %v2137 = vand.u32 %v1835, 4294901760
        %v2138 = vsub.f32 %v1835, %v2137
        %2139 = vmatmul.mubr.f32.gmra.mrb[0].mxu0 %v2138
        %v2140 = vpop.f32.mrb[0].mxu0
        %v2141 = vadd.f32 %v2043, %v2140
        %v2142 = vpop.f32.mrb[0].mxu0
        %2143 = vmatprep.mubr.f32.mxu0 0.0
        %v2144 = vand.u32 %v1838, 4294901760
        %v2145 = vsub.f32 %v1838, %v2144
        %2146 = vmatmul.mubr.f32.gmra.mrb[0].mxu0 %v2145
        %v2147 = vpop.f32.mrb[0].mxu0
        %v2148 = vadd.f32 %v2049, %v2147
        %v2149 = vpop.f32.mrb[0].mxu0
        %2150 = vmatprep.mubr.f32.mxu0 0.0
        %v2151 = vand.u32 %v1841, 4294901760
        %v2152 = vsub.f32 %v1841, %v2151
        %2153 = vmatmul.mubr.f32.gmra.mrb[0].mxu0 %v2152
        %v2154 = vpop.f32.mrb[0].mxu0
        %v2155 = vadd.f32 %v2055, %v2154
        %v2156 = vpop.f32.mrb[0].mxu0
        %2157 = vmatprep.mubr.f32.mxu0 0.0
        %v2158 = vand.u32 %v1844, 4294901760
        %v2159 = vsub.f32 %v1844, %v2158
        %2160 = vmatmul.mubr.f32.gmra.mrb[0].mxu0 %v2159
        %v2161 = vpop.f32.mrb[0].mxu0
        %v2162 = vadd.f32 %v2061, %v2161
        %v2163 = vpop.f32.mrb[0].mxu0
        %2164 = vdwg.mxu0
        %2165 = vmatprep.subr.mxu0 0.0
        %v2166 = vand.u32 %v1830, 4294901760
        %2167 = vmatpush1.msra.mxu0 %v2166
        %2168 = vmatprep.subr.mxu0 0.0
        %v2169 = vand.u32 %v1831, 4294901760
        %2170 = vmatpush1.msra.mxu0 %v2169
        %2171 = vmatprep.subr.mxu0 0.0
        %v2172 = vand.u32 %v1832, 4294901760
        %2173 = vmatpush1.msra.mxu0 %v2172
        %2174 = vmatprep.subr.mxu0 0.0
        %v2175 = vand.u32 %v1833, 4294901760
        %2176 = vmatpush1.msra.mxu0 %v2175
        %2177 = vmatprep.subr.mxu0 0.0
        %2178 = vmatpush1.msra.mxu0 0.0
        %2179 = vmatprep.subr.mxu0 0.0
        %2180 = vmatpush1.msra.mxu0 0.0
        %2181 = vmatprep.subr.mxu0 0.0
        %2182 = vmatpush1.msra.mxu0 0.0
        %2183 = vmatprep.subr.mxu0 0.0
        %2184 = vmatpush1.msra.mxu0 0.0
        %2185 = vmatprep.subr.mxu0 0.0
        %2186 = vmatpush1.msra.mxu0 0.0
        %2187 = vmatprep.subr.mxu0 0.0
        %2188 = vmatpush1.msra.mxu0 0.0
        %2189 = vmatprep.subr.mxu0 0.0
        %2190 = vmatpush1.msra.mxu0 0.0
        %2191 = vmatprep.subr.mxu0 0.0
        %2192 = vmatpush1.msra.mxu0 0.0
        %2193 = vmatprep.subr.mxu0 0.0
        %2194 = vmatpush1.msra.mxu0 0.0
        %2195 = vmatprep.subr.mxu0 0.0
        %2196 = vmatpush1.msra.mxu0 0.0
        %2197 = vmatprep.subr.mxu0 0.0
        %2198 = vmatpush1.msra.mxu0 0.0
        %2199 = vmatprep.subr.mxu0 0.0
        %2200 = vmatpush1.msra.mxu0 0.0
        %2201 = vmatprep.subr.mxu0 0.0
        %2202 = vmatpush1.msra.mxu0 0.0
        %2203 = vmatprep.subr.mxu0 0.0
        %2204 = vmatpush1.msra.mxu0 0.0
        %2205 = vmatprep.subr.mxu0 0.0
        %2206 = vmatpush1.msra.mxu0 0.0
        %2207 = vmatprep.subr.mxu0 0.0
        %2208 = vmatpush1.msra.mxu0 0.0
        %2209 = vmatprep.subr.mxu0 0.0
        %2210 = vmatpush1.msra.mxu0 0.0
        %2211 = vmatprep.subr.mxu0 0.0
        %2212 = vmatpush1.msra.mxu0 0.0
        %2213 = vmatprep.subr.mxu0 0.0
        %2214 = vmatpush1.msra.mxu0 0.0
        %2215 = vmatprep.subr.mxu0 0.0
        %2216 = vmatpush1.msra.mxu0 0.0
        %2217 = vmatprep.subr.mxu0 0.0
        %2218 = vmatpush1.msra.mxu0 0.0
        %2219 = vmatprep.subr.mxu0 0.0
        %2220 = vmatpush1.msra.mxu0 0.0
        %2221 = vmatprep.subr.mxu0 0.0
        %2222 = vmatpush1.msra.mxu0 0.0
        %2223 = vmatprep.subr.mxu0 0.0
        %2224 = vmatpush1.msra.mxu0 0.0
        %2225 = vmatprep.subr.mxu0 0.0
        %2226 = vmatpush1.msra.mxu0 0.0
        %2227 = vmatprep.subr.mxu0 0.0
        %2228 = vmatpush1.msra.mxu0 0.0
        %2229 = vmatprep.subr.mxu0 0.0
        %2230 = vmatpush1.msra.mxu0 0.0
        %2231 = vmatprep.subr.mxu0 0.0
        %2232 = vmatpush1.msra.mxu0 0.0
        %2233 = vmatprep.mubr.f32.mxu0 0.0
        %v2234 = vand.u32 %v1835, 4294901760
        %v2235 = vsub.f32 %v1835, %v2234
        %v2236 = vand.u32 %v2235, 4294901760
        %2237 = vmatmul.mubr.f32.gmra.mrb[0].mxu0 %v2236
        %v2238 = vpop.f32.mrb[0].mxu0
        %v2239 = vadd.f32 %v2141, %v2238
        %v2240 = vpop.f32.mrb[0].mxu0
        %2241 = vmatprep.mubr.f32.mxu0 0.0
        %v2242 = vand.u32 %v1838, 4294901760
        %v2243 = vsub.f32 %v1838, %v2242
        %v2244 = vand.u32 %v2243, 4294901760
        %2245 = vmatmul.mubr.f32.gmra.mrb[0].mxu0 %v2244
        %v2246 = vpop.f32.mrb[0].mxu0
        %v2247 = vadd.f32 %v2148, %v2246
        %v2248 = vpop.f32.mrb[0].mxu0
        %2249 = vmatprep.mubr.f32.mxu0 0.0
        %v2250 = vand.u32 %v1841, 4294901760
        %v2251 = vsub.f32 %v1841, %v2250
        %v2252 = vand.u32 %v2251, 4294901760
        %2253 = vmatmul.mubr.f32.gmra.mrb[0].mxu0 %v2252
        %v2254 = vpop.f32.mrb[0].mxu0
        %v2255 = vadd.f32 %v2155, %v2254
        %v2256 = vpop.f32.mrb[0].mxu0
        %2257 = vmatprep.mubr.f32.mxu0 0.0
        %v2258 = vand.u32 %v1844, 4294901760
        %v2259 = vsub.f32 %v1844, %v2258
        %v2260 = vand.u32 %v2259, 4294901760
        %2261 = vmatmul.mubr.f32.gmra.mrb[0].mxu0 %v2260
        %v2262 = vpop.f32.mrb[0].mxu0
        %v2263 = vadd.f32 %v2162, %v2262
        %v2264 = vpop.f32.mrb[0].mxu0
        %2265 = vdwg.mxu0
        %2266 = vmatprep.subr.mxu0 0.0
        %v2267 = vand.u32 %v1830, 4294901760
        %v2268 = vsub.f32 %v1830, %v2267
        %v2269 = vand.u32 %v2268, 4294901760
        %2270 = vmatpush1.msra.mxu0 %v2269
        %2271 = vmatprep.subr.mxu0 0.0
        %v2272 = vand.u32 %v1831, 4294901760
        %v2273 = vsub.f32 %v1831, %v2272
        %v2274 = vand.u32 %v2273, 4294901760
        %2275 = vmatpush1.msra.mxu0 %v2274
        %2276 = vmatprep.subr.mxu0 0.0
        %v2277 = vand.u32 %v1832, 4294901760
        %v2278 = vsub.f32 %v1832, %v2277
        %v2279 = vand.u32 %v2278, 4294901760
        %2280 = vmatpush1.msra.mxu0 %v2279
        %2281 = vmatprep.subr.mxu0 0.0
        %v2282 = vand.u32 %v1833, 4294901760
        %v2283 = vsub.f32 %v1833, %v2282
        %v2284 = vand.u32 %v2283, 4294901760
        %2285 = vmatpush1.msra.mxu0 %v2284
        %2286 = vmatprep.subr.mxu0 0.0
        %2287 = vmatpush1.msra.mxu0 0.0
        %2288 = vmatprep.subr.mxu0 0.0
        %2289 = vmatpush1.msra.mxu0 0.0
        %2290 = vmatprep.subr.mxu0 0.0
        %2291 = vmatpush1.msra.mxu0 0.0
        %2292 = vmatprep.subr.mxu0 0.0
        %2293 = vmatpush1.msra.mxu0 0.0
        %2294 = vmatprep.subr.mxu0 0.0
        %2295 = vmatpush1.msra.mxu0 0.0
        %2296 = vmatprep.subr.mxu0 0.0
        %2297 = vmatpush1.msra.mxu0 0.0
        %2298 = vmatprep.subr.mxu0 0.0
        %2299 = vmatpush1.msra.mxu0 0.0
        %2300 = vmatprep.subr.mxu0 0.0
        %2301 = vmatpush1.msra.mxu0 0.0
        %2302 = vmatprep.subr.mxu0 0.0
        %2303 = vmatpush1.msra.mxu0 0.0
        %2304 = vmatprep.subr.mxu0 0.0
        %2305 = vmatpush1.msra.mxu0 0.0
        %2306 = vmatprep.subr.mxu0 0.0
        %2307 = vmatpush1.msra.mxu0 0.0
        %2308 = vmatprep.subr.mxu0 0.0
        %2309 = vmatpush1.msra.mxu0 0.0
        %2310 = vmatprep.subr.mxu0 0.0
        %2311 = vmatpush1.msra.mxu0 0.0
        %2312 = vmatprep.subr.mxu0 0.0
        %2313 = vmatpush1.msra.mxu0 0.0
        %2314 = vmatprep.subr.mxu0 0.0
        %2315 = vmatpush1.msra.mxu0 0.0
        %2316 = vmatprep.subr.mxu0 0.0
        %2317 = vmatpush1.msra.mxu0 0.0
        %2318 = vmatprep.subr.mxu0 0.0
        %2319 = vmatpush1.msra.mxu0 0.0
        %2320 = vmatprep.subr.mxu0 0.0
        %2321 = vmatpush1.msra.mxu0 0.0
        %2322 = vmatprep.subr.mxu0 0.0
        %2323 = vmatpush1.msra.mxu0 0.0
        %2324 = vmatprep.subr.mxu0 0.0
        %2325 = vmatpush1.msra.mxu0 0.0
        %2326 = vmatprep.subr.mxu0 0.0
        %2327 = vmatpush1.msra.mxu0 0.0
        %2328 = vmatprep.subr.mxu0 0.0
        %2329 = vmatpush1.msra.mxu0 0.0
        %2330 = vmatprep.subr.mxu0 0.0
        %2331 = vmatpush1.msra.mxu0 0.0
        %2332 = vmatprep.subr.mxu0 0.0
        %2333 = vmatpush1.msra.mxu0 0.0
        %2334 = vmatprep.subr.mxu0 0.0
        %2335 = vmatpush1.msra.mxu0 0.0
        %2336 = vmatprep.subr.mxu0 0.0
        %2337 = vmatpush1.msra.mxu0 0.0
        %2338 = vmatprep.subr.mxu0 0.0
        %2339 = vmatpush1.msra.mxu0 0.0
        %2340 = vmatprep.subr.mxu0 0.0
        %2341 = vmatpush1.msra.mxu0 0.0
        %2342 = vmatprep.mubr.f32.mxu0 0.0
        %v2343 = vand.u32 %v1835, 4294901760
        %2344 = vmatmul.mubr.f32.gmra.mrb[0].mxu0 %v2343
        %v2345 = vpop.f32.mrb[0].mxu0
        %v2346 = vadd.f32 %v2239, %v2345
        %v2347 = vpop.f32.mrb[0].mxu0
        %2348 = vmatprep.mubr.f32.mxu0 0.0
        %v2349 = vand.u32 %v1838, 4294901760
        %2350 = vmatmul.mubr.f32.gmra.mrb[0].mxu0 %v2349
        %v2351 = vpop.f32.mrb[0].mxu0
        %v2352 = vadd.f32 %v2247, %v2351
        %v2353 = vpop.f32.mrb[0].mxu0
        %2354 = vmatprep.mubr.f32.mxu0 0.0
        %v2355 = vand.u32 %v1841, 4294901760
        %2356 = vmatmul.mubr.f32.gmra.mrb[0].mxu0 %v2355
        %v2357 = vpop.f32.mrb[0].mxu0
        %v2358 = vadd.f32 %v2255, %v2357
        %v2359 = vpop.f32.mrb[0].mxu0
        %2360 = vmatprep.mubr.f32.mxu0 0.0
        %v2361 = vand.u32 %v1844, 4294901760
        %2362 = vmatmul.mubr.f32.gmra.mrb[0].mxu0 %v2361
        %v2363 = vpop.f32.mrb[0].mxu0
        %v2364 = vadd.f32 %v2263, %v2363
        %v2365 = vpop.f32.mrb[0].mxu0
        %2366 = vdwg.mxu0
        %2367 = vmatprep.subr.mxu0 0.0
        %v2368 = vand.u32 %v1830, 4294901760
        %2369 = vmatpush1.msra.mxu0 %v2368
        %2370 = vmatprep.subr.mxu0 0.0
        %v2371 = vand.u32 %v1831, 4294901760
        %2372 = vmatpush1.msra.mxu0 %v2371
        %2373 = vmatprep.subr.mxu0 0.0
        %v2374 = vand.u32 %v1832, 4294901760
        %2375 = vmatpush1.msra.mxu0 %v2374
        %2376 = vmatprep.subr.mxu0 0.0
        %v2377 = vand.u32 %v1833, 4294901760
        %2378 = vmatpush1.msra.mxu0 %v2377
        %2379 = vmatprep.subr.mxu0 0.0
        %2380 = vmatpush1.msra.mxu0 0.0
        %2381 = vmatprep.subr.mxu0 0.0
        %2382 = vmatpush1.msra.mxu0 0.0
        %2383 = vmatprep.subr.mxu0 0.0
        %2384 = vmatpush1.msra.mxu0 0.0
        %2385 = vmatprep.subr.mxu0 0.0
        %2386 = vmatpush1.msra.mxu0 0.0
        %2387 = vmatprep.subr.mxu0 0.0
        %2388 = vmatpush1.msra.mxu0 0.0
        %2389 = vmatprep.subr.mxu0 0.0
        %2390 = vmatpush1.msra.mxu0 0.0
        %2391 = vmatprep.subr.mxu0 0.0
        %2392 = vmatpush1.msra.mxu0 0.0
        %2393 = vmatprep.subr.mxu0 0.0
        %2394 = vmatpush1.msra.mxu0 0.0
        %2395 = vmatprep.subr.mxu0 0.0
        %2396 = vmatpush1.msra.mxu0 0.0
        %2397 = vmatprep.subr.mxu0 0.0
        %2398 = vmatpush1.msra.mxu0 0.0
        %2399 = vmatprep.subr.mxu0 0.0
        %2400 = vmatpush1.msra.mxu0 0.0
        %2401 = vmatprep.subr.mxu0 0.0
        %2402 = vmatpush1.msra.mxu0 0.0
        %2403 = vmatprep.subr.mxu0 0.0
        %2404 = vmatpush1.msra.mxu0 0.0
        %2405 = vmatprep.subr.mxu0 0.0
        %2406 = vmatpush1.msra.mxu0 0.0
        %2407 = vmatprep.subr.mxu0 0.0
        %2408 = vmatpush1.msra.mxu0 0.0
        %2409 = vmatprep.subr.mxu0 0.0
        %2410 = vmatpush1.msra.mxu0 0.0
        %2411 = vmatprep.subr.mxu0 0.0
        %2412 = vmatpush1.msra.mxu0 0.0
        %2413 = vmatprep.subr.mxu0 0.0
        %2414 = vmatpush1.msra.mxu0 0.0
        %2415 = vmatprep.subr.mxu0 0.0
        %2416 = vmatpush1.msra.mxu0 0.0
        %2417 = vmatprep.subr.mxu0 0.0
        %2418 = vmatpush1.msra.mxu0 0.0
        %2419 = vmatprep.subr.mxu0 0.0
        %2420 = vmatpush1.msra.mxu0 0.0
        %2421 = vmatprep.subr.mxu0 0.0
        %2422 = vmatpush1.msra.mxu0 0.0
        %2423 = vmatprep.subr.mxu0 0.0
        %2424 = vmatpush1.msra.mxu0 0.0
        %2425 = vmatprep.subr.mxu0 0.0
        %2426 = vmatpush1.msra.mxu0 0.0
        %2427 = vmatprep.subr.mxu0 0.0
        %2428 = vmatpush1.msra.mxu0 0.0
        %2429 = vmatprep.subr.mxu0 0.0
        %2430 = vmatpush1.msra.mxu0 0.0
        %2431 = vmatprep.subr.mxu0 0.0
        %2432 = vmatpush1.msra.mxu0 0.0
        %2433 = vmatprep.subr.mxu0 0.0
        %2434 = vmatpush1.msra.mxu0 0.0
        %2435 = vmatprep.mubr.f32.mxu0 0.0
        %v2436 = vand.u32 %v1835, 4294901760
        %2437 = vmatmul.mubr.f32.gmra.mrb[0].mxu0 %v2436
        %v2438 = vpop.f32.mrb[0].mxu0
        %v2439 = vadd.f32 %v2346, %v2438
        %v2440 = vpop.f32.mrb[0].mxu0
        %2441 = vmatprep.mubr.f32.mxu0 0.0
        %v2442 = vand.u32 %v1838, 4294901760
        %2443 = vmatmul.mubr.f32.gmra.mrb[0].mxu0 %v2442
        %v2444 = vpop.f32.mrb[0].mxu0
        %v2445 = vadd.f32 %v2352, %v2444
        %v2446 = vpop.f32.mrb[0].mxu0
        %2447 = vmatprep.mubr.f32.mxu0 0.0
        %v2448 = vand.u32 %v1841, 4294901760
        %2449 = vmatmul.mubr.f32.gmra.mrb[0].mxu0 %v2448
        %v2450 = vpop.f32.mrb[0].mxu0
        %v2451 = vadd.f32 %v2358, %v2450
        %v2452 = vpop.f32.mrb[0].mxu0
        %2453 = vmatprep.mubr.f32.mxu0 0.0
        %v2454 = vand.u32 %v1844, 4294901760
        %2455 = vmatmul.mubr.f32.gmra.mrb[0].mxu0 %v2454
        %v2456 = vpop.f32.mrb[0].mxu0
        %v2457 = vadd.f32 %v2364, %v2456
        %v2458 = vpop.f32.mrb[0].mxu0
        %2459 = vdwg.mxu0
        %v2460 = vadd.f32 %v1808, %v2439
        %v2461 = vadd.f32 %v1814, %v2445
        %v2462 = vadd.f32 %v1820, %v2451
        %v2463 = vadd.f32 %v1826, %v2457
        %v2464 = vld [vmem:[%s2] sm:$0x1]
        %v2466 = vlaneseq
        %v2467 = vshrl.u32 %v2466, 7
        %v2468 = vsub.s32 0, %v2467
        %v2469 = vrot.slane %v2464, %v2468
        %v2471 = vadd.f32 %v2460, %v2469
        %v2472 = vadd.f32 %v2461, %v2469
        %v2473 = vadd.f32 %v2462, %v2469
        %v2474 = vadd.f32 %v2463, %v2469
        %v2475 = vmax.f32 %v2471, 0.0
        %v2476 = vmax.f32 %v2472, 0.0
        %v2477 = vmax.f32 %v2473, 0.0
        %v2478 = vmax.f32 %v2474, 0.0
        %v2479 = vrot.slane %v2475, 7
        %v2480 = vrot.slane %v2476, 7
        %v2481 = vrot.slane %v2477, 7
        %v2482 = vrot.slane %v2478, 7
        %v2483 = vsel %vm545, %v2481, %v2482
        %v2484 = vsel %vm545, %v2480, %v2481
        %v2485 = vsel %vm545, %v2479, %v2480
        %v2486 = vsel %vm545, %v2482, %v2479
        %v2487 = vmul.f32 %v2486, %v485
        %v2488 = vmul.f32 %v2485, %v486
        %v2489 = vmul.f32 %v2484, %v487
        %v2490 = vmul.f32 %v2483, %v488
        %v2491 = vrot.slane %v2475, 1
        %v2492 = vrot.slane %v2476, 1
        %v2493 = vrot.slane %v2477, 1
        %v2494 = vrot.slane %v2478, 1
        %v2495 = vsel %vm558, %v2493, %v2494
        %v2496 = vsel %vm558, %v2492, %v2493
        %v2497 = vsel %vm558, %v2491, %v2492
        %v2498 = vsel %vm558, %v2494, %v2491
        %v2499 = vmul.f32 %v2497, %v497
        %v2500 = vmul.f32 %v2496, %v498
        %v2501 = vmul.f32 %v2495, %v499
        %v2502 = vmul.f32 %v2498, %v500
        %v2503 = vld [vmem:[%s3] sm:$0xff]
        %v2504 = vld [vmem:[%s3 + $0x8] sm:$0xff]
        %v2505 = vld [vmem:[%s3 + $0x10] sm:$0xff]
        %v2506 = vld [vmem:[%s3 + $0x18] sm:$0xff]
        %v2507 = vld [vmem:[%s3 + $0x20] sm:$0xff]
        %v2508 = vld [vmem:[%s3 + $0x28] sm:$0xff]
        %v2509 = vld [vmem:[%s3 + $0x30] sm:$0xff]
        %v2510 = vld [vmem:[%s3 + $0x38] sm:$0xff]
        %s2511 = scalar_lea.vmem %s3, 64
        %v2512 = vld [vmem:[%s2511] sm:$0xff]
        %v2513 = vld [vmem:[%s2511 + $0x8] sm:$0xff]
        %v2514 = vld [vmem:[%s2511 + $0x10] sm:$0xff]
        %v2515 = vld [vmem:[%s2511 + $0x18] sm:$0xff]
        %v2516 = vld [vmem:[%s2511 + $0x20] sm:$0xff]
        %v2517 = vld [vmem:[%s2511 + $0x28] sm:$0xff]
        %v2518 = vld [vmem:[%s2511 + $0x30] sm:$0xff]
        %v2519 = vld [vmem:[%s2511 + $0x38] sm:$0xff]
        %vm2520 = vcmask 523264
        %v2522 = vsel %vm2520, %v2475, 0
        %v2525 = vsel %vm2520, %v2476, 0
        %v2528 = vsel %vm2520, %v2477, 0
        %v2531 = vsel %vm2520, %v2478, 0
        %2533 = vmatprep.subr.mxu0 0.0
        %v2534 = vand.u32 %v2512, 4294901760
        %2535 = vmatpush1.msra.mxu0 %v2534
        %2536 = vmatprep.subr.mxu0 0.0
        %v2537 = vand.u32 %v2513, 4294901760
        %2538 = vmatpush1.msra.mxu0 %v2537
        %2539 = vmatprep.subr.mxu0 0.0
        %v2540 = vand.u32 %v2514, 4294901760
        %2541 = vmatpush1.msra.mxu0 %v2540
        %2542 = vmatprep.subr.mxu0 0.0
        %v2543 = vand.u32 %v2515, 4294901760
        %2544 = vmatpush1.msra.mxu0 %v2543
        %2545 = vmatprep.subr.mxu0 0.0
        %v2546 = vand.u32 %v2516, 4294901760
        %2547 = vmatpush1.msra.mxu0 %v2546
        %2548 = vmatprep.subr.mxu0 0.0
        %v2549 = vand.u32 %v2517, 4294901760
        %2550 = vmatpush1.msra.mxu0 %v2549
        %2551 = vmatprep.subr.mxu0 0.0
        %v2552 = vand.u32 %v2518, 4294901760
        %2553 = vmatpush1.msra.mxu0 %v2552
        %2554 = vmatprep.subr.mxu0 0.0
        %v2555 = vand.u32 %v2519, 4294901760
        %2556 = vmatpush1.msra.mxu0 %v2555
        %2557 = vmatprep.subr.mxu0 0.0
        %2558 = vmatpush1.msra.mxu0 0.0
        %2559 = vmatprep.subr.mxu0 0.0
        %2560 = vmatpush1.msra.mxu0 0.0
        %2561 = vmatprep.subr.mxu0 0.0
        %2562 = vmatpush1.msra.mxu0 0.0
        %2563 = vmatprep.subr.mxu0 0.0
        %2564 = vmatpush1.msra.mxu0 0.0
        %2565 = vmatprep.subr.mxu0 0.0
        %2566 = vmatpush1.msra.mxu0 0.0
        %2567 = vmatprep.subr.mxu0 0.0
        %2568 = vmatpush1.msra.mxu0 0.0
        %2569 = vmatprep.subr.mxu0 0.0
        %2570 = vmatpush1.msra.mxu0 0.0
        %2571 = vmatprep.subr.mxu0 0.0
        %2572 = vmatpush1.msra.mxu0 0.0
        %2573 = vmatprep.subr.mxu0 0.0
        %2574 = vmatpush1.msra.mxu0 0.0
        %2575 = vmatprep.subr.mxu0 0.0
        %2576 = vmatpush1.msra.mxu0 0.0
        %2577 = vmatprep.subr.mxu0 0.0
        %2578 = vmatpush1.msra.mxu0 0.0
        %2579 = vmatprep.subr.mxu0 0.0
        %2580 = vmatpush1.msra.mxu0 0.0
        %2581 = vmatprep.subr.mxu0 0.0
        %2582 = vmatpush1.msra.mxu0 0.0
        %2583 = vmatprep.subr.mxu0 0.0
        %2584 = vmatpush1.msra.mxu0 0.0
        %2585 = vmatprep.subr.mxu0 0.0
        %2586 = vmatpush1.msra.mxu0 0.0
        %2587 = vmatprep.subr.mxu0 0.0
        %2588 = vmatpush1.msra.mxu0 0.0
        %2589 = vmatprep.subr.mxu0 0.0
        %2590 = vmatpush1.msra.mxu0 0.0
        %2591 = vmatprep.subr.mxu0 0.0
        %2592 = vmatpush1.msra.mxu0 0.0
        %2593 = vmatprep.subr.mxu0 0.0
        %2594 = vmatpush1.msra.mxu0 0.0
        %2595 = vmatprep.subr.mxu0 0.0
        %2596 = vmatpush1.msra.mxu0 0.0
        %2597 = vmatprep.subr.mxu0 0.0
        %2598 = vmatpush1.msra.mxu0 0.0
        %2599 = vmatprep.subr.mxu0 0.0
        %2600 = vmatpush1.msra.mxu0 0.0
        %2601 = vmatprep.subr.mxu0 0.0
        %2602 = vmatpush1.msra.mxu0 0.0
        %2603 = vmatprep.subr.mxu0 0.0
        %2604 = vmatpush1.msra.mxu0 0.0
        %2605 = vmatprep.mubr.f32.mxu0 0.0
        %v2606 = vand.u32 %v2522, 4294901760
        %v2607 = vsub.f32 %v2522, %v2606
        %v2608 = vand.u32 %v2607, 4294901760
        %v2609 = vsub.f32 %v2607, %v2608
        %v2610 = vand.u32 %v2609, 4294901760
        %2611 = vmatmul.mubr.f32.gmra.mrb[0].mxu0 %v2610
        %v2612 = vpop.f32.mrb[0].mxu0
        %v2613 = vadd.f32 0.0, %v2612
        %v2614 = vpop.f32.mrb[0].mxu0
        %2615 = vmatprep.mubr.f32.mxu0 0.0
        %v2616 = vand.u32 %v2525, 4294901760
        %v2617 = vsub.f32 %v2525, %v2616
        %v2618 = vand.u32 %v2617, 4294901760
        %v2619 = vsub.f32 %v2617, %v2618
        %v2620 = vand.u32 %v2619, 4294901760
        %2621 = vmatmul.mubr.f32.gmra.mrb[0].mxu0 %v2620
        %v2622 = vpop.f32.mrb[0].mxu0
        %v2623 = vadd.f32 0.0, %v2622
        %v2624 = vpop.f32.mrb[0].mxu0
        %2625 = vmatprep.mubr.f32.mxu0 0.0
        %v2626 = vand.u32 %v2528, 4294901760
        %v2627 = vsub.f32 %v2528, %v2626
        %v2628 = vand.u32 %v2627, 4294901760
        %v2629 = vsub.f32 %v2627, %v2628
        %v2630 = vand.u32 %v2629, 4294901760
        %2631 = vmatmul.mubr.f32.gmra.mrb[0].mxu0 %v2630
        %v2632 = vpop.f32.mrb[0].mxu0
        %v2633 = vadd.f32 0.0, %v2632
        %v2634 = vpop.f32.mrb[0].mxu0
        %2635 = vmatprep.mubr.f32.mxu0 0.0
        %v2636 = vand.u32 %v2531, 4294901760
        %v2637 = vsub.f32 %v2531, %v2636
        %v2638 = vand.u32 %v2637, 4294901760
        %v2639 = vsub.f32 %v2637, %v2638
        %v2640 = vand.u32 %v2639, 4294901760
        %2641 = vmatmul.mubr.f32.gmra.mrb[0].mxu0 %v2640
        %v2642 = vpop.f32.mrb[0].mxu0
        %v2643 = vadd.f32 0.0, %v2642
        %v2644 = vpop.f32.mrb[0].mxu0
        %2645 = vdwg.mxu0
        %2646 = vmatprep.subr.mxu0 0.0
        %v2647 = vand.u32 %v2512, 4294901760
        %v2648 = vsub.f32 %v2512, %v2647
        %v2649 = vand.u32 %v2648, 4294901760
        %v2650 = vsub.f32 %v2648, %v2649
        %v2651 = vand.u32 %v2650, 4294901760
        %2652 = vmatpush1.msra.mxu0 %v2651
        %2653 = vmatprep.subr.mxu0 0.0
        %v2654 = vand.u32 %v2513, 4294901760
        %v2655 = vsub.f32 %v2513, %v2654
        %v2656 = vand.u32 %v2655, 4294901760
        %v2657 = vsub.f32 %v2655, %v2656
        %v2658 = vand.u32 %v2657, 4294901760
        %2659 = vmatpush1.msra.mxu0 %v2658
        %2660 = vmatprep.subr.mxu0 0.0
        %v2661 = vand.u32 %v2514, 4294901760
        %v2662 = vsub.f32 %v2514, %v2661
        %v2663 = vand.u32 %v2662, 4294901760
        %v2664 = vsub.f32 %v2662, %v2663
        %v2665 = vand.u32 %v2664, 4294901760
        %2666 = vmatpush1.msra.mxu0 %v2665
        %2667 = vmatprep.subr.mxu0 0.0
        %v2668 = vand.u32 %v2515, 4294901760
        %v2669 = vsub.f32 %v2515, %v2668
        %v2670 = vand.u32 %v2669, 4294901760
        %v2671 = vsub.f32 %v2669, %v2670
        %v2672 = vand.u32 %v2671, 4294901760
        %2673 = vmatpush1.msra.mxu0 %v2672
        %2674 = vmatprep.subr.mxu0 0.0
        %v2675 = vand.u32 %v2516, 4294901760
        %v2676 = vsub.f32 %v2516, %v2675
        %v2677 = vand.u32 %v2676, 4294901760
        %v2678 = vsub.f32 %v2676, %v2677
        %v2679 = vand.u32 %v2678, 4294901760
        %2680 = vmatpush1.msra.mxu0 %v2679
        %2681 = vmatprep.subr.mxu0 0.0
        %v2682 = vand.u32 %v2517, 4294901760
        %v2683 = vsub.f32 %v2517, %v2682
        %v2684 = vand.u32 %v2683, 4294901760
        %v2685 = vsub.f32 %v2683, %v2684
        %v2686 = vand.u32 %v2685, 4294901760
        %2687 = vmatpush1.msra.mxu0 %v2686
        %2688 = vmatprep.subr.mxu0 0.0
        %v2689 = vand.u32 %v2518, 4294901760
        %v2690 = vsub.f32 %v2518, %v2689
        %v2691 = vand.u32 %v2690, 4294901760
        %v2692 = vsub.f32 %v2690, %v2691
        %v2693 = vand.u32 %v2692, 4294901760
        %2694 = vmatpush1.msra.mxu0 %v2693
        %2695 = vmatprep.subr.mxu0 0.0
        %v2696 = vand.u32 %v2519, 4294901760
        %v2697 = vsub.f32 %v2519, %v2696
        %v2698 = vand.u32 %v2697, 4294901760
        %v2699 = vsub.f32 %v2697, %v2698
        %v2700 = vand.u32 %v2699, 4294901760
        %2701 = vmatpush1.msra.mxu0 %v2700
        %2702 = vmatprep.subr.mxu0 0.0
        %2703 = vmatpush1.msra.mxu0 0.0
        %2704 = vmatprep.subr.mxu0 0.0
        %2705 = vmatpush1.msra.mxu0 0.0
        %2706 = vmatprep.subr.mxu0 0.0
        %2707 = vmatpush1.msra.mxu0 0.0
        %2708 = vmatprep.subr.mxu0 0.0
        %2709 = vmatpush1.msra.mxu0 0.0
        %2710 = vmatprep.subr.mxu0 0.0
        %2711 = vmatpush1.msra.mxu0 0.0
        %2712 = vmatprep.subr.mxu0 0.0
        %2713 = vmatpush1.msra.mxu0 0.0
        %2714 = vmatprep.subr.mxu0 0.0
        %2715 = vmatpush1.msra.mxu0 0.0
        %2716 = vmatprep.subr.mxu0 0.0
        %2717 = vmatpush1.msra.mxu0 0.0
        %2718 = vmatprep.subr.mxu0 0.0
        %2719 = vmatpush1.msra.mxu0 0.0
        %2720 = vmatprep.subr.mxu0 0.0
        %2721 = vmatpush1.msra.mxu0 0.0
        %2722 = vmatprep.subr.mxu0 0.0
        %2723 = vmatpush1.msra.mxu0 0.0
        %2724 = vmatprep.subr.mxu0 0.0
        %2725 = vmatpush1.msra.mxu0 0.0
        %2726 = vmatprep.subr.mxu0 0.0
        %2727 = vmatpush1.msra.mxu0 0.0
        %2728 = vmatprep.subr.mxu0 0.0
        %2729 = vmatpush1.msra.mxu0 0.0
        %2730 = vmatprep.subr.mxu0 0.0
        %2731 = vmatpush1.msra.mxu0 0.0
        %2732 = vmatprep.subr.mxu0 0.0
        %2733 = vmatpush1.msra.mxu0 0.0
        %2734 = vmatprep.subr.mxu0 0.0
        %2735 = vmatpush1.msra.mxu0 0.0
        %2736 = vmatprep.subr.mxu0 0.0
        %2737 = vmatpush1.msra.mxu0 0.0
        %2738 = vmatprep.subr.mxu0 0.0
        %2739 = vmatpush1.msra.mxu0 0.0
        %2740 = vmatprep.subr.mxu0 0.0
        %2741 = vmatpush1.msra.mxu0 0.0
        %2742 = vmatprep.subr.mxu0 0.0
        %2743 = vmatpush1.msra.mxu0 0.0
        %2744 = vmatprep.subr.mxu0 0.0
        %2745 = vmatpush1.msra.mxu0 0.0
        %2746 = vmatprep.subr.mxu0 0.0
        %2747 = vmatpush1.msra.mxu0 0.0
        %2748 = vmatprep.subr.mxu0 0.0
        %2749 = vmatpush1.msra.mxu0 0.0
        %2750 = vmatprep.mubr.f32.mxu0 0.0
        %v2751 = vand.u32 %v2522, 4294901760
        %2752 = vmatmul.mubr.f32.gmra.mrb[0].mxu0 %v2751
        %v2753 = vpop.f32.mrb[0].mxu0
        %v2754 = vadd.f32 %v2613, %v2753
        %v2755 = vpop.f32.mrb[0].mxu0
        %2756 = vmatprep.mubr.f32.mxu0 0.0
        %v2757 = vand.u32 %v2525, 4294901760
        %2758 = vmatmul.mubr.f32.gmra.mrb[0].mxu0 %v2757
        %v2759 = vpop.f32.mrb[0].mxu0
        %v2760 = vadd.f32 %v2623, %v2759
        %v2761 = vpop.f32.mrb[0].mxu0
        %2762 = vmatprep.mubr.f32.mxu0 0.0
        %v2763 = vand.u32 %v2528, 4294901760
        %2764 = vmatmul.mubr.f32.gmra.mrb[0].mxu0 %v2763
        %v2765 = vpop.f32.mrb[0].mxu0
        %v2766 = vadd.f32 %v2633, %v2765
        %v2767 = vpop.f32.mrb[0].mxu0
        %2768 = vmatprep.mubr.f32.mxu0 0.0
        %v2769 = vand.u32 %v2531, 4294901760
        %2770 = vmatmul.mubr.f32.gmra.mrb[0].mxu0 %v2769
        %v2771 = vpop.f32.mrb[0].mxu0
        %v2772 = vadd.f32 %v2643, %v2771
        %v2773 = vpop.f32.mrb[0].mxu0
        %2774 = vdwg.mxu0
        %2775 = vmatprep.subr.mxu0 0.0
        %v2776 = vand.u32 %v2512, 4294901760
        %v2777 = vsub.f32 %v2512, %v2776
        %2778 = vmatpush1.msra.mxu0 %v2777
        %2779 = vmatprep.subr.mxu0 0.0
        %v2780 = vand.u32 %v2513, 4294901760
        %v2781 = vsub.f32 %v2513, %v2780
        %2782 = vmatpush1.msra.mxu0 %v2781
        %2783 = vmatprep.subr.mxu0 0.0
        %v2784 = vand.u32 %v2514, 4294901760
        %v2785 = vsub.f32 %v2514, %v2784
        %2786 = vmatpush1.msra.mxu0 %v2785
        %2787 = vmatprep.subr.mxu0 0.0
        %v2788 = vand.u32 %v2515, 4294901760
        %v2789 = vsub.f32 %v2515, %v2788
        %2790 = vmatpush1.msra.mxu0 %v2789
        %2791 = vmatprep.subr.mxu0 0.0
        %v2792 = vand.u32 %v2516, 4294901760
        %v2793 = vsub.f32 %v2516, %v2792
        %2794 = vmatpush1.msra.mxu0 %v2793
        %2795 = vmatprep.subr.mxu0 0.0
        %v2796 = vand.u32 %v2517, 4294901760
        %v2797 = vsub.f32 %v2517, %v2796
        %2798 = vmatpush1.msra.mxu0 %v2797
        %2799 = vmatprep.subr.mxu0 0.0
        %v2800 = vand.u32 %v2518, 4294901760
        %v2801 = vsub.f32 %v2518, %v2800
        %2802 = vmatpush1.msra.mxu0 %v2801
        %2803 = vmatprep.subr.mxu0 0.0
        %v2804 = vand.u32 %v2519, 4294901760
        %v2805 = vsub.f32 %v2519, %v2804
        %2806 = vmatpush1.msra.mxu0 %v2805
        %2807 = vmatprep.subr.mxu0 0.0
        %2808 = vmatpush1.msra.mxu0 0.0
        %2809 = vmatprep.subr.mxu0 0.0
        %2810 = vmatpush1.msra.mxu0 0.0
        %2811 = vmatprep.subr.mxu0 0.0
        %2812 = vmatpush1.msra.mxu0 0.0
        %2813 = vmatprep.subr.mxu0 0.0
        %2814 = vmatpush1.msra.mxu0 0.0
        %2815 = vmatprep.subr.mxu0 0.0
        %2816 = vmatpush1.msra.mxu0 0.0
        %2817 = vmatprep.subr.mxu0 0.0
        %2818 = vmatpush1.msra.mxu0 0.0
        %2819 = vmatprep.subr.mxu0 0.0
        %2820 = vmatpush1.msra.mxu0 0.0
        %2821 = vmatprep.subr.mxu0 0.0
        %2822 = vmatpush1.msra.mxu0 0.0
        %2823 = vmatprep.subr.mxu0 0.0
        %2824 = vmatpush1.msra.mxu0 0.0
        %2825 = vmatprep.subr.mxu0 0.0
        %2826 = vmatpush1.msra.mxu0 0.0
        %2827 = vmatprep.subr.mxu0 0.0
        %2828 = vmatpush1.msra.mxu0 0.0
        %2829 = vmatprep.subr.mxu0 0.0
        %2830 = vmatpush1.msra.mxu0 0.0
        %2831 = vmatprep.subr.mxu0 0.0
        %2832 = vmatpush1.msra.mxu0 0.0
        %2833 = vmatprep.subr.mxu0 0.0
        %2834 = vmatpush1.msra.mxu0 0.0
        %2835 = vmatprep.subr.mxu0 0.0
        %2836 = vmatpush1.msra.mxu0 0.0
        %2837 = vmatprep.subr.mxu0 0.0
        %2838 = vmatpush1.msra.mxu0 0.0
        %2839 = vmatprep.subr.mxu0 0.0
        %2840 = vmatpush1.msra.mxu0 0.0
        %2841 = vmatprep.subr.mxu0 0.0
        %2842 = vmatpush1.msra.mxu0 0.0
        %2843 = vmatprep.subr.mxu0 0.0
        %2844 = vmatpush1.msra.mxu0 0.0
        %2845 = vmatprep.subr.mxu0 0.0
        %2846 = vmatpush1.msra.mxu0 0.0
        %2847 = vmatprep.subr.mxu0 0.0
        %2848 = vmatpush1.msra.mxu0 0.0
        %2849 = vmatprep.subr.mxu0 0.0
        %2850 = vmatpush1.msra.mxu0 0.0
        %2851 = vmatprep.subr.mxu0 0.0
        %2852 = vmatpush1.msra.mxu0 0.0
        %2853 = vmatprep.subr.mxu0 0.0
        %2854 = vmatpush1.msra.mxu0 0.0
        %2855 = vmatprep.mubr.f32.mxu0 0.0
        %v2856 = vand.u32 %v2522, 4294901760
        %v2857 = vsub.f32 %v2522, %v2856
        %2858 = vmatmul.mubr.f32.gmra.mrb[0].mxu0 %v2857
        %v2859 = vpop.f32.mrb[0].mxu0
        %v2860 = vadd.f32 %v2754, %v2859
        %v2861 = vpop.f32.mrb[0].mxu0
        %2862 = vmatprep.mubr.f32.mxu0 0.0
        %v2863 = vand.u32 %v2525, 4294901760
        %v2864 = vsub.f32 %v2525, %v2863
        %2865 = vmatmul.mubr.f32.gmra.mrb[0].mxu0 %v2864
        %v2866 = vpop.f32.mrb[0].mxu0
        %v2867 = vadd.f32 %v2760, %v2866
        %v2868 = vpop.f32.mrb[0].mxu0
        %2869 = vmatprep.mubr.f32.mxu0 0.0
        %v2870 = vand.u32 %v2528, 4294901760
        %v2871 = vsub.f32 %v2528, %v2870
        %2872 = vmatmul.mubr.f32.gmra.mrb[0].mxu0 %v2871
        %v2873 = vpop.f32.mrb[0].mxu0
        %v2874 = vadd.f32 %v2766, %v2873
        %v2875 = vpop.f32.mrb[0].mxu0
        %2876 = vmatprep.mubr.f32.mxu0 0.0
        %v2877 = vand.u32 %v2531, 4294901760
        %v2878 = vsub.f32 %v2531, %v2877
        %2879 = vmatmul.mubr.f32.gmra.mrb[0].mxu0 %v2878
        %v2880 = vpop.f32.mrb[0].mxu0
        %v2881 = vadd.f32 %v2772, %v2880
        %v2882 = vpop.f32.mrb[0].mxu0
        %2883 = vdwg.mxu0
        %2884 = vmatprep.subr.mxu0 0.0
        %v2885 = vand.u32 %v2512, 4294901760
        %2886 = vmatpush1.msra.mxu0 %v2885
        %2887 = vmatprep.subr.mxu0 0.0
        %v2888 = vand.u32 %v2513, 4294901760
        %2889 = vmatpush1.msra.mxu0 %v2888
        %2890 = vmatprep.subr.mxu0 0.0
        %v2891 = vand.u32 %v2514, 4294901760
        %2892 = vmatpush1.msra.mxu0 %v2891
        %2893 = vmatprep.subr.mxu0 0.0
        %v2894 = vand.u32 %v2515, 4294901760
        %2895 = vmatpush1.msra.mxu0 %v2894
        %2896 = vmatprep.subr.mxu0 0.0
        %v2897 = vand.u32 %v2516, 4294901760
        %2898 = vmatpush1.msra.mxu0 %v2897
        %2899 = vmatprep.subr.mxu0 0.0
        %v2900 = vand.u32 %v2517, 4294901760
        %2901 = vmatpush1.msra.mxu0 %v2900
        %2902 = vmatprep.subr.mxu0 0.0
        %v2903 = vand.u32 %v2518, 4294901760
        %2904 = vmatpush1.msra.mxu0 %v2903
        %2905 = vmatprep.subr.mxu0 0.0
        %v2906 = vand.u32 %v2519, 4294901760
        %2907 = vmatpush1.msra.mxu0 %v2906
        %2908 = vmatprep.subr.mxu0 0.0
        %2909 = vmatpush1.msra.mxu0 0.0
        %2910 = vmatprep.subr.mxu0 0.0
        %2911 = vmatpush1.msra.mxu0 0.0
        %2912 = vmatprep.subr.mxu0 0.0
        %2913 = vmatpush1.msra.mxu0 0.0
        %2914 = vmatprep.subr.mxu0 0.0
        %2915 = vmatpush1.msra.mxu0 0.0
        %2916 = vmatprep.subr.mxu0 0.0
        %2917 = vmatpush1.msra.mxu0 0.0
        %2918 = vmatprep.subr.mxu0 0.0
        %2919 = vmatpush1.msra.mxu0 0.0
        %2920 = vmatprep.subr.mxu0 0.0
        %2921 = vmatpush1.msra.mxu0 0.0
        %2922 = vmatprep.subr.mxu0 0.0
        %2923 = vmatpush1.msra.mxu0 0.0
        %2924 = vmatprep.subr.mxu0 0.0
        %2925 = vmatpush1.msra.mxu0 0.0
        %2926 = vmatprep.subr.mxu0 0.0
        %2927 = vmatpush1.msra.mxu0 0.0
        %2928 = vmatprep.subr.mxu0 0.0
        %2929 = vmatpush1.msra.mxu0 0.0
        %2930 = vmatprep.subr.mxu0 0.0
        %2931 = vmatpush1.msra.mxu0 0.0
        %2932 = vmatprep.subr.mxu0 0.0
        %2933 = vmatpush1.msra.mxu0 0.0
        %2934 = vmatprep.subr.mxu0 0.0
        %2935 = vmatpush1.msra.mxu0 0.0
        %2936 = vmatprep.subr.mxu0 0.0
        %2937 = vmatpush1.msra.mxu0 0.0
        %2938 = vmatprep.subr.mxu0 0.0
        %2939 = vmatpush1.msra.mxu0 0.0
        %2940 = vmatprep.subr.mxu0 0.0
        %2941 = vmatpush1.msra.mxu0 0.0
        %2942 = vmatprep.subr.mxu0 0.0
        %2943 = vmatpush1.msra.mxu0 0.0
        %2944 = vmatprep.subr.mxu0 0.0
        %2945 = vmatpush1.msra.mxu0 0.0
        %2946 = vmatprep.subr.mxu0 0.0
        %2947 = vmatpush1.msra.mxu0 0.0
        %2948 = vmatprep.subr.mxu0 0.0
        %2949 = vmatpush1.msra.mxu0 0.0
        %2950 = vmatprep.subr.mxu0 0.0
        %2951 = vmatpush1.msra.mxu0 0.0
        %2952 = vmatprep.subr.mxu0 0.0
        %2953 = vmatpush1.msra.mxu0 0.0
        %2954 = vmatprep.subr.mxu0 0.0
        %2955 = vmatpush1.msra.mxu0 0.0
        %2956 = vmatprep.mubr.f32.mxu0 0.0
        %v2957 = vand.u32 %v2522, 4294901760
        %v2958 = vsub.f32 %v2522, %v2957
        %v2959 = vand.u32 %v2958, 4294901760
        %2960 = vmatmul.mubr.f32.gmra.mrb[0].mxu0 %v2959
        %v2961 = vpop.f32.mrb[0].mxu0
        %v2962 = vadd.f32 %v2860, %v2961
        %v2963 = vpop.f32.mrb[0].mxu0
        %2964 = vmatprep.mubr.f32.mxu0 0.0
        %v2965 = vand.u32 %v2525, 4294901760
        %v2966 = vsub.f32 %v2525, %v2965
        %v2967 = vand.u32 %v2966, 4294901760
        %2968 = vmatmul.mubr.f32.gmra.mrb[0].mxu0 %v2967
        %v2969 = vpop.f32.mrb[0].mxu0
        %v2970 = vadd.f32 %v2867, %v2969
        %v2971 = vpop.f32.mrb[0].mxu0
        %2972 = vmatprep.mubr.f32.mxu0 0.0
        %v2973 = vand.u32 %v2528, 4294901760
        %v2974 = vsub.f32 %v2528, %v2973
        %v2975 = vand.u32 %v2974, 4294901760
        %2976 = vmatmul.mubr.f32.gmra.mrb[0].mxu0 %v2975
        %v2977 = vpop.f32.mrb[0].mxu0
        %v2978 = vadd.f32 %v2874, %v2977
        %v2979 = vpop.f32.mrb[0].mxu0
        %2980 = vmatprep.mubr.f32.mxu0 0.0
        %v2981 = vand.u32 %v2531, 4294901760
        %v2982 = vsub.f32 %v2531, %v2981
        %v2983 = vand.u32 %v2982, 4294901760
        %2984 = vmatmul.mubr.f32.gmra.mrb[0].mxu0 %v2983
        %v2985 = vpop.f32.mrb[0].mxu0
        %v2986 = vadd.f32 %v2881, %v2985
        %v2987 = vpop.f32.mrb[0].mxu0
        %2988 = vdwg.mxu0
        %2989 = vmatprep.subr.mxu0 0.0
        %v2990 = vand.u32 %v2512, 4294901760
        %v2991 = vsub.f32 %v2512, %v2990
        %v2992 = vand.u32 %v2991, 4294901760
        %2993 = vmatpush1.msra.mxu0 %v2992
        %2994 = vmatprep.subr.mxu0 0.0
        %v2995 = vand.u32 %v2513, 4294901760
        %v2996 = vsub.f32 %v2513, %v2995
        %v2997 = vand.u32 %v2996, 4294901760
        %2998 = vmatpush1.msra.mxu0 %v2997
        %2999 = vmatprep.subr.mxu0 0.0
        %v3000 = vand.u32 %v2514, 4294901760
        %v3001 = vsub.f32 %v2514, %v3000
        %v3002 = vand.u32 %v3001, 4294901760
        %3003 = vmatpush1.msra.mxu0 %v3002
        %3004 = vmatprep.subr.mxu0 0.0
        %v3005 = vand.u32 %v2515, 4294901760
        %v3006 = vsub.f32 %v2515, %v3005
        %v3007 = vand.u32 %v3006, 4294901760
        %3008 = vmatpush1.msra.mxu0 %v3007
        %3009 = vmatprep.subr.mxu0 0.0
        %v3010 = vand.u32 %v2516, 4294901760
        %v3011 = vsub.f32 %v2516, %v3010
        %v3012 = vand.u32 %v3011, 4294901760
        %3013 = vmatpush1.msra.mxu0 %v3012
        %3014 = vmatprep.subr.mxu0 0.0
        %v3015 = vand.u32 %v2517, 4294901760
        %v3016 = vsub.f32 %v2517, %v3015
        %v3017 = vand.u32 %v3016, 4294901760
        %3018 = vmatpush1.msra.mxu0 %v3017
        %3019 = vmatprep.subr.mxu0 0.0
        %v3020 = vand.u32 %v2518, 4294901760
        %v3021 = vsub.f32 %v2518, %v3020
        %v3022 = vand.u32 %v3021, 4294901760
        %3023 = vmatpush1.msra.mxu0 %v3022
        %3024 = vmatprep.subr.mxu0 0.0
        %v3025 = vand.u32 %v2519, 4294901760
        %v3026 = vsub.f32 %v2519, %v3025
        %v3027 = vand.u32 %v3026, 4294901760
        %3028 = vmatpush1.msra.mxu0 %v3027
        %3029 = vmatprep.subr.mxu0 0.0
        %3030 = vmatpush1.msra.mxu0 0.0
        %3031 = vmatprep.subr.mxu0 0.0
        %3032 = vmatpush1.msra.mxu0 0.0
        %3033 = vmatprep.subr.mxu0 0.0
        %3034 = vmatpush1.msra.mxu0 0.0
        %3035 = vmatprep.subr.mxu0 0.0
        %3036 = vmatpush1.msra.mxu0 0.0
        %3037 = vmatprep.subr.mxu0 0.0
        %3038 = vmatpush1.msra.mxu0 0.0
        %3039 = vmatprep.subr.mxu0 0.0
        %3040 = vmatpush1.msra.mxu0 0.0
        %3041 = vmatprep.subr.mxu0 0.0
        %3042 = vmatpush1.msra.mxu0 0.0
        %3043 = vmatprep.subr.mxu0 0.0
        %3044 = vmatpush1.msra.mxu0 0.0
        %3045 = vmatprep.subr.mxu0 0.0
        %3046 = vmatpush1.msra.mxu0 0.0
        %3047 = vmatprep.subr.mxu0 0.0
        %3048 = vmatpush1.msra.mxu0 0.0
        %3049 = vmatprep.subr.mxu0 0.0
        %3050 = vmatpush1.msra.mxu0 0.0
        %3051 = vmatprep.subr.mxu0 0.0
        %3052 = vmatpush1.msra.mxu0 0.0
        %3053 = vmatprep.subr.mxu0 0.0
        %3054 = vmatpush1.msra.mxu0 0.0
        %3055 = vmatprep.subr.mxu0 0.0
        %3056 = vmatpush1.msra.mxu0 0.0
        %3057 = vmatprep.subr.mxu0 0.0
        %3058 = vmatpush1.msra.mxu0 0.0
        %3059 = vmatprep.subr.mxu0 0.0
        %3060 = vmatpush1.msra.mxu0 0.0
        %3061 = vmatprep.subr.mxu0 0.0
        %3062 = vmatpush1.msra.mxu0 0.0
        %3063 = vmatprep.subr.mxu0 0.0
        %3064 = vmatpush1.msra.mxu0 0.0
        %3065 = vmatprep.subr.mxu0 0.0
        %3066 = vmatpush1.msra.mxu0 0.0
        %3067 = vmatprep.subr.mxu0 0.0
        %3068 = vmatpush1.msra.mxu0 0.0
        %3069 = vmatprep.subr.mxu0 0.0
        %3070 = vmatpush1.msra.mxu0 0.0
        %3071 = vmatprep.subr.mxu0 0.0
        %3072 = vmatpush1.msra.mxu0 0.0
        %3073 = vmatprep.subr.mxu0 0.0
        %3074 = vmatpush1.msra.mxu0 0.0
        %3075 = vmatprep.subr.mxu0 0.0
        %3076 = vmatpush1.msra.mxu0 0.0
        %3077 = vmatprep.mubr.f32.mxu0 0.0
        %v3078 = vand.u32 %v2522, 4294901760
        %3079 = vmatmul.mubr.f32.gmra.mrb[0].mxu0 %v3078
        %v3080 = vpop.f32.mrb[0].mxu0
        %v3081 = vadd.f32 %v2962, %v3080
        %v3082 = vpop.f32.mrb[0].mxu0
        %3083 = vmatprep.mubr.f32.mxu0 0.0
        %v3084 = vand.u32 %v2525, 4294901760
        %3085 = vmatmul.mubr.f32.gmra.mrb[0].mxu0 %v3084
        %v3086 = vpop.f32.mrb[0].mxu0
        %v3087 = vadd.f32 %v2970, %v3086
        %v3088 = vpop.f32.mrb[0].mxu0
        %3089 = vmatprep.mubr.f32.mxu0 0.0
        %v3090 = vand.u32 %v2528, 4294901760
        %3091 = vmatmul.mubr.f32.gmra.mrb[0].mxu0 %v3090
        %v3092 = vpop.f32.mrb[0].mxu0
        %v3093 = vadd.f32 %v2978, %v3092
        %v3094 = vpop.f32.mrb[0].mxu0
        %3095 = vmatprep.mubr.f32.mxu0 0.0
        %v3096 = vand.u32 %v2531, 4294901760
        %3097 = vmatmul.mubr.f32.gmra.mrb[0].mxu0 %v3096
        %v3098 = vpop.f32.mrb[0].mxu0
        %v3099 = vadd.f32 %v2986, %v3098
        %v3100 = vpop.f32.mrb[0].mxu0
        %3101 = vdwg.mxu0
        %3102 = vmatprep.subr.mxu0 0.0
        %v3103 = vand.u32 %v2512, 4294901760
        %3104 = vmatpush1.msra.mxu0 %v3103
        %3105 = vmatprep.subr.mxu0 0.0
        %v3106 = vand.u32 %v2513, 4294901760
        %3107 = vmatpush1.msra.mxu0 %v3106
        %3108 = vmatprep.subr.mxu0 0.0
        %v3109 = vand.u32 %v2514, 4294901760
        %3110 = vmatpush1.msra.mxu0 %v3109
        %3111 = vmatprep.subr.mxu0 0.0
        %v3112 = vand.u32 %v2515, 4294901760
        %3113 = vmatpush1.msra.mxu0 %v3112
        %3114 = vmatprep.subr.mxu0 0.0
        %v3115 = vand.u32 %v2516, 4294901760
        %3116 = vmatpush1.msra.mxu0 %v3115
        %3117 = vmatprep.subr.mxu0 0.0
        %v3118 = vand.u32 %v2517, 4294901760
        %3119 = vmatpush1.msra.mxu0 %v3118
        %3120 = vmatprep.subr.mxu0 0.0
        %v3121 = vand.u32 %v2518, 4294901760
        %3122 = vmatpush1.msra.mxu0 %v3121
        %3123 = vmatprep.subr.mxu0 0.0
        %v3124 = vand.u32 %v2519, 4294901760
        %3125 = vmatpush1.msra.mxu0 %v3124
        %3126 = vmatprep.subr.mxu0 0.0
        %3127 = vmatpush1.msra.mxu0 0.0
        %3128 = vmatprep.subr.mxu0 0.0
        %3129 = vmatpush1.msra.mxu0 0.0
        %3130 = vmatprep.subr.mxu0 0.0
        %3131 = vmatpush1.msra.mxu0 0.0
        %3132 = vmatprep.subr.mxu0 0.0
        %3133 = vmatpush1.msra.mxu0 0.0
        %3134 = vmatprep.subr.mxu0 0.0
        %3135 = vmatpush1.msra.mxu0 0.0
        %3136 = vmatprep.subr.mxu0 0.0
        %3137 = vmatpush1.msra.mxu0 0.0
        %3138 = vmatprep.subr.mxu0 0.0
        %3139 = vmatpush1.msra.mxu0 0.0
        %3140 = vmatprep.subr.mxu0 0.0
        %3141 = vmatpush1.msra.mxu0 0.0
        %3142 = vmatprep.subr.mxu0 0.0
        %3143 = vmatpush1.msra.mxu0 0.0
        %3144 = vmatprep.subr.mxu0 0.0
        %3145 = vmatpush1.msra.mxu0 0.0
        %3146 = vmatprep.subr.mxu0 0.0
        %3147 = vmatpush1.msra.mxu0 0.0
        %3148 = vmatprep.subr.mxu0 0.0
        %3149 = vmatpush1.msra.mxu0 0.0
        %3150 = vmatprep.subr.mxu0 0.0
        %3151 = vmatpush1.msra.mxu0 0.0
        %3152 = vmatprep.subr.mxu0 0.0
        %3153 = vmatpush1.msra.mxu0 0.0
        %3154 = vmatprep.subr.mxu0 0.0
        %3155 = vmatpush1.msra.mxu0 0.0
        %3156 = vmatprep.subr.mxu0 0.0
        %3157 = vmatpush1.msra.mxu0 0.0
        %3158 = vmatprep.subr.mxu0 0.0
        %3159 = vmatpush1.msra.mxu0 0.0
        %3160 = vmatprep.subr.mxu0 0.0
        %3161 = vmatpush1.msra.mxu0 0.0
        %3162 = vmatprep.subr.mxu0 0.0
        %3163 = vmatpush1.msra.mxu0 0.0
        %3164 = vmatprep.subr.mxu0 0.0
        %3165 = vmatpush1.msra.mxu0 0.0
        %3166 = vmatprep.subr.mxu0 0.0
        %3167 = vmatpush1.msra.mxu0 0.0
        %3168 = vmatprep.subr.mxu0 0.0
        %3169 = vmatpush1.msra.mxu0 0.0
        %3170 = vmatprep.subr.mxu0 0.0
        %3171 = vmatpush1.msra.mxu0 0.0
        %3172 = vmatprep.subr.mxu0 0.0
        %3173 = vmatpush1.msra.mxu0 0.0
        %3174 = vmatprep.mubr.f32.mxu0 0.0
        %v3175 = vand.u32 %v2522, 4294901760
        %3176 = vmatmul.mubr.f32.gmra.mrb[0].mxu0 %v3175
        %v3177 = vpop.f32.mrb[0].mxu0
        %v3178 = vadd.f32 %v3081, %v3177
        %v3179 = vpop.f32.mrb[0].mxu0
        %3180 = vmatprep.mubr.f32.mxu0 0.0
        %v3181 = vand.u32 %v2525, 4294901760
        %3182 = vmatmul.mubr.f32.gmra.mrb[0].mxu0 %v3181
        %v3183 = vpop.f32.mrb[0].mxu0
        %v3184 = vadd.f32 %v3087, %v3183
        %v3185 = vpop.f32.mrb[0].mxu0
        %3186 = vmatprep.mubr.f32.mxu0 0.0
        %v3187 = vand.u32 %v2528, 4294901760
        %3188 = vmatmul.mubr.f32.gmra.mrb[0].mxu0 %v3187
        %v3189 = vpop.f32.mrb[0].mxu0
        %v3190 = vadd.f32 %v3093, %v3189
        %v3191 = vpop.f32.mrb[0].mxu0
        %3192 = vmatprep.mubr.f32.mxu0 0.0
        %v3193 = vand.u32 %v2531, 4294901760
        %3194 = vmatmul.mubr.f32.gmra.mrb[0].mxu0 %v3193
        %v3195 = vpop.f32.mrb[0].mxu0
        %v3196 = vadd.f32 %v3099, %v3195
        %v3197 = vpop.f32.mrb[0].mxu0
        %3198 = vdwg.mxu0
        %v3200 = vsel %vm2520, %v2487, 0
        %v3203 = vsel %vm2520, %v2488, 0
        %v3206 = vsel %vm2520, %v2489, 0
        %v3209 = vsel %vm2520, %v2490, 0
        %3211 = vmatprep.subr.mxu0 0.0
        %v3212 = vand.u32 %v2503, 4294901760
        %3213 = vmatpush1.msra.mxu0 %v3212
        %3214 = vmatprep.subr.mxu0 0.0
        %v3215 = vand.u32 %v2504, 4294901760
        %3216 = vmatpush1.msra.mxu0 %v3215
        %3217 = vmatprep.subr.mxu0 0.0
        %v3218 = vand.u32 %v2505, 4294901760
        %3219 = vmatpush1.msra.mxu0 %v3218
        %3220 = vmatprep.subr.mxu0 0.0
        %v3221 = vand.u32 %v2506, 4294901760
        %3222 = vmatpush1.msra.mxu0 %v3221
        %3223 = vmatprep.subr.mxu0 0.0
        %v3224 = vand.u32 %v2507, 4294901760
        %3225 = vmatpush1.msra.mxu0 %v3224
        %3226 = vmatprep.subr.mxu0 0.0
        %v3227 = vand.u32 %v2508, 4294901760
        %3228 = vmatpush1.msra.mxu0 %v3227
        %3229 = vmatprep.subr.mxu0 0.0
        %v3230 = vand.u32 %v2509, 4294901760
        %3231 = vmatpush1.msra.mxu0 %v3230
        %3232 = vmatprep.subr.mxu0 0.0
        %v3233 = vand.u32 %v2510, 4294901760
        %3234 = vmatpush1.msra.mxu0 %v3233
        %3235 = vmatprep.subr.mxu0 0.0
        %3236 = vmatpush1.msra.mxu0 0.0
        %3237 = vmatprep.subr.mxu0 0.0
        %3238 = vmatpush1.msra.mxu0 0.0
        %3239 = vmatprep.subr.mxu0 0.0
        %3240 = vmatpush1.msra.mxu0 0.0
        %3241 = vmatprep.subr.mxu0 0.0
        %3242 = vmatpush1.msra.mxu0 0.0
        %3243 = vmatprep.subr.mxu0 0.0
        %3244 = vmatpush1.msra.mxu0 0.0
        %3245 = vmatprep.subr.mxu0 0.0
        %3246 = vmatpush1.msra.mxu0 0.0
        %3247 = vmatprep.subr.mxu0 0.0
        %3248 = vmatpush1.msra.mxu0 0.0
        %3249 = vmatprep.subr.mxu0 0.0
        %3250 = vmatpush1.msra.mxu0 0.0
        %3251 = vmatprep.subr.mxu0 0.0
        %3252 = vmatpush1.msra.mxu0 0.0
        %3253 = vmatprep.subr.mxu0 0.0
        %3254 = vmatpush1.msra.mxu0 0.0
        %3255 = vmatprep.subr.mxu0 0.0
        %3256 = vmatpush1.msra.mxu0 0.0
        %3257 = vmatprep.subr.mxu0 0.0
        %3258 = vmatpush1.msra.mxu0 0.0
        %3259 = vmatprep.subr.mxu0 0.0
        %3260 = vmatpush1.msra.mxu0 0.0
        %3261 = vmatprep.subr.mxu0 0.0
        %3262 = vmatpush1.msra.mxu0 0.0
        %3263 = vmatprep.subr.mxu0 0.0
        %3264 = vmatpush1.msra.mxu0 0.0
        %3265 = vmatprep.subr.mxu0 0.0
        %3266 = vmatpush1.msra.mxu0 0.0
        %3267 = vmatprep.subr.mxu0 0.0
        %3268 = vmatpush1.msra.mxu0 0.0
        %3269 = vmatprep.subr.mxu0 0.0
        %3270 = vmatpush1.msra.mxu0 0.0
        %3271 = vmatprep.subr.mxu0 0.0
        %3272 = vmatpush1.msra.mxu0 0.0
        %3273 = vmatprep.subr.mxu0 0.0
        %3274 = vmatpush1.msra.mxu0 0.0
        %3275 = vmatprep.subr.mxu0 0.0
        %3276 = vmatpush1.msra.mxu0 0.0
        %3277 = vmatprep.subr.mxu0 0.0
        %3278 = vmatpush1.msra.mxu0 0.0
        %3279 = vmatprep.subr.mxu0 0.0
        %3280 = vmatpush1.msra.mxu0 0.0
        %3281 = vmatprep.subr.mxu0 0.0
        %3282 = vmatpush1.msra.mxu0 0.0
        %3283 = vmatprep.mubr.f32.mxu0 0.0
        %v3284 = vand.u32 %v3200, 4294901760
        %v3285 = vsub.f32 %v3200, %v3284
        %v3286 = vand.u32 %v3285, 4294901760
        %v3287 = vsub.f32 %v3285, %v3286
        %v3288 = vand.u32 %v3287, 4294901760
        %3289 = vmatmul.mubr.f32.gmra.mrb[0].mxu0 %v3288
        %v3290 = vpop.f32.mrb[0].mxu0
        %v3291 = vadd.f32 %v3178, %v3290
        %v3292 = vpop.f32.mrb[0].mxu0
        %3293 = vmatprep.mubr.f32.mxu0 0.0
        %v3294 = vand.u32 %v3203, 4294901760
        %v3295 = vsub.f32 %v3203, %v3294
        %v3296 = vand.u32 %v3295, 4294901760
        %v3297 = vsub.f32 %v3295, %v3296
        %v3298 = vand.u32 %v3297, 4294901760
        %3299 = vmatmul.mubr.f32.gmra.mrb[0].mxu0 %v3298
        %v3300 = vpop.f32.mrb[0].mxu0
        %v3301 = vadd.f32 %v3184, %v3300
        %v3302 = vpop.f32.mrb[0].mxu0
        %3303 = vmatprep.mubr.f32.mxu0 0.0
        %v3304 = vand.u32 %v3206, 4294901760
        %v3305 = vsub.f32 %v3206, %v3304
        %v3306 = vand.u32 %v3305, 4294901760
        %v3307 = vsub.f32 %v3305, %v3306
        %v3308 = vand.u32 %v3307, 4294901760
        %3309 = vmatmul.mubr.f32.gmra.mrb[0].mxu0 %v3308
        %v3310 = vpop.f32.mrb[0].mxu0
        %v3311 = vadd.f32 %v3190, %v3310
        %v3312 = vpop.f32.mrb[0].mxu0
        %3313 = vmatprep.mubr.f32.mxu0 0.0
        %v3314 = vand.u32 %v3209, 4294901760
        %v3315 = vsub.f32 %v3209, %v3314
        %v3316 = vand.u32 %v3315, 4294901760
        %v3317 = vsub.f32 %v3315, %v3316
        %v3318 = vand.u32 %v3317, 4294901760
        %3319 = vmatmul.mubr.f32.gmra.mrb[0].mxu0 %v3318
        %v3320 = vpop.f32.mrb[0].mxu0
        %v3321 = vadd.f32 %v3196, %v3320
        %v3322 = vpop.f32.mrb[0].mxu0
        %3323 = vdwg.mxu0
        %3324 = vmatprep.subr.mxu0 0.0
        %v3325 = vand.u32 %v2503, 4294901760
        %v3326 = vsub.f32 %v2503, %v3325
        %v3327 = vand.u32 %v3326, 4294901760
        %v3328 = vsub.f32 %v3326, %v3327
        %v3329 = vand.u32 %v3328, 4294901760
        %3330 = vmatpush1.msra.mxu0 %v3329
        %3331 = vmatprep.subr.mxu0 0.0
        %v3332 = vand.u32 %v2504, 4294901760
        %v3333 = vsub.f32 %v2504, %v3332
        %v3334 = vand.u32 %v3333, 4294901760
        %v3335 = vsub.f32 %v3333, %v3334
        %v3336 = vand.u32 %v3335, 4294901760
        %3337 = vmatpush1.msra.mxu0 %v3336
        %3338 = vmatprep.subr.mxu0 0.0
        %v3339 = vand.u32 %v2505, 4294901760
        %v3340 = vsub.f32 %v2505, %v3339
        %v3341 = vand.u32 %v3340, 4294901760
        %v3342 = vsub.f32 %v3340, %v3341
        %v3343 = vand.u32 %v3342, 4294901760
        %3344 = vmatpush1.msra.mxu0 %v3343
        %3345 = vmatprep.subr.mxu0 0.0
        %v3346 = vand.u32 %v2506, 4294901760
        %v3347 = vsub.f32 %v2506, %v3346
        %v3348 = vand.u32 %v3347, 4294901760
        %v3349 = vsub.f32 %v3347, %v3348
        %v3350 = vand.u32 %v3349, 4294901760
        %3351 = vmatpush1.msra.mxu0 %v3350
        %3352 = vmatprep.subr.mxu0 0.0
        %v3353 = vand.u32 %v2507, 4294901760
        %v3354 = vsub.f32 %v2507, %v3353
        %v3355 = vand.u32 %v3354, 4294901760
        %v3356 = vsub.f32 %v3354, %v3355
        %v3357 = vand.u32 %v3356, 4294901760
        %3358 = vmatpush1.msra.mxu0 %v3357
        %3359 = vmatprep.subr.mxu0 0.0
        %v3360 = vand.u32 %v2508, 4294901760
        %v3361 = vsub.f32 %v2508, %v3360
        %v3362 = vand.u32 %v3361, 4294901760
        %v3363 = vsub.f32 %v3361, %v3362
        %v3364 = vand.u32 %v3363, 4294901760
        %3365 = vmatpush1.msra.mxu0 %v3364
        %3366 = vmatprep.subr.mxu0 0.0
        %v3367 = vand.u32 %v2509, 4294901760
        %v3368 = vsub.f32 %v2509, %v3367
        %v3369 = vand.u32 %v3368, 4294901760
        %v3370 = vsub.f32 %v3368, %v3369
        %v3371 = vand.u32 %v3370, 4294901760
        %3372 = vmatpush1.msra.mxu0 %v3371
        %3373 = vmatprep.subr.mxu0 0.0
        %v3374 = vand.u32 %v2510, 4294901760
        %v3375 = vsub.f32 %v2510, %v3374
        %v3376 = vand.u32 %v3375, 4294901760
        %v3377 = vsub.f32 %v3375, %v3376
        %v3378 = vand.u32 %v3377, 4294901760
        %3379 = vmatpush1.msra.mxu0 %v3378
        %3380 = vmatprep.subr.mxu0 0.0
        %3381 = vmatpush1.msra.mxu0 0.0
        %3382 = vmatprep.subr.mxu0 0.0
        %3383 = vmatpush1.msra.mxu0 0.0
        %3384 = vmatprep.subr.mxu0 0.0
        %3385 = vmatpush1.msra.mxu0 0.0
        %3386 = vmatprep.subr.mxu0 0.0
        %3387 = vmatpush1.msra.mxu0 0.0
        %3388 = vmatprep.subr.mxu0 0.0
        %3389 = vmatpush1.msra.mxu0 0.0
        %3390 = vmatprep.subr.mxu0 0.0
        %3391 = vmatpush1.msra.mxu0 0.0
        %3392 = vmatprep.subr.mxu0 0.0
        %3393 = vmatpush1.msra.mxu0 0.0
        %3394 = vmatprep.subr.mxu0 0.0
        %3395 = vmatpush1.msra.mxu0 0.0
        %3396 = vmatprep.subr.mxu0 0.0
        %3397 = vmatpush1.msra.mxu0 0.0
        %3398 = vmatprep.subr.mxu0 0.0
        %3399 = vmatpush1.msra.mxu0 0.0
        %3400 = vmatprep.subr.mxu0 0.0
        %3401 = vmatpush1.msra.mxu0 0.0
        %3402 = vmatprep.subr.mxu0 0.0
        %3403 = vmatpush1.msra.mxu0 0.0
        %3404 = vmatprep.subr.mxu0 0.0
        %3405 = vmatpush1.msra.mxu0 0.0
        %3406 = vmatprep.subr.mxu0 0.0
        %3407 = vmatpush1.msra.mxu0 0.0
        %3408 = vmatprep.subr.mxu0 0.0
        %3409 = vmatpush1.msra.mxu0 0.0
        %3410 = vmatprep.subr.mxu0 0.0
        %3411 = vmatpush1.msra.mxu0 0.0
        %3412 = vmatprep.subr.mxu0 0.0
        %3413 = vmatpush1.msra.mxu0 0.0
        %3414 = vmatprep.subr.mxu0 0.0
        %3415 = vmatpush1.msra.mxu0 0.0
        %3416 = vmatprep.subr.mxu0 0.0
        %3417 = vmatpush1.msra.mxu0 0.0
        %3418 = vmatprep.subr.mxu0 0.0
        %3419 = vmatpush1.msra.mxu0 0.0
        %3420 = vmatprep.subr.mxu0 0.0
        %3421 = vmatpush1.msra.mxu0 0.0
        %3422 = vmatprep.subr.mxu0 0.0
        %3423 = vmatpush1.msra.mxu0 0.0
        %3424 = vmatprep.subr.mxu0 0.0
        %3425 = vmatpush1.msra.mxu0 0.0
        %3426 = vmatprep.subr.mxu0 0.0
        %3427 = vmatpush1.msra.mxu0 0.0
        %3428 = vmatprep.mubr.f32.mxu0 0.0
        %v3429 = vand.u32 %v3200, 4294901760
        %3430 = vmatmul.mubr.f32.gmra.mrb[0].mxu0 %v3429
        %v3431 = vpop.f32.mrb[0].mxu0
        %v3432 = vadd.f32 %v3291, %v3431
        %v3433 = vpop.f32.mrb[0].mxu0
        %3434 = vmatprep.mubr.f32.mxu0 0.0
        %v3435 = vand.u32 %v3203, 4294901760
        %3436 = vmatmul.mubr.f32.gmra.mrb[0].mxu0 %v3435
        %v3437 = vpop.f32.mrb[0].mxu0
        %v3438 = vadd.f32 %v3301, %v3437
        %v3439 = vpop.f32.mrb[0].mxu0
        %3440 = vmatprep.mubr.f32.mxu0 0.0
        %v3441 = vand.u32 %v3206, 4294901760
        %3442 = vmatmul.mubr.f32.gmra.mrb[0].mxu0 %v3441
        %v3443 = vpop.f32.mrb[0].mxu0
        %v3444 = vadd.f32 %v3311, %v3443
        %v3445 = vpop.f32.mrb[0].mxu0
        %3446 = vmatprep.mubr.f32.mxu0 0.0
        %v3447 = vand.u32 %v3209, 4294901760
        %3448 = vmatmul.mubr.f32.gmra.mrb[0].mxu0 %v3447
        %v3449 = vpop.f32.mrb[0].mxu0
        %v3450 = vadd.f32 %v3321, %v3449
        %v3451 = vpop.f32.mrb[0].mxu0
        %3452 = vdwg.mxu0
        %3453 = vmatprep.subr.mxu0 0.0
        %v3454 = vand.u32 %v2503, 4294901760
        %v3455 = vsub.f32 %v2503, %v3454
        %3456 = vmatpush1.msra.mxu0 %v3455
        %3457 = vmatprep.subr.mxu0 0.0
        %v3458 = vand.u32 %v2504, 4294901760
        %v3459 = vsub.f32 %v2504, %v3458
        %3460 = vmatpush1.msra.mxu0 %v3459
        %3461 = vmatprep.subr.mxu0 0.0
        %v3462 = vand.u32 %v2505, 4294901760
        %v3463 = vsub.f32 %v2505, %v3462
        %3464 = vmatpush1.msra.mxu0 %v3463
        %3465 = vmatprep.subr.mxu0 0.0
        %v3466 = vand.u32 %v2506, 4294901760
        %v3467 = vsub.f32 %v2506, %v3466
        %3468 = vmatpush1.msra.mxu0 %v3467
        %3469 = vmatprep.subr.mxu0 0.0
        %v3470 = vand.u32 %v2507, 4294901760
        %v3471 = vsub.f32 %v2507, %v3470
        %3472 = vmatpush1.msra.mxu0 %v3471
        %3473 = vmatprep.subr.mxu0 0.0
        %v3474 = vand.u32 %v2508, 4294901760
        %v3475 = vsub.f32 %v2508, %v3474
        %3476 = vmatpush1.msra.mxu0 %v3475
        %3477 = vmatprep.subr.mxu0 0.0
        %v3478 = vand.u32 %v2509, 4294901760
        %v3479 = vsub.f32 %v2509, %v3478
        %3480 = vmatpush1.msra.mxu0 %v3479
        %3481 = vmatprep.subr.mxu0 0.0
        %v3482 = vand.u32 %v2510, 4294901760
        %v3483 = vsub.f32 %v2510, %v3482
        %3484 = vmatpush1.msra.mxu0 %v3483
        %3485 = vmatprep.subr.mxu0 0.0
        %3486 = vmatpush1.msra.mxu0 0.0
        %3487 = vmatprep.subr.mxu0 0.0
        %3488 = vmatpush1.msra.mxu0 0.0
        %3489 = vmatprep.subr.mxu0 0.0
        %3490 = vmatpush1.msra.mxu0 0.0
        %3491 = vmatprep.subr.mxu0 0.0
        %3492 = vmatpush1.msra.mxu0 0.0
        %3493 = vmatprep.subr.mxu0 0.0
        %3494 = vmatpush1.msra.mxu0 0.0
        %3495 = vmatprep.subr.mxu0 0.0
        %3496 = vmatpush1.msra.mxu0 0.0
        %3497 = vmatprep.subr.mxu0 0.0
        %3498 = vmatpush1.msra.mxu0 0.0
        %3499 = vmatprep.subr.mxu0 0.0
        %3500 = vmatpush1.msra.mxu0 0.0
        %3501 = vmatprep.subr.mxu0 0.0
        %3502 = vmatpush1.msra.mxu0 0.0
        %3503 = vmatprep.subr.mxu0 0.0
        %3504 = vmatpush1.msra.mxu0 0.0
        %3505 = vmatprep.subr.mxu0 0.0
        %3506 = vmatpush1.msra.mxu0 0.0
        %3507 = vmatprep.subr.mxu0 0.0
        %3508 = vmatpush1.msra.mxu0 0.0
        %3509 = vmatprep.subr.mxu0 0.0
        %3510 = vmatpush1.msra.mxu0 0.0
        %3511 = vmatprep.subr.mxu0 0.0
        %3512 = vmatpush1.msra.mxu0 0.0
        %3513 = vmatprep.subr.mxu0 0.0
        %3514 = vmatpush1.msra.mxu0 0.0
        %3515 = vmatprep.subr.mxu0 0.0
        %3516 = vmatpush1.msra.mxu0 0.0
        %3517 = vmatprep.subr.mxu0 0.0
        %3518 = vmatpush1.msra.mxu0 0.0
        %3519 = vmatprep.subr.mxu0 0.0
        %3520 = vmatpush1.msra.mxu0 0.0
        %3521 = vmatprep.subr.mxu0 0.0
        %3522 = vmatpush1.msra.mxu0 0.0
        %3523 = vmatprep.subr.mxu0 0.0
        %3524 = vmatpush1.msra.mxu0 0.0
        %3525 = vmatprep.subr.mxu0 0.0
        %3526 = vmatpush1.msra.mxu0 0.0
        %3527 = vmatprep.subr.mxu0 0.0
        %3528 = vmatpush1.msra.mxu0 0.0
        %3529 = vmatprep.subr.mxu0 0.0
        %3530 = vmatpush1.msra.mxu0 0.0
        %3531 = vmatprep.subr.mxu0 0.0
        %3532 = vmatpush1.msra.mxu0 0.0
        %3533 = vmatprep.mubr.f32.mxu0 0.0
        %v3534 = vand.u32 %v3200, 4294901760
        %v3535 = vsub.f32 %v3200, %v3534
        %3536 = vmatmul.mubr.f32.gmra.mrb[0].mxu0 %v3535
        %v3537 = vpop.f32.mrb[0].mxu0
        %v3538 = vadd.f32 %v3432, %v3537
        %v3539 = vpop.f32.mrb[0].mxu0
        %3540 = vmatprep.mubr.f32.mxu0 0.0
        %v3541 = vand.u32 %v3203, 4294901760
        %v3542 = vsub.f32 %v3203, %v3541
        %3543 = vmatmul.mubr.f32.gmra.mrb[0].mxu0 %v3542
        %v3544 = vpop.f32.mrb[0].mxu0
        %v3545 = vadd.f32 %v3438, %v3544
        %v3546 = vpop.f32.mrb[0].mxu0
        %3547 = vmatprep.mubr.f32.mxu0 0.0
        %v3548 = vand.u32 %v3206, 4294901760
        %v3549 = vsub.f32 %v3206, %v3548
        %3550 = vmatmul.mubr.f32.gmra.mrb[0].mxu0 %v3549
        %v3551 = vpop.f32.mrb[0].mxu0
        %v3552 = vadd.f32 %v3444, %v3551
        %v3553 = vpop.f32.mrb[0].mxu0
        %3554 = vmatprep.mubr.f32.mxu0 0.0
        %v3555 = vand.u32 %v3209, 4294901760
        %v3556 = vsub.f32 %v3209, %v3555
        %3557 = vmatmul.mubr.f32.gmra.mrb[0].mxu0 %v3556
        %v3558 = vpop.f32.mrb[0].mxu0
        %v3559 = vadd.f32 %v3450, %v3558
        %v3560 = vpop.f32.mrb[0].mxu0
        %3561 = vdwg.mxu0
        %3562 = vmatprep.subr.mxu0 0.0
        %v3563 = vand.u32 %v2503, 4294901760
        %3564 = vmatpush1.msra.mxu0 %v3563
        %3565 = vmatprep.subr.mxu0 0.0
        %v3566 = vand.u32 %v2504, 4294901760
        %3567 = vmatpush1.msra.mxu0 %v3566
        %3568 = vmatprep.subr.mxu0 0.0
        %v3569 = vand.u32 %v2505, 4294901760
        %3570 = vmatpush1.msra.mxu0 %v3569
        %3571 = vmatprep.subr.mxu0 0.0
        %v3572 = vand.u32 %v2506, 4294901760
        %3573 = vmatpush1.msra.mxu0 %v3572
        %3574 = vmatprep.subr.mxu0 0.0
        %v3575 = vand.u32 %v2507, 4294901760
        %3576 = vmatpush1.msra.mxu0 %v3575
        %3577 = vmatprep.subr.mxu0 0.0
        %v3578 = vand.u32 %v2508, 4294901760
        %3579 = vmatpush1.msra.mxu0 %v3578
        %3580 = vmatprep.subr.mxu0 0.0
        %v3581 = vand.u32 %v2509, 4294901760
        %3582 = vmatpush1.msra.mxu0 %v3581
        %3583 = vmatprep.subr.mxu0 0.0
        %v3584 = vand.u32 %v2510, 4294901760
        %3585 = vmatpush1.msra.mxu0 %v3584
        %3586 = vmatprep.subr.mxu0 0.0
        %3587 = vmatpush1.msra.mxu0 0.0
        %3588 = vmatprep.subr.mxu0 0.0
        %3589 = vmatpush1.msra.mxu0 0.0
        %3590 = vmatprep.subr.mxu0 0.0
        %3591 = vmatpush1.msra.mxu0 0.0
        %3592 = vmatprep.subr.mxu0 0.0
        %3593 = vmatpush1.msra.mxu0 0.0
        %3594 = vmatprep.subr.mxu0 0.0
        %3595 = vmatpush1.msra.mxu0 0.0
        %3596 = vmatprep.subr.mxu0 0.0
        %3597 = vmatpush1.msra.mxu0 0.0
        %3598 = vmatprep.subr.mxu0 0.0
        %3599 = vmatpush1.msra.mxu0 0.0
        %3600 = vmatprep.subr.mxu0 0.0
        %3601 = vmatpush1.msra.mxu0 0.0
        %3602 = vmatprep.subr.mxu0 0.0
        %3603 = vmatpush1.msra.mxu0 0.0
        %3604 = vmatprep.subr.mxu0 0.0
        %3605 = vmatpush1.msra.mxu0 0.0
        %3606 = vmatprep.subr.mxu0 0.0
        %3607 = vmatpush1.msra.mxu0 0.0
        %3608 = vmatprep.subr.mxu0 0.0
        %3609 = vmatpush1.msra.mxu0 0.0
        %3610 = vmatprep.subr.mxu0 0.0
        %3611 = vmatpush1.msra.mxu0 0.0
        %3612 = vmatprep.subr.mxu0 0.0
        %3613 = vmatpush1.msra.mxu0 0.0
        %3614 = vmatprep.subr.mxu0 0.0
        %3615 = vmatpush1.msra.mxu0 0.0
        %3616 = vmatprep.subr.mxu0 0.0
        %3617 = vmatpush1.msra.mxu0 0.0
        %3618 = vmatprep.subr.mxu0 0.0
        %3619 = vmatpush1.msra.mxu0 0.0
        %3620 = vmatprep.subr.mxu0 0.0
        %3621 = vmatpush1.msra.mxu0 0.0
        %3622 = vmatprep.subr.mxu0 0.0
        %3623 = vmatpush1.msra.mxu0 0.0
        %3624 = vmatprep.subr.mxu0 0.0
        %3625 = vmatpush1.msra.mxu0 0.0
        %3626 = vmatprep.subr.mxu0 0.0
        %3627 = vmatpush1.msra.mxu0 0.0
        %3628 = vmatprep.subr.mxu0 0.0
        %3629 = vmatpush1.msra.mxu0 0.0
        %3630 = vmatprep.subr.mxu0 0.0
        %3631 = vmatpush1.msra.mxu0 0.0
        %3632 = vmatprep.subr.mxu0 0.0
        %3633 = vmatpush1.msra.mxu0 0.0
        %3634 = vmatprep.mubr.f32.mxu0 0.0
        %v3635 = vand.u32 %v3200, 4294901760
        %v3636 = vsub.f32 %v3200, %v3635
        %v3637 = vand.u32 %v3636, 4294901760
        %3638 = vmatmul.mubr.f32.gmra.mrb[0].mxu0 %v3637
        %v3639 = vpop.f32.mrb[0].mxu0
        %v3640 = vadd.f32 %v3538, %v3639
        %v3641 = vpop.f32.mrb[0].mxu0
        %3642 = vmatprep.mubr.f32.mxu0 0.0
        %v3643 = vand.u32 %v3203, 4294901760
        %v3644 = vsub.f32 %v3203, %v3643
        %v3645 = vand.u32 %v3644, 4294901760
        %3646 = vmatmul.mubr.f32.gmra.mrb[0].mxu0 %v3645
        %v3647 = vpop.f32.mrb[0].mxu0
        %v3648 = vadd.f32 %v3545, %v3647
        %v3649 = vpop.f32.mrb[0].mxu0
        %3650 = vmatprep.mubr.f32.mxu0 0.0
        %v3651 = vand.u32 %v3206, 4294901760
        %v3652 = vsub.f32 %v3206, %v3651
        %v3653 = vand.u32 %v3652, 4294901760
        %3654 = vmatmul.mubr.f32.gmra.mrb[0].mxu0 %v3653
        %v3655 = vpop.f32.mrb[0].mxu0
        %v3656 = vadd.f32 %v3552, %v3655
        %v3657 = vpop.f32.mrb[0].mxu0
        %3658 = vmatprep.mubr.f32.mxu0 0.0
        %v3659 = vand.u32 %v3209, 4294901760
        %v3660 = vsub.f32 %v3209, %v3659
        %v3661 = vand.u32 %v3660, 4294901760
        %3662 = vmatmul.mubr.f32.gmra.mrb[0].mxu0 %v3661
        %v3663 = vpop.f32.mrb[0].mxu0
        %v3664 = vadd.f32 %v3559, %v3663
        %v3665 = vpop.f32.mrb[0].mxu0
        %3666 = vdwg.mxu0
        %3667 = vmatprep.subr.mxu0 0.0
        %v3668 = vand.u32 %v2503, 4294901760
        %v3669 = vsub.f32 %v2503, %v3668
        %v3670 = vand.u32 %v3669, 4294901760
        %3671 = vmatpush1.msra.mxu0 %v3670
        %3672 = vmatprep.subr.mxu0 0.0
        %v3673 = vand.u32 %v2504, 4294901760
        %v3674 = vsub.f32 %v2504, %v3673
        %v3675 = vand.u32 %v3674, 4294901760
        %3676 = vmatpush1.msra.mxu0 %v3675
        %3677 = vmatprep.subr.mxu0 0.0
        %v3678 = vand.u32 %v2505, 4294901760
        %v3679 = vsub.f32 %v2505, %v3678
        %v3680 = vand.u32 %v3679, 4294901760
        %3681 = vmatpush1.msra.mxu0 %v3680
        %3682 = vmatprep.subr.mxu0 0.0
        %v3683 = vand.u32 %v2506, 4294901760
        %v3684 = vsub.f32 %v2506, %v3683
        %v3685 = vand.u32 %v3684, 4294901760
        %3686 = vmatpush1.msra.mxu0 %v3685
        %3687 = vmatprep.subr.mxu0 0.0
        %v3688 = vand.u32 %v2507, 4294901760
        %v3689 = vsub.f32 %v2507, %v3688
        %v3690 = vand.u32 %v3689, 4294901760
        %3691 = vmatpush1.msra.mxu0 %v3690
        %3692 = vmatprep.subr.mxu0 0.0
        %v3693 = vand.u32 %v2508, 4294901760
        %v3694 = vsub.f32 %v2508, %v3693
        %v3695 = vand.u32 %v3694, 4294901760
        %3696 = vmatpush1.msra.mxu0 %v3695
        %3697 = vmatprep.subr.mxu0 0.0
        %v3698 = vand.u32 %v2509, 4294901760
        %v3699 = vsub.f32 %v2509, %v3698
        %v3700 = vand.u32 %v3699, 4294901760
        %3701 = vmatpush1.msra.mxu0 %v3700
        %3702 = vmatprep.subr.mxu0 0.0
        %v3703 = vand.u32 %v2510, 4294901760
        %v3704 = vsub.f32 %v2510, %v3703
        %v3705 = vand.u32 %v3704, 4294901760
        %3706 = vmatpush1.msra.mxu0 %v3705
        %3707 = vmatprep.subr.mxu0 0.0
        %3708 = vmatpush1.msra.mxu0 0.0
        %3709 = vmatprep.subr.mxu0 0.0
        %3710 = vmatpush1.msra.mxu0 0.0
        %3711 = vmatprep.subr.mxu0 0.0
        %3712 = vmatpush1.msra.mxu0 0.0
        %3713 = vmatprep.subr.mxu0 0.0
        %3714 = vmatpush1.msra.mxu0 0.0
        %3715 = vmatprep.subr.mxu0 0.0
        %3716 = vmatpush1.msra.mxu0 0.0
        %3717 = vmatprep.subr.mxu0 0.0
        %3718 = vmatpush1.msra.mxu0 0.0
        %3719 = vmatprep.subr.mxu0 0.0
        %3720 = vmatpush1.msra.mxu0 0.0
        %3721 = vmatprep.subr.mxu0 0.0
        %3722 = vmatpush1.msra.mxu0 0.0
        %3723 = vmatprep.subr.mxu0 0.0
        %3724 = vmatpush1.msra.mxu0 0.0
        %3725 = vmatprep.subr.mxu0 0.0
        %3726 = vmatpush1.msra.mxu0 0.0
        %3727 = vmatprep.subr.mxu0 0.0
        %3728 = vmatpush1.msra.mxu0 0.0
        %3729 = vmatprep.subr.mxu0 0.0
        %3730 = vmatpush1.msra.mxu0 0.0
        %3731 = vmatprep.subr.mxu0 0.0
        %3732 = vmatpush1.msra.mxu0 0.0
        %3733 = vmatprep.subr.mxu0 0.0
        %3734 = vmatpush1.msra.mxu0 0.0
        %3735 = vmatprep.subr.mxu0 0.0
        %3736 = vmatpush1.msra.mxu0 0.0
        %3737 = vmatprep.subr.mxu0 0.0
        %3738 = vmatpush1.msra.mxu0 0.0
        %3739 = vmatprep.subr.mxu0 0.0
        %3740 = vmatpush1.msra.mxu0 0.0
        %3741 = vmatprep.subr.mxu0 0.0
        %3742 = vmatpush1.msra.mxu0 0.0
        %3743 = vmatprep.subr.mxu0 0.0
        %3744 = vmatpush1.msra.mxu0 0.0
        %3745 = vmatprep.subr.mxu0 0.0
        %3746 = vmatpush1.msra.mxu0 0.0
        %3747 = vmatprep.subr.mxu0 0.0
        %3748 = vmatpush1.msra.mxu0 0.0
        %3749 = vmatprep.subr.mxu0 0.0
        %3750 = vmatpush1.msra.mxu0 0.0
        %3751 = vmatprep.subr.mxu0 0.0
        %3752 = vmatpush1.msra.mxu0 0.0
        %3753 = vmatprep.subr.mxu0 0.0
        %3754 = vmatpush1.msra.mxu0 0.0
        %3755 = vmatprep.mubr.f32.mxu0 0.0
        %v3756 = vand.u32 %v3200, 4294901760
        %3757 = vmatmul.mubr.f32.gmra.mrb[0].mxu0 %v3756
        %v3758 = vpop.f32.mrb[0].mxu0
        %v3759 = vadd.f32 %v3640, %v3758
        %v3760 = vpop.f32.mrb[0].mxu0
        %3761 = vmatprep.mubr.f32.mxu0 0.0
        %v3762 = vand.u32 %v3203, 4294901760
        %3763 = vmatmul.mubr.f32.gmra.mrb[0].mxu0 %v3762
        %v3764 = vpop.f32.mrb[0].mxu0
        %v3765 = vadd.f32 %v3648, %v3764
        %v3766 = vpop.f32.mrb[0].mxu0
        %3767 = vmatprep.mubr.f32.mxu0 0.0
        %v3768 = vand.u32 %v3206, 4294901760
        %3769 = vmatmul.mubr.f32.gmra.mrb[0].mxu0 %v3768
        %v3770 = vpop.f32.mrb[0].mxu0
        %v3771 = vadd.f32 %v3656, %v3770
        %v3772 = vpop.f32.mrb[0].mxu0
        %3773 = vmatprep.mubr.f32.mxu0 0.0
        %v3774 = vand.u32 %v3209, 4294901760
        %3775 = vmatmul.mubr.f32.gmra.mrb[0].mxu0 %v3774
        %v3776 = vpop.f32.mrb[0].mxu0
        %v3777 = vadd.f32 %v3664, %v3776
        %v3778 = vpop.f32.mrb[0].mxu0
        %3779 = vdwg.mxu0
        %3780 = vmatprep.subr.mxu0 0.0
        %v3781 = vand.u32 %v2503, 4294901760
        %3782 = vmatpush1.msra.mxu0 %v3781
        %3783 = vmatprep.subr.mxu0 0.0
        %v3784 = vand.u32 %v2504, 4294901760
        %3785 = vmatpush1.msra.mxu0 %v3784
        %3786 = vmatprep.subr.mxu0 0.0
        %v3787 = vand.u32 %v2505, 4294901760
        %3788 = vmatpush1.msra.mxu0 %v3787
        %3789 = vmatprep.subr.mxu0 0.0
        %v3790 = vand.u32 %v2506, 4294901760
        %3791 = vmatpush1.msra.mxu0 %v3790
        %3792 = vmatprep.subr.mxu0 0.0
        %v3793 = vand.u32 %v2507, 4294901760
        %3794 = vmatpush1.msra.mxu0 %v3793
        %3795 = vmatprep.subr.mxu0 0.0
        %v3796 = vand.u32 %v2508, 4294901760
        %3797 = vmatpush1.msra.mxu0 %v3796
        %3798 = vmatprep.subr.mxu0 0.0
        %v3799 = vand.u32 %v2509, 4294901760
        %3800 = vmatpush1.msra.mxu0 %v3799
        %3801 = vmatprep.subr.mxu0 0.0
        %v3802 = vand.u32 %v2510, 4294901760
        %3803 = vmatpush1.msra.mxu0 %v3802
        %3804 = vmatprep.subr.mxu0 0.0
        %3805 = vmatpush1.msra.mxu0 0.0
        %3806 = vmatprep.subr.mxu0 0.0
        %3807 = vmatpush1.msra.mxu0 0.0
        %3808 = vmatprep.subr.mxu0 0.0
        %3809 = vmatpush1.msra.mxu0 0.0
        %3810 = vmatprep.subr.mxu0 0.0
        %3811 = vmatpush1.msra.mxu0 0.0
        %3812 = vmatprep.subr.mxu0 0.0
        %3813 = vmatpush1.msra.mxu0 0.0
        %3814 = vmatprep.subr.mxu0 0.0
        %3815 = vmatpush1.msra.mxu0 0.0
        %3816 = vmatprep.subr.mxu0 0.0
        %3817 = vmatpush1.msra.mxu0 0.0
        %3818 = vmatprep.subr.mxu0 0.0
        %3819 = vmatpush1.msra.mxu0 0.0
        %3820 = vmatprep.subr.mxu0 0.0
        %3821 = vmatpush1.msra.mxu0 0.0
        %3822 = vmatprep.subr.mxu0 0.0
        %3823 = vmatpush1.msra.mxu0 0.0
        %3824 = vmatprep.subr.mxu0 0.0
        %3825 = vmatpush1.msra.mxu0 0.0
        %3826 = vmatprep.subr.mxu0 0.0
        %3827 = vmatpush1.msra.mxu0 0.0
        %3828 = vmatprep.subr.mxu0 0.0
        %3829 = vmatpush1.msra.mxu0 0.0
        %3830 = vmatprep.subr.mxu0 0.0
        %3831 = vmatpush1.msra.mxu0 0.0
        %3832 = vmatprep.subr.mxu0 0.0
        %3833 = vmatpush1.msra.mxu0 0.0
        %3834 = vmatprep.subr.mxu0 0.0
        %3835 = vmatpush1.msra.mxu0 0.0
        %3836 = vmatprep.subr.mxu0 0.0
        %3837 = vmatpush1.msra.mxu0 0.0
        %3838 = vmatprep.subr.mxu0 0.0
        %3839 = vmatpush1.msra.mxu0 0.0
        %3840 = vmatprep.subr.mxu0 0.0
        %3841 = vmatpush1.msra.mxu0 0.0
        %3842 = vmatprep.subr.mxu0 0.0
        %3843 = vmatpush1.msra.mxu0 0.0
        %3844 = vmatprep.subr.mxu0 0.0
        %3845 = vmatpush1.msra.mxu0 0.0
        %3846 = vmatprep.subr.mxu0 0.0
        %3847 = vmatpush1.msra.mxu0 0.0
        %3848 = vmatprep.subr.mxu0 0.0
        %3849 = vmatpush1.msra.mxu0 0.0
        %3850 = vmatprep.subr.mxu0 0.0
        %3851 = vmatpush1.msra.mxu0 0.0
        %3852 = vmatprep.mubr.f32.mxu0 0.0
        %v3853 = vand.u32 %v3200, 4294901760
        %3854 = vmatmul.mubr.f32.gmra.mrb[0].mxu0 %v3853
        %v3855 = vpop.f32.mrb[0].mxu0
        %v3856 = vadd.f32 %v3759, %v3855
        %v3857 = vpop.f32.mrb[0].mxu0
        %3858 = vmatprep.mubr.f32.mxu0 0.0
        %v3859 = vand.u32 %v3203, 4294901760
        %3860 = vmatmul.mubr.f32.gmra.mrb[0].mxu0 %v3859
        %v3861 = vpop.f32.mrb[0].mxu0
        %v3862 = vadd.f32 %v3765, %v3861
        %v3863 = vpop.f32.mrb[0].mxu0
        %3864 = vmatprep.mubr.f32.mxu0 0.0
        %v3865 = vand.u32 %v3206, 4294901760
        %3866 = vmatmul.mubr.f32.gmra.mrb[0].mxu0 %v3865
        %v3867 = vpop.f32.mrb[0].mxu0
        %v3868 = vadd.f32 %v3771, %v3867
        %v3869 = vpop.f32.mrb[0].mxu0
        %3870 = vmatprep.mubr.f32.mxu0 0.0
        %v3871 = vand.u32 %v3209, 4294901760
        %3872 = vmatmul.mubr.f32.gmra.mrb[0].mxu0 %v3871
        %v3873 = vpop.f32.mrb[0].mxu0
        %v3874 = vadd.f32 %v3777, %v3873
        %v3875 = vpop.f32.mrb[0].mxu0
        %3876 = vdwg.mxu0
        %s3877 = scalar_lea.vmem %s3, 128
        %v3878 = vld [vmem:[%s3877] sm:$0xff]
        %v3879 = vld [vmem:[%s3877 + $0x8] sm:$0xff]
        %v3880 = vld [vmem:[%s3877 + $0x10] sm:$0xff]
        %v3881 = vld [vmem:[%s3877 + $0x18] sm:$0xff]
        %v3882 = vld [vmem:[%s3877 + $0x20] sm:$0xff]
        %v3883 = vld [vmem:[%s3877 + $0x28] sm:$0xff]
        %v3884 = vld [vmem:[%s3877 + $0x30] sm:$0xff]
        %v3885 = vld [vmem:[%s3877 + $0x38] sm:$0xff]
        %v3887 = vsel %vm2520, %v2499, 0
        %v3890 = vsel %vm2520, %v2500, 0
        %v3893 = vsel %vm2520, %v2501, 0
        %v3896 = vsel %vm2520, %v2502, 0
        %3898 = vmatprep.subr.mxu0 0.0
        %v3899 = vand.u32 %v3878, 4294901760
        %3900 = vmatpush1.msra.mxu0 %v3899
        %3901 = vmatprep.subr.mxu0 0.0
        %v3902 = vand.u32 %v3879, 4294901760
        %3903 = vmatpush1.msra.mxu0 %v3902
        %3904 = vmatprep.subr.mxu0 0.0
        %v3905 = vand.u32 %v3880, 4294901760
        %3906 = vmatpush1.msra.mxu0 %v3905
        %3907 = vmatprep.subr.mxu0 0.0
        %v3908 = vand.u32 %v3881, 4294901760
        %3909 = vmatpush1.msra.mxu0 %v3908
        %3910 = vmatprep.subr.mxu0 0.0
        %v3911 = vand.u32 %v3882, 4294901760
        %3912 = vmatpush1.msra.mxu0 %v3911
        %3913 = vmatprep.subr.mxu0 0.0
        %v3914 = vand.u32 %v3883, 4294901760
        %3915 = vmatpush1.msra.mxu0 %v3914
        %3916 = vmatprep.subr.mxu0 0.0
        %v3917 = vand.u32 %v3884, 4294901760
        %3918 = vmatpush1.msra.mxu0 %v3917
        %3919 = vmatprep.subr.mxu0 0.0
        %v3920 = vand.u32 %v3885, 4294901760
        %3921 = vmatpush1.msra.mxu0 %v3920
        %3922 = vmatprep.subr.mxu0 0.0
        %3923 = vmatpush1.msra.mxu0 0.0
        %3924 = vmatprep.subr.mxu0 0.0
        %3925 = vmatpush1.msra.mxu0 0.0
        %3926 = vmatprep.subr.mxu0 0.0
        %3927 = vmatpush1.msra.mxu0 0.0
        %3928 = vmatprep.subr.mxu0 0.0
        %3929 = vmatpush1.msra.mxu0 0.0
        %3930 = vmatprep.subr.mxu0 0.0
        %3931 = vmatpush1.msra.mxu0 0.0
        %3932 = vmatprep.subr.mxu0 0.0
        %3933 = vmatpush1.msra.mxu0 0.0
        %3934 = vmatprep.subr.mxu0 0.0
        %3935 = vmatpush1.msra.mxu0 0.0
        %3936 = vmatprep.subr.mxu0 0.0
        %3937 = vmatpush1.msra.mxu0 0.0
        %3938 = vmatprep.subr.mxu0 0.0
        %3939 = vmatpush1.msra.mxu0 0.0
        %3940 = vmatprep.subr.mxu0 0.0
        %3941 = vmatpush1.msra.mxu0 0.0
        %3942 = vmatprep.subr.mxu0 0.0
        %3943 = vmatpush1.msra.mxu0 0.0
        %3944 = vmatprep.subr.mxu0 0.0
        %3945 = vmatpush1.msra.mxu0 0.0
        %3946 = vmatprep.subr.mxu0 0.0
        %3947 = vmatpush1.msra.mxu0 0.0
        %3948 = vmatprep.subr.mxu0 0.0
        %3949 = vmatpush1.msra.mxu0 0.0
        %3950 = vmatprep.subr.mxu0 0.0
        %3951 = vmatpush1.msra.mxu0 0.0
        %3952 = vmatprep.subr.mxu0 0.0
        %3953 = vmatpush1.msra.mxu0 0.0
        %3954 = vmatprep.subr.mxu0 0.0
        %3955 = vmatpush1.msra.mxu0 0.0
        %3956 = vmatprep.subr.mxu0 0.0
        %3957 = vmatpush1.msra.mxu0 0.0
        %3958 = vmatprep.subr.mxu0 0.0
        %3959 = vmatpush1.msra.mxu0 0.0
        %3960 = vmatprep.subr.mxu0 0.0
        %3961 = vmatpush1.msra.mxu0 0.0
        %3962 = vmatprep.subr.mxu0 0.0
        %3963 = vmatpush1.msra.mxu0 0.0
        %3964 = vmatprep.subr.mxu0 0.0
        %3965 = vmatpush1.msra.mxu0 0.0
        %3966 = vmatprep.subr.mxu0 0.0
        %3967 = vmatpush1.msra.mxu0 0.0
        %3968 = vmatprep.subr.mxu0 0.0
        %3969 = vmatpush1.msra.mxu0 0.0
        %3970 = vmatprep.mubr.f32.mxu0 0.0
        %v3971 = vand.u32 %v3887, 4294901760
        %v3972 = vsub.f32 %v3887, %v3971
        %v3973 = vand.u32 %v3972, 4294901760
        %v3974 = vsub.f32 %v3972, %v3973
        %v3975 = vand.u32 %v3974, 4294901760
        %3976 = vmatmul.mubr.f32.gmra.mrb[0].mxu0 %v3975
        %v3977 = vpop.f32.mrb[0].mxu0
        %v3978 = vadd.f32 0.0, %v3977
        %v3979 = vpop.f32.mrb[0].mxu0
        %3980 = vmatprep.mubr.f32.mxu0 0.0
        %v3981 = vand.u32 %v3890, 4294901760
        %v3982 = vsub.f32 %v3890, %v3981
        %v3983 = vand.u32 %v3982, 4294901760
        %v3984 = vsub.f32 %v3982, %v3983
        %v3985 = vand.u32 %v3984, 4294901760
        %3986 = vmatmul.mubr.f32.gmra.mrb[0].mxu0 %v3985
        %v3987 = vpop.f32.mrb[0].mxu0
        %v3988 = vadd.f32 0.0, %v3987
        %v3989 = vpop.f32.mrb[0].mxu0
        %3990 = vmatprep.mubr.f32.mxu0 0.0
        %v3991 = vand.u32 %v3893, 4294901760
        %v3992 = vsub.f32 %v3893, %v3991
        %v3993 = vand.u32 %v3992, 4294901760
        %v3994 = vsub.f32 %v3992, %v3993
        %v3995 = vand.u32 %v3994, 4294901760
        %3996 = vmatmul.mubr.f32.gmra.mrb[0].mxu0 %v3995
        %v3997 = vpop.f32.mrb[0].mxu0
        %v3998 = vadd.f32 0.0, %v3997
        %v3999 = vpop.f32.mrb[0].mxu0
        %4000 = vmatprep.mubr.f32.mxu0 0.0
        %v4001 = vand.u32 %v3896, 4294901760
        %v4002 = vsub.f32 %v3896, %v4001
        %v4003 = vand.u32 %v4002, 4294901760
        %v4004 = vsub.f32 %v4002, %v4003
        %v4005 = vand.u32 %v4004, 4294901760
        %4006 = vmatmul.mubr.f32.gmra.mrb[0].mxu0 %v4005
        %v4007 = vpop.f32.mrb[0].mxu0
        %v4008 = vadd.f32 0.0, %v4007
        %v4009 = vpop.f32.mrb[0].mxu0
        %4010 = vdwg.mxu0
        %4011 = vmatprep.subr.mxu0 0.0
        %v4012 = vand.u32 %v3878, 4294901760
        %v4013 = vsub.f32 %v3878, %v4012
        %v4014 = vand.u32 %v4013, 4294901760
        %v4015 = vsub.f32 %v4013, %v4014
        %v4016 = vand.u32 %v4015, 4294901760
        %4017 = vmatpush1.msra.mxu0 %v4016
        %4018 = vmatprep.subr.mxu0 0.0
        %v4019 = vand.u32 %v3879, 4294901760
        %v4020 = vsub.f32 %v3879, %v4019
        %v4021 = vand.u32 %v4020, 4294901760
        %v4022 = vsub.f32 %v4020, %v4021
        %v4023 = vand.u32 %v4022, 4294901760
        %4024 = vmatpush1.msra.mxu0 %v4023
        %4025 = vmatprep.subr.mxu0 0.0
        %v4026 = vand.u32 %v3880, 4294901760
        %v4027 = vsub.f32 %v3880, %v4026
        %v4028 = vand.u32 %v4027, 4294901760
        %v4029 = vsub.f32 %v4027, %v4028
        %v4030 = vand.u32 %v4029, 4294901760
        %4031 = vmatpush1.msra.mxu0 %v4030
        %4032 = vmatprep.subr.mxu0 0.0
        %v4033 = vand.u32 %v3881, 4294901760
        %v4034 = vsub.f32 %v3881, %v4033
        %v4035 = vand.u32 %v4034, 4294901760
        %v4036 = vsub.f32 %v4034, %v4035
        %v4037 = vand.u32 %v4036, 4294901760
        %4038 = vmatpush1.msra.mxu0 %v4037
        %4039 = vmatprep.subr.mxu0 0.0
        %v4040 = vand.u32 %v3882, 4294901760
        %v4041 = vsub.f32 %v3882, %v4040
        %v4042 = vand.u32 %v4041, 4294901760
        %v4043 = vsub.f32 %v4041, %v4042
        %v4044 = vand.u32 %v4043, 4294901760
        %4045 = vmatpush1.msra.mxu0 %v4044
        %4046 = vmatprep.subr.mxu0 0.0
        %v4047 = vand.u32 %v3883, 4294901760
        %v4048 = vsub.f32 %v3883, %v4047
        %v4049 = vand.u32 %v4048, 4294901760
        %v4050 = vsub.f32 %v4048, %v4049
        %v4051 = vand.u32 %v4050, 4294901760
        %4052 = vmatpush1.msra.mxu0 %v4051
        %4053 = vmatprep.subr.mxu0 0.0
        %v4054 = vand.u32 %v3884, 4294901760
        %v4055 = vsub.f32 %v3884, %v4054
        %v4056 = vand.u32 %v4055, 4294901760
        %v4057 = vsub.f32 %v4055, %v4056
        %v4058 = vand.u32 %v4057, 4294901760
        %4059 = vmatpush1.msra.mxu0 %v4058
        %4060 = vmatprep.subr.mxu0 0.0
        %v4061 = vand.u32 %v3885, 4294901760
        %v4062 = vsub.f32 %v3885, %v4061
        %v4063 = vand.u32 %v4062, 4294901760
        %v4064 = vsub.f32 %v4062, %v4063
        %v4065 = vand.u32 %v4064, 4294901760
        %4066 = vmatpush1.msra.mxu0 %v4065
        %4067 = vmatprep.subr.mxu0 0.0
        %4068 = vmatpush1.msra.mxu0 0.0
        %4069 = vmatprep.subr.mxu0 0.0
        %4070 = vmatpush1.msra.mxu0 0.0
        %4071 = vmatprep.subr.mxu0 0.0
        %4072 = vmatpush1.msra.mxu0 0.0
        %4073 = vmatprep.subr.mxu0 0.0
        %4074 = vmatpush1.msra.mxu0 0.0
        %4075 = vmatprep.subr.mxu0 0.0
        %4076 = vmatpush1.msra.mxu0 0.0
        %4077 = vmatprep.subr.mxu0 0.0
        %4078 = vmatpush1.msra.mxu0 0.0
        %4079 = vmatprep.subr.mxu0 0.0
        %4080 = vmatpush1.msra.mxu0 0.0
        %4081 = vmatprep.subr.mxu0 0.0
        %4082 = vmatpush1.msra.mxu0 0.0
        %4083 = vmatprep.subr.mxu0 0.0
        %4084 = vmatpush1.msra.mxu0 0.0
        %4085 = vmatprep.subr.mxu0 0.0
        %4086 = vmatpush1.msra.mxu0 0.0
        %4087 = vmatprep.subr.mxu0 0.0
        %4088 = vmatpush1.msra.mxu0 0.0
        %4089 = vmatprep.subr.mxu0 0.0
        %4090 = vmatpush1.msra.mxu0 0.0
        %4091 = vmatprep.subr.mxu0 0.0
        %4092 = vmatpush1.msra.mxu0 0.0
        %4093 = vmatprep.subr.mxu0 0.0
        %4094 = vmatpush1.msra.mxu0 0.0
        %4095 = vmatprep.subr.mxu0 0.0
        %4096 = vmatpush1.msra.mxu0 0.0
        %4097 = vmatprep.subr.mxu0 0.0
        %4098 = vmatpush1.msra.mxu0 0.0
        %4099 = vmatprep.subr.mxu0 0.0
        %4100 = vmatpush1.msra.mxu0 0.0
        %4101 = vmatprep.subr.mxu0 0.0
        %4102 = vmatpush1.msra.mxu0 0.0
        %4103 = vmatprep.subr.mxu0 0.0
        %4104 = vmatpush1.msra.mxu0 0.0
        %4105 = vmatprep.subr.mxu0 0.0
        %4106 = vmatpush1.msra.mxu0 0.0
        %4107 = vmatprep.subr.mxu0 0.0
        %4108 = vmatpush1.msra.mxu0 0.0
        %4109 = vmatprep.subr.mxu0 0.0
        %4110 = vmatpush1.msra.mxu0 0.0
        %4111 = vmatprep.subr.mxu0 0.0
        %4112 = vmatpush1.msra.mxu0 0.0
        %4113 = vmatprep.subr.mxu0 0.0
        %4114 = vmatpush1.msra.mxu0 0.0
        %4115 = vmatprep.mubr.f32.mxu0 0.0
        %v4116 = vand.u32 %v3887, 4294901760
        %4117 = vmatmul.mubr.f32.gmra.mrb[0].mxu0 %v4116
        %v4118 = vpop.f32.mrb[0].mxu0
        %v4119 = vadd.f32 %v3978, %v4118
        %v4120 = vpop.f32.mrb[0].mxu0
        %4121 = vmatprep.mubr.f32.mxu0 0.0
        %v4122 = vand.u32 %v3890, 4294901760
        %4123 = vmatmul.mubr.f32.gmra.mrb[0].mxu0 %v4122
        %v4124 = vpop.f32.mrb[0].mxu0
        %v4125 = vadd.f32 %v3988, %v4124
        %v4126 = vpop.f32.mrb[0].mxu0
        %4127 = vmatprep.mubr.f32.mxu0 0.0
        %v4128 = vand.u32 %v3893, 4294901760
        %4129 = vmatmul.mubr.f32.gmra.mrb[0].mxu0 %v4128
        %v4130 = vpop.f32.mrb[0].mxu0
        %v4131 = vadd.f32 %v3998, %v4130
        %v4132 = vpop.f32.mrb[0].mxu0
        %4133 = vmatprep.mubr.f32.mxu0 0.0
        %v4134 = vand.u32 %v3896, 4294901760
        %4135 = vmatmul.mubr.f32.gmra.mrb[0].mxu0 %v4134
        %v4136 = vpop.f32.mrb[0].mxu0
        %v4137 = vadd.f32 %v4008, %v4136
        %v4138 = vpop.f32.mrb[0].mxu0
        %4139 = vdwg.mxu0
        %4140 = vmatprep.subr.mxu0 0.0
        %v4141 = vand.u32 %v3878, 4294901760
        %v4142 = vsub.f32 %v3878, %v4141
        %4143 = vmatpush1.msra.mxu0 %v4142
        %4144 = vmatprep.subr.mxu0 0.0
        %v4145 = vand.u32 %v3879, 4294901760
        %v4146 = vsub.f32 %v3879, %v4145
        %4147 = vmatpush1.msra.mxu0 %v4146
        %4148 = vmatprep.subr.mxu0 0.0
        %v4149 = vand.u32 %v3880, 4294901760
        %v4150 = vsub.f32 %v3880, %v4149
        %4151 = vmatpush1.msra.mxu0 %v4150
        %4152 = vmatprep.subr.mxu0 0.0
        %v4153 = vand.u32 %v3881, 4294901760
        %v4154 = vsub.f32 %v3881, %v4153
        %4155 = vmatpush1.msra.mxu0 %v4154
        %4156 = vmatprep.subr.mxu0 0.0
        %v4157 = vand.u32 %v3882, 4294901760
        %v4158 = vsub.f32 %v3882, %v4157
        %4159 = vmatpush1.msra.mxu0 %v4158
        %4160 = vmatprep.subr.mxu0 0.0
        %v4161 = vand.u32 %v3883, 4294901760
        %v4162 = vsub.f32 %v3883, %v4161
        %4163 = vmatpush1.msra.mxu0 %v4162
        %4164 = vmatprep.subr.mxu0 0.0
        %v4165 = vand.u32 %v3884, 4294901760
        %v4166 = vsub.f32 %v3884, %v4165
        %4167 = vmatpush1.msra.mxu0 %v4166
        %4168 = vmatprep.subr.mxu0 0.0
        %v4169 = vand.u32 %v3885, 4294901760
        %v4170 = vsub.f32 %v3885, %v4169
        %4171 = vmatpush1.msra.mxu0 %v4170
        %4172 = vmatprep.subr.mxu0 0.0
        %4173 = vmatpush1.msra.mxu0 0.0
        %4174 = vmatprep.subr.mxu0 0.0
        %4175 = vmatpush1.msra.mxu0 0.0
        %4176 = vmatprep.subr.mxu0 0.0
        %4177 = vmatpush1.msra.mxu0 0.0
        %4178 = vmatprep.subr.mxu0 0.0
        %4179 = vmatpush1.msra.mxu0 0.0
        %4180 = vmatprep.subr.mxu0 0.0
        %4181 = vmatpush1.msra.mxu0 0.0
        %4182 = vmatprep.subr.mxu0 0.0
        %4183 = vmatpush1.msra.mxu0 0.0
        %4184 = vmatprep.subr.mxu0 0.0
        %4185 = vmatpush1.msra.mxu0 0.0
        %4186 = vmatprep.subr.mxu0 0.0
        %4187 = vmatpush1.msra.mxu0 0.0
        %4188 = vmatprep.subr.mxu0 0.0
        %4189 = vmatpush1.msra.mxu0 0.0
        %4190 = vmatprep.subr.mxu0 0.0
        %4191 = vmatpush1.msra.mxu0 0.0
        %4192 = vmatprep.subr.mxu0 0.0
        %4193 = vmatpush1.msra.mxu0 0.0
        %4194 = vmatprep.subr.mxu0 0.0
        %4195 = vmatpush1.msra.mxu0 0.0
        %4196 = vmatprep.subr.mxu0 0.0
        %4197 = vmatpush1.msra.mxu0 0.0
        %4198 = vmatprep.subr.mxu0 0.0
        %4199 = vmatpush1.msra.mxu0 0.0
        %4200 = vmatprep.subr.mxu0 0.0
        %4201 = vmatpush1.msra.mxu0 0.0
        %4202 = vmatprep.subr.mxu0 0.0
        %4203 = vmatpush1.msra.mxu0 0.0
        %4204 = vmatprep.subr.mxu0 0.0
        %4205 = vmatpush1.msra.mxu0 0.0
        %4206 = vmatprep.subr.mxu0 0.0
        %4207 = vmatpush1.msra.mxu0 0.0
        %4208 = vmatprep.subr.mxu0 0.0
        %4209 = vmatpush1.msra.mxu0 0.0
        %4210 = vmatprep.subr.mxu0 0.0
        %4211 = vmatpush1.msra.mxu0 0.0
        %4212 = vmatprep.subr.mxu0 0.0
        %4213 = vmatpush1.msra.mxu0 0.0
        %4214 = vmatprep.subr.mxu0 0.0
        %4215 = vmatpush1.msra.mxu0 0.0
        %4216 = vmatprep.subr.mxu0 0.0
        %4217 = vmatpush1.msra.mxu0 0.0
        %4218 = vmatprep.subr.mxu0 0.0
        %4219 = vmatpush1.msra.mxu0 0.0
        %4220 = vmatprep.mubr.f32.mxu0 0.0
        %v4221 = vand.u32 %v3887, 4294901760
        %v4222 = vsub.f32 %v3887, %v4221
        %4223 = vmatmul.mubr.f32.gmra.mrb[0].mxu0 %v4222
        %v4224 = vpop.f32.mrb[0].mxu0
        %v4225 = vadd.f32 %v4119, %v4224
        %v4226 = vpop.f32.mrb[0].mxu0
        %4227 = vmatprep.mubr.f32.mxu0 0.0
        %v4228 = vand.u32 %v3890, 4294901760
        %v4229 = vsub.f32 %v3890, %v4228
        %4230 = vmatmul.mubr.f32.gmra.mrb[0].mxu0 %v4229
        %v4231 = vpop.f32.mrb[0].mxu0
        %v4232 = vadd.f32 %v4125, %v4231
        %v4233 = vpop.f32.mrb[0].mxu0
        %4234 = vmatprep.mubr.f32.mxu0 0.0
        %v4235 = vand.u32 %v3893, 4294901760
        %v4236 = vsub.f32 %v3893, %v4235
        %4237 = vmatmul.mubr.f32.gmra.mrb[0].mxu0 %v4236
        %v4238 = vpop.f32.mrb[0].mxu0
        %v4239 = vadd.f32 %v4131, %v4238
        %v4240 = vpop.f32.mrb[0].mxu0
        %4241 = vmatprep.mubr.f32.mxu0 0.0
        %v4242 = vand.u32 %v3896, 4294901760
        %v4243 = vsub.f32 %v3896, %v4242
        %4244 = vmatmul.mubr.f32.gmra.mrb[0].mxu0 %v4243
        %v4245 = vpop.f32.mrb[0].mxu0
        %v4246 = vadd.f32 %v4137, %v4245
        %v4247 = vpop.f32.mrb[0].mxu0
        %4248 = vdwg.mxu0
        %4249 = vmatprep.subr.mxu0 0.0
        %v4250 = vand.u32 %v3878, 4294901760
        %4251 = vmatpush1.msra.mxu0 %v4250
        %4252 = vmatprep.subr.mxu0 0.0
        %v4253 = vand.u32 %v3879, 4294901760
        %4254 = vmatpush1.msra.mxu0 %v4253
        %4255 = vmatprep.subr.mxu0 0.0
        %v4256 = vand.u32 %v3880, 4294901760
        %4257 = vmatpush1.msra.mxu0 %v4256
        %4258 = vmatprep.subr.mxu0 0.0
        %v4259 = vand.u32 %v3881, 4294901760
        %4260 = vmatpush1.msra.mxu0 %v4259
        %4261 = vmatprep.subr.mxu0 0.0
        %v4262 = vand.u32 %v3882, 4294901760
        %4263 = vmatpush1.msra.mxu0 %v4262
        %4264 = vmatprep.subr.mxu0 0.0
        %v4265 = vand.u32 %v3883, 4294901760
        %4266 = vmatpush1.msra.mxu0 %v4265
        %4267 = vmatprep.subr.mxu0 0.0
        %v4268 = vand.u32 %v3884, 4294901760
        %4269 = vmatpush1.msra.mxu0 %v4268
        %4270 = vmatprep.subr.mxu0 0.0
        %v4271 = vand.u32 %v3885, 4294901760
        %4272 = vmatpush1.msra.mxu0 %v4271
        %4273 = vmatprep.subr.mxu0 0.0
        %4274 = vmatpush1.msra.mxu0 0.0
        %4275 = vmatprep.subr.mxu0 0.0
        %4276 = vmatpush1.msra.mxu0 0.0
        %4277 = vmatprep.subr.mxu0 0.0
        %4278 = vmatpush1.msra.mxu0 0.0
        %4279 = vmatprep.subr.mxu0 0.0
        %4280 = vmatpush1.msra.mxu0 0.0
        %4281 = vmatprep.subr.mxu0 0.0
        %4282 = vmatpush1.msra.mxu0 0.0
        %4283 = vmatprep.subr.mxu0 0.0
        %4284 = vmatpush1.msra.mxu0 0.0
        %4285 = vmatprep.subr.mxu0 0.0
        %4286 = vmatpush1.msra.mxu0 0.0
        %4287 = vmatprep.subr.mxu0 0.0
        %4288 = vmatpush1.msra.mxu0 0.0
        %4289 = vmatprep.subr.mxu0 0.0
        %4290 = vmatpush1.msra.mxu0 0.0
        %4291 = vmatprep.subr.mxu0 0.0
        %4292 = vmatpush1.msra.mxu0 0.0
        %4293 = vmatprep.subr.mxu0 0.0
        %4294 = vmatpush1.msra.mxu0 0.0
        %4295 = vmatprep.subr.mxu0 0.0
        %4296 = vmatpush1.msra.mxu0 0.0
        %4297 = vmatprep.subr.mxu0 0.0
        %4298 = vmatpush1.msra.mxu0 0.0
        %4299 = vmatprep.subr.mxu0 0.0
        %4300 = vmatpush1.msra.mxu0 0.0
        %4301 = vmatprep.subr.mxu0 0.0
        %4302 = vmatpush1.msra.mxu0 0.0
        %4303 = vmatprep.subr.mxu0 0.0
        %4304 = vmatpush1.msra.mxu0 0.0
        %4305 = vmatprep.subr.mxu0 0.0
        %4306 = vmatpush1.msra.mxu0 0.0
        %4307 = vmatprep.subr.mxu0 0.0
        %4308 = vmatpush1.msra.mxu0 0.0
        %4309 = vmatprep.subr.mxu0 0.0
        %4310 = vmatpush1.msra.mxu0 0.0
        %4311 = vmatprep.subr.mxu0 0.0
        %4312 = vmatpush1.msra.mxu0 0.0
        %4313 = vmatprep.subr.mxu0 0.0
        %4314 = vmatpush1.msra.mxu0 0.0
        %4315 = vmatprep.subr.mxu0 0.0
        %4316 = vmatpush1.msra.mxu0 0.0
        %4317 = vmatprep.subr.mxu0 0.0
        %4318 = vmatpush1.msra.mxu0 0.0
        %4319 = vmatprep.subr.mxu0 0.0
        %4320 = vmatpush1.msra.mxu0 0.0
        %4321 = vmatprep.mubr.f32.mxu0 0.0
        %v4322 = vand.u32 %v3887, 4294901760
        %v4323 = vsub.f32 %v3887, %v4322
        %v4324 = vand.u32 %v4323, 4294901760
        %4325 = vmatmul.mubr.f32.gmra.mrb[0].mxu0 %v4324
        %v4326 = vpop.f32.mrb[0].mxu0
        %v4327 = vadd.f32 %v4225, %v4326
        %v4328 = vpop.f32.mrb[0].mxu0
        %4329 = vmatprep.mubr.f32.mxu0 0.0
        %v4330 = vand.u32 %v3890, 4294901760
        %v4331 = vsub.f32 %v3890, %v4330
        %v4332 = vand.u32 %v4331, 4294901760
        %4333 = vmatmul.mubr.f32.gmra.mrb[0].mxu0 %v4332
        %v4334 = vpop.f32.mrb[0].mxu0
        %v4335 = vadd.f32 %v4232, %v4334
        %v4336 = vpop.f32.mrb[0].mxu0
        %4337 = vmatprep.mubr.f32.mxu0 0.0
        %v4338 = vand.u32 %v3893, 4294901760
        %v4339 = vsub.f32 %v3893, %v4338
        %v4340 = vand.u32 %v4339, 4294901760
        %4341 = vmatmul.mubr.f32.gmra.mrb[0].mxu0 %v4340
        %v4342 = vpop.f32.mrb[0].mxu0
        %v4343 = vadd.f32 %v4239, %v4342
        %v4344 = vpop.f32.mrb[0].mxu0
        %4345 = vmatprep.mubr.f32.mxu0 0.0
        %v4346 = vand.u32 %v3896, 4294901760
        %v4347 = vsub.f32 %v3896, %v4346
        %v4348 = vand.u32 %v4347, 4294901760
        %4349 = vmatmul.mubr.f32.gmra.mrb[0].mxu0 %v4348
        %v4350 = vpop.f32.mrb[0].mxu0
        %v4351 = vadd.f32 %v4246, %v4350
        %v4352 = vpop.f32.mrb[0].mxu0
        %4353 = vdwg.mxu0
        %4354 = vmatprep.subr.mxu0 0.0
        %v4355 = vand.u32 %v3878, 4294901760
        %v4356 = vsub.f32 %v3878, %v4355
        %v4357 = vand.u32 %v4356, 4294901760
        %4358 = vmatpush1.msra.mxu0 %v4357
        %4359 = vmatprep.subr.mxu0 0.0
        %v4360 = vand.u32 %v3879, 4294901760
        %v4361 = vsub.f32 %v3879, %v4360
        %v4362 = vand.u32 %v4361, 4294901760
        %4363 = vmatpush1.msra.mxu0 %v4362
        %4364 = vmatprep.subr.mxu0 0.0
        %v4365 = vand.u32 %v3880, 4294901760
        %v4366 = vsub.f32 %v3880, %v4365
        %v4367 = vand.u32 %v4366, 4294901760
        %4368 = vmatpush1.msra.mxu0 %v4367
        %4369 = vmatprep.subr.mxu0 0.0
        %v4370 = vand.u32 %v3881, 4294901760
        %v4371 = vsub.f32 %v3881, %v4370
        %v4372 = vand.u32 %v4371, 4294901760
        %4373 = vmatpush1.msra.mxu0 %v4372
        %4374 = vmatprep.subr.mxu0 0.0
        %v4375 = vand.u32 %v3882, 4294901760
        %v4376 = vsub.f32 %v3882, %v4375
        %v4377 = vand.u32 %v4376, 4294901760
        %4378 = vmatpush1.msra.mxu0 %v4377
        %4379 = vmatprep.subr.mxu0 0.0
        %v4380 = vand.u32 %v3883, 4294901760
        %v4381 = vsub.f32 %v3883, %v4380
        %v4382 = vand.u32 %v4381, 4294901760
        %4383 = vmatpush1.msra.mxu0 %v4382
        %4384 = vmatprep.subr.mxu0 0.0
        %v4385 = vand.u32 %v3884, 4294901760
        %v4386 = vsub.f32 %v3884, %v4385
        %v4387 = vand.u32 %v4386, 4294901760
        %4388 = vmatpush1.msra.mxu0 %v4387
        %4389 = vmatprep.subr.mxu0 0.0
        %v4390 = vand.u32 %v3885, 4294901760
        %v4391 = vsub.f32 %v3885, %v4390
        %v4392 = vand.u32 %v4391, 4294901760
        %4393 = vmatpush1.msra.mxu0 %v4392
        %4394 = vmatprep.subr.mxu0 0.0
        %4395 = vmatpush1.msra.mxu0 0.0
        %4396 = vmatprep.subr.mxu0 0.0
        %4397 = vmatpush1.msra.mxu0 0.0
        %4398 = vmatprep.subr.mxu0 0.0
        %4399 = vmatpush1.msra.mxu0 0.0
        %4400 = vmatprep.subr.mxu0 0.0
        %4401 = vmatpush1.msra.mxu0 0.0
        %4402 = vmatprep.subr.mxu0 0.0
        %4403 = vmatpush1.msra.mxu0 0.0
        %4404 = vmatprep.subr.mxu0 0.0
        %4405 = vmatpush1.msra.mxu0 0.0
        %4406 = vmatprep.subr.mxu0 0.0
        %4407 = vmatpush1.msra.mxu0 0.0
        %4408 = vmatprep.subr.mxu0 0.0
        %4409 = vmatpush1.msra.mxu0 0.0
        %4410 = vmatprep.subr.mxu0 0.0
        %4411 = vmatpush1.msra.mxu0 0.0
        %4412 = vmatprep.subr.mxu0 0.0
        %4413 = vmatpush1.msra.mxu0 0.0
        %4414 = vmatprep.subr.mxu0 0.0
        %4415 = vmatpush1.msra.mxu0 0.0
        %4416 = vmatprep.subr.mxu0 0.0
        %4417 = vmatpush1.msra.mxu0 0.0
        %4418 = vmatprep.subr.mxu0 0.0
        %4419 = vmatpush1.msra.mxu0 0.0
        %4420 = vmatprep.subr.mxu0 0.0
        %4421 = vmatpush1.msra.mxu0 0.0
        %4422 = vmatprep.subr.mxu0 0.0
        %4423 = vmatpush1.msra.mxu0 0.0
        %4424 = vmatprep.subr.mxu0 0.0
        %4425 = vmatpush1.msra.mxu0 0.0
        %4426 = vmatprep.subr.mxu0 0.0
        %4427 = vmatpush1.msra.mxu0 0.0
        %4428 = vmatprep.subr.mxu0 0.0
        %4429 = vmatpush1.msra.mxu0 0.0
        %4430 = vmatprep.subr.mxu0 0.0
        %4431 = vmatpush1.msra.mxu0 0.0
        %4432 = vmatprep.subr.mxu0 0.0
        %4433 = vmatpush1.msra.mxu0 0.0
        %4434 = vmatprep.subr.mxu0 0.0
        %4435 = vmatpush1.msra.mxu0 0.0
        %4436 = vmatprep.subr.mxu0 0.0
        %4437 = vmatpush1.msra.mxu0 0.0
        %4438 = vmatprep.subr.mxu0 0.0
        %4439 = vmatpush1.msra.mxu0 0.0
        %4440 = vmatprep.subr.mxu0 0.0
        %4441 = vmatpush1.msra.mxu0 0.0
        %4442 = vmatprep.mubr.f32.mxu0 0.0
        %v4443 = vand.u32 %v3887, 4294901760
        %4444 = vmatmul.mubr.f32.gmra.mrb[0].mxu0 %v4443
        %v4445 = vpop.f32.mrb[0].mxu0
        %v4446 = vadd.f32 %v4327, %v4445
        %v4447 = vpop.f32.mrb[0].mxu0
        %4448 = vmatprep.mubr.f32.mxu0 0.0
        %v4449 = vand.u32 %v3890, 4294901760
        %4450 = vmatmul.mubr.f32.gmra.mrb[0].mxu0 %v4449
        %v4451 = vpop.f32.mrb[0].mxu0
        %v4452 = vadd.f32 %v4335, %v4451
        %v4453 = vpop.f32.mrb[0].mxu0
        %4454 = vmatprep.mubr.f32.mxu0 0.0
        %v4455 = vand.u32 %v3893, 4294901760
        %4456 = vmatmul.mubr.f32.gmra.mrb[0].mxu0 %v4455
        %v4457 = vpop.f32.mrb[0].mxu0
        %v4458 = vadd.f32 %v4343, %v4457
        %v4459 = vpop.f32.mrb[0].mxu0
        %4460 = vmatprep.mubr.f32.mxu0 0.0
        %v4461 = vand.u32 %v3896, 4294901760
        %4462 = vmatmul.mubr.f32.gmra.mrb[0].mxu0 %v4461
        %v4463 = vpop.f32.mrb[0].mxu0
        %v4464 = vadd.f32 %v4351, %v4463
        %v4465 = vpop.f32.mrb[0].mxu0
        %4466 = vdwg.mxu0
        %4467 = vmatprep.subr.mxu0 0.0
        %v4468 = vand.u32 %v3878, 4294901760
        %4469 = vmatpush1.msra.mxu0 %v4468
        %4470 = vmatprep.subr.mxu0 0.0
        %v4471 = vand.u32 %v3879, 4294901760
        %4472 = vmatpush1.msra.mxu0 %v4471
        %4473 = vmatprep.subr.mxu0 0.0
        %v4474 = vand.u32 %v3880, 4294901760
        %4475 = vmatpush1.msra.mxu0 %v4474
        %4476 = vmatprep.subr.mxu0 0.0
        %v4477 = vand.u32 %v3881, 4294901760
        %4478 = vmatpush1.msra.mxu0 %v4477
        %4479 = vmatprep.subr.mxu0 0.0
        %v4480 = vand.u32 %v3882, 4294901760
        %4481 = vmatpush1.msra.mxu0 %v4480
        %4482 = vmatprep.subr.mxu0 0.0
        %v4483 = vand.u32 %v3883, 4294901760
        %4484 = vmatpush1.msra.mxu0 %v4483
        %4485 = vmatprep.subr.mxu0 0.0
        %v4486 = vand.u32 %v3884, 4294901760
        %4487 = vmatpush1.msra.mxu0 %v4486
        %4488 = vmatprep.subr.mxu0 0.0
        %v4489 = vand.u32 %v3885, 4294901760
        %4490 = vmatpush1.msra.mxu0 %v4489
        %4491 = vmatprep.subr.mxu0 0.0
        %4492 = vmatpush1.msra.mxu0 0.0
        %4493 = vmatprep.subr.mxu0 0.0
        %4494 = vmatpush1.msra.mxu0 0.0
        %4495 = vmatprep.subr.mxu0 0.0
        %4496 = vmatpush1.msra.mxu0 0.0
        %4497 = vmatprep.subr.mxu0 0.0
        %4498 = vmatpush1.msra.mxu0 0.0
        %4499 = vmatprep.subr.mxu0 0.0
        %4500 = vmatpush1.msra.mxu0 0.0
        %4501 = vmatprep.subr.mxu0 0.0
        %4502 = vmatpush1.msra.mxu0 0.0
        %4503 = vmatprep.subr.mxu0 0.0
        %4504 = vmatpush1.msra.mxu0 0.0
        %4505 = vmatprep.subr.mxu0 0.0
        %4506 = vmatpush1.msra.mxu0 0.0
        %4507 = vmatprep.subr.mxu0 0.0
        %4508 = vmatpush1.msra.mxu0 0.0
        %4509 = vmatprep.subr.mxu0 0.0
        %4510 = vmatpush1.msra.mxu0 0.0
        %4511 = vmatprep.subr.mxu0 0.0
        %4512 = vmatpush1.msra.mxu0 0.0
        %4513 = vmatprep.subr.mxu0 0.0
        %4514 = vmatpush1.msra.mxu0 0.0
        %4515 = vmatprep.subr.mxu0 0.0
        %4516 = vmatpush1.msra.mxu0 0.0
        %4517 = vmatprep.subr.mxu0 0.0
        %4518 = vmatpush1.msra.mxu0 0.0
        %4519 = vmatprep.subr.mxu0 0.0
        %4520 = vmatpush1.msra.mxu0 0.0
        %4521 = vmatprep.subr.mxu0 0.0
        %4522 = vmatpush1.msra.mxu0 0.0
        %4523 = vmatprep.subr.mxu0 0.0
        %4524 = vmatpush1.msra.mxu0 0.0
        %4525 = vmatprep.subr.mxu0 0.0
        %4526 = vmatpush1.msra.mxu0 0.0
        %4527 = vmatprep.subr.mxu0 0.0
        %4528 = vmatpush1.msra.mxu0 0.0
        %4529 = vmatprep.subr.mxu0 0.0
        %4530 = vmatpush1.msra.mxu0 0.0
        %4531 = vmatprep.subr.mxu0 0.0
        %4532 = vmatpush1.msra.mxu0 0.0
        %4533 = vmatprep.subr.mxu0 0.0
        %4534 = vmatpush1.msra.mxu0 0.0
        %4535 = vmatprep.subr.mxu0 0.0
        %4536 = vmatpush1.msra.mxu0 0.0
        %4537 = vmatprep.subr.mxu0 0.0
        %4538 = vmatpush1.msra.mxu0 0.0
        %4539 = vmatprep.mubr.f32.mxu0 0.0
        %v4540 = vand.u32 %v3887, 4294901760
        %4541 = vmatmul.mubr.f32.gmra.mrb[0].mxu0 %v4540
        %v4542 = vpop.f32.mrb[0].mxu0
        %v4543 = vadd.f32 %v4446, %v4542
        %v4544 = vpop.f32.mrb[0].mxu0
        %4545 = vmatprep.mubr.f32.mxu0 0.0
        %v4546 = vand.u32 %v3890, 4294901760
        %4547 = vmatmul.mubr.f32.gmra.mrb[0].mxu0 %v4546
        %v4548 = vpop.f32.mrb[0].mxu0
        %v4549 = vadd.f32 %v4452, %v4548
        %v4550 = vpop.f32.mrb[0].mxu0
        %4551 = vmatprep.mubr.f32.mxu0 0.0
        %v4552 = vand.u32 %v3893, 4294901760
        %4553 = vmatmul.mubr.f32.gmra.mrb[0].mxu0 %v4552
        %v4554 = vpop.f32.mrb[0].mxu0
        %v4555 = vadd.f32 %v4458, %v4554
        %v4556 = vpop.f32.mrb[0].mxu0
        %4557 = vmatprep.mubr.f32.mxu0 0.0
        %v4558 = vand.u32 %v3896, 4294901760
        %4559 = vmatmul.mubr.f32.gmra.mrb[0].mxu0 %v4558
        %v4560 = vpop.f32.mrb[0].mxu0
        %v4561 = vadd.f32 %v4464, %v4560
        %v4562 = vpop.f32.mrb[0].mxu0
        %4563 = vdwg.mxu0
        %v4564 = vadd.f32 %v3856, %v4543
        %v4565 = vadd.f32 %v3862, %v4549
        %v4566 = vadd.f32 %v3868, %v4555
        %v4567 = vadd.f32 %v3874, %v4561
        %v4568 = vld [vmem:[%s4] sm:$0x1]
        %v4570 = vlaneseq
        %v4571 = vshrl.u32 %v4570, 7
        %v4572 = vsub.s32 0, %v4571
        %v4573 = vrot.slane %v4568, %v4572
        %v4575 = vadd.f32 %v4564, %v4573
        %v4576 = vadd.f32 %v4565, %v4573
        %v4577 = vadd.f32 %v4566, %v4573
        %v4578 = vadd.f32 %v4567, %v4573
        %4581 = vrot.lane.b32.xlu0 %v4577, 32
        %v4582 = vpop.permute.xlu0 %4581
        %4583 = vrot.lane.b32.xlu0 %v4578, 32
        %v4584 = vpop.permute.xlu0 %4583
        %v4587 = vsel %vm576, %v4575, %v4582
        %v4588 = vsel %vm576, %v4576, %v4584
        %4589 = vst.msk [vmem:[%s423] sm:$0xff] %vm2520, %v4587
        %4590 = vst.msk [vmem:[%s423 + $0x8] sm:$0xff] %vm2520, %v4588
        %v4591 = vrot.slane %v4587, 7
        %v4592 = vrot.slane %v4588, 7
        %v4593 = vsel %vm545, %v4591, %v4592
        %v4594 = vsel %vm545, %v4592, %v4591
        %v4595 = vmul.f32 %v4594, %v529
        %v4596 = vmul.f32 %v4593, %v530
        %v4597 = vrot.slane %v4587, 1
        %v4598 = vrot.slane %v4588, 1
        %v4599 = vsel %vm558, %v4597, %v4598
        %v4600 = vsel %vm558, %v4598, %v4597
        %v4601 = vmul.f32 %v4599, %v535
        %v4602 = vmul.f32 %v4600, %v536
        %v4603 = vld [vmem:[%s5] sm:$0xff]
        %v4604 = vld [vmem:[%s5 + $0x8] sm:$0xff]
        %v4605 = vld [vmem:[%s5 + $0x10] sm:$0xff]
        %v4606 = vld [vmem:[%s5 + $0x18] sm:$0xff]
        %v4607 = vld [vmem:[%s5 + $0x20] sm:$0xff]
        %v4608 = vld [vmem:[%s5 + $0x28] sm:$0xff]
        %v4609 = vld [vmem:[%s5 + $0x30] sm:$0xff]
        %v4610 = vld [vmem:[%s5 + $0x38] sm:$0xff]
        %s4611 = scalar_lea.vmem %s5, 64
        %v4612 = vld [vmem:[%s4611] sm:$0xff]
        %v4613 = vld [vmem:[%s4611 + $0x8] sm:$0xff]
        %v4614 = vld [vmem:[%s4611 + $0x10] sm:$0xff]
        %v4615 = vld [vmem:[%s4611 + $0x18] sm:$0xff]
        %v4616 = vld [vmem:[%s4611 + $0x20] sm:$0xff]
        %v4617 = vld [vmem:[%s4611 + $0x28] sm:$0xff]
        %v4618 = vld [vmem:[%s4611 + $0x30] sm:$0xff]
        %v4619 = vld [vmem:[%s4611 + $0x38] sm:$0xff]
        %v4621 = vsel %vm2520, %v4587, 0
        %v4624 = vsel %vm2520, %v4588, 0
        %4626 = vmatprep.subr.mxu0 0.0
        %v4627 = vand.u32 %v4612, 4294901760
        %4628 = vmatpush1.msra.mxu0 %v4627
        %4629 = vmatprep.subr.mxu0 0.0
        %v4630 = vand.u32 %v4613, 4294901760
        %4631 = vmatpush1.msra.mxu0 %v4630
        %4632 = vmatprep.subr.mxu0 0.0
        %v4633 = vand.u32 %v4614, 4294901760
        %4634 = vmatpush1.msra.mxu0 %v4633
        %4635 = vmatprep.subr.mxu0 0.0
        %v4636 = vand.u32 %v4615, 4294901760
        %4637 = vmatpush1.msra.mxu0 %v4636
        %4638 = vmatprep.subr.mxu0 0.0
        %v4639 = vand.u32 %v4616, 4294901760
        %4640 = vmatpush1.msra.mxu0 %v4639
        %4641 = vmatprep.subr.mxu0 0.0
        %v4642 = vand.u32 %v4617, 4294901760
        %4643 = vmatpush1.msra.mxu0 %v4642
        %4644 = vmatprep.subr.mxu0 0.0
        %v4645 = vand.u32 %v4618, 4294901760
        %4646 = vmatpush1.msra.mxu0 %v4645
        %4647 = vmatprep.subr.mxu0 0.0
        %v4648 = vand.u32 %v4619, 4294901760
        %4649 = vmatpush1.msra.mxu0 %v4648
        %4650 = vmatprep.subr.mxu0 0.0
        %4651 = vmatpush1.msra.mxu0 0.0
        %4652 = vmatprep.subr.mxu0 0.0
        %4653 = vmatpush1.msra.mxu0 0.0
        %4654 = vmatprep.subr.mxu0 0.0
        %4655 = vmatpush1.msra.mxu0 0.0
        %4656 = vmatprep.subr.mxu0 0.0
        %4657 = vmatpush1.msra.mxu0 0.0
        %4658 = vmatprep.subr.mxu0 0.0
        %4659 = vmatpush1.msra.mxu0 0.0
        %4660 = vmatprep.subr.mxu0 0.0
        %4661 = vmatpush1.msra.mxu0 0.0
        %4662 = vmatprep.subr.mxu0 0.0
        %4663 = vmatpush1.msra.mxu0 0.0
        %4664 = vmatprep.subr.mxu0 0.0
        %4665 = vmatpush1.msra.mxu0 0.0
        %4666 = vmatprep.subr.mxu0 0.0
        %4667 = vmatpush1.msra.mxu0 0.0
        %4668 = vmatprep.subr.mxu0 0.0
        %4669 = vmatpush1.msra.mxu0 0.0
        %4670 = vmatprep.subr.mxu0 0.0
        %4671 = vmatpush1.msra.mxu0 0.0
        %4672 = vmatprep.subr.mxu0 0.0
        %4673 = vmatpush1.msra.mxu0 0.0
        %4674 = vmatprep.subr.mxu0 0.0
        %4675 = vmatpush1.msra.mxu0 0.0
        %4676 = vmatprep.subr.mxu0 0.0
        %4677 = vmatpush1.msra.mxu0 0.0
        %4678 = vmatprep.subr.mxu0 0.0
        %4679 = vmatpush1.msra.mxu0 0.0
        %4680 = vmatprep.subr.mxu0 0.0
        %4681 = vmatpush1.msra.mxu0 0.0
        %4682 = vmatprep.subr.mxu0 0.0
        %4683 = vmatpush1.msra.mxu0 0.0
        %4684 = vmatprep.subr.mxu0 0.0
        %4685 = vmatpush1.msra.mxu0 0.0
        %4686 = vmatprep.subr.mxu0 0.0
        %4687 = vmatpush1.msra.mxu0 0.0
        %4688 = vmatprep.subr.mxu0 0.0
        %4689 = vmatpush1.msra.mxu0 0.0
        %4690 = vmatprep.subr.mxu0 0.0
        %4691 = vmatpush1.msra.mxu0 0.0
        %4692 = vmatprep.subr.mxu0 0.0
        %4693 = vmatpush1.msra.mxu0 0.0
        %4694 = vmatprep.subr.mxu0 0.0
        %4695 = vmatpush1.msra.mxu0 0.0
        %4696 = vmatprep.subr.mxu0 0.0
        %4697 = vmatpush1.msra.mxu0 0.0
        %4698 = vmatprep.mubr.f32.mxu0 0.0
        %v4699 = vand.u32 %v4621, 4294901760
        %v4700 = vsub.f32 %v4621, %v4699
        %v4701 = vand.u32 %v4700, 4294901760
        %v4702 = vsub.f32 %v4700, %v4701
        %v4703 = vand.u32 %v4702, 4294901760
        %4704 = vmatmul.mubr.f32.gmra.mrb[0].mxu0 %v4703
        %v4705 = vpop.f32.mrb[0].mxu0
        %v4706 = vadd.f32 0.0, %v4705
        %v4707 = vpop.f32.mrb[0].mxu0
        %4708 = vmatprep.mubr.f32.mxu0 0.0
        %v4709 = vand.u32 %v4624, 4294901760
        %v4710 = vsub.f32 %v4624, %v4709
        %v4711 = vand.u32 %v4710, 4294901760
        %v4712 = vsub.f32 %v4710, %v4711
        %v4713 = vand.u32 %v4712, 4294901760
        %4714 = vmatmul.mubr.f32.gmra.mrb[0].mxu0 %v4713
        %v4715 = vpop.f32.mrb[0].mxu0
        %v4716 = vadd.f32 0.0, %v4715
        %v4717 = vpop.f32.mrb[0].mxu0
        %4718 = vdwg.mxu0
        %4719 = vmatprep.subr.mxu0 0.0
        %v4720 = vand.u32 %v4612, 4294901760
        %v4721 = vsub.f32 %v4612, %v4720
        %v4722 = vand.u32 %v4721, 4294901760
        %v4723 = vsub.f32 %v4721, %v4722
        %v4724 = vand.u32 %v4723, 4294901760
        %4725 = vmatpush1.msra.mxu0 %v4724
        %4726 = vmatprep.subr.mxu0 0.0
        %v4727 = vand.u32 %v4613, 4294901760
        %v4728 = vsub.f32 %v4613, %v4727
        %v4729 = vand.u32 %v4728, 4294901760
        %v4730 = vsub.f32 %v4728, %v4729
        %v4731 = vand.u32 %v4730, 4294901760
        %4732 = vmatpush1.msra.mxu0 %v4731
        %4733 = vmatprep.subr.mxu0 0.0
        %v4734 = vand.u32 %v4614, 4294901760
        %v4735 = vsub.f32 %v4614, %v4734
        %v4736 = vand.u32 %v4735, 4294901760
        %v4737 = vsub.f32 %v4735, %v4736
        %v4738 = vand.u32 %v4737, 4294901760
        %4739 = vmatpush1.msra.mxu0 %v4738
        %4740 = vmatprep.subr.mxu0 0.0
        %v4741 = vand.u32 %v4615, 4294901760
        %v4742 = vsub.f32 %v4615, %v4741
        %v4743 = vand.u32 %v4742, 4294901760
        %v4744 = vsub.f32 %v4742, %v4743
        %v4745 = vand.u32 %v4744, 4294901760
        %4746 = vmatpush1.msra.mxu0 %v4745
        %4747 = vmatprep.subr.mxu0 0.0
        %v4748 = vand.u32 %v4616, 4294901760
        %v4749 = vsub.f32 %v4616, %v4748
        %v4750 = vand.u32 %v4749, 4294901760
        %v4751 = vsub.f32 %v4749, %v4750
        %v4752 = vand.u32 %v4751, 4294901760
        %4753 = vmatpush1.msra.mxu0 %v4752
        %4754 = vmatprep.subr.mxu0 0.0
        %v4755 = vand.u32 %v4617, 4294901760
        %v4756 = vsub.f32 %v4617, %v4755
        %v4757 = vand.u32 %v4756, 4294901760
        %v4758 = vsub.f32 %v4756, %v4757
        %v4759 = vand.u32 %v4758, 4294901760
        %4760 = vmatpush1.msra.mxu0 %v4759
        %4761 = vmatprep.subr.mxu0 0.0
        %v4762 = vand.u32 %v4618, 4294901760
        %v4763 = vsub.f32 %v4618, %v4762
        %v4764 = vand.u32 %v4763, 4294901760
        %v4765 = vsub.f32 %v4763, %v4764
        %v4766 = vand.u32 %v4765, 4294901760
        %4767 = vmatpush1.msra.mxu0 %v4766
        %4768 = vmatprep.subr.mxu0 0.0
        %v4769 = vand.u32 %v4619, 4294901760
        %v4770 = vsub.f32 %v4619, %v4769
        %v4771 = vand.u32 %v4770, 4294901760
        %v4772 = vsub.f32 %v4770, %v4771
        %v4773 = vand.u32 %v4772, 4294901760
        %4774 = vmatpush1.msra.mxu0 %v4773
        %4775 = vmatprep.subr.mxu0 0.0
        %4776 = vmatpush1.msra.mxu0 0.0
        %4777 = vmatprep.subr.mxu0 0.0
        %4778 = vmatpush1.msra.mxu0 0.0
        %4779 = vmatprep.subr.mxu0 0.0
        %4780 = vmatpush1.msra.mxu0 0.0
        %4781 = vmatprep.subr.mxu0 0.0
        %4782 = vmatpush1.msra.mxu0 0.0
        %4783 = vmatprep.subr.mxu0 0.0
        %4784 = vmatpush1.msra.mxu0 0.0
        %4785 = vmatprep.subr.mxu0 0.0
        %4786 = vmatpush1.msra.mxu0 0.0
        %4787 = vmatprep.subr.mxu0 0.0
        %4788 = vmatpush1.msra.mxu0 0.0
        %4789 = vmatprep.subr.mxu0 0.0
        %4790 = vmatpush1.msra.mxu0 0.0
        %4791 = vmatprep.subr.mxu0 0.0
        %4792 = vmatpush1.msra.mxu0 0.0
        %4793 = vmatprep.subr.mxu0 0.0
        %4794 = vmatpush1.msra.mxu0 0.0
        %4795 = vmatprep.subr.mxu0 0.0
        %4796 = vmatpush1.msra.mxu0 0.0
        %4797 = vmatprep.subr.mxu0 0.0
        %4798 = vmatpush1.msra.mxu0 0.0
        %4799 = vmatprep.subr.mxu0 0.0
        %4800 = vmatpush1.msra.mxu0 0.0
        %4801 = vmatprep.subr.mxu0 0.0
        %4802 = vmatpush1.msra.mxu0 0.0
        %4803 = vmatprep.subr.mxu0 0.0
        %4804 = vmatpush1.msra.mxu0 0.0
        %4805 = vmatprep.subr.mxu0 0.0
        %4806 = vmatpush1.msra.mxu0 0.0
        %4807 = vmatprep.subr.mxu0 0.0
        %4808 = vmatpush1.msra.mxu0 0.0
        %4809 = vmatprep.subr.mxu0 0.0
        %4810 = vmatpush1.msra.mxu0 0.0
        %4811 = vmatprep.subr.mxu0 0.0
        %4812 = vmatpush1.msra.mxu0 0.0
        %4813 = vmatprep.subr.mxu0 0.0
        %4814 = vmatpush1.msra.mxu0 0.0
        %4815 = vmatprep.subr.mxu0 0.0
        %4816 = vmatpush1.msra.mxu0 0.0
        %4817 = vmatprep.subr.mxu0 0.0
        %4818 = vmatpush1.msra.mxu0 0.0
        %4819 = vmatprep.subr.mxu0 0.0
        %4820 = vmatpush1.msra.mxu0 0.0
        %4821 = vmatprep.subr.mxu0 0.0
        %4822 = vmatpush1.msra.mxu0 0.0
        %4823 = vmatprep.mubr.f32.mxu0 0.0
        %v4824 = vand.u32 %v4621, 4294901760
        %4825 = vmatmul.mubr.f32.gmra.mrb[0].mxu0 %v4824
        %v4826 = vpop.f32.mrb[0].mxu0
        %v4827 = vadd.f32 %v4706, %v4826
        %v4828 = vpop.f32.mrb[0].mxu0
        %4829 = vmatprep.mubr.f32.mxu0 0.0
        %v4830 = vand.u32 %v4624, 4294901760
        %4831 = vmatmul.mubr.f32.gmra.mrb[0].mxu0 %v4830
        %v4832 = vpop.f32.mrb[0].mxu0
        %v4833 = vadd.f32 %v4716, %v4832
        %v4834 = vpop.f32.mrb[0].mxu0
        %4835 = vdwg.mxu0
        %4836 = vmatprep.subr.mxu0 0.0
        %v4837 = vand.u32 %v4612, 4294901760
        %v4838 = vsub.f32 %v4612, %v4837
        %4839 = vmatpush1.msra.mxu0 %v4838
        %4840 = vmatprep.subr.mxu0 0.0
        %v4841 = vand.u32 %v4613, 4294901760
        %v4842 = vsub.f32 %v4613, %v4841
        %4843 = vmatpush1.msra.mxu0 %v4842
        %4844 = vmatprep.subr.mxu0 0.0
        %v4845 = vand.u32 %v4614, 4294901760
        %v4846 = vsub.f32 %v4614, %v4845
        %4847 = vmatpush1.msra.mxu0 %v4846
        %4848 = vmatprep.subr.mxu0 0.0
        %v4849 = vand.u32 %v4615, 4294901760
        %v4850 = vsub.f32 %v4615, %v4849
        %4851 = vmatpush1.msra.mxu0 %v4850
        %4852 = vmatprep.subr.mxu0 0.0
        %v4853 = vand.u32 %v4616, 4294901760
        %v4854 = vsub.f32 %v4616, %v4853
        %4855 = vmatpush1.msra.mxu0 %v4854
        %4856 = vmatprep.subr.mxu0 0.0
        %v4857 = vand.u32 %v4617, 4294901760
        %v4858 = vsub.f32 %v4617, %v4857
        %4859 = vmatpush1.msra.mxu0 %v4858
        %4860 = vmatprep.subr.mxu0 0.0
        %v4861 = vand.u32 %v4618, 4294901760
        %v4862 = vsub.f32 %v4618, %v4861
        %4863 = vmatpush1.msra.mxu0 %v4862
        %4864 = vmatprep.subr.mxu0 0.0
        %v4865 = vand.u32 %v4619, 4294901760
        %v4866 = vsub.f32 %v4619, %v4865
        %4867 = vmatpush1.msra.mxu0 %v4866
        %4868 = vmatprep.subr.mxu0 0.0
        %4869 = vmatpush1.msra.mxu0 0.0
        %4870 = vmatprep.subr.mxu0 0.0
        %4871 = vmatpush1.msra.mxu0 0.0
        %4872 = vmatprep.subr.mxu0 0.0
        %4873 = vmatpush1.msra.mxu0 0.0
        %4874 = vmatprep.subr.mxu0 0.0
        %4875 = vmatpush1.msra.mxu0 0.0
        %4876 = vmatprep.subr.mxu0 0.0
        %4877 = vmatpush1.msra.mxu0 0.0
        %4878 = vmatprep.subr.mxu0 0.0
        %4879 = vmatpush1.msra.mxu0 0.0
        %4880 = vmatprep.subr.mxu0 0.0
        %4881 = vmatpush1.msra.mxu0 0.0
        %4882 = vmatprep.subr.mxu0 0.0
        %4883 = vmatpush1.msra.mxu0 0.0
        %4884 = vmatprep.subr.mxu0 0.0
        %4885 = vmatpush1.msra.mxu0 0.0
        %4886 = vmatprep.subr.mxu0 0.0
        %4887 = vmatpush1.msra.mxu0 0.0
        %4888 = vmatprep.subr.mxu0 0.0
        %4889 = vmatpush1.msra.mxu0 0.0
        %4890 = vmatprep.subr.mxu0 0.0
        %4891 = vmatpush1.msra.mxu0 0.0
        %4892 = vmatprep.subr.mxu0 0.0
        %4893 = vmatpush1.msra.mxu0 0.0
        %4894 = vmatprep.subr.mxu0 0.0
        %4895 = vmatpush1.msra.mxu0 0.0
        %4896 = vmatprep.subr.mxu0 0.0
        %4897 = vmatpush1.msra.mxu0 0.0
        %4898 = vmatprep.subr.mxu0 0.0
        %4899 = vmatpush1.msra.mxu0 0.0
        %4900 = vmatprep.subr.mxu0 0.0
        %4901 = vmatpush1.msra.mxu0 0.0
        %4902 = vmatprep.subr.mxu0 0.0
        %4903 = vmatpush1.msra.mxu0 0.0
        %4904 = vmatprep.subr.mxu0 0.0
        %4905 = vmatpush1.msra.mxu0 0.0
        %4906 = vmatprep.subr.mxu0 0.0
        %4907 = vmatpush1.msra.mxu0 0.0
        %4908 = vmatprep.subr.mxu0 0.0
        %4909 = vmatpush1.msra.mxu0 0.0
        %4910 = vmatprep.subr.mxu0 0.0
        %4911 = vmatpush1.msra.mxu0 0.0
        %4912 = vmatprep.subr.mxu0 0.0
        %4913 = vmatpush1.msra.mxu0 0.0
        %4914 = vmatprep.subr.mxu0 0.0
        %4915 = vmatpush1.msra.mxu0 0.0
        %4916 = vmatprep.mubr.f32.mxu0 0.0
        %v4917 = vand.u32 %v4621, 4294901760
        %v4918 = vsub.f32 %v4621, %v4917
        %4919 = vmatmul.mubr.f32.gmra.mrb[0].mxu0 %v4918
        %v4920 = vpop.f32.mrb[0].mxu0
        %v4921 = vadd.f32 %v4827, %v4920
        %v4922 = vpop.f32.mrb[0].mxu0
        %4923 = vmatprep.mubr.f32.mxu0 0.0
        %v4924 = vand.u32 %v4624, 4294901760
        %v4925 = vsub.f32 %v4624, %v4924
        %4926 = vmatmul.mubr.f32.gmra.mrb[0].mxu0 %v4925
        %v4927 = vpop.f32.mrb[0].mxu0
        %v4928 = vadd.f32 %v4833, %v4927
        %v4929 = vpop.f32.mrb[0].mxu0
        %4930 = vdwg.mxu0
        %4931 = vmatprep.subr.mxu0 0.0
        %v4932 = vand.u32 %v4612, 4294901760
        %4933 = vmatpush1.msra.mxu0 %v4932
        %4934 = vmatprep.subr.mxu0 0.0
        %v4935 = vand.u32 %v4613, 4294901760
        %4936 = vmatpush1.msra.mxu0 %v4935
        %4937 = vmatprep.subr.mxu0 0.0
        %v4938 = vand.u32 %v4614, 4294901760
        %4939 = vmatpush1.msra.mxu0 %v4938
        %4940 = vmatprep.subr.mxu0 0.0
        %v4941 = vand.u32 %v4615, 4294901760
        %4942 = vmatpush1.msra.mxu0 %v4941
        %4943 = vmatprep.subr.mxu0 0.0
        %v4944 = vand.u32 %v4616, 4294901760
        %4945 = vmatpush1.msra.mxu0 %v4944
        %4946 = vmatprep.subr.mxu0 0.0
        %v4947 = vand.u32 %v4617, 4294901760
        %4948 = vmatpush1.msra.mxu0 %v4947
        %4949 = vmatprep.subr.mxu0 0.0
        %v4950 = vand.u32 %v4618, 4294901760
        %4951 = vmatpush1.msra.mxu0 %v4950
        %4952 = vmatprep.subr.mxu0 0.0
        %v4953 = vand.u32 %v4619, 4294901760
        %4954 = vmatpush1.msra.mxu0 %v4953
        %4955 = vmatprep.subr.mxu0 0.0
        %4956 = vmatpush1.msra.mxu0 0.0
        %4957 = vmatprep.subr.mxu0 0.0
        %4958 = vmatpush1.msra.mxu0 0.0
        %4959 = vmatprep.subr.mxu0 0.0
        %4960 = vmatpush1.msra.mxu0 0.0
        %4961 = vmatprep.subr.mxu0 0.0
        %4962 = vmatpush1.msra.mxu0 0.0
        %4963 = vmatprep.subr.mxu0 0.0
        %4964 = vmatpush1.msra.mxu0 0.0
        %4965 = vmatprep.subr.mxu0 0.0
        %4966 = vmatpush1.msra.mxu0 0.0
        %4967 = vmatprep.subr.mxu0 0.0
        %4968 = vmatpush1.msra.mxu0 0.0
        %4969 = vmatprep.subr.mxu0 0.0
        %4970 = vmatpush1.msra.mxu0 0.0
        %4971 = vmatprep.subr.mxu0 0.0
        %4972 = vmatpush1.msra.mxu0 0.0
        %4973 = vmatprep.subr.mxu0 0.0
        %4974 = vmatpush1.msra.mxu0 0.0
        %4975 = vmatprep.subr.mxu0 0.0
        %4976 = vmatpush1.msra.mxu0 0.0
        %4977 = vmatprep.subr.mxu0 0.0
        %4978 = vmatpush1.msra.mxu0 0.0
        %4979 = vmatprep.subr.mxu0 0.0
        %4980 = vmatpush1.msra.mxu0 0.0
        %4981 = vmatprep.subr.mxu0 0.0
        %4982 = vmatpush1.msra.mxu0 0.0
        %4983 = vmatprep.subr.mxu0 0.0
        %4984 = vmatpush1.msra.mxu0 0.0
        %4985 = vmatprep.subr.mxu0 0.0
        %4986 = vmatpush1.msra.mxu0 0.0
        %4987 = vmatprep.subr.mxu0 0.0
        %4988 = vmatpush1.msra.mxu0 0.0
        %4989 = vmatprep.subr.mxu0 0.0
        %4990 = vmatpush1.msra.mxu0 0.0
        %4991 = vmatprep.subr.mxu0 0.0
        %4992 = vmatpush1.msra.mxu0 0.0
        %4993 = vmatprep.subr.mxu0 0.0
        %4994 = vmatpush1.msra.mxu0 0.0
        %4995 = vmatprep.subr.mxu0 0.0
        %4996 = vmatpush1.msra.mxu0 0.0
        %4997 = vmatprep.subr.mxu0 0.0
        %4998 = vmatpush1.msra.mxu0 0.0
        %4999 = vmatprep.subr.mxu0 0.0
        %5000 = vmatpush1.msra.mxu0 0.0
        %5001 = vmatprep.subr.mxu0 0.0
        %5002 = vmatpush1.msra.mxu0 0.0
        %5003 = vmatprep.mubr.f32.mxu0 0.0
        %v5004 = vand.u32 %v4621, 4294901760
        %v5005 = vsub.f32 %v4621, %v5004
        %v5006 = vand.u32 %v5005, 4294901760
        %5007 = vmatmul.mubr.f32.gmra.mrb[0].mxu0 %v5006
        %v5008 = vpop.f32.mrb[0].mxu0
        %v5009 = vadd.f32 %v4921, %v5008
        %v5010 = vpop.f32.mrb[0].mxu0
        %5011 = vmatprep.mubr.f32.mxu0 0.0
        %v5012 = vand.u32 %v4624, 4294901760
        %v5013 = vsub.f32 %v4624, %v5012
        %v5014 = vand.u32 %v5013, 4294901760
        %5015 = vmatmul.mubr.f32.gmra.mrb[0].mxu0 %v5014
        %v5016 = vpop.f32.mrb[0].mxu0
        %v5017 = vadd.f32 %v4928, %v5016
        %v5018 = vpop.f32.mrb[0].mxu0
        %5019 = vdwg.mxu0
        %5020 = vmatprep.subr.mxu0 0.0
        %v5021 = vand.u32 %v4612, 4294901760
        %v5022 = vsub.f32 %v4612, %v5021
        %v5023 = vand.u32 %v5022, 4294901760
        %5024 = vmatpush1.msra.mxu0 %v5023
        %5025 = vmatprep.subr.mxu0 0.0
        %v5026 = vand.u32 %v4613, 4294901760
        %v5027 = vsub.f32 %v4613, %v5026
        %v5028 = vand.u32 %v5027, 4294901760
        %5029 = vmatpush1.msra.mxu0 %v5028
        %5030 = vmatprep.subr.mxu0 0.0
        %v5031 = vand.u32 %v4614, 4294901760
        %v5032 = vsub.f32 %v4614, %v5031
        %v5033 = vand.u32 %v5032, 4294901760
        %5034 = vmatpush1.msra.mxu0 %v5033
        %5035 = vmatprep.subr.mxu0 0.0
        %v5036 = vand.u32 %v4615, 4294901760
        %v5037 = vsub.f32 %v4615, %v5036
        %v5038 = vand.u32 %v5037, 4294901760
        %5039 = vmatpush1.msra.mxu0 %v5038
        %5040 = vmatprep.subr.mxu0 0.0
        %v5041 = vand.u32 %v4616, 4294901760
        %v5042 = vsub.f32 %v4616, %v5041
        %v5043 = vand.u32 %v5042, 4294901760
        %5044 = vmatpush1.msra.mxu0 %v5043
        %5045 = vmatprep.subr.mxu0 0.0
        %v5046 = vand.u32 %v4617, 4294901760
        %v5047 = vsub.f32 %v4617, %v5046
        %v5048 = vand.u32 %v5047, 4294901760
        %5049 = vmatpush1.msra.mxu0 %v5048
        %5050 = vmatprep.subr.mxu0 0.0
        %v5051 = vand.u32 %v4618, 4294901760
        %v5052 = vsub.f32 %v4618, %v5051
        %v5053 = vand.u32 %v5052, 4294901760
        %5054 = vmatpush1.msra.mxu0 %v5053
        %5055 = vmatprep.subr.mxu0 0.0
        %v5056 = vand.u32 %v4619, 4294901760
        %v5057 = vsub.f32 %v4619, %v5056
        %v5058 = vand.u32 %v5057, 4294901760
        %5059 = vmatpush1.msra.mxu0 %v5058
        %5060 = vmatprep.subr.mxu0 0.0
        %5061 = vmatpush1.msra.mxu0 0.0
        %5062 = vmatprep.subr.mxu0 0.0
        %5063 = vmatpush1.msra.mxu0 0.0
        %5064 = vmatprep.subr.mxu0 0.0
        %5065 = vmatpush1.msra.mxu0 0.0
        %5066 = vmatprep.subr.mxu0 0.0
        %5067 = vmatpush1.msra.mxu0 0.0
        %5068 = vmatprep.subr.mxu0 0.0
        %5069 = vmatpush1.msra.mxu0 0.0
        %5070 = vmatprep.subr.mxu0 0.0
        %5071 = vmatpush1.msra.mxu0 0.0
        %5072 = vmatprep.subr.mxu0 0.0
        %5073 = vmatpush1.msra.mxu0 0.0
        %5074 = vmatprep.subr.mxu0 0.0
        %5075 = vmatpush1.msra.mxu0 0.0
        %5076 = vmatprep.subr.mxu0 0.0
        %5077 = vmatpush1.msra.mxu0 0.0
        %5078 = vmatprep.subr.mxu0 0.0
        %5079 = vmatpush1.msra.mxu0 0.0
        %5080 = vmatprep.subr.mxu0 0.0
        %5081 = vmatpush1.msra.mxu0 0.0
        %5082 = vmatprep.subr.mxu0 0.0
        %5083 = vmatpush1.msra.mxu0 0.0
        %5084 = vmatprep.subr.mxu0 0.0
        %5085 = vmatpush1.msra.mxu0 0.0
        %5086 = vmatprep.subr.mxu0 0.0
        %5087 = vmatpush1.msra.mxu0 0.0
        %5088 = vmatprep.subr.mxu0 0.0
        %5089 = vmatpush1.msra.mxu0 0.0
        %5090 = vmatprep.subr.mxu0 0.0
        %5091 = vmatpush1.msra.mxu0 0.0
        %5092 = vmatprep.subr.mxu0 0.0
        %5093 = vmatpush1.msra.mxu0 0.0
        %5094 = vmatprep.subr.mxu0 0.0
        %5095 = vmatpush1.msra.mxu0 0.0
        %5096 = vmatprep.subr.mxu0 0.0
        %5097 = vmatpush1.msra.mxu0 0.0
        %5098 = vmatprep.subr.mxu0 0.0
        %5099 = vmatpush1.msra.mxu0 0.0
        %5100 = vmatprep.subr.mxu0 0.0
        %5101 = vmatpush1.msra.mxu0 0.0
        %5102 = vmatprep.subr.mxu0 0.0
        %5103 = vmatpush1.msra.mxu0 0.0
        %5104 = vmatprep.subr.mxu0 0.0
        %5105 = vmatpush1.msra.mxu0 0.0
        %5106 = vmatprep.subr.mxu0 0.0
        %5107 = vmatpush1.msra.mxu0 0.0
        %5108 = vmatprep.mubr.f32.mxu0 0.0
        %v5109 = vand.u32 %v4621, 4294901760
        %5110 = vmatmul.mubr.f32.gmra.mrb[0].mxu0 %v5109
        %v5111 = vpop.f32.mrb[0].mxu0
        %v5112 = vadd.f32 %v5009, %v5111
        %v5113 = vpop.f32.mrb[0].mxu0
        %5114 = vmatprep.mubr.f32.mxu0 0.0
        %v5115 = vand.u32 %v4624, 4294901760
        %5116 = vmatmul.mubr.f32.gmra.mrb[0].mxu0 %v5115
        %v5117 = vpop.f32.mrb[0].mxu0
        %v5118 = vadd.f32 %v5017, %v5117
        %v5119 = vpop.f32.mrb[0].mxu0
        %5120 = vdwg.mxu0
        %5121 = vmatprep.subr.mxu0 0.0
        %v5122 = vand.u32 %v4612, 4294901760
        %5123 = vmatpush1.msra.mxu0 %v5122
        %5124 = vmatprep.subr.mxu0 0.0
        %v5125 = vand.u32 %v4613, 4294901760
        %5126 = vmatpush1.msra.mxu0 %v5125
        %5127 = vmatprep.subr.mxu0 0.0
        %v5128 = vand.u32 %v4614, 4294901760
        %5129 = vmatpush1.msra.mxu0 %v5128
        %5130 = vmatprep.subr.mxu0 0.0
        %v5131 = vand.u32 %v4615, 4294901760
        %5132 = vmatpush1.msra.mxu0 %v5131
        %5133 = vmatprep.subr.mxu0 0.0
        %v5134 = vand.u32 %v4616, 4294901760
        %5135 = vmatpush1.msra.mxu0 %v5134
        %5136 = vmatprep.subr.mxu0 0.0
        %v5137 = vand.u32 %v4617, 4294901760
        %5138 = vmatpush1.msra.mxu0 %v5137
        %5139 = vmatprep.subr.mxu0 0.0
        %v5140 = vand.u32 %v4618, 4294901760
        %5141 = vmatpush1.msra.mxu0 %v5140
        %5142 = vmatprep.subr.mxu0 0.0
        %v5143 = vand.u32 %v4619, 4294901760
        %5144 = vmatpush1.msra.mxu0 %v5143
        %5145 = vmatprep.subr.mxu0 0.0
        %5146 = vmatpush1.msra.mxu0 0.0
        %5147 = vmatprep.subr.mxu0 0.0
        %5148 = vmatpush1.msra.mxu0 0.0
        %5149 = vmatprep.subr.mxu0 0.0
        %5150 = vmatpush1.msra.mxu0 0.0
        %5151 = vmatprep.subr.mxu0 0.0
        %5152 = vmatpush1.msra.mxu0 0.0
        %5153 = vmatprep.subr.mxu0 0.0
        %5154 = vmatpush1.msra.mxu0 0.0
        %5155 = vmatprep.subr.mxu0 0.0
        %5156 = vmatpush1.msra.mxu0 0.0
        %5157 = vmatprep.subr.mxu0 0.0
        %5158 = vmatpush1.msra.mxu0 0.0
        %5159 = vmatprep.subr.mxu0 0.0
        %5160 = vmatpush1.msra.mxu0 0.0
        %5161 = vmatprep.subr.mxu0 0.0
        %5162 = vmatpush1.msra.mxu0 0.0
        %5163 = vmatprep.subr.mxu0 0.0
        %5164 = vmatpush1.msra.mxu0 0.0
        %5165 = vmatprep.subr.mxu0 0.0
        %5166 = vmatpush1.msra.mxu0 0.0
        %5167 = vmatprep.subr.mxu0 0.0
        %5168 = vmatpush1.msra.mxu0 0.0
        %5169 = vmatprep.subr.mxu0 0.0
        %5170 = vmatpush1.msra.mxu0 0.0
        %5171 = vmatprep.subr.mxu0 0.0
        %5172 = vmatpush1.msra.mxu0 0.0
        %5173 = vmatprep.subr.mxu0 0.0
        %5174 = vmatpush1.msra.mxu0 0.0
        %5175 = vmatprep.subr.mxu0 0.0
        %5176 = vmatpush1.msra.mxu0 0.0
        %5177 = vmatprep.subr.mxu0 0.0
        %5178 = vmatpush1.msra.mxu0 0.0
        %5179 = vmatprep.subr.mxu0 0.0
        %5180 = vmatpush1.msra.mxu0 0.0
        %5181 = vmatprep.subr.mxu0 0.0
        %5182 = vmatpush1.msra.mxu0 0.0
        %5183 = vmatprep.subr.mxu0 0.0
        %5184 = vmatpush1.msra.mxu0 0.0
        %5185 = vmatprep.subr.mxu0 0.0
        %5186 = vmatpush1.msra.mxu0 0.0
        %5187 = vmatprep.subr.mxu0 0.0
        %5188 = vmatpush1.msra.mxu0 0.0
        %5189 = vmatprep.subr.mxu0 0.0
        %5190 = vmatpush1.msra.mxu0 0.0
        %5191 = vmatprep.subr.mxu0 0.0
        %5192 = vmatpush1.msra.mxu0 0.0
        %5193 = vmatprep.mubr.f32.mxu0 0.0
        %v5194 = vand.u32 %v4621, 4294901760
        %5195 = vmatmul.mubr.f32.gmra.mrb[0].mxu0 %v5194
        %v5196 = vpop.f32.mrb[0].mxu0
        %v5197 = vadd.f32 %v5112, %v5196
        %v5198 = vpop.f32.mrb[0].mxu0
        %5199 = vmatprep.mubr.f32.mxu0 0.0
        %v5200 = vand.u32 %v4624, 4294901760
        %5201 = vmatmul.mubr.f32.gmra.mrb[0].mxu0 %v5200
        %v5202 = vpop.f32.mrb[0].mxu0
        %v5203 = vadd.f32 %v5118, %v5202
        %v5204 = vpop.f32.mrb[0].mxu0
        %5205 = vdwg.mxu0
        %v5207 = vsel %vm2520, %v4595, 0
        %v5210 = vsel %vm2520, %v4596, 0
        %5212 = vmatprep.subr.mxu0 0.0
        %v5213 = vand.u32 %v4603, 4294901760
        %5214 = vmatpush1.msra.mxu0 %v5213
        %5215 = vmatprep.subr.mxu0 0.0
        %v5216 = vand.u32 %v4604, 4294901760
        %5217 = vmatpush1.msra.mxu0 %v5216
        %5218 = vmatprep.subr.mxu0 0.0
        %v5219 = vand.u32 %v4605, 4294901760
        %5220 = vmatpush1.msra.mxu0 %v5219
        %5221 = vmatprep.subr.mxu0 0.0
        %v5222 = vand.u32 %v4606, 4294901760
        %5223 = vmatpush1.msra.mxu0 %v5222
        %5224 = vmatprep.subr.mxu0 0.0
        %v5225 = vand.u32 %v4607, 4294901760
        %5226 = vmatpush1.msra.mxu0 %v5225
        %5227 = vmatprep.subr.mxu0 0.0
        %v5228 = vand.u32 %v4608, 4294901760
        %5229 = vmatpush1.msra.mxu0 %v5228
        %5230 = vmatprep.subr.mxu0 0.0
        %v5231 = vand.u32 %v4609, 4294901760
        %5232 = vmatpush1.msra.mxu0 %v5231
        %5233 = vmatprep.subr.mxu0 0.0
        %v5234 = vand.u32 %v4610, 4294901760
        %5235 = vmatpush1.msra.mxu0 %v5234
        %5236 = vmatprep.subr.mxu0 0.0
        %5237 = vmatpush1.msra.mxu0 0.0
        %5238 = vmatprep.subr.mxu0 0.0
        %5239 = vmatpush1.msra.mxu0 0.0
        %5240 = vmatprep.subr.mxu0 0.0
        %5241 = vmatpush1.msra.mxu0 0.0
        %5242 = vmatprep.subr.mxu0 0.0
        %5243 = vmatpush1.msra.mxu0 0.0
        %5244 = vmatprep.subr.mxu0 0.0
        %5245 = vmatpush1.msra.mxu0 0.0
        %5246 = vmatprep.subr.mxu0 0.0
        %5247 = vmatpush1.msra.mxu0 0.0
        %5248 = vmatprep.subr.mxu0 0.0
        %5249 = vmatpush1.msra.mxu0 0.0
        %5250 = vmatprep.subr.mxu0 0.0
        %5251 = vmatpush1.msra.mxu0 0.0
        %5252 = vmatprep.subr.mxu0 0.0
        %5253 = vmatpush1.msra.mxu0 0.0
        %5254 = vmatprep.subr.mxu0 0.0
        %5255 = vmatpush1.msra.mxu0 0.0
        %5256 = vmatprep.subr.mxu0 0.0
        %5257 = vmatpush1.msra.mxu0 0.0
        %5258 = vmatprep.subr.mxu0 0.0
        %5259 = vmatpush1.msra.mxu0 0.0
        %5260 = vmatprep.subr.mxu0 0.0
        %5261 = vmatpush1.msra.mxu0 0.0
        %5262 = vmatprep.subr.mxu0 0.0
        %5263 = vmatpush1.msra.mxu0 0.0
        %5264 = vmatprep.subr.mxu0 0.0
        %5265 = vmatpush1.msra.mxu0 0.0
        %5266 = vmatprep.subr.mxu0 0.0
        %5267 = vmatpush1.msra.mxu0 0.0
        %5268 = vmatprep.subr.mxu0 0.0
        %5269 = vmatpush1.msra.mxu0 0.0
        %5270 = vmatprep.subr.mxu0 0.0
        %5271 = vmatpush1.msra.mxu0 0.0
        %5272 = vmatprep.subr.mxu0 0.0
        %5273 = vmatpush1.msra.mxu0 0.0
        %5274 = vmatprep.subr.mxu0 0.0
        %5275 = vmatpush1.msra.mxu0 0.0
        %5276 = vmatprep.subr.mxu0 0.0
        %5277 = vmatpush1.msra.mxu0 0.0
        %5278 = vmatprep.subr.mxu0 0.0
        %5279 = vmatpush1.msra.mxu0 0.0
        %5280 = vmatprep.subr.mxu0 0.0
        %5281 = vmatpush1.msra.mxu0 0.0
        %5282 = vmatprep.subr.mxu0 0.0
        %5283 = vmatpush1.msra.mxu0 0.0
        %5284 = vmatprep.mubr.f32.mxu0 0.0
        %v5285 = vand.u32 %v5207, 4294901760
        %v5286 = vsub.f32 %v5207, %v5285
        %v5287 = vand.u32 %v5286, 4294901760
        %v5288 = vsub.f32 %v5286, %v5287
        %v5289 = vand.u32 %v5288, 4294901760
        %5290 = vmatmul.mubr.f32.gmra.mrb[0].mxu0 %v5289
        %v5291 = vpop.f32.mrb[0].mxu0
        %v5292 = vadd.f32 %v5197, %v5291
        %v5293 = vpop.f32.mrb[0].mxu0
        %5294 = vmatprep.mubr.f32.mxu0 0.0
        %v5295 = vand.u32 %v5210, 4294901760
        %v5296 = vsub.f32 %v5210, %v5295
        %v5297 = vand.u32 %v5296, 4294901760
        %v5298 = vsub.f32 %v5296, %v5297
        %v5299 = vand.u32 %v5298, 4294901760
        %5300 = vmatmul.mubr.f32.gmra.mrb[0].mxu0 %v5299
        %v5301 = vpop.f32.mrb[0].mxu0
        %v5302 = vadd.f32 %v5203, %v5301
        %v5303 = vpop.f32.mrb[0].mxu0
        %5304 = vdwg.mxu0
        %5305 = vmatprep.subr.mxu0 0.0
        %v5306 = vand.u32 %v4603, 4294901760
        %v5307 = vsub.f32 %v4603, %v5306
        %v5308 = vand.u32 %v5307, 4294901760
        %v5309 = vsub.f32 %v5307, %v5308
        %v5310 = vand.u32 %v5309, 4294901760
        %5311 = vmatpush1.msra.mxu0 %v5310
        %5312 = vmatprep.subr.mxu0 0.0
        %v5313 = vand.u32 %v4604, 4294901760
        %v5314 = vsub.f32 %v4604, %v5313
        %v5315 = vand.u32 %v5314, 4294901760
        %v5316 = vsub.f32 %v5314, %v5315
        %v5317 = vand.u32 %v5316, 4294901760
        %5318 = vmatpush1.msra.mxu0 %v5317
        %5319 = vmatprep.subr.mxu0 0.0
        %v5320 = vand.u32 %v4605, 4294901760
        %v5321 = vsub.f32 %v4605, %v5320
        %v5322 = vand.u32 %v5321, 4294901760
        %v5323 = vsub.f32 %v5321, %v5322
        %v5324 = vand.u32 %v5323, 4294901760
        %5325 = vmatpush1.msra.mxu0 %v5324
        %5326 = vmatprep.subr.mxu0 0.0
        %v5327 = vand.u32 %v4606, 4294901760
        %v5328 = vsub.f32 %v4606, %v5327
        %v5329 = vand.u32 %v5328, 4294901760
        %v5330 = vsub.f32 %v5328, %v5329
        %v5331 = vand.u32 %v5330, 4294901760
        %5332 = vmatpush1.msra.mxu0 %v5331
        %5333 = vmatprep.subr.mxu0 0.0
        %v5334 = vand.u32 %v4607, 4294901760
        %v5335 = vsub.f32 %v4607, %v5334
        %v5336 = vand.u32 %v5335, 4294901760
        %v5337 = vsub.f32 %v5335, %v5336
        %v5338 = vand.u32 %v5337, 4294901760
        %5339 = vmatpush1.msra.mxu0 %v5338
        %5340 = vmatprep.subr.mxu0 0.0
        %v5341 = vand.u32 %v4608, 4294901760
        %v5342 = vsub.f32 %v4608, %v5341
        %v5343 = vand.u32 %v5342, 4294901760
        %v5344 = vsub.f32 %v5342, %v5343
        %v5345 = vand.u32 %v5344, 4294901760
        %5346 = vmatpush1.msra.mxu0 %v5345
        %5347 = vmatprep.subr.mxu0 0.0
        %v5348 = vand.u32 %v4609, 4294901760
        %v5349 = vsub.f32 %v4609, %v5348
        %v5350 = vand.u32 %v5349, 4294901760
        %v5351 = vsub.f32 %v5349, %v5350
        %v5352 = vand.u32 %v5351, 4294901760
        %5353 = vmatpush1.msra.mxu0 %v5352
        %5354 = vmatprep.subr.mxu0 0.0
        %v5355 = vand.u32 %v4610, 4294901760
        %v5356 = vsub.f32 %v4610, %v5355
        %v5357 = vand.u32 %v5356, 4294901760
        %v5358 = vsub.f32 %v5356, %v5357
        %v5359 = vand.u32 %v5358, 4294901760
        %5360 = vmatpush1.msra.mxu0 %v5359
        %5361 = vmatprep.subr.mxu0 0.0
        %5362 = vmatpush1.msra.mxu0 0.0
        %5363 = vmatprep.subr.mxu0 0.0
        %5364 = vmatpush1.msra.mxu0 0.0
        %5365 = vmatprep.subr.mxu0 0.0
        %5366 = vmatpush1.msra.mxu0 0.0
        %5367 = vmatprep.subr.mxu0 0.0
        %5368 = vmatpush1.msra.mxu0 0.0
        %5369 = vmatprep.subr.mxu0 0.0
        %5370 = vmatpush1.msra.mxu0 0.0
        %5371 = vmatprep.subr.mxu0 0.0
        %5372 = vmatpush1.msra.mxu0 0.0
        %5373 = vmatprep.subr.mxu0 0.0
        %5374 = vmatpush1.msra.mxu0 0.0
        %5375 = vmatprep.subr.mxu0 0.0
        %5376 = vmatpush1.msra.mxu0 0.0
        %5377 = vmatprep.subr.mxu0 0.0
        %5378 = vmatpush1.msra.mxu0 0.0
        %5379 = vmatprep.subr.mxu0 0.0
        %5380 = vmatpush1.msra.mxu0 0.0
        %5381 = vmatprep.subr.mxu0 0.0
        %5382 = vmatpush1.msra.mxu0 0.0
        %5383 = vmatprep.subr.mxu0 0.0
        %5384 = vmatpush1.msra.mxu0 0.0
        %5385 = vmatprep.subr.mxu0 0.0
        %5386 = vmatpush1.msra.mxu0 0.0
        %5387 = vmatprep.subr.mxu0 0.0
        %5388 = vmatpush1.msra.mxu0 0.0
        %5389 = vmatprep.subr.mxu0 0.0
        %5390 = vmatpush1.msra.mxu0 0.0
        %5391 = vmatprep.subr.mxu0 0.0
        %5392 = vmatpush1.msra.mxu0 0.0
        %5393 = vmatprep.subr.mxu0 0.0
        %5394 = vmatpush1.msra.mxu0 0.0
        %5395 = vmatprep.subr.mxu0 0.0
        %5396 = vmatpush1.msra.mxu0 0.0
        %5397 = vmatprep.subr.mxu0 0.0
        %5398 = vmatpush1.msra.mxu0 0.0
        %5399 = vmatprep.subr.mxu0 0.0
        %5400 = vmatpush1.msra.mxu0 0.0
        %5401 = vmatprep.subr.mxu0 0.0
        %5402 = vmatpush1.msra.mxu0 0.0
        %5403 = vmatprep.subr.mxu0 0.0
        %5404 = vmatpush1.msra.mxu0 0.0
        %5405 = vmatprep.subr.mxu0 0.0
        %5406 = vmatpush1.msra.mxu0 0.0
        %5407 = vmatprep.subr.mxu0 0.0
        %5408 = vmatpush1.msra.mxu0 0.0
        %5409 = vmatprep.mubr.f32.mxu0 0.0
        %v5410 = vand.u32 %v5207, 4294901760
        %5411 = vmatmul.mubr.f32.gmra.mrb[0].mxu0 %v5410
        %v5412 = vpop.f32.mrb[0].mxu0
        %v5413 = vadd.f32 %v5292, %v5412
        %v5414 = vpop.f32.mrb[0].mxu0
        %5415 = vmatprep.mubr.f32.mxu0 0.0
        %v5416 = vand.u32 %v5210, 4294901760
        %5417 = vmatmul.mubr.f32.gmra.mrb[0].mxu0 %v5416
        %v5418 = vpop.f32.mrb[0].mxu0
        %v5419 = vadd.f32 %v5302, %v5418
        %v5420 = vpop.f32.mrb[0].mxu0
        %5421 = vdwg.mxu0
        %5422 = vmatprep.subr.mxu0 0.0
        %v5423 = vand.u32 %v4603, 4294901760
        %v5424 = vsub.f32 %v4603, %v5423
        %5425 = vmatpush1.msra.mxu0 %v5424
        %5426 = vmatprep.subr.mxu0 0.0
        %v5427 = vand.u32 %v4604, 4294901760
        %v5428 = vsub.f32 %v4604, %v5427
        %5429 = vmatpush1.msra.mxu0 %v5428
        %5430 = vmatprep.subr.mxu0 0.0
        %v5431 = vand.u32 %v4605, 4294901760
        %v5432 = vsub.f32 %v4605, %v5431
        %5433 = vmatpush1.msra.mxu0 %v5432
        %5434 = vmatprep.subr.mxu0 0.0
        %v5435 = vand.u32 %v4606, 4294901760
        %v5436 = vsub.f32 %v4606, %v5435
        %5437 = vmatpush1.msra.mxu0 %v5436
        %5438 = vmatprep.subr.mxu0 0.0
        %v5439 = vand.u32 %v4607, 4294901760
        %v5440 = vsub.f32 %v4607, %v5439
        %5441 = vmatpush1.msra.mxu0 %v5440
        %5442 = vmatprep.subr.mxu0 0.0
        %v5443 = vand.u32 %v4608, 4294901760
        %v5444 = vsub.f32 %v4608, %v5443
        %5445 = vmatpush1.msra.mxu0 %v5444
        %5446 = vmatprep.subr.mxu0 0.0
        %v5447 = vand.u32 %v4609, 4294901760
        %v5448 = vsub.f32 %v4609, %v5447
        %5449 = vmatpush1.msra.mxu0 %v5448
        %5450 = vmatprep.subr.mxu0 0.0
        %v5451 = vand.u32 %v4610, 4294901760
        %v5452 = vsub.f32 %v4610, %v5451
        %5453 = vmatpush1.msra.mxu0 %v5452
        %5454 = vmatprep.subr.mxu0 0.0
        %5455 = vmatpush1.msra.mxu0 0.0
        %5456 = vmatprep.subr.mxu0 0.0
        %5457 = vmatpush1.msra.mxu0 0.0
        %5458 = vmatprep.subr.mxu0 0.0
        %5459 = vmatpush1.msra.mxu0 0.0
        %5460 = vmatprep.subr.mxu0 0.0
        %5461 = vmatpush1.msra.mxu0 0.0
        %5462 = vmatprep.subr.mxu0 0.0
        %5463 = vmatpush1.msra.mxu0 0.0
        %5464 = vmatprep.subr.mxu0 0.0
        %5465 = vmatpush1.msra.mxu0 0.0
        %5466 = vmatprep.subr.mxu0 0.0
        %5467 = vmatpush1.msra.mxu0 0.0
        %5468 = vmatprep.subr.mxu0 0.0
        %5469 = vmatpush1.msra.mxu0 0.0
        %5470 = vmatprep.subr.mxu0 0.0
        %5471 = vmatpush1.msra.mxu0 0.0
        %5472 = vmatprep.subr.mxu0 0.0
        %5473 = vmatpush1.msra.mxu0 0.0
        %5474 = vmatprep.subr.mxu0 0.0
        %5475 = vmatpush1.msra.mxu0 0.0
        %5476 = vmatprep.subr.mxu0 0.0
        %5477 = vmatpush1.msra.mxu0 0.0
        %5478 = vmatprep.subr.mxu0 0.0
        %5479 = vmatpush1.msra.mxu0 0.0
        %5480 = vmatprep.subr.mxu0 0.0
        %5481 = vmatpush1.msra.mxu0 0.0
        %5482 = vmatprep.subr.mxu0 0.0
        %5483 = vmatpush1.msra.mxu0 0.0
        %5484 = vmatprep.subr.mxu0 0.0
        %5485 = vmatpush1.msra.mxu0 0.0
        %5486 = vmatprep.subr.mxu0 0.0
        %5487 = vmatpush1.msra.mxu0 0.0
        %5488 = vmatprep.subr.mxu0 0.0
        %5489 = vmatpush1.msra.mxu0 0.0
        %5490 = vmatprep.subr.mxu0 0.0
        %5491 = vmatpush1.msra.mxu0 0.0
        %5492 = vmatprep.subr.mxu0 0.0
        %5493 = vmatpush1.msra.mxu0 0.0
        %5494 = vmatprep.subr.mxu0 0.0
        %5495 = vmatpush1.msra.mxu0 0.0
        %5496 = vmatprep.subr.mxu0 0.0
        %5497 = vmatpush1.msra.mxu0 0.0
        %5498 = vmatprep.subr.mxu0 0.0
        %5499 = vmatpush1.msra.mxu0 0.0
        %5500 = vmatprep.subr.mxu0 0.0
        %5501 = vmatpush1.msra.mxu0 0.0
        %5502 = vmatprep.mubr.f32.mxu0 0.0
        %v5503 = vand.u32 %v5207, 4294901760
        %v5504 = vsub.f32 %v5207, %v5503
        %5505 = vmatmul.mubr.f32.gmra.mrb[0].mxu0 %v5504
        %v5506 = vpop.f32.mrb[0].mxu0
        %v5507 = vadd.f32 %v5413, %v5506
        %v5508 = vpop.f32.mrb[0].mxu0
        %5509 = vmatprep.mubr.f32.mxu0 0.0
        %v5510 = vand.u32 %v5210, 4294901760
        %v5511 = vsub.f32 %v5210, %v5510
        %5512 = vmatmul.mubr.f32.gmra.mrb[0].mxu0 %v5511
        %v5513 = vpop.f32.mrb[0].mxu0
        %v5514 = vadd.f32 %v5419, %v5513
        %v5515 = vpop.f32.mrb[0].mxu0
        %5516 = vdwg.mxu0
        %5517 = vmatprep.subr.mxu0 0.0
        %v5518 = vand.u32 %v4603, 4294901760
        %5519 = vmatpush1.msra.mxu0 %v5518
        %5520 = vmatprep.subr.mxu0 0.0
        %v5521 = vand.u32 %v4604, 4294901760
        %5522 = vmatpush1.msra.mxu0 %v5521
        %5523 = vmatprep.subr.mxu0 0.0
        %v5524 = vand.u32 %v4605, 4294901760
        %5525 = vmatpush1.msra.mxu0 %v5524
        %5526 = vmatprep.subr.mxu0 0.0
        %v5527 = vand.u32 %v4606, 4294901760
        %5528 = vmatpush1.msra.mxu0 %v5527
        %5529 = vmatprep.subr.mxu0 0.0
        %v5530 = vand.u32 %v4607, 4294901760
        %5531 = vmatpush1.msra.mxu0 %v5530
        %5532 = vmatprep.subr.mxu0 0.0
        %v5533 = vand.u32 %v4608, 4294901760
        %5534 = vmatpush1.msra.mxu0 %v5533
        %5535 = vmatprep.subr.mxu0 0.0
        %v5536 = vand.u32 %v4609, 4294901760
        %5537 = vmatpush1.msra.mxu0 %v5536
        %5538 = vmatprep.subr.mxu0 0.0
        %v5539 = vand.u32 %v4610, 4294901760
        %5540 = vmatpush1.msra.mxu0 %v5539
        %5541 = vmatprep.subr.mxu0 0.0
        %5542 = vmatpush1.msra.mxu0 0.0
        %5543 = vmatprep.subr.mxu0 0.0
        %5544 = vmatpush1.msra.mxu0 0.0
        %5545 = vmatprep.subr.mxu0 0.0
        %5546 = vmatpush1.msra.mxu0 0.0
        %5547 = vmatprep.subr.mxu0 0.0
        %5548 = vmatpush1.msra.mxu0 0.0
        %5549 = vmatprep.subr.mxu0 0.0
        %5550 = vmatpush1.msra.mxu0 0.0
        %5551 = vmatprep.subr.mxu0 0.0
        %5552 = vmatpush1.msra.mxu0 0.0
        %5553 = vmatprep.subr.mxu0 0.0
        %5554 = vmatpush1.msra.mxu0 0.0
        %5555 = vmatprep.subr.mxu0 0.0
        %5556 = vmatpush1.msra.mxu0 0.0
        %5557 = vmatprep.subr.mxu0 0.0
        %5558 = vmatpush1.msra.mxu0 0.0
        %5559 = vmatprep.subr.mxu0 0.0
        %5560 = vmatpush1.msra.mxu0 0.0
        %5561 = vmatprep.subr.mxu0 0.0
        %5562 = vmatpush1.msra.mxu0 0.0
        %5563 = vmatprep.subr.mxu0 0.0
        %5564 = vmatpush1.msra.mxu0 0.0
        %5565 = vmatprep.subr.mxu0 0.0
        %5566 = vmatpush1.msra.mxu0 0.0
        %5567 = vmatprep.subr.mxu0 0.0
        %5568 = vmatpush1.msra.mxu0 0.0
        %5569 = vmatprep.subr.mxu0 0.0
        %5570 = vmatpush1.msra.mxu0 0.0
        %5571 = vmatprep.subr.mxu0 0.0
        %5572 = vmatpush1.msra.mxu0 0.0
        %5573 = vmatprep.subr.mxu0 0.0
        %5574 = vmatpush1.msra.mxu0 0.0
        %5575 = vmatprep.subr.mxu0 0.0
        %5576 = vmatpush1.msra.mxu0 0.0
        %5577 = vmatprep.subr.mxu0 0.0
        %5578 = vmatpush1.msra.mxu0 0.0
        %5579 = vmatprep.subr.mxu0 0.0
        %5580 = vmatpush1.msra.mxu0 0.0
        %5581 = vmatprep.subr.mxu0 0.0
        %5582 = vmatpush1.msra.mxu0 0.0
        %5583 = vmatprep.subr.mxu0 0.0
        %5584 = vmatpush1.msra.mxu0 0.0
        %5585 = vmatprep.subr.mxu0 0.0
        %5586 = vmatpush1.msra.mxu0 0.0
        %5587 = vmatprep.subr.mxu0 0.0
        %5588 = vmatpush1.msra.mxu0 0.0
        %5589 = vmatprep.mubr.f32.mxu0 0.0
        %v5590 = vand.u32 %v5207, 4294901760
        %v5591 = vsub.f32 %v5207, %v5590
        %v5592 = vand.u32 %v5591, 4294901760
        %5593 = vmatmul.mubr.f32.gmra.mrb[0].mxu0 %v5592
        %v5594 = vpop.f32.mrb[0].mxu0
        %v5595 = vadd.f32 %v5507, %v5594
        %v5596 = vpop.f32.mrb[0].mxu0
        %5597 = vmatprep.mubr.f32.mxu0 0.0
        %v5598 = vand.u32 %v5210, 4294901760
        %v5599 = vsub.f32 %v5210, %v5598
        %v5600 = vand.u32 %v5599, 4294901760
        %5601 = vmatmul.mubr.f32.gmra.mrb[0].mxu0 %v5600
        %v5602 = vpop.f32.mrb[0].mxu0
        %v5603 = vadd.f32 %v5514, %v5602
        %v5604 = vpop.f32.mrb[0].mxu0
        %5605 = vdwg.mxu0
        %5606 = vmatprep.subr.mxu0 0.0
        %v5607 = vand.u32 %v4603, 4294901760
        %v5608 = vsub.f32 %v4603, %v5607
        %v5609 = vand.u32 %v5608, 4294901760
        %5610 = vmatpush1.msra.mxu0 %v5609
        %5611 = vmatprep.subr.mxu0 0.0
        %v5612 = vand.u32 %v4604, 4294901760
        %v5613 = vsub.f32 %v4604, %v5612
        %v5614 = vand.u32 %v5613, 4294901760
        %5615 = vmatpush1.msra.mxu0 %v5614
        %5616 = vmatprep.subr.mxu0 0.0
        %v5617 = vand.u32 %v4605, 4294901760
        %v5618 = vsub.f32 %v4605, %v5617
        %v5619 = vand.u32 %v5618, 4294901760
        %5620 = vmatpush1.msra.mxu0 %v5619
        %5621 = vmatprep.subr.mxu0 0.0
        %v5622 = vand.u32 %v4606, 4294901760
        %v5623 = vsub.f32 %v4606, %v5622
        %v5624 = vand.u32 %v5623, 4294901760
        %5625 = vmatpush1.msra.mxu0 %v5624
        %5626 = vmatprep.subr.mxu0 0.0
        %v5627 = vand.u32 %v4607, 4294901760
        %v5628 = vsub.f32 %v4607, %v5627
        %v5629 = vand.u32 %v5628, 4294901760
        %5630 = vmatpush1.msra.mxu0 %v5629
        %5631 = vmatprep.subr.mxu0 0.0
        %v5632 = vand.u32 %v4608, 4294901760
        %v5633 = vsub.f32 %v4608, %v5632
        %v5634 = vand.u32 %v5633, 4294901760
        %5635 = vmatpush1.msra.mxu0 %v5634
        %5636 = vmatprep.subr.mxu0 0.0
        %v5637 = vand.u32 %v4609, 4294901760
        %v5638 = vsub.f32 %v4609, %v5637
        %v5639 = vand.u32 %v5638, 4294901760
        %5640 = vmatpush1.msra.mxu0 %v5639
        %5641 = vmatprep.subr.mxu0 0.0
        %v5642 = vand.u32 %v4610, 4294901760
        %v5643 = vsub.f32 %v4610, %v5642
        %v5644 = vand.u32 %v5643, 4294901760
        %5645 = vmatpush1.msra.mxu0 %v5644
        %5646 = vmatprep.subr.mxu0 0.0
        %5647 = vmatpush1.msra.mxu0 0.0
        %5648 = vmatprep.subr.mxu0 0.0
        %5649 = vmatpush1.msra.mxu0 0.0
        %5650 = vmatprep.subr.mxu0 0.0
        %5651 = vmatpush1.msra.mxu0 0.0
        %5652 = vmatprep.subr.mxu0 0.0
        %5653 = vmatpush1.msra.mxu0 0.0
        %5654 = vmatprep.subr.mxu0 0.0
        %5655 = vmatpush1.msra.mxu0 0.0
        %5656 = vmatprep.subr.mxu0 0.0
        %5657 = vmatpush1.msra.mxu0 0.0
        %5658 = vmatprep.subr.mxu0 0.0
        %5659 = vmatpush1.msra.mxu0 0.0
        %5660 = vmatprep.subr.mxu0 0.0
        %5661 = vmatpush1.msra.mxu0 0.0
        %5662 = vmatprep.subr.mxu0 0.0
        %5663 = vmatpush1.msra.mxu0 0.0
        %5664 = vmatprep.subr.mxu0 0.0
        %5665 = vmatpush1.msra.mxu0 0.0
        %5666 = vmatprep.subr.mxu0 0.0
        %5667 = vmatpush1.msra.mxu0 0.0
        %5668 = vmatprep.subr.mxu0 0.0
        %5669 = vmatpush1.msra.mxu0 0.0
        %5670 = vmatprep.subr.mxu0 0.0
        %5671 = vmatpush1.msra.mxu0 0.0
        %5672 = vmatprep.subr.mxu0 0.0
        %5673 = vmatpush1.msra.mxu0 0.0
        %5674 = vmatprep.subr.mxu0 0.0
        %5675 = vmatpush1.msra.mxu0 0.0
        %5676 = vmatprep.subr.mxu0 0.0
        %5677 = vmatpush1.msra.mxu0 0.0
        %5678 = vmatprep.subr.mxu0 0.0
        %5679 = vmatpush1.msra.mxu0 0.0
        %5680 = vmatprep.subr.mxu0 0.0
        %5681 = vmatpush1.msra.mxu0 0.0
        %5682 = vmatprep.subr.mxu0 0.0
        %5683 = vmatpush1.msra.mxu0 0.0
        %5684 = vmatprep.subr.mxu0 0.0
        %5685 = vmatpush1.msra.mxu0 0.0
        %5686 = vmatprep.subr.mxu0 0.0
        %5687 = vmatpush1.msra.mxu0 0.0
        %5688 = vmatprep.subr.mxu0 0.0
        %5689 = vmatpush1.msra.mxu0 0.0
        %5690 = vmatprep.subr.mxu0 0.0
        %5691 = vmatpush1.msra.mxu0 0.0
        %5692 = vmatprep.subr.mxu0 0.0
        %5693 = vmatpush1.msra.mxu0 0.0
        %5694 = vmatprep.mubr.f32.mxu0 0.0
        %v5695 = vand.u32 %v5207, 4294901760
        %5696 = vmatmul.mubr.f32.gmra.mrb[0].mxu0 %v5695
        %v5697 = vpop.f32.mrb[0].mxu0
        %v5698 = vadd.f32 %v5595, %v5697
        %v5699 = vpop.f32.mrb[0].mxu0
        %5700 = vmatprep.mubr.f32.mxu0 0.0
        %v5701 = vand.u32 %v5210, 4294901760
        %5702 = vmatmul.mubr.f32.gmra.mrb[0].mxu0 %v5701
        %v5703 = vpop.f32.mrb[0].mxu0
        %v5704 = vadd.f32 %v5603, %v5703
        %v5705 = vpop.f32.mrb[0].mxu0
        %5706 = vdwg.mxu0
        %5707 = vmatprep.subr.mxu0 0.0
        %v5708 = vand.u32 %v4603, 4294901760
        %5709 = vmatpush1.msra.mxu0 %v5708
        %5710 = vmatprep.subr.mxu0 0.0
        %v5711 = vand.u32 %v4604, 4294901760
        %5712 = vmatpush1.msra.mxu0 %v5711
        %5713 = vmatprep.subr.mxu0 0.0
        %v5714 = vand.u32 %v4605, 4294901760
        %5715 = vmatpush1.msra.mxu0 %v5714
        %5716 = vmatprep.subr.mxu0 0.0
        %v5717 = vand.u32 %v4606, 4294901760
        %5718 = vmatpush1.msra.mxu0 %v5717
        %5719 = vmatprep.subr.mxu0 0.0
        %v5720 = vand.u32 %v4607, 4294901760
        %5721 = vmatpush1.msra.mxu0 %v5720
        %5722 = vmatprep.subr.mxu0 0.0
        %v5723 = vand.u32 %v4608, 4294901760
        %5724 = vmatpush1.msra.mxu0 %v5723
        %5725 = vmatprep.subr.mxu0 0.0
        %v5726 = vand.u32 %v4609, 4294901760
        %5727 = vmatpush1.msra.mxu0 %v5726
        %5728 = vmatprep.subr.mxu0 0.0
        %v5729 = vand.u32 %v4610, 4294901760
        %5730 = vmatpush1.msra.mxu0 %v5729
        %5731 = vmatprep.subr.mxu0 0.0
        %5732 = vmatpush1.msra.mxu0 0.0
        %5733 = vmatprep.subr.mxu0 0.0
        %5734 = vmatpush1.msra.mxu0 0.0
        %5735 = vmatprep.subr.mxu0 0.0
        %5736 = vmatpush1.msra.mxu0 0.0
        %5737 = vmatprep.subr.mxu0 0.0
        %5738 = vmatpush1.msra.mxu0 0.0
        %5739 = vmatprep.subr.mxu0 0.0
        %5740 = vmatpush1.msra.mxu0 0.0
        %5741 = vmatprep.subr.mxu0 0.0
        %5742 = vmatpush1.msra.mxu0 0.0
        %5743 = vmatprep.subr.mxu0 0.0
        %5744 = vmatpush1.msra.mxu0 0.0
        %5745 = vmatprep.subr.mxu0 0.0
        %5746 = vmatpush1.msra.mxu0 0.0
        %5747 = vmatprep.subr.mxu0 0.0
        %5748 = vmatpush1.msra.mxu0 0.0
        %5749 = vmatprep.subr.mxu0 0.0
        %5750 = vmatpush1.msra.mxu0 0.0
        %5751 = vmatprep.subr.mxu0 0.0
        %5752 = vmatpush1.msra.mxu0 0.0
        %5753 = vmatprep.subr.mxu0 0.0
        %5754 = vmatpush1.msra.mxu0 0.0
        %5755 = vmatprep.subr.mxu0 0.0
        %5756 = vmatpush1.msra.mxu0 0.0
        %5757 = vmatprep.subr.mxu0 0.0
        %5758 = vmatpush1.msra.mxu0 0.0
        %5759 = vmatprep.subr.mxu0 0.0
        %5760 = vmatpush1.msra.mxu0 0.0
        %5761 = vmatprep.subr.mxu0 0.0
        %5762 = vmatpush1.msra.mxu0 0.0
        %5763 = vmatprep.subr.mxu0 0.0
        %5764 = vmatpush1.msra.mxu0 0.0
        %5765 = vmatprep.subr.mxu0 0.0
        %5766 = vmatpush1.msra.mxu0 0.0
        %5767 = vmatprep.subr.mxu0 0.0
        %5768 = vmatpush1.msra.mxu0 0.0
        %5769 = vmatprep.subr.mxu0 0.0
        %5770 = vmatpush1.msra.mxu0 0.0
        %5771 = vmatprep.subr.mxu0 0.0
        %5772 = vmatpush1.msra.mxu0 0.0
        %5773 = vmatprep.subr.mxu0 0.0
        %5774 = vmatpush1.msra.mxu0 0.0
        %5775 = vmatprep.subr.mxu0 0.0
        %5776 = vmatpush1.msra.mxu0 0.0
        %5777 = vmatprep.subr.mxu0 0.0
        %5778 = vmatpush1.msra.mxu0 0.0
        %5779 = vmatprep.mubr.f32.mxu0 0.0
        %v5780 = vand.u32 %v5207, 4294901760
        %5781 = vmatmul.mubr.f32.gmra.mrb[0].mxu0 %v5780
        %v5782 = vpop.f32.mrb[0].mxu0
        %v5783 = vadd.f32 %v5698, %v5782
        %v5784 = vpop.f32.mrb[0].mxu0
        %5785 = vmatprep.mubr.f32.mxu0 0.0
        %v5786 = vand.u32 %v5210, 4294901760
        %5787 = vmatmul.mubr.f32.gmra.mrb[0].mxu0 %v5786
        %v5788 = vpop.f32.mrb[0].mxu0
        %v5789 = vadd.f32 %v5704, %v5788
        %v5790 = vpop.f32.mrb[0].mxu0
        %5791 = vdwg.mxu0
        %s5792 = scalar_lea.vmem %s5, 128
        %v5793 = vld [vmem:[%s5792] sm:$0xff]
        %v5794 = vld [vmem:[%s5792 + $0x8] sm:$0xff]
        %v5795 = vld [vmem:[%s5792 + $0x10] sm:$0xff]
        %v5796 = vld [vmem:[%s5792 + $0x18] sm:$0xff]
        %v5797 = vld [vmem:[%s5792 + $0x20] sm:$0xff]
        %v5798 = vld [vmem:[%s5792 + $0x28] sm:$0xff]
        %v5799 = vld [vmem:[%s5792 + $0x30] sm:$0xff]
        %v5800 = vld [vmem:[%s5792 + $0x38] sm:$0xff]
        %v5802 = vsel %vm2520, %v4601, 0
        %v5805 = vsel %vm2520, %v4602, 0
        %5807 = vmatprep.subr.mxu0 0.0
        %v5808 = vand.u32 %v5793, 4294901760
        %5809 = vmatpush1.msra.mxu0 %v5808
        %5810 = vmatprep.subr.mxu0 0.0
        %v5811 = vand.u32 %v5794, 4294901760
        %5812 = vmatpush1.msra.mxu0 %v5811
        %5813 = vmatprep.subr.mxu0 0.0
        %v5814 = vand.u32 %v5795, 4294901760
        %5815 = vmatpush1.msra.mxu0 %v5814
        %5816 = vmatprep.subr.mxu0 0.0
        %v5817 = vand.u32 %v5796, 4294901760
        %5818 = vmatpush1.msra.mxu0 %v5817
        %5819 = vmatprep.subr.mxu0 0.0
        %v5820 = vand.u32 %v5797, 4294901760
        %5821 = vmatpush1.msra.mxu0 %v5820
        %5822 = vmatprep.subr.mxu0 0.0
        %v5823 = vand.u32 %v5798, 4294901760
        %5824 = vmatpush1.msra.mxu0 %v5823
        %5825 = vmatprep.subr.mxu0 0.0
        %v5826 = vand.u32 %v5799, 4294901760
        %5827 = vmatpush1.msra.mxu0 %v5826
        %5828 = vmatprep.subr.mxu0 0.0
        %v5829 = vand.u32 %v5800, 4294901760
        %5830 = vmatpush1.msra.mxu0 %v5829
        %5831 = vmatprep.subr.mxu0 0.0
        %5832 = vmatpush1.msra.mxu0 0.0
        %5833 = vmatprep.subr.mxu0 0.0
        %5834 = vmatpush1.msra.mxu0 0.0
        %5835 = vmatprep.subr.mxu0 0.0
        %5836 = vmatpush1.msra.mxu0 0.0
        %5837 = vmatprep.subr.mxu0 0.0
        %5838 = vmatpush1.msra.mxu0 0.0
        %5839 = vmatprep.subr.mxu0 0.0
        %5840 = vmatpush1.msra.mxu0 0.0
        %5841 = vmatprep.subr.mxu0 0.0
        %5842 = vmatpush1.msra.mxu0 0.0
        %5843 = vmatprep.subr.mxu0 0.0
        %5844 = vmatpush1.msra.mxu0 0.0
        %5845 = vmatprep.subr.mxu0 0.0
        %5846 = vmatpush1.msra.mxu0 0.0
        %5847 = vmatprep.subr.mxu0 0.0
        %5848 = vmatpush1.msra.mxu0 0.0
        %5849 = vmatprep.subr.mxu0 0.0
        %5850 = vmatpush1.msra.mxu0 0.0
        %5851 = vmatprep.subr.mxu0 0.0
        %5852 = vmatpush1.msra.mxu0 0.0
        %5853 = vmatprep.subr.mxu0 0.0
        %5854 = vmatpush1.msra.mxu0 0.0
        %5855 = vmatprep.subr.mxu0 0.0
        %5856 = vmatpush1.msra.mxu0 0.0
        %5857 = vmatprep.subr.mxu0 0.0
        %5858 = vmatpush1.msra.mxu0 0.0
        %5859 = vmatprep.subr.mxu0 0.0
        %5860 = vmatpush1.msra.mxu0 0.0
        %5861 = vmatprep.subr.mxu0 0.0
        %5862 = vmatpush1.msra.mxu0 0.0
        %5863 = vmatprep.subr.mxu0 0.0
        %5864 = vmatpush1.msra.mxu0 0.0
        %5865 = vmatprep.subr.mxu0 0.0
        %5866 = vmatpush1.msra.mxu0 0.0
        %5867 = vmatprep.subr.mxu0 0.0
        %5868 = vmatpush1.msra.mxu0 0.0
        %5869 = vmatprep.subr.mxu0 0.0
        %5870 = vmatpush1.msra.mxu0 0.0
        %5871 = vmatprep.subr.mxu0 0.0
        %5872 = vmatpush1.msra.mxu0 0.0
        %5873 = vmatprep.subr.mxu0 0.0
        %5874 = vmatpush1.msra.mxu0 0.0
        %5875 = vmatprep.subr.mxu0 0.0
        %5876 = vmatpush1.msra.mxu0 0.0
        %5877 = vmatprep.subr.mxu0 0.0
        %5878 = vmatpush1.msra.mxu0 0.0
        %5879 = vmatprep.mubr.f32.mxu0 0.0
        %v5880 = vand.u32 %v5802, 4294901760
        %v5881 = vsub.f32 %v5802, %v5880
        %v5882 = vand.u32 %v5881, 4294901760
        %v5883 = vsub.f32 %v5881, %v5882
        %v5884 = vand.u32 %v5883, 4294901760
        %5885 = vmatmul.mubr.f32.gmra.mrb[0].mxu0 %v5884
        %v5886 = vpop.f32.mrb[0].mxu0
        %v5887 = vadd.f32 0.0, %v5886
        %v5888 = vpop.f32.mrb[0].mxu0
        %5889 = vmatprep.mubr.f32.mxu0 0.0
        %v5890 = vand.u32 %v5805, 4294901760
        %v5891 = vsub.f32 %v5805, %v5890
        %v5892 = vand.u32 %v5891, 4294901760
        %v5893 = vsub.f32 %v5891, %v5892
        %v5894 = vand.u32 %v5893, 4294901760
        %5895 = vmatmul.mubr.f32.gmra.mrb[0].mxu0 %v5894
        %v5896 = vpop.f32.mrb[0].mxu0
        %v5897 = vadd.f32 0.0, %v5896
        %v5898 = vpop.f32.mrb[0].mxu0
        %5899 = vdwg.mxu0
        %5900 = vmatprep.subr.mxu0 0.0
        %v5901 = vand.u32 %v5793, 4294901760
        %v5902 = vsub.f32 %v5793, %v5901
        %v5903 = vand.u32 %v5902, 4294901760
        %v5904 = vsub.f32 %v5902, %v5903
        %v5905 = vand.u32 %v5904, 4294901760
        %5906 = vmatpush1.msra.mxu0 %v5905
        %5907 = vmatprep.subr.mxu0 0.0
        %v5908 = vand.u32 %v5794, 4294901760
        %v5909 = vsub.f32 %v5794, %v5908
        %v5910 = vand.u32 %v5909, 4294901760
        %v5911 = vsub.f32 %v5909, %v5910
        %v5912 = vand.u32 %v5911, 4294901760
        %5913 = vmatpush1.msra.mxu0 %v5912
        %5914 = vmatprep.subr.mxu0 0.0
        %v5915 = vand.u32 %v5795, 4294901760
        %v5916 = vsub.f32 %v5795, %v5915
        %v5917 = vand.u32 %v5916, 4294901760
        %v5918 = vsub.f32 %v5916, %v5917
        %v5919 = vand.u32 %v5918, 4294901760
        %5920 = vmatpush1.msra.mxu0 %v5919
        %5921 = vmatprep.subr.mxu0 0.0
        %v5922 = vand.u32 %v5796, 4294901760
        %v5923 = vsub.f32 %v5796, %v5922
        %v5924 = vand.u32 %v5923, 4294901760
        %v5925 = vsub.f32 %v5923, %v5924
        %v5926 = vand.u32 %v5925, 4294901760
        %5927 = vmatpush1.msra.mxu0 %v5926
        %5928 = vmatprep.subr.mxu0 0.0
        %v5929 = vand.u32 %v5797, 4294901760
        %v5930 = vsub.f32 %v5797, %v5929
        %v5931 = vand.u32 %v5930, 4294901760
        %v5932 = vsub.f32 %v5930, %v5931
        %v5933 = vand.u32 %v5932, 4294901760
        %5934 = vmatpush1.msra.mxu0 %v5933
        %5935 = vmatprep.subr.mxu0 0.0
        %v5936 = vand.u32 %v5798, 4294901760
        %v5937 = vsub.f32 %v5798, %v5936
        %v5938 = vand.u32 %v5937, 4294901760
        %v5939 = vsub.f32 %v5937, %v5938
        %v5940 = vand.u32 %v5939, 4294901760
        %5941 = vmatpush1.msra.mxu0 %v5940
        %5942 = vmatprep.subr.mxu0 0.0
        %v5943 = vand.u32 %v5799, 4294901760
        %v5944 = vsub.f32 %v5799, %v5943
        %v5945 = vand.u32 %v5944, 4294901760
        %v5946 = vsub.f32 %v5944, %v5945
        %v5947 = vand.u32 %v5946, 4294901760
        %5948 = vmatpush1.msra.mxu0 %v5947
        %5949 = vmatprep.subr.mxu0 0.0
        %v5950 = vand.u32 %v5800, 4294901760
        %v5951 = vsub.f32 %v5800, %v5950
        %v5952 = vand.u32 %v5951, 4294901760
        %v5953 = vsub.f32 %v5951, %v5952
        %v5954 = vand.u32 %v5953, 4294901760
        %5955 = vmatpush1.msra.mxu0 %v5954
        %5956 = vmatprep.subr.mxu0 0.0
        %5957 = vmatpush1.msra.mxu0 0.0
        %5958 = vmatprep.subr.mxu0 0.0
        %5959 = vmatpush1.msra.mxu0 0.0
        %5960 = vmatprep.subr.mxu0 0.0
        %5961 = vmatpush1.msra.mxu0 0.0
        %5962 = vmatprep.subr.mxu0 0.0
        %5963 = vmatpush1.msra.mxu0 0.0
        %5964 = vmatprep.subr.mxu0 0.0
        %5965 = vmatpush1.msra.mxu0 0.0
        %5966 = vmatprep.subr.mxu0 0.0
        %5967 = vmatpush1.msra.mxu0 0.0
        %5968 = vmatprep.subr.mxu0 0.0
        %5969 = vmatpush1.msra.mxu0 0.0
        %5970 = vmatprep.subr.mxu0 0.0
        %5971 = vmatpush1.msra.mxu0 0.0
        %5972 = vmatprep.subr.mxu0 0.0
        %5973 = vmatpush1.msra.mxu0 0.0
        %5974 = vmatprep.subr.mxu0 0.0
        %5975 = vmatpush1.msra.mxu0 0.0
        %5976 = vmatprep.subr.mxu0 0.0
        %5977 = vmatpush1.msra.mxu0 0.0
        %5978 = vmatprep.subr.mxu0 0.0
        %5979 = vmatpush1.msra.mxu0 0.0
        %5980 = vmatprep.subr.mxu0 0.0
        %5981 = vmatpush1.msra.mxu0 0.0
        %5982 = vmatprep.subr.mxu0 0.0
        %5983 = vmatpush1.msra.mxu0 0.0
        %5984 = vmatprep.subr.mxu0 0.0
        %5985 = vmatpush1.msra.mxu0 0.0
        %5986 = vmatprep.subr.mxu0 0.0
        %5987 = vmatpush1.msra.mxu0 0.0
        %5988 = vmatprep.subr.mxu0 0.0
        %5989 = vmatpush1.msra.mxu0 0.0
        %5990 = vmatprep.subr.mxu0 0.0
        %5991 = vmatpush1.msra.mxu0 0.0
        %5992 = vmatprep.subr.mxu0 0.0
        %5993 = vmatpush1.msra.mxu0 0.0
        %5994 = vmatprep.subr.mxu0 0.0
        %5995 = vmatpush1.msra.mxu0 0.0
        %5996 = vmatprep.subr.mxu0 0.0
        %5997 = vmatpush1.msra.mxu0 0.0
        %5998 = vmatprep.subr.mxu0 0.0
        %5999 = vmatpush1.msra.mxu0 0.0
        %6000 = vmatprep.subr.mxu0 0.0
        %6001 = vmatpush1.msra.mxu0 0.0
        %6002 = vmatprep.subr.mxu0 0.0
        %6003 = vmatpush1.msra.mxu0 0.0
        %6004 = vmatprep.mubr.f32.mxu0 0.0
        %v6005 = vand.u32 %v5802, 4294901760
        %6006 = vmatmul.mubr.f32.gmra.mrb[0].mxu0 %v6005
        %v6007 = vpop.f32.mrb[0].mxu0
        %v6008 = vadd.f32 %v5887, %v6007
        %v6009 = vpop.f32.mrb[0].mxu0
        %6010 = vmatprep.mubr.f32.mxu0 0.0
        %v6011 = vand.u32 %v5805, 4294901760
        %6012 = vmatmul.mubr.f32.gmra.mrb[0].mxu0 %v6011
        %v6013 = vpop.f32.mrb[0].mxu0
        %v6014 = vadd.f32 %v5897, %v6013
        %v6015 = vpop.f32.mrb[0].mxu0
        %6016 = vdwg.mxu0
        %6017 = vmatprep.subr.mxu0 0.0
        %v6018 = vand.u32 %v5793, 4294901760
        %v6019 = vsub.f32 %v5793, %v6018
        %6020 = vmatpush1.msra.mxu0 %v6019
        %6021 = vmatprep.subr.mxu0 0.0
        %v6022 = vand.u32 %v5794, 4294901760
        %v6023 = vsub.f32 %v5794, %v6022
        %6024 = vmatpush1.msra.mxu0 %v6023
        %6025 = vmatprep.subr.mxu0 0.0
        %v6026 = vand.u32 %v5795, 4294901760
        %v6027 = vsub.f32 %v5795, %v6026
        %6028 = vmatpush1.msra.mxu0 %v6027
        %6029 = vmatprep.subr.mxu0 0.0
        %v6030 = vand.u32 %v5796, 4294901760
        %v6031 = vsub.f32 %v5796, %v6030
        %6032 = vmatpush1.msra.mxu0 %v6031
        %6033 = vmatprep.subr.mxu0 0.0
        %v6034 = vand.u32 %v5797, 4294901760
        %v6035 = vsub.f32 %v5797, %v6034
        %6036 = vmatpush1.msra.mxu0 %v6035
        %6037 = vmatprep.subr.mxu0 0.0
        %v6038 = vand.u32 %v5798, 4294901760
        %v6039 = vsub.f32 %v5798, %v6038
        %6040 = vmatpush1.msra.mxu0 %v6039
        %6041 = vmatprep.subr.mxu0 0.0
        %v6042 = vand.u32 %v5799, 4294901760
        %v6043 = vsub.f32 %v5799, %v6042
        %6044 = vmatpush1.msra.mxu0 %v6043
        %6045 = vmatprep.subr.mxu0 0.0
        %v6046 = vand.u32 %v5800, 4294901760
        %v6047 = vsub.f32 %v5800, %v6046
        %6048 = vmatpush1.msra.mxu0 %v6047
        %6049 = vmatprep.subr.mxu0 0.0
        %6050 = vmatpush1.msra.mxu0 0.0
        %6051 = vmatprep.subr.mxu0 0.0
        %6052 = vmatpush1.msra.mxu0 0.0
        %6053 = vmatprep.subr.mxu0 0.0
        %6054 = vmatpush1.msra.mxu0 0.0
        %6055 = vmatprep.subr.mxu0 0.0
        %6056 = vmatpush1.msra.mxu0 0.0
        %6057 = vmatprep.subr.mxu0 0.0
        %6058 = vmatpush1.msra.mxu0 0.0
        %6059 = vmatprep.subr.mxu0 0.0
        %6060 = vmatpush1.msra.mxu0 0.0
        %6061 = vmatprep.subr.mxu0 0.0
        %6062 = vmatpush1.msra.mxu0 0.0
        %6063 = vmatprep.subr.mxu0 0.0
        %6064 = vmatpush1.msra.mxu0 0.0
        %6065 = vmatprep.subr.mxu0 0.0
        %6066 = vmatpush1.msra.mxu0 0.0
        %6067 = vmatprep.subr.mxu0 0.0
        %6068 = vmatpush1.msra.mxu0 0.0
        %6069 = vmatprep.subr.mxu0 0.0
        %6070 = vmatpush1.msra.mxu0 0.0
        %6071 = vmatprep.subr.mxu0 0.0
        %6072 = vmatpush1.msra.mxu0 0.0
        %6073 = vmatprep.subr.mxu0 0.0
        %6074 = vmatpush1.msra.mxu0 0.0
        %6075 = vmatprep.subr.mxu0 0.0
        %6076 = vmatpush1.msra.mxu0 0.0
        %6077 = vmatprep.subr.mxu0 0.0
        %6078 = vmatpush1.msra.mxu0 0.0
        %6079 = vmatprep.subr.mxu0 0.0
        %6080 = vmatpush1.msra.mxu0 0.0
        %6081 = vmatprep.subr.mxu0 0.0
        %6082 = vmatpush1.msra.mxu0 0.0
        %6083 = vmatprep.subr.mxu0 0.0
        %6084 = vmatpush1.msra.mxu0 0.0
        %6085 = vmatprep.subr.mxu0 0.0
        %6086 = vmatpush1.msra.mxu0 0.0
        %6087 = vmatprep.subr.mxu0 0.0
        %6088 = vmatpush1.msra.mxu0 0.0
        %6089 = vmatprep.subr.mxu0 0.0
        %6090 = vmatpush1.msra.mxu0 0.0
        %6091 = vmatprep.subr.mxu0 0.0
        %6092 = vmatpush1.msra.mxu0 0.0
        %6093 = vmatprep.subr.mxu0 0.0
        %6094 = vmatpush1.msra.mxu0 0.0
        %6095 = vmatprep.subr.mxu0 0.0
        %6096 = vmatpush1.msra.mxu0 0.0
        %6097 = vmatprep.mubr.f32.mxu0 0.0
        %v6098 = vand.u32 %v5802, 4294901760
        %v6099 = vsub.f32 %v5802, %v6098
        %6100 = vmatmul.mubr.f32.gmra.mrb[0].mxu0 %v6099
        %v6101 = vpop.f32.mrb[0].mxu0
        %v6102 = vadd.f32 %v6008, %v6101
        %v6103 = vpop.f32.mrb[0].mxu0
        %6104 = vmatprep.mubr.f32.mxu0 0.0
        %v6105 = vand.u32 %v5805, 4294901760
        %v6106 = vsub.f32 %v5805, %v6105
        %6107 = vmatmul.mubr.f32.gmra.mrb[0].mxu0 %v6106
        %v6108 = vpop.f32.mrb[0].mxu0
        %v6109 = vadd.f32 %v6014, %v6108
        %v6110 = vpop.f32.mrb[0].mxu0
        %6111 = vdwg.mxu0
        %6112 = vmatprep.subr.mxu0 0.0
        %v6113 = vand.u32 %v5793, 4294901760
        %6114 = vmatpush1.msra.mxu0 %v6113
        %6115 = vmatprep.subr.mxu0 0.0
        %v6116 = vand.u32 %v5794, 4294901760
        %6117 = vmatpush1.msra.mxu0 %v6116
        %6118 = vmatprep.subr.mxu0 0.0
        %v6119 = vand.u32 %v5795, 4294901760
        %6120 = vmatpush1.msra.mxu0 %v6119
        %6121 = vmatprep.subr.mxu0 0.0
        %v6122 = vand.u32 %v5796, 4294901760
        %6123 = vmatpush1.msra.mxu0 %v6122
        %6124 = vmatprep.subr.mxu0 0.0
        %v6125 = vand.u32 %v5797, 4294901760
        %6126 = vmatpush1.msra.mxu0 %v6125
        %6127 = vmatprep.subr.mxu0 0.0
        %v6128 = vand.u32 %v5798, 4294901760
        %6129 = vmatpush1.msra.mxu0 %v6128
        %6130 = vmatprep.subr.mxu0 0.0
        %v6131 = vand.u32 %v5799, 4294901760
        %6132 = vmatpush1.msra.mxu0 %v6131
        %6133 = vmatprep.subr.mxu0 0.0
        %v6134 = vand.u32 %v5800, 4294901760
        %6135 = vmatpush1.msra.mxu0 %v6134
        %6136 = vmatprep.subr.mxu0 0.0
        %6137 = vmatpush1.msra.mxu0 0.0
        %6138 = vmatprep.subr.mxu0 0.0
        %6139 = vmatpush1.msra.mxu0 0.0
        %6140 = vmatprep.subr.mxu0 0.0
        %6141 = vmatpush1.msra.mxu0 0.0
        %6142 = vmatprep.subr.mxu0 0.0
        %6143 = vmatpush1.msra.mxu0 0.0
        %6144 = vmatprep.subr.mxu0 0.0
        %6145 = vmatpush1.msra.mxu0 0.0
        %6146 = vmatprep.subr.mxu0 0.0
        %6147 = vmatpush1.msra.mxu0 0.0
        %6148 = vmatprep.subr.mxu0 0.0
        %6149 = vmatpush1.msra.mxu0 0.0
        %6150 = vmatprep.subr.mxu0 0.0
        %6151 = vmatpush1.msra.mxu0 0.0
        %6152 = vmatprep.subr.mxu0 0.0
        %6153 = vmatpush1.msra.mxu0 0.0
        %6154 = vmatprep.subr.mxu0 0.0
        %6155 = vmatpush1.msra.mxu0 0.0
        %6156 = vmatprep.subr.mxu0 0.0
        %6157 = vmatpush1.msra.mxu0 0.0
        %6158 = vmatprep.subr.mxu0 0.0
        %6159 = vmatpush1.msra.mxu0 0.0
        %6160 = vmatprep.subr.mxu0 0.0
        %6161 = vmatpush1.msra.mxu0 0.0
        %6162 = vmatprep.subr.mxu0 0.0
        %6163 = vmatpush1.msra.mxu0 0.0
        %6164 = vmatprep.subr.mxu0 0.0
        %6165 = vmatpush1.msra.mxu0 0.0
        %6166 = vmatprep.subr.mxu0 0.0
        %6167 = vmatpush1.msra.mxu0 0.0
        %6168 = vmatprep.subr.mxu0 0.0
        %6169 = vmatpush1.msra.mxu0 0.0
        %6170 = vmatprep.subr.mxu0 0.0
        %6171 = vmatpush1.msra.mxu0 0.0
        %6172 = vmatprep.subr.mxu0 0.0
        %6173 = vmatpush1.msra.mxu0 0.0
        %6174 = vmatprep.subr.mxu0 0.0
        %6175 = vmatpush1.msra.mxu0 0.0
        %6176 = vmatprep.subr.mxu0 0.0
        %6177 = vmatpush1.msra.mxu0 0.0
        %6178 = vmatprep.subr.mxu0 0.0
        %6179 = vmatpush1.msra.mxu0 0.0
        %6180 = vmatprep.subr.mxu0 0.0
        %6181 = vmatpush1.msra.mxu0 0.0
        %6182 = vmatprep.subr.mxu0 0.0
        %6183 = vmatpush1.msra.mxu0 0.0
        %6184 = vmatprep.mubr.f32.mxu0 0.0
        %v6185 = vand.u32 %v5802, 4294901760
        %v6186 = vsub.f32 %v5802, %v6185
        %v6187 = vand.u32 %v6186, 4294901760
        %6188 = vmatmul.mubr.f32.gmra.mrb[0].mxu0 %v6187
        %v6189 = vpop.f32.mrb[0].mxu0
        %v6190 = vadd.f32 %v6102, %v6189
        %v6191 = vpop.f32.mrb[0].mxu0
        %6192 = vmatprep.mubr.f32.mxu0 0.0
        %v6193 = vand.u32 %v5805, 4294901760
        %v6194 = vsub.f32 %v5805, %v6193
        %v6195 = vand.u32 %v6194, 4294901760
        %6196 = vmatmul.mubr.f32.gmra.mrb[0].mxu0 %v6195
        %v6197 = vpop.f32.mrb[0].mxu0
        %v6198 = vadd.f32 %v6109, %v6197
        %v6199 = vpop.f32.mrb[0].mxu0
        %6200 = vdwg.mxu0
        %6201 = vmatprep.subr.mxu0 0.0
        %v6202 = vand.u32 %v5793, 4294901760
        %v6203 = vsub.f32 %v5793, %v6202
        %v6204 = vand.u32 %v6203, 4294901760
        %6205 = vmatpush1.msra.mxu0 %v6204
        %6206 = vmatprep.subr.mxu0 0.0
        %v6207 = vand.u32 %v5794, 4294901760
        %v6208 = vsub.f32 %v5794, %v6207
        %v6209 = vand.u32 %v6208, 4294901760
        %6210 = vmatpush1.msra.mxu0 %v6209
        %6211 = vmatprep.subr.mxu0 0.0
        %v6212 = vand.u32 %v5795, 4294901760
        %v6213 = vsub.f32 %v5795, %v6212
        %v6214 = vand.u32 %v6213, 4294901760
        %6215 = vmatpush1.msra.mxu0 %v6214
        %6216 = vmatprep.subr.mxu0 0.0
        %v6217 = vand.u32 %v5796, 4294901760
        %v6218 = vsub.f32 %v5796, %v6217
        %v6219 = vand.u32 %v6218, 4294901760
        %6220 = vmatpush1.msra.mxu0 %v6219
        %6221 = vmatprep.subr.mxu0 0.0
        %v6222 = vand.u32 %v5797, 4294901760
        %v6223 = vsub.f32 %v5797, %v6222
        %v6224 = vand.u32 %v6223, 4294901760
        %6225 = vmatpush1.msra.mxu0 %v6224
        %6226 = vmatprep.subr.mxu0 0.0
        %v6227 = vand.u32 %v5798, 4294901760
        %v6228 = vsub.f32 %v5798, %v6227
        %v6229 = vand.u32 %v6228, 4294901760
        %6230 = vmatpush1.msra.mxu0 %v6229
        %6231 = vmatprep.subr.mxu0 0.0
        %v6232 = vand.u32 %v5799, 4294901760
        %v6233 = vsub.f32 %v5799, %v6232
        %v6234 = vand.u32 %v6233, 4294901760
        %6235 = vmatpush1.msra.mxu0 %v6234
        %6236 = vmatprep.subr.mxu0 0.0
        %v6237 = vand.u32 %v5800, 4294901760
        %v6238 = vsub.f32 %v5800, %v6237
        %v6239 = vand.u32 %v6238, 4294901760
        %6240 = vmatpush1.msra.mxu0 %v6239
        %6241 = vmatprep.subr.mxu0 0.0
        %6242 = vmatpush1.msra.mxu0 0.0
        %6243 = vmatprep.subr.mxu0 0.0
        %6244 = vmatpush1.msra.mxu0 0.0
        %6245 = vmatprep.subr.mxu0 0.0
        %6246 = vmatpush1.msra.mxu0 0.0
        %6247 = vmatprep.subr.mxu0 0.0
        %6248 = vmatpush1.msra.mxu0 0.0
        %6249 = vmatprep.subr.mxu0 0.0
        %6250 = vmatpush1.msra.mxu0 0.0
        %6251 = vmatprep.subr.mxu0 0.0
        %6252 = vmatpush1.msra.mxu0 0.0
        %6253 = vmatprep.subr.mxu0 0.0
        %6254 = vmatpush1.msra.mxu0 0.0
        %6255 = vmatprep.subr.mxu0 0.0
        %6256 = vmatpush1.msra.mxu0 0.0
        %6257 = vmatprep.subr.mxu0 0.0
        %6258 = vmatpush1.msra.mxu0 0.0
        %6259 = vmatprep.subr.mxu0 0.0
        %6260 = vmatpush1.msra.mxu0 0.0
        %6261 = vmatprep.subr.mxu0 0.0
        %6262 = vmatpush1.msra.mxu0 0.0
        %6263 = vmatprep.subr.mxu0 0.0
        %6264 = vmatpush1.msra.mxu0 0.0
        %6265 = vmatprep.subr.mxu0 0.0
        %6266 = vmatpush1.msra.mxu0 0.0
        %6267 = vmatprep.subr.mxu0 0.0
        %6268 = vmatpush1.msra.mxu0 0.0
        %6269 = vmatprep.subr.mxu0 0.0
        %6270 = vmatpush1.msra.mxu0 0.0
        %6271 = vmatprep.subr.mxu0 0.0
        %6272 = vmatpush1.msra.mxu0 0.0
        %6273 = vmatprep.subr.mxu0 0.0
        %6274 = vmatpush1.msra.mxu0 0.0
        %6275 = vmatprep.subr.mxu0 0.0
        %6276 = vmatpush1.msra.mxu0 0.0
        %6277 = vmatprep.subr.mxu0 0.0
        %6278 = vmatpush1.msra.mxu0 0.0
        %6279 = vmatprep.subr.mxu0 0.0
        %6280 = vmatpush1.msra.mxu0 0.0
        %6281 = vmatprep.subr.mxu0 0.0
        %6282 = vmatpush1.msra.mxu0 0.0
        %6283 = vmatprep.subr.mxu0 0.0
        %6284 = vmatpush1.msra.mxu0 0.0
        %6285 = vmatprep.subr.mxu0 0.0
        %6286 = vmatpush1.msra.mxu0 0.0
        %6287 = vmatprep.subr.mxu0 0.0
        %6288 = vmatpush1.msra.mxu0 0.0
        %6289 = vmatprep.mubr.f32.mxu0 0.0
        %v6290 = vand.u32 %v5802, 4294901760
        %6291 = vmatmul.mubr.f32.gmra.mrb[0].mxu0 %v6290
        %v6292 = vpop.f32.mrb[0].mxu0
        %v6293 = vadd.f32 %v6190, %v6292
        %v6294 = vpop.f32.mrb[0].mxu0
        %6295 = vmatprep.mubr.f32.mxu0 0.0
        %v6296 = vand.u32 %v5805, 4294901760
        %6297 = vmatmul.mubr.f32.gmra.mrb[0].mxu0 %v6296
        %v6298 = vpop.f32.mrb[0].mxu0
        %v6299 = vadd.f32 %v6198, %v6298
        %v6300 = vpop.f32.mrb[0].mxu0
        %6301 = vdwg.mxu0
        %6302 = vmatprep.subr.mxu0 0.0
        %v6303 = vand.u32 %v5793, 4294901760
        %6304 = vmatpush1.msra.mxu0 %v6303
        %6305 = vmatprep.subr.mxu0 0.0
        %v6306 = vand.u32 %v5794, 4294901760
        %6307 = vmatpush1.msra.mxu0 %v6306
        %6308 = vmatprep.subr.mxu0 0.0
        %v6309 = vand.u32 %v5795, 4294901760
        %6310 = vmatpush1.msra.mxu0 %v6309
        %6311 = vmatprep.subr.mxu0 0.0
        %v6312 = vand.u32 %v5796, 4294901760
        %6313 = vmatpush1.msra.mxu0 %v6312
        %6314 = vmatprep.subr.mxu0 0.0
        %v6315 = vand.u32 %v5797, 4294901760
        %6316 = vmatpush1.msra.mxu0 %v6315
        %6317 = vmatprep.subr.mxu0 0.0
        %v6318 = vand.u32 %v5798, 4294901760
        %6319 = vmatpush1.msra.mxu0 %v6318
        %6320 = vmatprep.subr.mxu0 0.0
        %v6321 = vand.u32 %v5799, 4294901760
        %6322 = vmatpush1.msra.mxu0 %v6321
        %6323 = vmatprep.subr.mxu0 0.0
        %v6324 = vand.u32 %v5800, 4294901760
        %6325 = vmatpush1.msra.mxu0 %v6324
        %6326 = vmatprep.subr.mxu0 0.0
        %6327 = vmatpush1.msra.mxu0 0.0
        %6328 = vmatprep.subr.mxu0 0.0
        %6329 = vmatpush1.msra.mxu0 0.0
        %6330 = vmatprep.subr.mxu0 0.0
        %6331 = vmatpush1.msra.mxu0 0.0
        %6332 = vmatprep.subr.mxu0 0.0
        %6333 = vmatpush1.msra.mxu0 0.0
        %6334 = vmatprep.subr.mxu0 0.0
        %6335 = vmatpush1.msra.mxu0 0.0
        %6336 = vmatprep.subr.mxu0 0.0
        %6337 = vmatpush1.msra.mxu0 0.0
        %6338 = vmatprep.subr.mxu0 0.0
        %6339 = vmatpush1.msra.mxu0 0.0
        %6340 = vmatprep.subr.mxu0 0.0
        %6341 = vmatpush1.msra.mxu0 0.0
        %6342 = vmatprep.subr.mxu0 0.0
        %6343 = vmatpush1.msra.mxu0 0.0
        %6344 = vmatprep.subr.mxu0 0.0
        %6345 = vmatpush1.msra.mxu0 0.0
        %6346 = vmatprep.subr.mxu0 0.0
        %6347 = vmatpush1.msra.mxu0 0.0
        %6348 = vmatprep.subr.mxu0 0.0
        %6349 = vmatpush1.msra.mxu0 0.0
        %6350 = vmatprep.subr.mxu0 0.0
        %6351 = vmatpush1.msra.mxu0 0.0
        %6352 = vmatprep.subr.mxu0 0.0
        %6353 = vmatpush1.msra.mxu0 0.0
        %6354 = vmatprep.subr.mxu0 0.0
        %6355 = vmatpush1.msra.mxu0 0.0
        %6356 = vmatprep.subr.mxu0 0.0
        %6357 = vmatpush1.msra.mxu0 0.0
        %6358 = vmatprep.subr.mxu0 0.0
        %6359 = vmatpush1.msra.mxu0 0.0
        %6360 = vmatprep.subr.mxu0 0.0
        %6361 = vmatpush1.msra.mxu0 0.0
        %6362 = vmatprep.subr.mxu0 0.0
        %6363 = vmatpush1.msra.mxu0 0.0
        %6364 = vmatprep.subr.mxu0 0.0
        %6365 = vmatpush1.msra.mxu0 0.0
        %6366 = vmatprep.subr.mxu0 0.0
        %6367 = vmatpush1.msra.mxu0 0.0
        %6368 = vmatprep.subr.mxu0 0.0
        %6369 = vmatpush1.msra.mxu0 0.0
        %6370 = vmatprep.subr.mxu0 0.0
        %6371 = vmatpush1.msra.mxu0 0.0
        %6372 = vmatprep.subr.mxu0 0.0
        %6373 = vmatpush1.msra.mxu0 0.0
        %6374 = vmatprep.mubr.f32.mxu0 0.0
        %v6375 = vand.u32 %v5802, 4294901760
        %6376 = vmatmul.mubr.f32.gmra.mrb[0].mxu0 %v6375
        %v6377 = vpop.f32.mrb[0].mxu0
        %v6378 = vadd.f32 %v6293, %v6377
        %v6379 = vpop.f32.mrb[0].mxu0
        %6380 = vmatprep.mubr.f32.mxu0 0.0
        %v6381 = vand.u32 %v5805, 4294901760
        %6382 = vmatmul.mubr.f32.gmra.mrb[0].mxu0 %v6381
        %v6383 = vpop.f32.mrb[0].mxu0
        %v6384 = vadd.f32 %v6299, %v6383
        %v6385 = vpop.f32.mrb[0].mxu0
        %6386 = vdwg.mxu0
        %v6387 = vadd.f32 %v5783, %v6378
        %v6388 = vadd.f32 %v5789, %v6384
        %v6389 = vld [vmem:[%s6] sm:$0x1]
        %v6391 = vlaneseq
        %v6392 = vshrl.u32 %v6391, 7
        %v6393 = vsub.s32 0, %v6392
        %v6394 = vrot.slane %v6389, %v6393
        %v6396 = vadd.f32 %v6387, %v6394
        %v6397 = vadd.f32 %v6388, %v6394
        %v6398 = vmax.f32 %v6396, 0.0
        %v6399 = vmax.f32 %v6397, 0.0
        %v6400 = vrot.slane %v6398, 7
        %v6401 = vrot.slane %v6399, 7
        %v6402 = vsel %vm545, %v6400, %v6401
        %v6403 = vsel %vm545, %v6401, %v6400
        %v6404 = vmul.f32 %v6403, %v529
        %v6405 = vmul.f32 %v6402, %v530
        %v6406 = vrot.slane %v6398, 1
        %v6407 = vrot.slane %v6399, 1
        %v6408 = vsel %vm558, %v6406, %v6407
        %v6409 = vsel %vm558, %v6407, %v6406
        %v6410 = vmul.f32 %v6408, %v535
        %v6411 = vmul.f32 %v6409, %v536
        %v6412 = vld [vmem:[%s7] sm:$0xff]
        %v6413 = vld [vmem:[%s7 + $0x8] sm:$0xff]
        %v6414 = vld [vmem:[%s7 + $0x10] sm:$0xff]
        %v6415 = vld [vmem:[%s7 + $0x18] sm:$0xff]
        %v6416 = vld [vmem:[%s7 + $0x20] sm:$0xff]
        %v6417 = vld [vmem:[%s7 + $0x28] sm:$0xff]
        %v6418 = vld [vmem:[%s7 + $0x30] sm:$0xff]
        %v6419 = vld [vmem:[%s7 + $0x38] sm:$0xff]
        %v6420 = vld [vmem:[%s7 + $0x40] sm:$0xff]
        %v6421 = vld [vmem:[%s7 + $0x48] sm:$0xff]
        %v6422 = vld [vmem:[%s7 + $0x50] sm:$0xff]
        %v6423 = vld [vmem:[%s7 + $0x58] sm:$0xff]
        %v6424 = vld [vmem:[%s7 + $0x60] sm:$0xff]
        %v6425 = vld [vmem:[%s7 + $0x68] sm:$0xff]
        %v6426 = vld [vmem:[%s7 + $0x70] sm:$0xff]
        %v6427 = vld [vmem:[%s7 + $0x78] sm:$0xff]
        %s6428 = scalar_lea.vmem %s7, 128
        %v6429 = vld [vmem:[%s6428] sm:$0xff]
        %v6430 = vld [vmem:[%s6428 + $0x8] sm:$0xff]
        %v6431 = vld [vmem:[%s6428 + $0x10] sm:$0xff]
        %v6432 = vld [vmem:[%s6428 + $0x18] sm:$0xff]
        %v6433 = vld [vmem:[%s6428 + $0x20] sm:$0xff]
        %v6434 = vld [vmem:[%s6428 + $0x28] sm:$0xff]
        %v6435 = vld [vmem:[%s6428 + $0x30] sm:$0xff]
        %v6436 = vld [vmem:[%s6428 + $0x38] sm:$0xff]
        %v6437 = vld [vmem:[%s6428 + $0x40] sm:$0xff]
        %v6438 = vld [vmem:[%s6428 + $0x48] sm:$0xff]
        %v6439 = vld [vmem:[%s6428 + $0x50] sm:$0xff]
        %v6440 = vld [vmem:[%s6428 + $0x58] sm:$0xff]
        %v6441 = vld [vmem:[%s6428 + $0x60] sm:$0xff]
        %v6442 = vld [vmem:[%s6428 + $0x68] sm:$0xff]
        %v6443 = vld [vmem:[%s6428 + $0x70] sm:$0xff]
        %v6444 = vld [vmem:[%s6428 + $0x78] sm:$0xff]
        %6445 = vmatprep.subr.mxu0 0.0
        %v6446 = vand.u32 %v6429, 4294901760
        %6447 = vmatpush1.msra.mxu0 %v6446
        %6448 = vmatprep.subr.mxu0 0.0
        %v6449 = vand.u32 %v6430, 4294901760
        %6450 = vmatpush1.msra.mxu0 %v6449
        %6451 = vmatprep.subr.mxu0 0.0
        %v6452 = vand.u32 %v6431, 4294901760
        %6453 = vmatpush1.msra.mxu0 %v6452
        %6454 = vmatprep.subr.mxu0 0.0
        %v6455 = vand.u32 %v6432, 4294901760
        %6456 = vmatpush1.msra.mxu0 %v6455
        %6457 = vmatprep.subr.mxu0 0.0
        %v6458 = vand.u32 %v6433, 4294901760
        %6459 = vmatpush1.msra.mxu0 %v6458
        %6460 = vmatprep.subr.mxu0 0.0
        %v6461 = vand.u32 %v6434, 4294901760
        %6462 = vmatpush1.msra.mxu0 %v6461
        %6463 = vmatprep.subr.mxu0 0.0
        %v6464 = vand.u32 %v6435, 4294901760
        %6465 = vmatpush1.msra.mxu0 %v6464
        %6466 = vmatprep.subr.mxu0 0.0
        %v6467 = vand.u32 %v6436, 4294901760
        %6468 = vmatpush1.msra.mxu0 %v6467
        %6469 = vmatprep.subr.mxu0 0.0
        %v6470 = vand.u32 %v6437, 4294901760
        %6471 = vmatpush1.msra.mxu0 %v6470
        %6472 = vmatprep.subr.mxu0 0.0
        %v6473 = vand.u32 %v6438, 4294901760
        %6474 = vmatpush1.msra.mxu0 %v6473
        %6475 = vmatprep.subr.mxu0 0.0
        %v6476 = vand.u32 %v6439, 4294901760
        %6477 = vmatpush1.msra.mxu0 %v6476
        %6478 = vmatprep.subr.mxu0 0.0
        %v6479 = vand.u32 %v6440, 4294901760
        %6480 = vmatpush1.msra.mxu0 %v6479
        %6481 = vmatprep.subr.mxu0 0.0
        %v6482 = vand.u32 %v6441, 4294901760
        %6483 = vmatpush1.msra.mxu0 %v6482
        %6484 = vmatprep.subr.mxu0 0.0
        %v6485 = vand.u32 %v6442, 4294901760
        %6486 = vmatpush1.msra.mxu0 %v6485
        %6487 = vmatprep.subr.mxu0 0.0
        %v6488 = vand.u32 %v6443, 4294901760
        %6489 = vmatpush1.msra.mxu0 %v6488
        %6490 = vmatprep.subr.mxu0 0.0
        %v6491 = vand.u32 %v6444, 4294901760
        %6492 = vmatpush1.msra.mxu0 %v6491
        %6493 = vmatprep.subr.mxu0 0.0
        %6494 = vmatpush1.msra.mxu0 0.0
        %6495 = vmatprep.subr.mxu0 0.0
        %6496 = vmatpush1.msra.mxu0 0.0
        %6497 = vmatprep.subr.mxu0 0.0
        %6498 = vmatpush1.msra.mxu0 0.0
        %6499 = vmatprep.subr.mxu0 0.0
        %6500 = vmatpush1.msra.mxu0 0.0
        %6501 = vmatprep.subr.mxu0 0.0
        %6502 = vmatpush1.msra.mxu0 0.0
        %6503 = vmatprep.subr.mxu0 0.0
        %6504 = vmatpush1.msra.mxu0 0.0
        %6505 = vmatprep.subr.mxu0 0.0
        %6506 = vmatpush1.msra.mxu0 0.0
        %6507 = vmatprep.subr.mxu0 0.0
        %6508 = vmatpush1.msra.mxu0 0.0
        %6509 = vmatprep.subr.mxu0 0.0
        %6510 = vmatpush1.msra.mxu0 0.0
        %6511 = vmatprep.subr.mxu0 0.0
        %6512 = vmatpush1.msra.mxu0 0.0
        %6513 = vmatprep.subr.mxu0 0.0
        %6514 = vmatpush1.msra.mxu0 0.0
        %6515 = vmatprep.subr.mxu0 0.0
        %6516 = vmatpush1.msra.mxu0 0.0
        %6517 = vmatprep.subr.mxu0 0.0
        %6518 = vmatpush1.msra.mxu0 0.0
        %6519 = vmatprep.subr.mxu0 0.0
        %6520 = vmatpush1.msra.mxu0 0.0
        %6521 = vmatprep.subr.mxu0 0.0
        %6522 = vmatpush1.msra.mxu0 0.0
        %6523 = vmatprep.subr.mxu0 0.0
        %6524 = vmatpush1.msra.mxu0 0.0
        %6525 = vmatprep.mubr.f32.mxu0 0.0
        %v6526 = vand.u32 %v6398, 4294901760
        %v6527 = vsub.f32 %v6398, %v6526
        %v6528 = vand.u32 %v6527, 4294901760
        %v6529 = vsub.f32 %v6527, %v6528
        %v6530 = vand.u32 %v6529, 4294901760
        %6531 = vmatmul.mubr.f32.gmra.mrb[0].mxu0 %v6530
        %v6532 = vpop.f32.mrb[0].mxu0
        %v6533 = vadd.f32 0.0, %v6532
        %v6534 = vpop.f32.mrb[0].mxu0
        %6535 = vmatprep.mubr.f32.mxu0 0.0
        %v6536 = vand.u32 %v6399, 4294901760
        %v6537 = vsub.f32 %v6399, %v6536
        %v6538 = vand.u32 %v6537, 4294901760
        %v6539 = vsub.f32 %v6537, %v6538
        %v6540 = vand.u32 %v6539, 4294901760
        %6541 = vmatmul.mubr.f32.gmra.mrb[0].mxu0 %v6540
        %v6542 = vpop.f32.mrb[0].mxu0
        %v6543 = vadd.f32 0.0, %v6542
        %v6544 = vpop.f32.mrb[0].mxu0
        %6545 = vdwg.mxu0
        %6546 = vmatprep.subr.mxu0 0.0
        %v6547 = vand.u32 %v6429, 4294901760
        %v6548 = vsub.f32 %v6429, %v6547
        %v6549 = vand.u32 %v6548, 4294901760
        %v6550 = vsub.f32 %v6548, %v6549
        %v6551 = vand.u32 %v6550, 4294901760
        %6552 = vmatpush1.msra.mxu0 %v6551
        %6553 = vmatprep.subr.mxu0 0.0
        %v6554 = vand.u32 %v6430, 4294901760
        %v6555 = vsub.f32 %v6430, %v6554
        %v6556 = vand.u32 %v6555, 4294901760
        %v6557 = vsub.f32 %v6555, %v6556
        %v6558 = vand.u32 %v6557, 4294901760
        %6559 = vmatpush1.msra.mxu0 %v6558
        %6560 = vmatprep.subr.mxu0 0.0
        %v6561 = vand.u32 %v6431, 4294901760
        %v6562 = vsub.f32 %v6431, %v6561
        %v6563 = vand.u32 %v6562, 4294901760
        %v6564 = vsub.f32 %v6562, %v6563
        %v6565 = vand.u32 %v6564, 4294901760
        %6566 = vmatpush1.msra.mxu0 %v6565
        %6567 = vmatprep.subr.mxu0 0.0
        %v6568 = vand.u32 %v6432, 4294901760
        %v6569 = vsub.f32 %v6432, %v6568
        %v6570 = vand.u32 %v6569, 4294901760
        %v6571 = vsub.f32 %v6569, %v6570
        %v6572 = vand.u32 %v6571, 4294901760
        %6573 = vmatpush1.msra.mxu0 %v6572
        %6574 = vmatprep.subr.mxu0 0.0
        %v6575 = vand.u32 %v6433, 4294901760
        %v6576 = vsub.f32 %v6433, %v6575
        %v6577 = vand.u32 %v6576, 4294901760
        %v6578 = vsub.f32 %v6576, %v6577
        %v6579 = vand.u32 %v6578, 4294901760
        %6580 = vmatpush1.msra.mxu0 %v6579
        %6581 = vmatprep.subr.mxu0 0.0
        %v6582 = vand.u32 %v6434, 4294901760
        %v6583 = vsub.f32 %v6434, %v6582
        %v6584 = vand.u32 %v6583, 4294901760
        %v6585 = vsub.f32 %v6583, %v6584
        %v6586 = vand.u32 %v6585, 4294901760
        %6587 = vmatpush1.msra.mxu0 %v6586
        %6588 = vmatprep.subr.mxu0 0.0
        %v6589 = vand.u32 %v6435, 4294901760
        %v6590 = vsub.f32 %v6435, %v6589
        %v6591 = vand.u32 %v6590, 4294901760
        %v6592 = vsub.f32 %v6590, %v6591
        %v6593 = vand.u32 %v6592, 4294901760
        %6594 = vmatpush1.msra.mxu0 %v6593
        %6595 = vmatprep.subr.mxu0 0.0
        %v6596 = vand.u32 %v6436, 4294901760
        %v6597 = vsub.f32 %v6436, %v6596
        %v6598 = vand.u32 %v6597, 4294901760
        %v6599 = vsub.f32 %v6597, %v6598
        %v6600 = vand.u32 %v6599, 4294901760
        %6601 = vmatpush1.msra.mxu0 %v6600
        %6602 = vmatprep.subr.mxu0 0.0
        %v6603 = vand.u32 %v6437, 4294901760
        %v6604 = vsub.f32 %v6437, %v6603
        %v6605 = vand.u32 %v6604, 4294901760
        %v6606 = vsub.f32 %v6604, %v6605
        %v6607 = vand.u32 %v6606, 4294901760
        %6608 = vmatpush1.msra.mxu0 %v6607
        %6609 = vmatprep.subr.mxu0 0.0
        %v6610 = vand.u32 %v6438, 4294901760
        %v6611 = vsub.f32 %v6438, %v6610
        %v6612 = vand.u32 %v6611, 4294901760
        %v6613 = vsub.f32 %v6611, %v6612
        %v6614 = vand.u32 %v6613, 4294901760
        %6615 = vmatpush1.msra.mxu0 %v6614
        %6616 = vmatprep.subr.mxu0 0.0
        %v6617 = vand.u32 %v6439, 4294901760
        %v6618 = vsub.f32 %v6439, %v6617
        %v6619 = vand.u32 %v6618, 4294901760
        %v6620 = vsub.f32 %v6618, %v6619
        %v6621 = vand.u32 %v6620, 4294901760
        %6622 = vmatpush1.msra.mxu0 %v6621
        %6623 = vmatprep.subr.mxu0 0.0
        %v6624 = vand.u32 %v6440, 4294901760
        %v6625 = vsub.f32 %v6440, %v6624
        %v6626 = vand.u32 %v6625, 4294901760
        %v6627 = vsub.f32 %v6625, %v6626
        %v6628 = vand.u32 %v6627, 4294901760
        %6629 = vmatpush1.msra.mxu0 %v6628
        %6630 = vmatprep.subr.mxu0 0.0
        %v6631 = vand.u32 %v6441, 4294901760
        %v6632 = vsub.f32 %v6441, %v6631
        %v6633 = vand.u32 %v6632, 4294901760
        %v6634 = vsub.f32 %v6632, %v6633
        %v6635 = vand.u32 %v6634, 4294901760
        %6636 = vmatpush1.msra.mxu0 %v6635
        %6637 = vmatprep.subr.mxu0 0.0
        %v6638 = vand.u32 %v6442, 4294901760
        %v6639 = vsub.f32 %v6442, %v6638
        %v6640 = vand.u32 %v6639, 4294901760
        %v6641 = vsub.f32 %v6639, %v6640
        %v6642 = vand.u32 %v6641, 4294901760
        %6643 = vmatpush1.msra.mxu0 %v6642
        %6644 = vmatprep.subr.mxu0 0.0
        %v6645 = vand.u32 %v6443, 4294901760
        %v6646 = vsub.f32 %v6443, %v6645
        %v6647 = vand.u32 %v6646, 4294901760
        %v6648 = vsub.f32 %v6646, %v6647
        %v6649 = vand.u32 %v6648, 4294901760
        %6650 = vmatpush1.msra.mxu0 %v6649
        %6651 = vmatprep.subr.mxu0 0.0
        %v6652 = vand.u32 %v6444, 4294901760
        %v6653 = vsub.f32 %v6444, %v6652
        %v6654 = vand.u32 %v6653, 4294901760
        %v6655 = vsub.f32 %v6653, %v6654
        %v6656 = vand.u32 %v6655, 4294901760
        %6657 = vmatpush1.msra.mxu0 %v6656
        %6658 = vmatprep.subr.mxu0 0.0
        %6659 = vmatpush1.msra.mxu0 0.0
        %6660 = vmatprep.subr.mxu0 0.0
        %6661 = vmatpush1.msra.mxu0 0.0
        %6662 = vmatprep.subr.mxu0 0.0
        %6663 = vmatpush1.msra.mxu0 0.0
        %6664 = vmatprep.subr.mxu0 0.0
        %6665 = vmatpush1.msra.mxu0 0.0
        %6666 = vmatprep.subr.mxu0 0.0
        %6667 = vmatpush1.msra.mxu0 0.0
        %6668 = vmatprep.subr.mxu0 0.0
        %6669 = vmatpush1.msra.mxu0 0.0
        %6670 = vmatprep.subr.mxu0 0.0
        %6671 = vmatpush1.msra.mxu0 0.0
        %6672 = vmatprep.subr.mxu0 0.0
        %6673 = vmatpush1.msra.mxu0 0.0
        %6674 = vmatprep.subr.mxu0 0.0
        %6675 = vmatpush1.msra.mxu0 0.0
        %6676 = vmatprep.subr.mxu0 0.0
        %6677 = vmatpush1.msra.mxu0 0.0
        %6678 = vmatprep.subr.mxu0 0.0
        %6679 = vmatpush1.msra.mxu0 0.0
        %6680 = vmatprep.subr.mxu0 0.0
        %6681 = vmatpush1.msra.mxu0 0.0
        %6682 = vmatprep.subr.mxu0 0.0
        %6683 = vmatpush1.msra.mxu0 0.0
        %6684 = vmatprep.subr.mxu0 0.0
        %6685 = vmatpush1.msra.mxu0 0.0
        %6686 = vmatprep.subr.mxu0 0.0
        %6687 = vmatpush1.msra.mxu0 0.0
        %6688 = vmatprep.subr.mxu0 0.0
        %6689 = vmatpush1.msra.mxu0 0.0
        %6690 = vmatprep.mubr.f32.mxu0 0.0
        %v6691 = vand.u32 %v6398, 4294901760
        %6692 = vmatmul.mubr.f32.gmra.mrb[0].mxu0 %v6691
        %v6693 = vpop.f32.mrb[0].mxu0
        %v6694 = vadd.f32 %v6533, %v6693
        %v6695 = vpop.f32.mrb[0].mxu0
        %6696 = vmatprep.mubr.f32.mxu0 0.0
        %v6697 = vand.u32 %v6399, 4294901760
        %6698 = vmatmul.mubr.f32.gmra.mrb[0].mxu0 %v6697
        %v6699 = vpop.f32.mrb[0].mxu0
        %v6700 = vadd.f32 %v6543, %v6699
        %v6701 = vpop.f32.mrb[0].mxu0
        %6702 = vdwg.mxu0
        %6703 = vmatprep.subr.mxu0 0.0
        %v6704 = vand.u32 %v6429, 4294901760
        %v6705 = vsub.f32 %v6429, %v6704
        %6706 = vmatpush1.msra.mxu0 %v6705
        %6707 = vmatprep.subr.mxu0 0.0
        %v6708 = vand.u32 %v6430, 4294901760
        %v6709 = vsub.f32 %v6430, %v6708
        %6710 = vmatpush1.msra.mxu0 %v6709
        %6711 = vmatprep.subr.mxu0 0.0
        %v6712 = vand.u32 %v6431, 4294901760
        %v6713 = vsub.f32 %v6431, %v6712
        %6714 = vmatpush1.msra.mxu0 %v6713
        %6715 = vmatprep.subr.mxu0 0.0
        %v6716 = vand.u32 %v6432, 4294901760
        %v6717 = vsub.f32 %v6432, %v6716
        %6718 = vmatpush1.msra.mxu0 %v6717
        %6719 = vmatprep.subr.mxu0 0.0
        %v6720 = vand.u32 %v6433, 4294901760
        %v6721 = vsub.f32 %v6433, %v6720
        %6722 = vmatpush1.msra.mxu0 %v6721
        %6723 = vmatprep.subr.mxu0 0.0
        %v6724 = vand.u32 %v6434, 4294901760
        %v6725 = vsub.f32 %v6434, %v6724
        %6726 = vmatpush1.msra.mxu0 %v6725
        %6727 = vmatprep.subr.mxu0 0.0
        %v6728 = vand.u32 %v6435, 4294901760
        %v6729 = vsub.f32 %v6435, %v6728
        %6730 = vmatpush1.msra.mxu0 %v6729
        %6731 = vmatprep.subr.mxu0 0.0
        %v6732 = vand.u32 %v6436, 4294901760
        %v6733 = vsub.f32 %v6436, %v6732
        %6734 = vmatpush1.msra.mxu0 %v6733
        %6735 = vmatprep.subr.mxu0 0.0
        %v6736 = vand.u32 %v6437, 4294901760
        %v6737 = vsub.f32 %v6437, %v6736
        %6738 = vmatpush1.msra.mxu0 %v6737
        %6739 = vmatprep.subr.mxu0 0.0
        %v6740 = vand.u32 %v6438, 4294901760
        %v6741 = vsub.f32 %v6438, %v6740
        %6742 = vmatpush1.msra.mxu0 %v6741
        %6743 = vmatprep.subr.mxu0 0.0
        %v6744 = vand.u32 %v6439, 4294901760
        %v6745 = vsub.f32 %v6439, %v6744
        %6746 = vmatpush1.msra.mxu0 %v6745
        %6747 = vmatprep.subr.mxu0 0.0
        %v6748 = vand.u32 %v6440, 4294901760
        %v6749 = vsub.f32 %v6440, %v6748
        %6750 = vmatpush1.msra.mxu0 %v6749
        %6751 = vmatprep.subr.mxu0 0.0
        %v6752 = vand.u32 %v6441, 4294901760
        %v6753 = vsub.f32 %v6441, %v6752
        %6754 = vmatpush1.msra.mxu0 %v6753
        %6755 = vmatprep.subr.mxu0 0.0
        %v6756 = vand.u32 %v6442, 4294901760
        %v6757 = vsub.f32 %v6442, %v6756
        %6758 = vmatpush1.msra.mxu0 %v6757
        %6759 = vmatprep.subr.mxu0 0.0
        %v6760 = vand.u32 %v6443, 4294901760
        %v6761 = vsub.f32 %v6443, %v6760
        %6762 = vmatpush1.msra.mxu0 %v6761
        %6763 = vmatprep.subr.mxu0 0.0
        %v6764 = vand.u32 %v6444, 4294901760
        %v6765 = vsub.f32 %v6444, %v6764
        %6766 = vmatpush1.msra.mxu0 %v6765
        %6767 = vmatprep.subr.mxu0 0.0
        %6768 = vmatpush1.msra.mxu0 0.0
        %6769 = vmatprep.subr.mxu0 0.0
        %6770 = vmatpush1.msra.mxu0 0.0
        %6771 = vmatprep.subr.mxu0 0.0
        %6772 = vmatpush1.msra.mxu0 0.0
        %6773 = vmatprep.subr.mxu0 0.0
        %6774 = vmatpush1.msra.mxu0 0.0
        %6775 = vmatprep.subr.mxu0 0.0
        %6776 = vmatpush1.msra.mxu0 0.0
        %6777 = vmatprep.subr.mxu0 0.0
        %6778 = vmatpush1.msra.mxu0 0.0
        %6779 = vmatprep.subr.mxu0 0.0
        %6780 = vmatpush1.msra.mxu0 0.0
        %6781 = vmatprep.subr.mxu0 0.0
        %6782 = vmatpush1.msra.mxu0 0.0
        %6783 = vmatprep.subr.mxu0 0.0
        %6784 = vmatpush1.msra.mxu0 0.0
        %6785 = vmatprep.subr.mxu0 0.0
        %6786 = vmatpush1.msra.mxu0 0.0
        %6787 = vmatprep.subr.mxu0 0.0
        %6788 = vmatpush1.msra.mxu0 0.0
        %6789 = vmatprep.subr.mxu0 0.0
        %6790 = vmatpush1.msra.mxu0 0.0
        %6791 = vmatprep.subr.mxu0 0.0
        %6792 = vmatpush1.msra.mxu0 0.0
        %6793 = vmatprep.subr.mxu0 0.0
        %6794 = vmatpush1.msra.mxu0 0.0
        %6795 = vmatprep.subr.mxu0 0.0
        %6796 = vmatpush1.msra.mxu0 0.0
        %6797 = vmatprep.subr.mxu0 0.0
        %6798 = vmatpush1.msra.mxu0 0.0
        %6799 = vmatprep.mubr.f32.mxu0 0.0
        %v6800 = vand.u32 %v6398, 4294901760
        %v6801 = vsub.f32 %v6398, %v6800
        %6802 = vmatmul.mubr.f32.gmra.mrb[0].mxu0 %v6801
        %v6803 = vpop.f32.mrb[0].mxu0
        %v6804 = vadd.f32 %v6694, %v6803
        %v6805 = vpop.f32.mrb[0].mxu0
        %6806 = vmatprep.mubr.f32.mxu0 0.0
        %v6807 = vand.u32 %v6399, 4294901760
        %v6808 = vsub.f32 %v6399, %v6807
        %6809 = vmatmul.mubr.f32.gmra.mrb[0].mxu0 %v6808
        %v6810 = vpop.f32.mrb[0].mxu0
        %v6811 = vadd.f32 %v6700, %v6810
        %v6812 = vpop.f32.mrb[0].mxu0
        %6813 = vdwg.mxu0
        %6814 = vmatprep.subr.mxu0 0.0
        %v6815 = vand.u32 %v6429, 4294901760
        %6816 = vmatpush1.msra.mxu0 %v6815
        %6817 = vmatprep.subr.mxu0 0.0
        %v6818 = vand.u32 %v6430, 4294901760
        %6819 = vmatpush1.msra.mxu0 %v6818
        %6820 = vmatprep.subr.mxu0 0.0
        %v6821 = vand.u32 %v6431, 4294901760
        %6822 = vmatpush1.msra.mxu0 %v6821
        %6823 = vmatprep.subr.mxu0 0.0
        %v6824 = vand.u32 %v6432, 4294901760
        %6825 = vmatpush1.msra.mxu0 %v6824
        %6826 = vmatprep.subr.mxu0 0.0
        %v6827 = vand.u32 %v6433, 4294901760
        %6828 = vmatpush1.msra.mxu0 %v6827
        %6829 = vmatprep.subr.mxu0 0.0
        %v6830 = vand.u32 %v6434, 4294901760
        %6831 = vmatpush1.msra.mxu0 %v6830
        %6832 = vmatprep.subr.mxu0 0.0
        %v6833 = vand.u32 %v6435, 4294901760
        %6834 = vmatpush1.msra.mxu0 %v6833
        %6835 = vmatprep.subr.mxu0 0.0
        %v6836 = vand.u32 %v6436, 4294901760
        %6837 = vmatpush1.msra.mxu0 %v6836
        %6838 = vmatprep.subr.mxu0 0.0
        %v6839 = vand.u32 %v6437, 4294901760
        %6840 = vmatpush1.msra.mxu0 %v6839
        %6841 = vmatprep.subr.mxu0 0.0
        %v6842 = vand.u32 %v6438, 4294901760
        %6843 = vmatpush1.msra.mxu0 %v6842
        %6844 = vmatprep.subr.mxu0 0.0
        %v6845 = vand.u32 %v6439, 4294901760
        %6846 = vmatpush1.msra.mxu0 %v6845
        %6847 = vmatprep.subr.mxu0 0.0
        %v6848 = vand.u32 %v6440, 4294901760
        %6849 = vmatpush1.msra.mxu0 %v6848
        %6850 = vmatprep.subr.mxu0 0.0
        %v6851 = vand.u32 %v6441, 4294901760
        %6852 = vmatpush1.msra.mxu0 %v6851
        %6853 = vmatprep.subr.mxu0 0.0
        %v6854 = vand.u32 %v6442, 4294901760
        %6855 = vmatpush1.msra.mxu0 %v6854
        %6856 = vmatprep.subr.mxu0 0.0
        %v6857 = vand.u32 %v6443, 4294901760
        %6858 = vmatpush1.msra.mxu0 %v6857
        %6859 = vmatprep.subr.mxu0 0.0
        %v6860 = vand.u32 %v6444, 4294901760
        %6861 = vmatpush1.msra.mxu0 %v6860
        %6862 = vmatprep.subr.mxu0 0.0
        %6863 = vmatpush1.msra.mxu0 0.0
        %6864 = vmatprep.subr.mxu0 0.0
        %6865 = vmatpush1.msra.mxu0 0.0
        %6866 = vmatprep.subr.mxu0 0.0
        %6867 = vmatpush1.msra.mxu0 0.0
        %6868 = vmatprep.subr.mxu0 0.0
        %6869 = vmatpush1.msra.mxu0 0.0
        %6870 = vmatprep.subr.mxu0 0.0
        %6871 = vmatpush1.msra.mxu0 0.0
        %6872 = vmatprep.subr.mxu0 0.0
        %6873 = vmatpush1.msra.mxu0 0.0
        %6874 = vmatprep.subr.mxu0 0.0
        %6875 = vmatpush1.msra.mxu0 0.0
        %6876 = vmatprep.subr.mxu0 0.0
        %6877 = vmatpush1.msra.mxu0 0.0
        %6878 = vmatprep.subr.mxu0 0.0
        %6879 = vmatpush1.msra.mxu0 0.0
        %6880 = vmatprep.subr.mxu0 0.0
        %6881 = vmatpush1.msra.mxu0 0.0
        %6882 = vmatprep.subr.mxu0 0.0
        %6883 = vmatpush1.msra.mxu0 0.0
        %6884 = vmatprep.subr.mxu0 0.0
        %6885 = vmatpush1.msra.mxu0 0.0
        %6886 = vmatprep.subr.mxu0 0.0
        %6887 = vmatpush1.msra.mxu0 0.0
        %6888 = vmatprep.subr.mxu0 0.0
        %6889 = vmatpush1.msra.mxu0 0.0
        %6890 = vmatprep.subr.mxu0 0.0
        %6891 = vmatpush1.msra.mxu0 0.0
        %6892 = vmatprep.subr.mxu0 0.0
        %6893 = vmatpush1.msra.mxu0 0.0
        %6894 = vmatprep.mubr.f32.mxu0 0.0
        %v6895 = vand.u32 %v6398, 4294901760
        %v6896 = vsub.f32 %v6398, %v6895
        %v6897 = vand.u32 %v6896, 4294901760
        %6898 = vmatmul.mubr.f32.gmra.mrb[0].mxu0 %v6897
        %v6899 = vpop.f32.mrb[0].mxu0
        %v6900 = vadd.f32 %v6804, %v6899
        %v6901 = vpop.f32.mrb[0].mxu0
        %6902 = vmatprep.mubr.f32.mxu0 0.0
        %v6903 = vand.u32 %v6399, 4294901760
        %v6904 = vsub.f32 %v6399, %v6903
        %v6905 = vand.u32 %v6904, 4294901760
        %6906 = vmatmul.mubr.f32.gmra.mrb[0].mxu0 %v6905
        %v6907 = vpop.f32.mrb[0].mxu0
        %v6908 = vadd.f32 %v6811, %v6907
        %v6909 = vpop.f32.mrb[0].mxu0
        %6910 = vdwg.mxu0
        %6911 = vmatprep.subr.mxu0 0.0
        %v6912 = vand.u32 %v6429, 4294901760
        %v6913 = vsub.f32 %v6429, %v6912
        %v6914 = vand.u32 %v6913, 4294901760
        %6915 = vmatpush1.msra.mxu0 %v6914
        %6916 = vmatprep.subr.mxu0 0.0
        %v6917 = vand.u32 %v6430, 4294901760
        %v6918 = vsub.f32 %v6430, %v6917
        %v6919 = vand.u32 %v6918, 4294901760
        %6920 = vmatpush1.msra.mxu0 %v6919
        %6921 = vmatprep.subr.mxu0 0.0
        %v6922 = vand.u32 %v6431, 4294901760
        %v6923 = vsub.f32 %v6431, %v6922
        %v6924 = vand.u32 %v6923, 4294901760
        %6925 = vmatpush1.msra.mxu0 %v6924
        %6926 = vmatprep.subr.mxu0 0.0
        %v6927 = vand.u32 %v6432, 4294901760
        %v6928 = vsub.f32 %v6432, %v6927
        %v6929 = vand.u32 %v6928, 4294901760
        %6930 = vmatpush1.msra.mxu0 %v6929
        %6931 = vmatprep.subr.mxu0 0.0
        %v6932 = vand.u32 %v6433, 4294901760
        %v6933 = vsub.f32 %v6433, %v6932
        %v6934 = vand.u32 %v6933, 4294901760
        %6935 = vmatpush1.msra.mxu0 %v6934
        %6936 = vmatprep.subr.mxu0 0.0
        %v6937 = vand.u32 %v6434, 4294901760
        %v6938 = vsub.f32 %v6434, %v6937
        %v6939 = vand.u32 %v6938, 4294901760
        %6940 = vmatpush1.msra.mxu0 %v6939
        %6941 = vmatprep.subr.mxu0 0.0
        %v6942 = vand.u32 %v6435, 4294901760
        %v6943 = vsub.f32 %v6435, %v6942
        %v6944 = vand.u32 %v6943, 4294901760
        %6945 = vmatpush1.msra.mxu0 %v6944
        %6946 = vmatprep.subr.mxu0 0.0
        %v6947 = vand.u32 %v6436, 4294901760
        %v6948 = vsub.f32 %v6436, %v6947
        %v6949 = vand.u32 %v6948, 4294901760
        %6950 = vmatpush1.msra.mxu0 %v6949
        %6951 = vmatprep.subr.mxu0 0.0
        %v6952 = vand.u32 %v6437, 4294901760
        %v6953 = vsub.f32 %v6437, %v6952
        %v6954 = vand.u32 %v6953, 4294901760
        %6955 = vmatpush1.msra.mxu0 %v6954
        %6956 = vmatprep.subr.mxu0 0.0
        %v6957 = vand.u32 %v6438, 4294901760
        %v6958 = vsub.f32 %v6438, %v6957
        %v6959 = vand.u32 %v6958, 4294901760
        %6960 = vmatpush1.msra.mxu0 %v6959
        %6961 = vmatprep.subr.mxu0 0.0
        %v6962 = vand.u32 %v6439, 4294901760
        %v6963 = vsub.f32 %v6439, %v6962
        %v6964 = vand.u32 %v6963, 4294901760
        %6965 = vmatpush1.msra.mxu0 %v6964
        %6966 = vmatprep.subr.mxu0 0.0
        %v6967 = vand.u32 %v6440, 4294901760
        %v6968 = vsub.f32 %v6440, %v6967
        %v6969 = vand.u32 %v6968, 4294901760
        %6970 = vmatpush1.msra.mxu0 %v6969
        %6971 = vmatprep.subr.mxu0 0.0
        %v6972 = vand.u32 %v6441, 4294901760
        %v6973 = vsub.f32 %v6441, %v6972
        %v6974 = vand.u32 %v6973, 4294901760
        %6975 = vmatpush1.msra.mxu0 %v6974
        %6976 = vmatprep.subr.mxu0 0.0
        %v6977 = vand.u32 %v6442, 4294901760
        %v6978 = vsub.f32 %v6442, %v6977
        %v6979 = vand.u32 %v6978, 4294901760
        %6980 = vmatpush1.msra.mxu0 %v6979
        %6981 = vmatprep.subr.mxu0 0.0
        %v6982 = vand.u32 %v6443, 4294901760
        %v6983 = vsub.f32 %v6443, %v6982
        %v6984 = vand.u32 %v6983, 4294901760
        %6985 = vmatpush1.msra.mxu0 %v6984
        %6986 = vmatprep.subr.mxu0 0.0
        %v6987 = vand.u32 %v6444, 4294901760
        %v6988 = vsub.f32 %v6444, %v6987
        %v6989 = vand.u32 %v6988, 4294901760
        %6990 = vmatpush1.msra.mxu0 %v6989
        %6991 = vmatprep.subr.mxu0 0.0
        %6992 = vmatpush1.msra.mxu0 0.0
        %6993 = vmatprep.subr.mxu0 0.0
        %6994 = vmatpush1.msra.mxu0 0.0
        %6995 = vmatprep.subr.mxu0 0.0
        %6996 = vmatpush1.msra.mxu0 0.0
        %6997 = vmatprep.subr.mxu0 0.0
        %6998 = vmatpush1.msra.mxu0 0.0
        %6999 = vmatprep.subr.mxu0 0.0
        %7000 = vmatpush1.msra.mxu0 0.0
        %7001 = vmatprep.subr.mxu0 0.0
        %7002 = vmatpush1.msra.mxu0 0.0
        %7003 = vmatprep.subr.mxu0 0.0
        %7004 = vmatpush1.msra.mxu0 0.0
        %7005 = vmatprep.subr.mxu0 0.0
        %7006 = vmatpush1.msra.mxu0 0.0
        %7007 = vmatprep.subr.mxu0 0.0
        %7008 = vmatpush1.msra.mxu0 0.0
        %7009 = vmatprep.subr.mxu0 0.0
        %7010 = vmatpush1.msra.mxu0 0.0
        %7011 = vmatprep.subr.mxu0 0.0
        %7012 = vmatpush1.msra.mxu0 0.0
        %7013 = vmatprep.subr.mxu0 0.0
        %7014 = vmatpush1.msra.mxu0 0.0
        %7015 = vmatprep.subr.mxu0 0.0
        %7016 = vmatpush1.msra.mxu0 0.0
        %7017 = vmatprep.subr.mxu0 0.0
        %7018 = vmatpush1.msra.mxu0 0.0
        %7019 = vmatprep.subr.mxu0 0.0
        %7020 = vmatpush1.msra.mxu0 0.0
        %7021 = vmatprep.subr.mxu0 0.0
        %7022 = vmatpush1.msra.mxu0 0.0
        %7023 = vmatprep.mubr.f32.mxu0 0.0
        %v7024 = vand.u32 %v6398, 4294901760
        %7025 = vmatmul.mubr.f32.gmra.mrb[0].mxu0 %v7024
        %v7026 = vpop.f32.mrb[0].mxu0
        %v7027 = vadd.f32 %v6900, %v7026
        %v7028 = vpop.f32.mrb[0].mxu0
        %7029 = vmatprep.mubr.f32.mxu0 0.0
        %v7030 = vand.u32 %v6399, 4294901760
        %7031 = vmatmul.mubr.f32.gmra.mrb[0].mxu0 %v7030
        %v7032 = vpop.f32.mrb[0].mxu0
        %v7033 = vadd.f32 %v6908, %v7032
        %v7034 = vpop.f32.mrb[0].mxu0
        %7035 = vdwg.mxu0
        %7036 = vmatprep.subr.mxu0 0.0
        %v7037 = vand.u32 %v6429, 4294901760
        %7038 = vmatpush1.msra.mxu0 %v7037
        %7039 = vmatprep.subr.mxu0 0.0
        %v7040 = vand.u32 %v6430, 4294901760
        %7041 = vmatpush1.msra.mxu0 %v7040
        %7042 = vmatprep.subr.mxu0 0.0
        %v7043 = vand.u32 %v6431, 4294901760
        %7044 = vmatpush1.msra.mxu0 %v7043
        %7045 = vmatprep.subr.mxu0 0.0
        %v7046 = vand.u32 %v6432, 4294901760
        %7047 = vmatpush1.msra.mxu0 %v7046
        %7048 = vmatprep.subr.mxu0 0.0
        %v7049 = vand.u32 %v6433, 4294901760
        %7050 = vmatpush1.msra.mxu0 %v7049
        %7051 = vmatprep.subr.mxu0 0.0
        %v7052 = vand.u32 %v6434, 4294901760
        %7053 = vmatpush1.msra.mxu0 %v7052
        %7054 = vmatprep.subr.mxu0 0.0
        %v7055 = vand.u32 %v6435, 4294901760
        %7056 = vmatpush1.msra.mxu0 %v7055
        %7057 = vmatprep.subr.mxu0 0.0
        %v7058 = vand.u32 %v6436, 4294901760
        %7059 = vmatpush1.msra.mxu0 %v7058
        %7060 = vmatprep.subr.mxu0 0.0
        %v7061 = vand.u32 %v6437, 4294901760
        %7062 = vmatpush1.msra.mxu0 %v7061
        %7063 = vmatprep.subr.mxu0 0.0
        %v7064 = vand.u32 %v6438, 4294901760
        %7065 = vmatpush1.msra.mxu0 %v7064
        %7066 = vmatprep.subr.mxu0 0.0
        %v7067 = vand.u32 %v6439, 4294901760
        %7068 = vmatpush1.msra.mxu0 %v7067
        %7069 = vmatprep.subr.mxu0 0.0
        %v7070 = vand.u32 %v6440, 4294901760
        %7071 = vmatpush1.msra.mxu0 %v7070
        %7072 = vmatprep.subr.mxu0 0.0
        %v7073 = vand.u32 %v6441, 4294901760
        %7074 = vmatpush1.msra.mxu0 %v7073
        %7075 = vmatprep.subr.mxu0 0.0
        %v7076 = vand.u32 %v6442, 4294901760
        %7077 = vmatpush1.msra.mxu0 %v7076
        %7078 = vmatprep.subr.mxu0 0.0
        %v7079 = vand.u32 %v6443, 4294901760
        %7080 = vmatpush1.msra.mxu0 %v7079
        %7081 = vmatprep.subr.mxu0 0.0
        %v7082 = vand.u32 %v6444, 4294901760
        %7083 = vmatpush1.msra.mxu0 %v7082
        %7084 = vmatprep.subr.mxu0 0.0
        %7085 = vmatpush1.msra.mxu0 0.0
        %7086 = vmatprep.subr.mxu0 0.0
        %7087 = vmatpush1.msra.mxu0 0.0
        %7088 = vmatprep.subr.mxu0 0.0
        %7089 = vmatpush1.msra.mxu0 0.0
        %7090 = vmatprep.subr.mxu0 0.0
        %7091 = vmatpush1.msra.mxu0 0.0
        %7092 = vmatprep.subr.mxu0 0.0
        %7093 = vmatpush1.msra.mxu0 0.0
        %7094 = vmatprep.subr.mxu0 0.0
        %7095 = vmatpush1.msra.mxu0 0.0
        %7096 = vmatprep.subr.mxu0 0.0
        %7097 = vmatpush1.msra.mxu0 0.0
        %7098 = vmatprep.subr.mxu0 0.0
        %7099 = vmatpush1.msra.mxu0 0.0
        %7100 = vmatprep.subr.mxu0 0.0
        %7101 = vmatpush1.msra.mxu0 0.0
        %7102 = vmatprep.subr.mxu0 0.0
        %7103 = vmatpush1.msra.mxu0 0.0
        %7104 = vmatprep.subr.mxu0 0.0
        %7105 = vmatpush1.msra.mxu0 0.0
        %7106 = vmatprep.subr.mxu0 0.0
        %7107 = vmatpush1.msra.mxu0 0.0
        %7108 = vmatprep.subr.mxu0 0.0
        %7109 = vmatpush1.msra.mxu0 0.0
        %7110 = vmatprep.subr.mxu0 0.0
        %7111 = vmatpush1.msra.mxu0 0.0
        %7112 = vmatprep.subr.mxu0 0.0
        %7113 = vmatpush1.msra.mxu0 0.0
        %7114 = vmatprep.subr.mxu0 0.0
        %7115 = vmatpush1.msra.mxu0 0.0
        %7116 = vmatprep.mubr.f32.mxu0 0.0
        %v7117 = vand.u32 %v6398, 4294901760
        %7118 = vmatmul.mubr.f32.gmra.mrb[0].mxu0 %v7117
        %v7119 = vpop.f32.mrb[0].mxu0
        %v7120 = vadd.f32 %v7027, %v7119
        %v7121 = vpop.f32.mrb[0].mxu0
        %7122 = vmatprep.mubr.f32.mxu0 0.0
        %v7123 = vand.u32 %v6399, 4294901760
        %7124 = vmatmul.mubr.f32.gmra.mrb[0].mxu0 %v7123
        %v7125 = vpop.f32.mrb[0].mxu0
        %v7126 = vadd.f32 %v7033, %v7125
        %v7127 = vpop.f32.mrb[0].mxu0
        %7128 = vdwg.mxu0
        %7129 = vmatprep.subr.mxu0 0.0
        %v7130 = vand.u32 %v6412, 4294901760
        %7131 = vmatpush1.msra.mxu0 %v7130
        %7132 = vmatprep.subr.mxu0 0.0
        %v7133 = vand.u32 %v6413, 4294901760
        %7134 = vmatpush1.msra.mxu0 %v7133
        %7135 = vmatprep.subr.mxu0 0.0
        %v7136 = vand.u32 %v6414, 4294901760
        %7137 = vmatpush1.msra.mxu0 %v7136
        %7138 = vmatprep.subr.mxu0 0.0
        %v7139 = vand.u32 %v6415, 4294901760
        %7140 = vmatpush1.msra.mxu0 %v7139
        %7141 = vmatprep.subr.mxu0 0.0
        %v7142 = vand.u32 %v6416, 4294901760
        %7143 = vmatpush1.msra.mxu0 %v7142
        %7144 = vmatprep.subr.mxu0 0.0
        %v7145 = vand.u32 %v6417, 4294901760
        %7146 = vmatpush1.msra.mxu0 %v7145
        %7147 = vmatprep.subr.mxu0 0.0
        %v7148 = vand.u32 %v6418, 4294901760
        %7149 = vmatpush1.msra.mxu0 %v7148
        %7150 = vmatprep.subr.mxu0 0.0
        %v7151 = vand.u32 %v6419, 4294901760
        %7152 = vmatpush1.msra.mxu0 %v7151
        %7153 = vmatprep.subr.mxu0 0.0
        %v7154 = vand.u32 %v6420, 4294901760
        %7155 = vmatpush1.msra.mxu0 %v7154
        %7156 = vmatprep.subr.mxu0 0.0
        %v7157 = vand.u32 %v6421, 4294901760
        %7158 = vmatpush1.msra.mxu0 %v7157
        %7159 = vmatprep.subr.mxu0 0.0
        %v7160 = vand.u32 %v6422, 4294901760
        %7161 = vmatpush1.msra.mxu0 %v7160
        %7162 = vmatprep.subr.mxu0 0.0
        %v7163 = vand.u32 %v6423, 4294901760
        %7164 = vmatpush1.msra.mxu0 %v7163
        %7165 = vmatprep.subr.mxu0 0.0
        %v7166 = vand.u32 %v6424, 4294901760
        %7167 = vmatpush1.msra.mxu0 %v7166
        %7168 = vmatprep.subr.mxu0 0.0
        %v7169 = vand.u32 %v6425, 4294901760
        %7170 = vmatpush1.msra.mxu0 %v7169
        %7171 = vmatprep.subr.mxu0 0.0
        %v7172 = vand.u32 %v6426, 4294901760
        %7173 = vmatpush1.msra.mxu0 %v7172
        %7174 = vmatprep.subr.mxu0 0.0
        %v7175 = vand.u32 %v6427, 4294901760
        %7176 = vmatpush1.msra.mxu0 %v7175
        %7177 = vmatprep.subr.mxu0 0.0
        %7178 = vmatpush1.msra.mxu0 0.0
        %7179 = vmatprep.subr.mxu0 0.0
        %7180 = vmatpush1.msra.mxu0 0.0
        %7181 = vmatprep.subr.mxu0 0.0
        %7182 = vmatpush1.msra.mxu0 0.0
        %7183 = vmatprep.subr.mxu0 0.0
        %7184 = vmatpush1.msra.mxu0 0.0
        %7185 = vmatprep.subr.mxu0 0.0
        %7186 = vmatpush1.msra.mxu0 0.0
        %7187 = vmatprep.subr.mxu0 0.0
        %7188 = vmatpush1.msra.mxu0 0.0
        %7189 = vmatprep.subr.mxu0 0.0
        %7190 = vmatpush1.msra.mxu0 0.0
        %7191 = vmatprep.subr.mxu0 0.0
        %7192 = vmatpush1.msra.mxu0 0.0
        %7193 = vmatprep.subr.mxu0 0.0
        %7194 = vmatpush1.msra.mxu0 0.0
        %7195 = vmatprep.subr.mxu0 0.0
        %7196 = vmatpush1.msra.mxu0 0.0
        %7197 = vmatprep.subr.mxu0 0.0
        %7198 = vmatpush1.msra.mxu0 0.0
        %7199 = vmatprep.subr.mxu0 0.0
        %7200 = vmatpush1.msra.mxu0 0.0
        %7201 = vmatprep.subr.mxu0 0.0
        %7202 = vmatpush1.msra.mxu0 0.0
        %7203 = vmatprep.subr.mxu0 0.0
        %7204 = vmatpush1.msra.mxu0 0.0
        %7205 = vmatprep.subr.mxu0 0.0
        %7206 = vmatpush1.msra.mxu0 0.0
        %7207 = vmatprep.subr.mxu0 0.0
        %7208 = vmatpush1.msra.mxu0 0.0
        %7209 = vmatprep.mubr.f32.mxu0 0.0
        %v7210 = vand.u32 %v6404, 4294901760
        %v7211 = vsub.f32 %v6404, %v7210
        %v7212 = vand.u32 %v7211, 4294901760
        %v7213 = vsub.f32 %v7211, %v7212
        %v7214 = vand.u32 %v7213, 4294901760
        %7215 = vmatmul.mubr.f32.gmra.mrb[0].mxu0 %v7214
        %v7216 = vpop.f32.mrb[0].mxu0
        %v7217 = vadd.f32 %v7120, %v7216
        %v7218 = vpop.f32.mrb[0].mxu0
        %7219 = vmatprep.mubr.f32.mxu0 0.0
        %v7220 = vand.u32 %v6405, 4294901760
        %v7221 = vsub.f32 %v6405, %v7220
        %v7222 = vand.u32 %v7221, 4294901760
        %v7223 = vsub.f32 %v7221, %v7222
        %v7224 = vand.u32 %v7223, 4294901760
        %7225 = vmatmul.mubr.f32.gmra.mrb[0].mxu0 %v7224
        %v7226 = vpop.f32.mrb[0].mxu0
        %v7227 = vadd.f32 %v7126, %v7226
        %v7228 = vpop.f32.mrb[0].mxu0
        %7229 = vdwg.mxu0
        %7230 = vmatprep.subr.mxu0 0.0
        %v7231 = vand.u32 %v6412, 4294901760
        %v7232 = vsub.f32 %v6412, %v7231
        %v7233 = vand.u32 %v7232, 4294901760
        %v7234 = vsub.f32 %v7232, %v7233
        %v7235 = vand.u32 %v7234, 4294901760
        %7236 = vmatpush1.msra.mxu0 %v7235
        %7237 = vmatprep.subr.mxu0 0.0
        %v7238 = vand.u32 %v6413, 4294901760
        %v7239 = vsub.f32 %v6413, %v7238
        %v7240 = vand.u32 %v7239, 4294901760
        %v7241 = vsub.f32 %v7239, %v7240
        %v7242 = vand.u32 %v7241, 4294901760
        %7243 = vmatpush1.msra.mxu0 %v7242
        %7244 = vmatprep.subr.mxu0 0.0
        %v7245 = vand.u32 %v6414, 4294901760
        %v7246 = vsub.f32 %v6414, %v7245
        %v7247 = vand.u32 %v7246, 4294901760
        %v7248 = vsub.f32 %v7246, %v7247
        %v7249 = vand.u32 %v7248, 4294901760
        %7250 = vmatpush1.msra.mxu0 %v7249
        %7251 = vmatprep.subr.mxu0 0.0
        %v7252 = vand.u32 %v6415, 4294901760
        %v7253 = vsub.f32 %v6415, %v7252
        %v7254 = vand.u32 %v7253, 4294901760
        %v7255 = vsub.f32 %v7253, %v7254
        %v7256 = vand.u32 %v7255, 4294901760
        %7257 = vmatpush1.msra.mxu0 %v7256
        %7258 = vmatprep.subr.mxu0 0.0
        %v7259 = vand.u32 %v6416, 4294901760
        %v7260 = vsub.f32 %v6416, %v7259
        %v7261 = vand.u32 %v7260, 4294901760
        %v7262 = vsub.f32 %v7260, %v7261
        %v7263 = vand.u32 %v7262, 4294901760
        %7264 = vmatpush1.msra.mxu0 %v7263
        %7265 = vmatprep.subr.mxu0 0.0
        %v7266 = vand.u32 %v6417, 4294901760
        %v7267 = vsub.f32 %v6417, %v7266
        %v7268 = vand.u32 %v7267, 4294901760
        %v7269 = vsub.f32 %v7267, %v7268
        %v7270 = vand.u32 %v7269, 4294901760
        %7271 = vmatpush1.msra.mxu0 %v7270
        %7272 = vmatprep.subr.mxu0 0.0
        %v7273 = vand.u32 %v6418, 4294901760
        %v7274 = vsub.f32 %v6418, %v7273
        %v7275 = vand.u32 %v7274, 4294901760
        %v7276 = vsub.f32 %v7274, %v7275
        %v7277 = vand.u32 %v7276, 4294901760
        %7278 = vmatpush1.msra.mxu0 %v7277
        %7279 = vmatprep.subr.mxu0 0.0
        %v7280 = vand.u32 %v6419, 4294901760
        %v7281 = vsub.f32 %v6419, %v7280
        %v7282 = vand.u32 %v7281, 4294901760
        %v7283 = vsub.f32 %v7281, %v7282
        %v7284 = vand.u32 %v7283, 4294901760
        %7285 = vmatpush1.msra.mxu0 %v7284
        %7286 = vmatprep.subr.mxu0 0.0
        %v7287 = vand.u32 %v6420, 4294901760
        %v7288 = vsub.f32 %v6420, %v7287
        %v7289 = vand.u32 %v7288, 4294901760
        %v7290 = vsub.f32 %v7288, %v7289
        %v7291 = vand.u32 %v7290, 4294901760
        %7292 = vmatpush1.msra.mxu0 %v7291
        %7293 = vmatprep.subr.mxu0 0.0
        %v7294 = vand.u32 %v6421, 4294901760
        %v7295 = vsub.f32 %v6421, %v7294
        %v7296 = vand.u32 %v7295, 4294901760
        %v7297 = vsub.f32 %v7295, %v7296
        %v7298 = vand.u32 %v7297, 4294901760
        %7299 = vmatpush1.msra.mxu0 %v7298
        %7300 = vmatprep.subr.mxu0 0.0
        %v7301 = vand.u32 %v6422, 4294901760
        %v7302 = vsub.f32 %v6422, %v7301
        %v7303 = vand.u32 %v7302, 4294901760
        %v7304 = vsub.f32 %v7302, %v7303
        %v7305 = vand.u32 %v7304, 4294901760
        %7306 = vmatpush1.msra.mxu0 %v7305
        %7307 = vmatprep.subr.mxu0 0.0
        %v7308 = vand.u32 %v6423, 4294901760
        %v7309 = vsub.f32 %v6423, %v7308
        %v7310 = vand.u32 %v7309, 4294901760
        %v7311 = vsub.f32 %v7309, %v7310
        %v7312 = vand.u32 %v7311, 4294901760
        %7313 = vmatpush1.msra.mxu0 %v7312
        %7314 = vmatprep.subr.mxu0 0.0
        %v7315 = vand.u32 %v6424, 4294901760
        %v7316 = vsub.f32 %v6424, %v7315
        %v7317 = vand.u32 %v7316, 4294901760
        %v7318 = vsub.f32 %v7316, %v7317
        %v7319 = vand.u32 %v7318, 4294901760
        %7320 = vmatpush1.msra.mxu0 %v7319
        %7321 = vmatprep.subr.mxu0 0.0
        %v7322 = vand.u32 %v6425, 4294901760
        %v7323 = vsub.f32 %v6425, %v7322
        %v7324 = vand.u32 %v7323, 4294901760
        %v7325 = vsub.f32 %v7323, %v7324
        %v7326 = vand.u32 %v7325, 4294901760
        %7327 = vmatpush1.msra.mxu0 %v7326
        %7328 = vmatprep.subr.mxu0 0.0
        %v7329 = vand.u32 %v6426, 4294901760
        %v7330 = vsub.f32 %v6426, %v7329
        %v7331 = vand.u32 %v7330, 4294901760
        %v7332 = vsub.f32 %v7330, %v7331
        %v7333 = vand.u32 %v7332, 4294901760
        %7334 = vmatpush1.msra.mxu0 %v7333
        %7335 = vmatprep.subr.mxu0 0.0
        %v7336 = vand.u32 %v6427, 4294901760
        %v7337 = vsub.f32 %v6427, %v7336
        %v7338 = vand.u32 %v7337, 4294901760
        %v7339 = vsub.f32 %v7337, %v7338
        %v7340 = vand.u32 %v7339, 4294901760
        %7341 = vmatpush1.msra.mxu0 %v7340
        %7342 = vmatprep.subr.mxu0 0.0
        %7343 = vmatpush1.msra.mxu0 0.0
        %7344 = vmatprep.subr.mxu0 0.0
        %7345 = vmatpush1.msra.mxu0 0.0
        %7346 = vmatprep.subr.mxu0 0.0
        %7347 = vmatpush1.msra.mxu0 0.0
        %7348 = vmatprep.subr.mxu0 0.0
        %7349 = vmatpush1.msra.mxu0 0.0
        %7350 = vmatprep.subr.mxu0 0.0
        %7351 = vmatpush1.msra.mxu0 0.0
        %7352 = vmatprep.subr.mxu0 0.0
        %7353 = vmatpush1.msra.mxu0 0.0
        %7354 = vmatprep.subr.mxu0 0.0
        %7355 = vmatpush1.msra.mxu0 0.0
        %7356 = vmatprep.subr.mxu0 0.0
        %7357 = vmatpush1.msra.mxu0 0.0
        %7358 = vmatprep.subr.mxu0 0.0
        %7359 = vmatpush1.msra.mxu0 0.0
        %7360 = vmatprep.subr.mxu0 0.0
        %7361 = vmatpush1.msra.mxu0 0.0
        %7362 = vmatprep.subr.mxu0 0.0
        %7363 = vmatpush1.msra.mxu0 0.0
        %7364 = vmatprep.subr.mxu0 0.0
        %7365 = vmatpush1.msra.mxu0 0.0
        %7366 = vmatprep.subr.mxu0 0.0
        %7367 = vmatpush1.msra.mxu0 0.0
        %7368 = vmatprep.subr.mxu0 0.0
        %7369 = vmatpush1.msra.mxu0 0.0
        %7370 = vmatprep.subr.mxu0 0.0
        %7371 = vmatpush1.msra.mxu0 0.0
        %7372 = vmatprep.subr.mxu0 0.0
        %7373 = vmatpush1.msra.mxu0 0.0
        %7374 = vmatprep.mubr.f32.mxu0 0.0
        %v7375 = vand.u32 %v6404, 4294901760
        %7376 = vmatmul.mubr.f32.gmra.mrb[0].mxu0 %v7375
        %v7377 = vpop.f32.mrb[0].mxu0
        %v7378 = vadd.f32 %v7217, %v7377
        %v7379 = vpop.f32.mrb[0].mxu0
        %7380 = vmatprep.mubr.f32.mxu0 0.0
        %v7381 = vand.u32 %v6405, 4294901760
        %7382 = vmatmul.mubr.f32.gmra.mrb[0].mxu0 %v7381
        %v7383 = vpop.f32.mrb[0].mxu0
        %v7384 = vadd.f32 %v7227, %v7383
        %v7385 = vpop.f32.mrb[0].mxu0
        %7386 = vdwg.mxu0
        %7387 = vmatprep.subr.mxu0 0.0
        %v7388 = vand.u32 %v6412, 4294901760
        %v7389 = vsub.f32 %v6412, %v7388
        %7390 = vmatpush1.msra.mxu0 %v7389
        %7391 = vmatprep.subr.mxu0 0.0
        %v7392 = vand.u32 %v6413, 4294901760
        %v7393 = vsub.f32 %v6413, %v7392
        %7394 = vmatpush1.msra.mxu0 %v7393
        %7395 = vmatprep.subr.mxu0 0.0
        %v7396 = vand.u32 %v6414, 4294901760
        %v7397 = vsub.f32 %v6414, %v7396
        %7398 = vmatpush1.msra.mxu0 %v7397
        %7399 = vmatprep.subr.mxu0 0.0
        %v7400 = vand.u32 %v6415, 4294901760
        %v7401 = vsub.f32 %v6415, %v7400
        %7402 = vmatpush1.msra.mxu0 %v7401
        %7403 = vmatprep.subr.mxu0 0.0
        %v7404 = vand.u32 %v6416, 4294901760
        %v7405 = vsub.f32 %v6416, %v7404
        %7406 = vmatpush1.msra.mxu0 %v7405
        %7407 = vmatprep.subr.mxu0 0.0
        %v7408 = vand.u32 %v6417, 4294901760
        %v7409 = vsub.f32 %v6417, %v7408
        %7410 = vmatpush1.msra.mxu0 %v7409
        %7411 = vmatprep.subr.mxu0 0.0
        %v7412 = vand.u32 %v6418, 4294901760
        %v7413 = vsub.f32 %v6418, %v7412
        %7414 = vmatpush1.msra.mxu0 %v7413
        %7415 = vmatprep.subr.mxu0 0.0
        %v7416 = vand.u32 %v6419, 4294901760
        %v7417 = vsub.f32 %v6419, %v7416
        %7418 = vmatpush1.msra.mxu0 %v7417
        %7419 = vmatprep.subr.mxu0 0.0
        %v7420 = vand.u32 %v6420, 4294901760
        %v7421 = vsub.f32 %v6420, %v7420
        %7422 = vmatpush1.msra.mxu0 %v7421
        %7423 = vmatprep.subr.mxu0 0.0
        %v7424 = vand.u32 %v6421, 4294901760
        %v7425 = vsub.f32 %v6421, %v7424
        %7426 = vmatpush1.msra.mxu0 %v7425
        %7427 = vmatprep.subr.mxu0 0.0
        %v7428 = vand.u32 %v6422, 4294901760
        %v7429 = vsub.f32 %v6422, %v7428
        %7430 = vmatpush1.msra.mxu0 %v7429
        %7431 = vmatprep.subr.mxu0 0.0
        %v7432 = vand.u32 %v6423, 4294901760
        %v7433 = vsub.f32 %v6423, %v7432
        %7434 = vmatpush1.msra.mxu0 %v7433
        %7435 = vmatprep.subr.mxu0 0.0
        %v7436 = vand.u32 %v6424, 4294901760
        %v7437 = vsub.f32 %v6424, %v7436
        %7438 = vmatpush1.msra.mxu0 %v7437
        %7439 = vmatprep.subr.mxu0 0.0
        %v7440 = vand.u32 %v6425, 4294901760
        %v7441 = vsub.f32 %v6425, %v7440
        %7442 = vmatpush1.msra.mxu0 %v7441
        %7443 = vmatprep.subr.mxu0 0.0
        %v7444 = vand.u32 %v6426, 4294901760
        %v7445 = vsub.f32 %v6426, %v7444
        %7446 = vmatpush1.msra.mxu0 %v7445
        %7447 = vmatprep.subr.mxu0 0.0
        %v7448 = vand.u32 %v6427, 4294901760
        %v7449 = vsub.f32 %v6427, %v7448
        %7450 = vmatpush1.msra.mxu0 %v7449
        %7451 = vmatprep.subr.mxu0 0.0
        %7452 = vmatpush1.msra.mxu0 0.0
        %7453 = vmatprep.subr.mxu0 0.0
        %7454 = vmatpush1.msra.mxu0 0.0
        %7455 = vmatprep.subr.mxu0 0.0
        %7456 = vmatpush1.msra.mxu0 0.0
        %7457 = vmatprep.subr.mxu0 0.0
        %7458 = vmatpush1.msra.mxu0 0.0
        %7459 = vmatprep.subr.mxu0 0.0
        %7460 = vmatpush1.msra.mxu0 0.0
        %7461 = vmatprep.subr.mxu0 0.0
        %7462 = vmatpush1.msra.mxu0 0.0
        %7463 = vmatprep.subr.mxu0 0.0
        %7464 = vmatpush1.msra.mxu0 0.0
        %7465 = vmatprep.subr.mxu0 0.0
        %7466 = vmatpush1.msra.mxu0 0.0
        %7467 = vmatprep.subr.mxu0 0.0
        %7468 = vmatpush1.msra.mxu0 0.0
        %7469 = vmatprep.subr.mxu0 0.0
        %7470 = vmatpush1.msra.mxu0 0.0
        %7471 = vmatprep.subr.mxu0 0.0
        %7472 = vmatpush1.msra.mxu0 0.0
        %7473 = vmatprep.subr.mxu0 0.0
        %7474 = vmatpush1.msra.mxu0 0.0
        %7475 = vmatprep.subr.mxu0 0.0
        %7476 = vmatpush1.msra.mxu0 0.0
        %7477 = vmatprep.subr.mxu0 0.0
        %7478 = vmatpush1.msra.mxu0 0.0
        %7479 = vmatprep.subr.mxu0 0.0
        %7480 = vmatpush1.msra.mxu0 0.0
        %7481 = vmatprep.subr.mxu0 0.0
        %7482 = vmatpush1.msra.mxu0 0.0
        %7483 = vmatprep.mubr.f32.mxu0 0.0
        %v7484 = vand.u32 %v6404, 4294901760
        %v7485 = vsub.f32 %v6404, %v7484
        %7486 = vmatmul.mubr.f32.gmra.mrb[0].mxu0 %v7485
        %v7487 = vpop.f32.mrb[0].mxu0
        %v7488 = vadd.f32 %v7378, %v7487
        %v7489 = vpop.f32.mrb[0].mxu0
        %7490 = vmatprep.mubr.f32.mxu0 0.0
        %v7491 = vand.u32 %v6405, 4294901760
        %v7492 = vsub.f32 %v6405, %v7491
        %7493 = vmatmul.mubr.f32.gmra.mrb[0].mxu0 %v7492
        %v7494 = vpop.f32.mrb[0].mxu0
        %v7495 = vadd.f32 %v7384, %v7494
        %v7496 = vpop.f32.mrb[0].mxu0
        %7497 = vdwg.mxu0
        %7498 = vmatprep.subr.mxu0 0.0
        %v7499 = vand.u32 %v6412, 4294901760
        %7500 = vmatpush1.msra.mxu0 %v7499
        %7501 = vmatprep.subr.mxu0 0.0
        %v7502 = vand.u32 %v6413, 4294901760
        %7503 = vmatpush1.msra.mxu0 %v7502
        %7504 = vmatprep.subr.mxu0 0.0
        %v7505 = vand.u32 %v6414, 4294901760
        %7506 = vmatpush1.msra.mxu0 %v7505
        %7507 = vmatprep.subr.mxu0 0.0
        %v7508 = vand.u32 %v6415, 4294901760
        %7509 = vmatpush1.msra.mxu0 %v7508
        %7510 = vmatprep.subr.mxu0 0.0
        %v7511 = vand.u32 %v6416, 4294901760
        %7512 = vmatpush1.msra.mxu0 %v7511
        %7513 = vmatprep.subr.mxu0 0.0
        %v7514 = vand.u32 %v6417, 4294901760
        %7515 = vmatpush1.msra.mxu0 %v7514
        %7516 = vmatprep.subr.mxu0 0.0
        %v7517 = vand.u32 %v6418, 4294901760
        %7518 = vmatpush1.msra.mxu0 %v7517
        %7519 = vmatprep.subr.mxu0 0.0
        %v7520 = vand.u32 %v6419, 4294901760
        %7521 = vmatpush1.msra.mxu0 %v7520
        %7522 = vmatprep.subr.mxu0 0.0
        %v7523 = vand.u32 %v6420, 4294901760
        %7524 = vmatpush1.msra.mxu0 %v7523
        %7525 = vmatprep.subr.mxu0 0.0
        %v7526 = vand.u32 %v6421, 4294901760
        %7527 = vmatpush1.msra.mxu0 %v7526
        %7528 = vmatprep.subr.mxu0 0.0
        %v7529 = vand.u32 %v6422, 4294901760
        %7530 = vmatpush1.msra.mxu0 %v7529
        %7531 = vmatprep.subr.mxu0 0.0
        %v7532 = vand.u32 %v6423, 4294901760
        %7533 = vmatpush1.msra.mxu0 %v7532
        %7534 = vmatprep.subr.mxu0 0.0
        %v7535 = vand.u32 %v6424, 4294901760
        %7536 = vmatpush1.msra.mxu0 %v7535
        %7537 = vmatprep.subr.mxu0 0.0
        %v7538 = vand.u32 %v6425, 4294901760
        %7539 = vmatpush1.msra.mxu0 %v7538
        %7540 = vmatprep.subr.mxu0 0.0
        %v7541 = vand.u32 %v6426, 4294901760
        %7542 = vmatpush1.msra.mxu0 %v7541
        %7543 = vmatprep.subr.mxu0 0.0
        %v7544 = vand.u32 %v6427, 4294901760
        %7545 = vmatpush1.msra.mxu0 %v7544
        %7546 = vmatprep.subr.mxu0 0.0
        %7547 = vmatpush1.msra.mxu0 0.0
        %7548 = vmatprep.subr.mxu0 0.0
        %7549 = vmatpush1.msra.mxu0 0.0
        %7550 = vmatprep.subr.mxu0 0.0
        %7551 = vmatpush1.msra.mxu0 0.0
        %7552 = vmatprep.subr.mxu0 0.0
        %7553 = vmatpush1.msra.mxu0 0.0
        %7554 = vmatprep.subr.mxu0 0.0
        %7555 = vmatpush1.msra.mxu0 0.0
        %7556 = vmatprep.subr.mxu0 0.0
        %7557 = vmatpush1.msra.mxu0 0.0
        %7558 = vmatprep.subr.mxu0 0.0
        %7559 = vmatpush1.msra.mxu0 0.0
        %7560 = vmatprep.subr.mxu0 0.0
        %7561 = vmatpush1.msra.mxu0 0.0
        %7562 = vmatprep.subr.mxu0 0.0
        %7563 = vmatpush1.msra.mxu0 0.0
        %7564 = vmatprep.subr.mxu0 0.0
        %7565 = vmatpush1.msra.mxu0 0.0
        %7566 = vmatprep.subr.mxu0 0.0
        %7567 = vmatpush1.msra.mxu0 0.0
        %7568 = vmatprep.subr.mxu0 0.0
        %7569 = vmatpush1.msra.mxu0 0.0
        %7570 = vmatprep.subr.mxu0 0.0
        %7571 = vmatpush1.msra.mxu0 0.0
        %7572 = vmatprep.subr.mxu0 0.0
        %7573 = vmatpush1.msra.mxu0 0.0
        %7574 = vmatprep.subr.mxu0 0.0
        %7575 = vmatpush1.msra.mxu0 0.0
        %7576 = vmatprep.subr.mxu0 0.0
        %7577 = vmatpush1.msra.mxu0 0.0
        %7578 = vmatprep.mubr.f32.mxu0 0.0
        %v7579 = vand.u32 %v6404, 4294901760
        %v7580 = vsub.f32 %v6404, %v7579
        %v7581 = vand.u32 %v7580, 4294901760
        %7582 = vmatmul.mubr.f32.gmra.mrb[0].mxu0 %v7581
        %v7583 = vpop.f32.mrb[0].mxu0
        %v7584 = vadd.f32 %v7488, %v7583
        %v7585 = vpop.f32.mrb[0].mxu0
        %7586 = vmatprep.mubr.f32.mxu0 0.0
        %v7587 = vand.u32 %v6405, 4294901760
        %v7588 = vsub.f32 %v6405, %v7587
        %v7589 = vand.u32 %v7588, 4294901760
        %7590 = vmatmul.mubr.f32.gmra.mrb[0].mxu0 %v7589
        %v7591 = vpop.f32.mrb[0].mxu0
        %v7592 = vadd.f32 %v7495, %v7591
        %v7593 = vpop.f32.mrb[0].mxu0
        %7594 = vdwg.mxu0
        %7595 = vmatprep.subr.mxu0 0.0
        %v7596 = vand.u32 %v6412, 4294901760
        %v7597 = vsub.f32 %v6412, %v7596
        %v7598 = vand.u32 %v7597, 4294901760
        %7599 = vmatpush1.msra.mxu0 %v7598
        %7600 = vmatprep.subr.mxu0 0.0
        %v7601 = vand.u32 %v6413, 4294901760
        %v7602 = vsub.f32 %v6413, %v7601
        %v7603 = vand.u32 %v7602, 4294901760
        %7604 = vmatpush1.msra.mxu0 %v7603
        %7605 = vmatprep.subr.mxu0 0.0
        %v7606 = vand.u32 %v6414, 4294901760
        %v7607 = vsub.f32 %v6414, %v7606
        %v7608 = vand.u32 %v7607, 4294901760
        %7609 = vmatpush1.msra.mxu0 %v7608
        %7610 = vmatprep.subr.mxu0 0.0
        %v7611 = vand.u32 %v6415, 4294901760
        %v7612 = vsub.f32 %v6415, %v7611
        %v7613 = vand.u32 %v7612, 4294901760
        %7614 = vmatpush1.msra.mxu0 %v7613
        %7615 = vmatprep.subr.mxu0 0.0
        %v7616 = vand.u32 %v6416, 4294901760
        %v7617 = vsub.f32 %v6416, %v7616
        %v7618 = vand.u32 %v7617, 4294901760
        %7619 = vmatpush1.msra.mxu0 %v7618
        %7620 = vmatprep.subr.mxu0 0.0
        %v7621 = vand.u32 %v6417, 4294901760
        %v7622 = vsub.f32 %v6417, %v7621
        %v7623 = vand.u32 %v7622, 4294901760
        %7624 = vmatpush1.msra.mxu0 %v7623
        %7625 = vmatprep.subr.mxu0 0.0
        %v7626 = vand.u32 %v6418, 4294901760
        %v7627 = vsub.f32 %v6418, %v7626
        %v7628 = vand.u32 %v7627, 4294901760
        %7629 = vmatpush1.msra.mxu0 %v7628
        %7630 = vmatprep.subr.mxu0 0.0
        %v7631 = vand.u32 %v6419, 4294901760
        %v7632 = vsub.f32 %v6419, %v7631
        %v7633 = vand.u32 %v7632, 4294901760
        %7634 = vmatpush1.msra.mxu0 %v7633
        %7635 = vmatprep.subr.mxu0 0.0
        %v7636 = vand.u32 %v6420, 4294901760
        %v7637 = vsub.f32 %v6420, %v7636
        %v7638 = vand.u32 %v7637, 4294901760
        %7639 = vmatpush1.msra.mxu0 %v7638
        %7640 = vmatprep.subr.mxu0 0.0
        %v7641 = vand.u32 %v6421, 4294901760
        %v7642 = vsub.f32 %v6421, %v7641
        %v7643 = vand.u32 %v7642, 4294901760
        %7644 = vmatpush1.msra.mxu0 %v7643
        %7645 = vmatprep.subr.mxu0 0.0
        %v7646 = vand.u32 %v6422, 4294901760
        %v7647 = vsub.f32 %v6422, %v7646
        %v7648 = vand.u32 %v7647, 4294901760
        %7649 = vmatpush1.msra.mxu0 %v7648
        %7650 = vmatprep.subr.mxu0 0.0
        %v7651 = vand.u32 %v6423, 4294901760
        %v7652 = vsub.f32 %v6423, %v7651
        %v7653 = vand.u32 %v7652, 4294901760
        %7654 = vmatpush1.msra.mxu0 %v7653
        %7655 = vmatprep.subr.mxu0 0.0
        %v7656 = vand.u32 %v6424, 4294901760
        %v7657 = vsub.f32 %v6424, %v7656
        %v7658 = vand.u32 %v7657, 4294901760
        %7659 = vmatpush1.msra.mxu0 %v7658
        %7660 = vmatprep.subr.mxu0 0.0
        %v7661 = vand.u32 %v6425, 4294901760
        %v7662 = vsub.f32 %v6425, %v7661
        %v7663 = vand.u32 %v7662, 4294901760
        %7664 = vmatpush1.msra.mxu0 %v7663
        %7665 = vmatprep.subr.mxu0 0.0
        %v7666 = vand.u32 %v6426, 4294901760
        %v7667 = vsub.f32 %v6426, %v7666
        %v7668 = vand.u32 %v7667, 4294901760
        %7669 = vmatpush1.msra.mxu0 %v7668
        %7670 = vmatprep.subr.mxu0 0.0
        %v7671 = vand.u32 %v6427, 4294901760
        %v7672 = vsub.f32 %v6427, %v7671
        %v7673 = vand.u32 %v7672, 4294901760
        %7674 = vmatpush1.msra.mxu0 %v7673
        %7675 = vmatprep.subr.mxu0 0.0
        %7676 = vmatpush1.msra.mxu0 0.0
        %7677 = vmatprep.subr.mxu0 0.0
        %7678 = vmatpush1.msra.mxu0 0.0
        %7679 = vmatprep.subr.mxu0 0.0
        %7680 = vmatpush1.msra.mxu0 0.0
        %7681 = vmatprep.subr.mxu0 0.0
        %7682 = vmatpush1.msra.mxu0 0.0
        %7683 = vmatprep.subr.mxu0 0.0
        %7684 = vmatpush1.msra.mxu0 0.0
        %7685 = vmatprep.subr.mxu0 0.0
        %7686 = vmatpush1.msra.mxu0 0.0
        %7687 = vmatprep.subr.mxu0 0.0
        %7688 = vmatpush1.msra.mxu0 0.0
        %7689 = vmatprep.subr.mxu0 0.0
        %7690 = vmatpush1.msra.mxu0 0.0
        %7691 = vmatprep.subr.mxu0 0.0
        %7692 = vmatpush1.msra.mxu0 0.0
        %7693 = vmatprep.subr.mxu0 0.0
        %7694 = vmatpush1.msra.mxu0 0.0
        %7695 = vmatprep.subr.mxu0 0.0
        %7696 = vmatpush1.msra.mxu0 0.0
        %7697 = vmatprep.subr.mxu0 0.0
        %7698 = vmatpush1.msra.mxu0 0.0
        %7699 = vmatprep.subr.mxu0 0.0
        %7700 = vmatpush1.msra.mxu0 0.0
        %7701 = vmatprep.subr.mxu0 0.0
        %7702 = vmatpush1.msra.mxu0 0.0
        %7703 = vmatprep.subr.mxu0 0.0
        %7704 = vmatpush1.msra.mxu0 0.0
        %7705 = vmatprep.subr.mxu0 0.0
        %7706 = vmatpush1.msra.mxu0 0.0
        %7707 = vmatprep.mubr.f32.mxu0 0.0
        %v7708 = vand.u32 %v6404, 4294901760
        %7709 = vmatmul.mubr.f32.gmra.mrb[0].mxu0 %v7708
        %v7710 = vpop.f32.mrb[0].mxu0
        %v7711 = vadd.f32 %v7584, %v7710
        %v7712 = vpop.f32.mrb[0].mxu0
        %7713 = vmatprep.mubr.f32.mxu0 0.0
        %v7714 = vand.u32 %v6405, 4294901760
        %7715 = vmatmul.mubr.f32.gmra.mrb[0].mxu0 %v7714
        %v7716 = vpop.f32.mrb[0].mxu0
        %v7717 = vadd.f32 %v7592, %v7716
        %v7718 = vpop.f32.mrb[0].mxu0
        %7719 = vdwg.mxu0
        %7720 = vmatprep.subr.mxu0 0.0
        %v7721 = vand.u32 %v6412, 4294901760
        %7722 = vmatpush1.msra.mxu0 %v7721
        %7723 = vmatprep.subr.mxu0 0.0
        %v7724 = vand.u32 %v6413, 4294901760
        %7725 = vmatpush1.msra.mxu0 %v7724
        %7726 = vmatprep.subr.mxu0 0.0
        %v7727 = vand.u32 %v6414, 4294901760
        %7728 = vmatpush1.msra.mxu0 %v7727
        %7729 = vmatprep.subr.mxu0 0.0
        %v7730 = vand.u32 %v6415, 4294901760
        %7731 = vmatpush1.msra.mxu0 %v7730
        %7732 = vmatprep.subr.mxu0 0.0
        %v7733 = vand.u32 %v6416, 4294901760
        %7734 = vmatpush1.msra.mxu0 %v7733
        %7735 = vmatprep.subr.mxu0 0.0
        %v7736 = vand.u32 %v6417, 4294901760
        %7737 = vmatpush1.msra.mxu0 %v7736
        %7738 = vmatprep.subr.mxu0 0.0
        %v7739 = vand.u32 %v6418, 4294901760
        %7740 = vmatpush1.msra.mxu0 %v7739
        %7741 = vmatprep.subr.mxu0 0.0
        %v7742 = vand.u32 %v6419, 4294901760
        %7743 = vmatpush1.msra.mxu0 %v7742
        %7744 = vmatprep.subr.mxu0 0.0
        %v7745 = vand.u32 %v6420, 4294901760
        %7746 = vmatpush1.msra.mxu0 %v7745
        %7747 = vmatprep.subr.mxu0 0.0
        %v7748 = vand.u32 %v6421, 4294901760
        %7749 = vmatpush1.msra.mxu0 %v7748
        %7750 = vmatprep.subr.mxu0 0.0
        %v7751 = vand.u32 %v6422, 4294901760
        %7752 = vmatpush1.msra.mxu0 %v7751
        %7753 = vmatprep.subr.mxu0 0.0
        %v7754 = vand.u32 %v6423, 4294901760
        %7755 = vmatpush1.msra.mxu0 %v7754
        %7756 = vmatprep.subr.mxu0 0.0
        %v7757 = vand.u32 %v6424, 4294901760
        %7758 = vmatpush1.msra.mxu0 %v7757
        %7759 = vmatprep.subr.mxu0 0.0
        %v7760 = vand.u32 %v6425, 4294901760
        %7761 = vmatpush1.msra.mxu0 %v7760
        %7762 = vmatprep.subr.mxu0 0.0
        %v7763 = vand.u32 %v6426, 4294901760
        %7764 = vmatpush1.msra.mxu0 %v7763
        %7765 = vmatprep.subr.mxu0 0.0
        %v7766 = vand.u32 %v6427, 4294901760
        %7767 = vmatpush1.msra.mxu0 %v7766
        %7768 = vmatprep.subr.mxu0 0.0
        %7769 = vmatpush1.msra.mxu0 0.0
        %7770 = vmatprep.subr.mxu0 0.0
        %7771 = vmatpush1.msra.mxu0 0.0
        %7772 = vmatprep.subr.mxu0 0.0
        %7773 = vmatpush1.msra.mxu0 0.0
        %7774 = vmatprep.subr.mxu0 0.0
        %7775 = vmatpush1.msra.mxu0 0.0
        %7776 = vmatprep.subr.mxu0 0.0
        %7777 = vmatpush1.msra.mxu0 0.0
        %7778 = vmatprep.subr.mxu0 0.0
        %7779 = vmatpush1.msra.mxu0 0.0
        %7780 = vmatprep.subr.mxu0 0.0
        %7781 = vmatpush1.msra.mxu0 0.0
        %7782 = vmatprep.subr.mxu0 0.0
        %7783 = vmatpush1.msra.mxu0 0.0
        %7784 = vmatprep.subr.mxu0 0.0
        %7785 = vmatpush1.msra.mxu0 0.0
        %7786 = vmatprep.subr.mxu0 0.0
        %7787 = vmatpush1.msra.mxu0 0.0
        %7788 = vmatprep.subr.mxu0 0.0
        %7789 = vmatpush1.msra.mxu0 0.0
        %7790 = vmatprep.subr.mxu0 0.0
        %7791 = vmatpush1.msra.mxu0 0.0
        %7792 = vmatprep.subr.mxu0 0.0
        %7793 = vmatpush1.msra.mxu0 0.0
        %7794 = vmatprep.subr.mxu0 0.0
        %7795 = vmatpush1.msra.mxu0 0.0
        %7796 = vmatprep.subr.mxu0 0.0
        %7797 = vmatpush1.msra.mxu0 0.0
        %7798 = vmatprep.subr.mxu0 0.0
        %7799 = vmatpush1.msra.mxu0 0.0
        %7800 = vmatprep.mubr.f32.mxu0 0.0
        %v7801 = vand.u32 %v6404, 4294901760
        %7802 = vmatmul.mubr.f32.gmra.mrb[0].mxu0 %v7801
        %v7803 = vpop.f32.mrb[0].mxu0
        %v7804 = vadd.f32 %v7711, %v7803
        %v7805 = vpop.f32.mrb[0].mxu0
        %7806 = vmatprep.mubr.f32.mxu0 0.0
        %v7807 = vand.u32 %v6405, 4294901760
        %7808 = vmatmul.mubr.f32.gmra.mrb[0].mxu0 %v7807
        %v7809 = vpop.f32.mrb[0].mxu0
        %v7810 = vadd.f32 %v7717, %v7809
        %v7811 = vpop.f32.mrb[0].mxu0
        %7812 = vdwg.mxu0
        %s7813 = scalar_lea.vmem %s7, 256
        %v7814 = vld [vmem:[%s7813] sm:$0xff]
        %v7815 = vld [vmem:[%s7813 + $0x8] sm:$0xff]
        %v7816 = vld [vmem:[%s7813 + $0x10] sm:$0xff]
        %v7817 = vld [vmem:[%s7813 + $0x18] sm:$0xff]
        %v7818 = vld [vmem:[%s7813 + $0x20] sm:$0xff]
        %v7819 = vld [vmem:[%s7813 + $0x28] sm:$0xff]
        %v7820 = vld [vmem:[%s7813 + $0x30] sm:$0xff]
        %v7821 = vld [vmem:[%s7813 + $0x38] sm:$0xff]
        %v7822 = vld [vmem:[%s7813 + $0x40] sm:$0xff]
        %v7823 = vld [vmem:[%s7813 + $0x48] sm:$0xff]
        %v7824 = vld [vmem:[%s7813 + $0x50] sm:$0xff]
        %v7825 = vld [vmem:[%s7813 + $0x58] sm:$0xff]
        %v7826 = vld [vmem:[%s7813 + $0x60] sm:$0xff]
        %v7827 = vld [vmem:[%s7813 + $0x68] sm:$0xff]
        %v7828 = vld [vmem:[%s7813 + $0x70] sm:$0xff]
        %v7829 = vld [vmem:[%s7813 + $0x78] sm:$0xff]
        %7830 = vmatprep.subr.mxu0 0.0
        %v7831 = vand.u32 %v7814, 4294901760
        %7832 = vmatpush1.msra.mxu0 %v7831
        %7833 = vmatprep.subr.mxu0 0.0
        %v7834 = vand.u32 %v7815, 4294901760
        %7835 = vmatpush1.msra.mxu0 %v7834
        %7836 = vmatprep.subr.mxu0 0.0
        %v7837 = vand.u32 %v7816, 4294901760
        %7838 = vmatpush1.msra.mxu0 %v7837
        %7839 = vmatprep.subr.mxu0 0.0
        %v7840 = vand.u32 %v7817, 4294901760
        %7841 = vmatpush1.msra.mxu0 %v7840
        %7842 = vmatprep.subr.mxu0 0.0
        %v7843 = vand.u32 %v7818, 4294901760
        %7844 = vmatpush1.msra.mxu0 %v7843
        %7845 = vmatprep.subr.mxu0 0.0
        %v7846 = vand.u32 %v7819, 4294901760
        %7847 = vmatpush1.msra.mxu0 %v7846
        %7848 = vmatprep.subr.mxu0 0.0
        %v7849 = vand.u32 %v7820, 4294901760
        %7850 = vmatpush1.msra.mxu0 %v7849
        %7851 = vmatprep.subr.mxu0 0.0
        %v7852 = vand.u32 %v7821, 4294901760
        %7853 = vmatpush1.msra.mxu0 %v7852
        %7854 = vmatprep.subr.mxu0 0.0
        %v7855 = vand.u32 %v7822, 4294901760
        %7856 = vmatpush1.msra.mxu0 %v7855
        %7857 = vmatprep.subr.mxu0 0.0
        %v7858 = vand.u32 %v7823, 4294901760
        %7859 = vmatpush1.msra.mxu0 %v7858
        %7860 = vmatprep.subr.mxu0 0.0
        %v7861 = vand.u32 %v7824, 4294901760
        %7862 = vmatpush1.msra.mxu0 %v7861
        %7863 = vmatprep.subr.mxu0 0.0
        %v7864 = vand.u32 %v7825, 4294901760
        %7865 = vmatpush1.msra.mxu0 %v7864
        %7866 = vmatprep.subr.mxu0 0.0
        %v7867 = vand.u32 %v7826, 4294901760
        %7868 = vmatpush1.msra.mxu0 %v7867
        %7869 = vmatprep.subr.mxu0 0.0
        %v7870 = vand.u32 %v7827, 4294901760
        %7871 = vmatpush1.msra.mxu0 %v7870
        %7872 = vmatprep.subr.mxu0 0.0
        %v7873 = vand.u32 %v7828, 4294901760
        %7874 = vmatpush1.msra.mxu0 %v7873
        %7875 = vmatprep.subr.mxu0 0.0
        %v7876 = vand.u32 %v7829, 4294901760
        %7877 = vmatpush1.msra.mxu0 %v7876
        %7878 = vmatprep.subr.mxu0 0.0
        %7879 = vmatpush1.msra.mxu0 0.0
        %7880 = vmatprep.subr.mxu0 0.0
        %7881 = vmatpush1.msra.mxu0 0.0
        %7882 = vmatprep.subr.mxu0 0.0
        %7883 = vmatpush1.msra.mxu0 0.0
        %7884 = vmatprep.subr.mxu0 0.0
        %7885 = vmatpush1.msra.mxu0 0.0
        %7886 = vmatprep.subr.mxu0 0.0
        %7887 = vmatpush1.msra.mxu0 0.0
        %7888 = vmatprep.subr.mxu0 0.0
        %7889 = vmatpush1.msra.mxu0 0.0
        %7890 = vmatprep.subr.mxu0 0.0
        %7891 = vmatpush1.msra.mxu0 0.0
        %7892 = vmatprep.subr.mxu0 0.0
        %7893 = vmatpush1.msra.mxu0 0.0
        %7894 = vmatprep.subr.mxu0 0.0
        %7895 = vmatpush1.msra.mxu0 0.0
        %7896 = vmatprep.subr.mxu0 0.0
        %7897 = vmatpush1.msra.mxu0 0.0
        %7898 = vmatprep.subr.mxu0 0.0
        %7899 = vmatpush1.msra.mxu0 0.0
        %7900 = vmatprep.subr.mxu0 0.0
        %7901 = vmatpush1.msra.mxu0 0.0
        %7902 = vmatprep.subr.mxu0 0.0
        %7903 = vmatpush1.msra.mxu0 0.0
        %7904 = vmatprep.subr.mxu0 0.0
        %7905 = vmatpush1.msra.mxu0 0.0
        %7906 = vmatprep.subr.mxu0 0.0
        %7907 = vmatpush1.msra.mxu0 0.0
        %7908 = vmatprep.subr.mxu0 0.0
        %7909 = vmatpush1.msra.mxu0 0.0
        %7910 = vmatprep.mubr.f32.mxu0 0.0
        %v7911 = vand.u32 %v6410, 4294901760
        %v7912 = vsub.f32 %v6410, %v7911
        %v7913 = vand.u32 %v7912, 4294901760
        %v7914 = vsub.f32 %v7912, %v7913
        %v7915 = vand.u32 %v7914, 4294901760
        %7916 = vmatmul.mubr.f32.gmra.mrb[0].mxu0 %v7915
        %v7917 = vpop.f32.mrb[0].mxu0
        %v7918 = vadd.f32 0.0, %v7917
        %v7919 = vpop.f32.mrb[0].mxu0
        %7920 = vmatprep.mubr.f32.mxu0 0.0
        %v7921 = vand.u32 %v6411, 4294901760
        %v7922 = vsub.f32 %v6411, %v7921
        %v7923 = vand.u32 %v7922, 4294901760
        %v7924 = vsub.f32 %v7922, %v7923
        %v7925 = vand.u32 %v7924, 4294901760
        %7926 = vmatmul.mubr.f32.gmra.mrb[0].mxu0 %v7925
        %v7927 = vpop.f32.mrb[0].mxu0
        %v7928 = vadd.f32 0.0, %v7927
        %v7929 = vpop.f32.mrb[0].mxu0
        %7930 = vdwg.mxu0
        %7931 = vmatprep.subr.mxu0 0.0
        %v7932 = vand.u32 %v7814, 4294901760
        %v7933 = vsub.f32 %v7814, %v7932
        %v7934 = vand.u32 %v7933, 4294901760
        %v7935 = vsub.f32 %v7933, %v7934
        %v7936 = vand.u32 %v7935, 4294901760
        %7937 = vmatpush1.msra.mxu0 %v7936
        %7938 = vmatprep.subr.mxu0 0.0
        %v7939 = vand.u32 %v7815, 4294901760
        %v7940 = vsub.f32 %v7815, %v7939
        %v7941 = vand.u32 %v7940, 4294901760
        %v7942 = vsub.f32 %v7940, %v7941
        %v7943 = vand.u32 %v7942, 4294901760
        %7944 = vmatpush1.msra.mxu0 %v7943
        %7945 = vmatprep.subr.mxu0 0.0
        %v7946 = vand.u32 %v7816, 4294901760
        %v7947 = vsub.f32 %v7816, %v7946
        %v7948 = vand.u32 %v7947, 4294901760
        %v7949 = vsub.f32 %v7947, %v7948
        %v7950 = vand.u32 %v7949, 4294901760
        %7951 = vmatpush1.msra.mxu0 %v7950
        %7952 = vmatprep.subr.mxu0 0.0
        %v7953 = vand.u32 %v7817, 4294901760
        %v7954 = vsub.f32 %v7817, %v7953
        %v7955 = vand.u32 %v7954, 4294901760
        %v7956 = vsub.f32 %v7954, %v7955
        %v7957 = vand.u32 %v7956, 4294901760
        %7958 = vmatpush1.msra.mxu0 %v7957
        %7959 = vmatprep.subr.mxu0 0.0
        %v7960 = vand.u32 %v7818, 4294901760
        %v7961 = vsub.f32 %v7818, %v7960
        %v7962 = vand.u32 %v7961, 4294901760
        %v7963 = vsub.f32 %v7961, %v7962
        %v7964 = vand.u32 %v7963, 4294901760
        %7965 = vmatpush1.msra.mxu0 %v7964
        %7966 = vmatprep.subr.mxu0 0.0
        %v7967 = vand.u32 %v7819, 4294901760
        %v7968 = vsub.f32 %v7819, %v7967
        %v7969 = vand.u32 %v7968, 4294901760
        %v7970 = vsub.f32 %v7968, %v7969
        %v7971 = vand.u32 %v7970, 4294901760
        %7972 = vmatpush1.msra.mxu0 %v7971
        %7973 = vmatprep.subr.mxu0 0.0
        %v7974 = vand.u32 %v7820, 4294901760
        %v7975 = vsub.f32 %v7820, %v7974
        %v7976 = vand.u32 %v7975, 4294901760
        %v7977 = vsub.f32 %v7975, %v7976
        %v7978 = vand.u32 %v7977, 4294901760
        %7979 = vmatpush1.msra.mxu0 %v7978
        %7980 = vmatprep.subr.mxu0 0.0
        %v7981 = vand.u32 %v7821, 4294901760
        %v7982 = vsub.f32 %v7821, %v7981
        %v7983 = vand.u32 %v7982, 4294901760
        %v7984 = vsub.f32 %v7982, %v7983
        %v7985 = vand.u32 %v7984, 4294901760
        %7986 = vmatpush1.msra.mxu0 %v7985
        %7987 = vmatprep.subr.mxu0 0.0
        %v7988 = vand.u32 %v7822, 4294901760
        %v7989 = vsub.f32 %v7822, %v7988
        %v7990 = vand.u32 %v7989, 4294901760
        %v7991 = vsub.f32 %v7989, %v7990
        %v7992 = vand.u32 %v7991, 4294901760
        %7993 = vmatpush1.msra.mxu0 %v7992
        %7994 = vmatprep.subr.mxu0 0.0
        %v7995 = vand.u32 %v7823, 4294901760
        %v7996 = vsub.f32 %v7823, %v7995
        %v7997 = vand.u32 %v7996, 4294901760
        %v7998 = vsub.f32 %v7996, %v7997
        %v7999 = vand.u32 %v7998, 4294901760
        %8000 = vmatpush1.msra.mxu0 %v7999
        %8001 = vmatprep.subr.mxu0 0.0
        %v8002 = vand.u32 %v7824, 4294901760
        %v8003 = vsub.f32 %v7824, %v8002
        %v8004 = vand.u32 %v8003, 4294901760
        %v8005 = vsub.f32 %v8003, %v8004
        %v8006 = vand.u32 %v8005, 4294901760
        %8007 = vmatpush1.msra.mxu0 %v8006
        %8008 = vmatprep.subr.mxu0 0.0
        %v8009 = vand.u32 %v7825, 4294901760
        %v8010 = vsub.f32 %v7825, %v8009
        %v8011 = vand.u32 %v8010, 4294901760
        %v8012 = vsub.f32 %v8010, %v8011
        %v8013 = vand.u32 %v8012, 4294901760
        %8014 = vmatpush1.msra.mxu0 %v8013
        %8015 = vmatprep.subr.mxu0 0.0
        %v8016 = vand.u32 %v7826, 4294901760
        %v8017 = vsub.f32 %v7826, %v8016
        %v8018 = vand.u32 %v8017, 4294901760
        %v8019 = vsub.f32 %v8017, %v8018
        %v8020 = vand.u32 %v8019, 4294901760
        %8021 = vmatpush1.msra.mxu0 %v8020
        %8022 = vmatprep.subr.mxu0 0.0
        %v8023 = vand.u32 %v7827, 4294901760
        %v8024 = vsub.f32 %v7827, %v8023
        %v8025 = vand.u32 %v8024, 4294901760
        %v8026 = vsub.f32 %v8024, %v8025
        %v8027 = vand.u32 %v8026, 4294901760
        %8028 = vmatpush1.msra.mxu0 %v8027
        %8029 = vmatprep.subr.mxu0 0.0
        %v8030 = vand.u32 %v7828, 4294901760
        %v8031 = vsub.f32 %v7828, %v8030
        %v8032 = vand.u32 %v8031, 4294901760
        %v8033 = vsub.f32 %v8031, %v8032
        %v8034 = vand.u32 %v8033, 4294901760
        %8035 = vmatpush1.msra.mxu0 %v8034
        %8036 = vmatprep.subr.mxu0 0.0
        %v8037 = vand.u32 %v7829, 4294901760
        %v8038 = vsub.f32 %v7829, %v8037
        %v8039 = vand.u32 %v8038, 4294901760
        %v8040 = vsub.f32 %v8038, %v8039
        %v8041 = vand.u32 %v8040, 4294901760
        %8042 = vmatpush1.msra.mxu0 %v8041
        %8043 = vmatprep.subr.mxu0 0.0
        %8044 = vmatpush1.msra.mxu0 0.0
        %8045 = vmatprep.subr.mxu0 0.0
        %8046 = vmatpush1.msra.mxu0 0.0
        %8047 = vmatprep.subr.mxu0 0.0
        %8048 = vmatpush1.msra.mxu0 0.0
        %8049 = vmatprep.subr.mxu0 0.0
        %8050 = vmatpush1.msra.mxu0 0.0
        %8051 = vmatprep.subr.mxu0 0.0
        %8052 = vmatpush1.msra.mxu0 0.0
        %8053 = vmatprep.subr.mxu0 0.0
        %8054 = vmatpush1.msra.mxu0 0.0
        %8055 = vmatprep.subr.mxu0 0.0
        %8056 = vmatpush1.msra.mxu0 0.0
        %8057 = vmatprep.subr.mxu0 0.0
        %8058 = vmatpush1.msra.mxu0 0.0
        %8059 = vmatprep.subr.mxu0 0.0
        %8060 = vmatpush1.msra.mxu0 0.0
        %8061 = vmatprep.subr.mxu0 0.0
        %8062 = vmatpush1.msra.mxu0 0.0
        %8063 = vmatprep.subr.mxu0 0.0
        %8064 = vmatpush1.msra.mxu0 0.0
        %8065 = vmatprep.subr.mxu0 0.0
        %8066 = vmatpush1.msra.mxu0 0.0
        %8067 = vmatprep.subr.mxu0 0.0
        %8068 = vmatpush1.msra.mxu0 0.0
        %8069 = vmatprep.subr.mxu0 0.0
        %8070 = vmatpush1.msra.mxu0 0.0
        %8071 = vmatprep.subr.mxu0 0.0
        %8072 = vmatpush1.msra.mxu0 0.0
        %8073 = vmatprep.subr.mxu0 0.0
        %8074 = vmatpush1.msra.mxu0 0.0
        %8075 = vmatprep.mubr.f32.mxu0 0.0
        %v8076 = vand.u32 %v6410, 4294901760
        %8077 = vmatmul.mubr.f32.gmra.mrb[0].mxu0 %v8076
        %v8078 = vpop.f32.mrb[0].mxu0
        %v8079 = vadd.f32 %v7918, %v8078
        %v8080 = vpop.f32.mrb[0].mxu0
        %8081 = vmatprep.mubr.f32.mxu0 0.0
        %v8082 = vand.u32 %v6411, 4294901760
        %8083 = vmatmul.mubr.f32.gmra.mrb[0].mxu0 %v8082
        %v8084 = vpop.f32.mrb[0].mxu0
        %v8085 = vadd.f32 %v7928, %v8084
        %v8086 = vpop.f32.mrb[0].mxu0
        %8087 = vdwg.mxu0
        %8088 = vmatprep.subr.mxu0 0.0
        %v8089 = vand.u32 %v7814, 4294901760
        %v8090 = vsub.f32 %v7814, %v8089
        %8091 = vmatpush1.msra.mxu0 %v8090
        %8092 = vmatprep.subr.mxu0 0.0
        %v8093 = vand.u32 %v7815, 4294901760
        %v8094 = vsub.f32 %v7815, %v8093
        %8095 = vmatpush1.msra.mxu0 %v8094
        %8096 = vmatprep.subr.mxu0 0.0
        %v8097 = vand.u32 %v7816, 4294901760
        %v8098 = vsub.f32 %v7816, %v8097
        %8099 = vmatpush1.msra.mxu0 %v8098
        %8100 = vmatprep.subr.mxu0 0.0
        %v8101 = vand.u32 %v7817, 4294901760
        %v8102 = vsub.f32 %v7817, %v8101
        %8103 = vmatpush1.msra.mxu0 %v8102
        %8104 = vmatprep.subr.mxu0 0.0
        %v8105 = vand.u32 %v7818, 4294901760
        %v8106 = vsub.f32 %v7818, %v8105
        %8107 = vmatpush1.msra.mxu0 %v8106
        %8108 = vmatprep.subr.mxu0 0.0
        %v8109 = vand.u32 %v7819, 4294901760
        %v8110 = vsub.f32 %v7819, %v8109
        %8111 = vmatpush1.msra.mxu0 %v8110
        %8112 = vmatprep.subr.mxu0 0.0
        %v8113 = vand.u32 %v7820, 4294901760
        %v8114 = vsub.f32 %v7820, %v8113
        %8115 = vmatpush1.msra.mxu0 %v8114
        %8116 = vmatprep.subr.mxu0 0.0
        %v8117 = vand.u32 %v7821, 4294901760
        %v8118 = vsub.f32 %v7821, %v8117
        %8119 = vmatpush1.msra.mxu0 %v8118
        %8120 = vmatprep.subr.mxu0 0.0
        %v8121 = vand.u32 %v7822, 4294901760
        %v8122 = vsub.f32 %v7822, %v8121
        %8123 = vmatpush1.msra.mxu0 %v8122
        %8124 = vmatprep.subr.mxu0 0.0
        %v8125 = vand.u32 %v7823, 4294901760
        %v8126 = vsub.f32 %v7823, %v8125
        %8127 = vmatpush1.msra.mxu0 %v8126
        %8128 = vmatprep.subr.mxu0 0.0
        %v8129 = vand.u32 %v7824, 4294901760
        %v8130 = vsub.f32 %v7824, %v8129
        %8131 = vmatpush1.msra.mxu0 %v8130
        %8132 = vmatprep.subr.mxu0 0.0
        %v8133 = vand.u32 %v7825, 4294901760
        %v8134 = vsub.f32 %v7825, %v8133
        %8135 = vmatpush1.msra.mxu0 %v8134
        %8136 = vmatprep.subr.mxu0 0.0
        %v8137 = vand.u32 %v7826, 4294901760
        %v8138 = vsub.f32 %v7826, %v8137
        %8139 = vmatpush1.msra.mxu0 %v8138
        %8140 = vmatprep.subr.mxu0 0.0
        %v8141 = vand.u32 %v7827, 4294901760
        %v8142 = vsub.f32 %v7827, %v8141
        %8143 = vmatpush1.msra.mxu0 %v8142
        %8144 = vmatprep.subr.mxu0 0.0
        %v8145 = vand.u32 %v7828, 4294901760
        %v8146 = vsub.f32 %v7828, %v8145
        %8147 = vmatpush1.msra.mxu0 %v8146
        %8148 = vmatprep.subr.mxu0 0.0
        %v8149 = vand.u32 %v7829, 4294901760
        %v8150 = vsub.f32 %v7829, %v8149
        %8151 = vmatpush1.msra.mxu0 %v8150
        %8152 = vmatprep.subr.mxu0 0.0
        %8153 = vmatpush1.msra.mxu0 0.0
        %8154 = vmatprep.subr.mxu0 0.0
        %8155 = vmatpush1.msra.mxu0 0.0
        %8156 = vmatprep.subr.mxu0 0.0
        %8157 = vmatpush1.msra.mxu0 0.0
        %8158 = vmatprep.subr.mxu0 0.0
        %8159 = vmatpush1.msra.mxu0 0.0
        %8160 = vmatprep.subr.mxu0 0.0
        %8161 = vmatpush1.msra.mxu0 0.0
        %8162 = vmatprep.subr.mxu0 0.0
        %8163 = vmatpush1.msra.mxu0 0.0
        %8164 = vmatprep.subr.mxu0 0.0
        %8165 = vmatpush1.msra.mxu0 0.0
        %8166 = vmatprep.subr.mxu0 0.0
        %8167 = vmatpush1.msra.mxu0 0.0
        %8168 = vmatprep.subr.mxu0 0.0
        %8169 = vmatpush1.msra.mxu0 0.0
        %8170 = vmatprep.subr.mxu0 0.0
        %8171 = vmatpush1.msra.mxu0 0.0
        %8172 = vmatprep.subr.mxu0 0.0
        %8173 = vmatpush1.msra.mxu0 0.0
        %8174 = vmatprep.subr.mxu0 0.0
        %8175 = vmatpush1.msra.mxu0 0.0
        %8176 = vmatprep.subr.mxu0 0.0
        %8177 = vmatpush1.msra.mxu0 0.0
        %8178 = vmatprep.subr.mxu0 0.0
        %8179 = vmatpush1.msra.mxu0 0.0
        %8180 = vmatprep.subr.mxu0 0.0
        %8181 = vmatpush1.msra.mxu0 0.0
        %8182 = vmatprep.subr.mxu0 0.0
        %8183 = vmatpush1.msra.mxu0 0.0
        %8184 = vmatprep.mubr.f32.mxu0 0.0
        %v8185 = vand.u32 %v6410, 4294901760
        %v8186 = vsub.f32 %v6410, %v8185
        %8187 = vmatmul.mubr.f32.gmra.mrb[0].mxu0 %v8186
        %v8188 = vpop.f32.mrb[0].mxu0
        %v8189 = vadd.f32 %v8079, %v8188
        %v8190 = vpop.f32.mrb[0].mxu0
        %8191 = vmatprep.mubr.f32.mxu0 0.0
        %v8192 = vand.u32 %v6411, 4294901760
        %v8193 = vsub.f32 %v6411, %v8192
        %8194 = vmatmul.mubr.f32.gmra.mrb[0].mxu0 %v8193
        %v8195 = vpop.f32.mrb[0].mxu0
        %v8196 = vadd.f32 %v8085, %v8195
        %v8197 = vpop.f32.mrb[0].mxu0
        %8198 = vdwg.mxu0
        %8199 = vmatprep.subr.mxu0 0.0
        %v8200 = vand.u32 %v7814, 4294901760
        %8201 = vmatpush1.msra.mxu0 %v8200
        %8202 = vmatprep.subr.mxu0 0.0
        %v8203 = vand.u32 %v7815, 4294901760
        %8204 = vmatpush1.msra.mxu0 %v8203
        %8205 = vmatprep.subr.mxu0 0.0
        %v8206 = vand.u32 %v7816, 4294901760
        %8207 = vmatpush1.msra.mxu0 %v8206
        %8208 = vmatprep.subr.mxu0 0.0
        %v8209 = vand.u32 %v7817, 4294901760
        %8210 = vmatpush1.msra.mxu0 %v8209
        %8211 = vmatprep.subr.mxu0 0.0
        %v8212 = vand.u32 %v7818, 4294901760
        %8213 = vmatpush1.msra.mxu0 %v8212
        %8214 = vmatprep.subr.mxu0 0.0
        %v8215 = vand.u32 %v7819, 4294901760
        %8216 = vmatpush1.msra.mxu0 %v8215
        %8217 = vmatprep.subr.mxu0 0.0
        %v8218 = vand.u32 %v7820, 4294901760
        %8219 = vmatpush1.msra.mxu0 %v8218
        %8220 = vmatprep.subr.mxu0 0.0
        %v8221 = vand.u32 %v7821, 4294901760
        %8222 = vmatpush1.msra.mxu0 %v8221
        %8223 = vmatprep.subr.mxu0 0.0
        %v8224 = vand.u32 %v7822, 4294901760
        %8225 = vmatpush1.msra.mxu0 %v8224
        %8226 = vmatprep.subr.mxu0 0.0
        %v8227 = vand.u32 %v7823, 4294901760
        %8228 = vmatpush1.msra.mxu0 %v8227
        %8229 = vmatprep.subr.mxu0 0.0
        %v8230 = vand.u32 %v7824, 4294901760
        %8231 = vmatpush1.msra.mxu0 %v8230
        %8232 = vmatprep.subr.mxu0 0.0
        %v8233 = vand.u32 %v7825, 4294901760
        %8234 = vmatpush1.msra.mxu0 %v8233
        %8235 = vmatprep.subr.mxu0 0.0
        %v8236 = vand.u32 %v7826, 4294901760
        %8237 = vmatpush1.msra.mxu0 %v8236
        %8238 = vmatprep.subr.mxu0 0.0
        %v8239 = vand.u32 %v7827, 4294901760
        %8240 = vmatpush1.msra.mxu0 %v8239
        %8241 = vmatprep.subr.mxu0 0.0
        %v8242 = vand.u32 %v7828, 4294901760
        %8243 = vmatpush1.msra.mxu0 %v8242
        %8244 = vmatprep.subr.mxu0 0.0
        %v8245 = vand.u32 %v7829, 4294901760
        %8246 = vmatpush1.msra.mxu0 %v8245
        %8247 = vmatprep.subr.mxu0 0.0
        %8248 = vmatpush1.msra.mxu0 0.0
        %8249 = vmatprep.subr.mxu0 0.0
        %8250 = vmatpush1.msra.mxu0 0.0
        %8251 = vmatprep.subr.mxu0 0.0
        %8252 = vmatpush1.msra.mxu0 0.0
        %8253 = vmatprep.subr.mxu0 0.0
        %8254 = vmatpush1.msra.mxu0 0.0
        %8255 = vmatprep.subr.mxu0 0.0
        %8256 = vmatpush1.msra.mxu0 0.0
        %8257 = vmatprep.subr.mxu0 0.0
        %8258 = vmatpush1.msra.mxu0 0.0
        %8259 = vmatprep.subr.mxu0 0.0
        %8260 = vmatpush1.msra.mxu0 0.0
        %8261 = vmatprep.subr.mxu0 0.0
        %8262 = vmatpush1.msra.mxu0 0.0
        %8263 = vmatprep.subr.mxu0 0.0
        %8264 = vmatpush1.msra.mxu0 0.0
        %8265 = vmatprep.subr.mxu0 0.0
        %8266 = vmatpush1.msra.mxu0 0.0
        %8267 = vmatprep.subr.mxu0 0.0
        %8268 = vmatpush1.msra.mxu0 0.0
        %8269 = vmatprep.subr.mxu0 0.0
        %8270 = vmatpush1.msra.mxu0 0.0
        %8271 = vmatprep.subr.mxu0 0.0
        %8272 = vmatpush1.msra.mxu0 0.0
        %8273 = vmatprep.subr.mxu0 0.0
        %8274 = vmatpush1.msra.mxu0 0.0
        %8275 = vmatprep.subr.mxu0 0.0
        %8276 = vmatpush1.msra.mxu0 0.0
        %8277 = vmatprep.subr.mxu0 0.0
        %8278 = vmatpush1.msra.mxu0 0.0
        %8279 = vmatprep.mubr.f32.mxu0 0.0
        %v8280 = vand.u32 %v6410, 4294901760
        %v8281 = vsub.f32 %v6410, %v8280
        %v8282 = vand.u32 %v8281, 4294901760
        %8283 = vmatmul.mubr.f32.gmra.mrb[0].mxu0 %v8282
        %v8284 = vpop.f32.mrb[0].mxu0
        %v8285 = vadd.f32 %v8189, %v8284
        %v8286 = vpop.f32.mrb[0].mxu0
        %8287 = vmatprep.mubr.f32.mxu0 0.0
        %v8288 = vand.u32 %v6411, 4294901760
        %v8289 = vsub.f32 %v6411, %v8288
        %v8290 = vand.u32 %v8289, 4294901760
        %8291 = vmatmul.mubr.f32.gmra.mrb[0].mxu0 %v8290
        %v8292 = vpop.f32.mrb[0].mxu0
        %v8293 = vadd.f32 %v8196, %v8292
        %v8294 = vpop.f32.mrb[0].mxu0
        %8295 = vdwg.mxu0
        %8296 = vmatprep.subr.mxu0 0.0
        %v8297 = vand.u32 %v7814, 4294901760
        %v8298 = vsub.f32 %v7814, %v8297
        %v8299 = vand.u32 %v8298, 4294901760
        %8300 = vmatpush1.msra.mxu0 %v8299
        %8301 = vmatprep.subr.mxu0 0.0
        %v8302 = vand.u32 %v7815, 4294901760
        %v8303 = vsub.f32 %v7815, %v8302
        %v8304 = vand.u32 %v8303, 4294901760
        %8305 = vmatpush1.msra.mxu0 %v8304
        %8306 = vmatprep.subr.mxu0 0.0
        %v8307 = vand.u32 %v7816, 4294901760
        %v8308 = vsub.f32 %v7816, %v8307
        %v8309 = vand.u32 %v8308, 4294901760
        %8310 = vmatpush1.msra.mxu0 %v8309
        %8311 = vmatprep.subr.mxu0 0.0
        %v8312 = vand.u32 %v7817, 4294901760
        %v8313 = vsub.f32 %v7817, %v8312
        %v8314 = vand.u32 %v8313, 4294901760
        %8315 = vmatpush1.msra.mxu0 %v8314
        %8316 = vmatprep.subr.mxu0 0.0
        %v8317 = vand.u32 %v7818, 4294901760
        %v8318 = vsub.f32 %v7818, %v8317
        %v8319 = vand.u32 %v8318, 4294901760
        %8320 = vmatpush1.msra.mxu0 %v8319
        %8321 = vmatprep.subr.mxu0 0.0
        %v8322 = vand.u32 %v7819, 4294901760
        %v8323 = vsub.f32 %v7819, %v8322
        %v8324 = vand.u32 %v8323, 4294901760
        %8325 = vmatpush1.msra.mxu0 %v8324
        %8326 = vmatprep.subr.mxu0 0.0
        %v8327 = vand.u32 %v7820, 4294901760
        %v8328 = vsub.f32 %v7820, %v8327
        %v8329 = vand.u32 %v8328, 4294901760
        %8330 = vmatpush1.msra.mxu0 %v8329
        %8331 = vmatprep.subr.mxu0 0.0
        %v8332 = vand.u32 %v7821, 4294901760
        %v8333 = vsub.f32 %v7821, %v8332
        %v8334 = vand.u32 %v8333, 4294901760
        %8335 = vmatpush1.msra.mxu0 %v8334
        %8336 = vmatprep.subr.mxu0 0.0
        %v8337 = vand.u32 %v7822, 4294901760
        %v8338 = vsub.f32 %v7822, %v8337
        %v8339 = vand.u32 %v8338, 4294901760
        %8340 = vmatpush1.msra.mxu0 %v8339
        %8341 = vmatprep.subr.mxu0 0.0
        %v8342 = vand.u32 %v7823, 4294901760
        %v8343 = vsub.f32 %v7823, %v8342
        %v8344 = vand.u32 %v8343, 4294901760
        %8345 = vmatpush1.msra.mxu0 %v8344
        %8346 = vmatprep.subr.mxu0 0.0
        %v8347 = vand.u32 %v7824, 4294901760
        %v8348 = vsub.f32 %v7824, %v8347
        %v8349 = vand.u32 %v8348, 4294901760
        %8350 = vmatpush1.msra.mxu0 %v8349
        %8351 = vmatprep.subr.mxu0 0.0
        %v8352 = vand.u32 %v7825, 4294901760
        %v8353 = vsub.f32 %v7825, %v8352
        %v8354 = vand.u32 %v8353, 4294901760
        %8355 = vmatpush1.msra.mxu0 %v8354
        %8356 = vmatprep.subr.mxu0 0.0
        %v8357 = vand.u32 %v7826, 4294901760
        %v8358 = vsub.f32 %v7826, %v8357
        %v8359 = vand.u32 %v8358, 4294901760
        %8360 = vmatpush1.msra.mxu0 %v8359
        %8361 = vmatprep.subr.mxu0 0.0
        %v8362 = vand.u32 %v7827, 4294901760
        %v8363 = vsub.f32 %v7827, %v8362
        %v8364 = vand.u32 %v8363, 4294901760
        %8365 = vmatpush1.msra.mxu0 %v8364
        %8366 = vmatprep.subr.mxu0 0.0
        %v8367 = vand.u32 %v7828, 4294901760
        %v8368 = vsub.f32 %v7828, %v8367
        %v8369 = vand.u32 %v8368, 4294901760
        %8370 = vmatpush1.msra.mxu0 %v8369
        %8371 = vmatprep.subr.mxu0 0.0
        %v8372 = vand.u32 %v7829, 4294901760
        %v8373 = vsub.f32 %v7829, %v8372
        %v8374 = vand.u32 %v8373, 4294901760
        %8375 = vmatpush1.msra.mxu0 %v8374
        %8376 = vmatprep.subr.mxu0 0.0
        %8377 = vmatpush1.msra.mxu0 0.0
        %8378 = vmatprep.subr.mxu0 0.0
        %8379 = vmatpush1.msra.mxu0 0.0
        %8380 = vmatprep.subr.mxu0 0.0
        %8381 = vmatpush1.msra.mxu0 0.0
        %8382 = vmatprep.subr.mxu0 0.0
        %8383 = vmatpush1.msra.mxu0 0.0
        %8384 = vmatprep.subr.mxu0 0.0
        %8385 = vmatpush1.msra.mxu0 0.0
        %8386 = vmatprep.subr.mxu0 0.0
        %8387 = vmatpush1.msra.mxu0 0.0
        %8388 = vmatprep.subr.mxu0 0.0
        %8389 = vmatpush1.msra.mxu0 0.0
        %8390 = vmatprep.subr.mxu0 0.0
        %8391 = vmatpush1.msra.mxu0 0.0
        %8392 = vmatprep.subr.mxu0 0.0
        %8393 = vmatpush1.msra.mxu0 0.0
        %8394 = vmatprep.subr.mxu0 0.0
        %8395 = vmatpush1.msra.mxu0 0.0
        %8396 = vmatprep.subr.mxu0 0.0
        %8397 = vmatpush1.msra.mxu0 0.0
        %8398 = vmatprep.subr.mxu0 0.0
        %8399 = vmatpush1.msra.mxu0 0.0
        %8400 = vmatprep.subr.mxu0 0.0
        %8401 = vmatpush1.msra.mxu0 0.0
        %8402 = vmatprep.subr.mxu0 0.0
        %8403 = vmatpush1.msra.mxu0 0.0
        %8404 = vmatprep.subr.mxu0 0.0
        %8405 = vmatpush1.msra.mxu0 0.0
        %8406 = vmatprep.subr.mxu0 0.0
        %8407 = vmatpush1.msra.mxu0 0.0
        %8408 = vmatprep.mubr.f32.mxu0 0.0
        %v8409 = vand.u32 %v6410, 4294901760
        %8410 = vmatmul.mubr.f32.gmra.mrb[0].mxu0 %v8409
        %v8411 = vpop.f32.mrb[0].mxu0
        %v8412 = vadd.f32 %v8285, %v8411
        %v8413 = vpop.f32.mrb[0].mxu0
        %8414 = vmatprep.mubr.f32.mxu0 0.0
        %v8415 = vand.u32 %v6411, 4294901760
        %8416 = vmatmul.mubr.f32.gmra.mrb[0].mxu0 %v8415
        %v8417 = vpop.f32.mrb[0].mxu0
        %v8418 = vadd.f32 %v8293, %v8417
        %v8419 = vpop.f32.mrb[0].mxu0
        %8420 = vdwg.mxu0
        %8421 = vmatprep.subr.mxu0 0.0
        %v8422 = vand.u32 %v7814, 4294901760
        %8423 = vmatpush1.msra.mxu0 %v8422
        %8424 = vmatprep.subr.mxu0 0.0
        %v8425 = vand.u32 %v7815, 4294901760
        %8426 = vmatpush1.msra.mxu0 %v8425
        %8427 = vmatprep.subr.mxu0 0.0
        %v8428 = vand.u32 %v7816, 4294901760
        %8429 = vmatpush1.msra.mxu0 %v8428
        %8430 = vmatprep.subr.mxu0 0.0
        %v8431 = vand.u32 %v7817, 4294901760
        %8432 = vmatpush1.msra.mxu0 %v8431
        %8433 = vmatprep.subr.mxu0 0.0
        %v8434 = vand.u32 %v7818, 4294901760
        %8435 = vmatpush1.msra.mxu0 %v8434
        %8436 = vmatprep.subr.mxu0 0.0
        %v8437 = vand.u32 %v7819, 4294901760
        %8438 = vmatpush1.msra.mxu0 %v8437
        %8439 = vmatprep.subr.mxu0 0.0
        %v8440 = vand.u32 %v7820, 4294901760
        %8441 = vmatpush1.msra.mxu0 %v8440
        %8442 = vmatprep.subr.mxu0 0.0
        %v8443 = vand.u32 %v7821, 4294901760
        %8444 = vmatpush1.msra.mxu0 %v8443
        %8445 = vmatprep.subr.mxu0 0.0
        %v8446 = vand.u32 %v7822, 4294901760
        %8447 = vmatpush1.msra.mxu0 %v8446
        %8448 = vmatprep.subr.mxu0 0.0
        %v8449 = vand.u32 %v7823, 4294901760
        %8450 = vmatpush1.msra.mxu0 %v8449
        %8451 = vmatprep.subr.mxu0 0.0
        %v8452 = vand.u32 %v7824, 4294901760
        %8453 = vmatpush1.msra.mxu0 %v8452
        %8454 = vmatprep.subr.mxu0 0.0
        %v8455 = vand.u32 %v7825, 4294901760
        %8456 = vmatpush1.msra.mxu0 %v8455
        %8457 = vmatprep.subr.mxu0 0.0
        %v8458 = vand.u32 %v7826, 4294901760
        %8459 = vmatpush1.msra.mxu0 %v8458
        %8460 = vmatprep.subr.mxu0 0.0
        %v8461 = vand.u32 %v7827, 4294901760
        %8462 = vmatpush1.msra.mxu0 %v8461
        %8463 = vmatprep.subr.mxu0 0.0
        %v8464 = vand.u32 %v7828, 4294901760
        %8465 = vmatpush1.msra.mxu0 %v8464
        %8466 = vmatprep.subr.mxu0 0.0
        %v8467 = vand.u32 %v7829, 4294901760
        %8468 = vmatpush1.msra.mxu0 %v8467
        %8469 = vmatprep.subr.mxu0 0.0
        %8470 = vmatpush1.msra.mxu0 0.0
        %8471 = vmatprep.subr.mxu0 0.0
        %8472 = vmatpush1.msra.mxu0 0.0
        %8473 = vmatprep.subr.mxu0 0.0
        %8474 = vmatpush1.msra.mxu0 0.0
        %8475 = vmatprep.subr.mxu0 0.0
        %8476 = vmatpush1.msra.mxu0 0.0
        %8477 = vmatprep.subr.mxu0 0.0
        %8478 = vmatpush1.msra.mxu0 0.0
        %8479 = vmatprep.subr.mxu0 0.0
        %8480 = vmatpush1.msra.mxu0 0.0
        %8481 = vmatprep.subr.mxu0 0.0
        %8482 = vmatpush1.msra.mxu0 0.0
        %8483 = vmatprep.subr.mxu0 0.0
        %8484 = vmatpush1.msra.mxu0 0.0
        %8485 = vmatprep.subr.mxu0 0.0
        %8486 = vmatpush1.msra.mxu0 0.0
        %8487 = vmatprep.subr.mxu0 0.0
        %8488 = vmatpush1.msra.mxu0 0.0
        %8489 = vmatprep.subr.mxu0 0.0
        %8490 = vmatpush1.msra.mxu0 0.0
        %8491 = vmatprep.subr.mxu0 0.0
        %8492 = vmatpush1.msra.mxu0 0.0
        %8493 = vmatprep.subr.mxu0 0.0
        %8494 = vmatpush1.msra.mxu0 0.0
        %8495 = vmatprep.subr.mxu0 0.0
        %8496 = vmatpush1.msra.mxu0 0.0
        %8497 = vmatprep.subr.mxu0 0.0
        %8498 = vmatpush1.msra.mxu0 0.0
        %8499 = vmatprep.subr.mxu0 0.0
        %8500 = vmatpush1.msra.mxu0 0.0
        %8501 = vmatprep.mubr.f32.mxu0 0.0
        %v8502 = vand.u32 %v6410, 4294901760
        %8503 = vmatmul.mubr.f32.gmra.mrb[0].mxu0 %v8502
        %v8504 = vpop.f32.mrb[0].mxu0
        %v8505 = vadd.f32 %v8412, %v8504
        %v8506 = vpop.f32.mrb[0].mxu0
        %8507 = vmatprep.mubr.f32.mxu0 0.0
        %v8508 = vand.u32 %v6411, 4294901760
        %8509 = vmatmul.mubr.f32.gmra.mrb[0].mxu0 %v8508
        %v8510 = vpop.f32.mrb[0].mxu0
        %v8511 = vadd.f32 %v8418, %v8510
        %v8512 = vpop.f32.mrb[0].mxu0
        %8513 = vdwg.mxu0
        %v8514 = vadd.f32 %v7804, %v8505
        %v8515 = vadd.f32 %v7810, %v8511
        %v8516 = vld [vmem:[%s8] sm:$0x1]
        %v8518 = vlaneseq
        %v8519 = vshrl.u32 %v8518, 7
        %v8520 = vsub.s32 0, %v8519
        %v8521 = vrot.slane %v8516, %v8520
        %v8523 = vadd.f32 %v8514, %v8521
        %v8524 = vadd.f32 %v8515, %v8521
        %v8525 = vmax.f32 %v8523, 0.0
        %v8526 = vmax.f32 %v8524, 0.0
        %v8527 = vld [vmem:[%s9] sm:$0xff]
        %v8528 = vld [vmem:[%s9 + $0x8] sm:$0xff]
        %v8529 = vld [vmem:[%s9 + $0x10] sm:$0xff]
        %v8530 = vld [vmem:[%s9 + $0x18] sm:$0xff]
        %v8531 = vld [vmem:[%s9 + $0x20] sm:$0xff]
        %v8532 = vld [vmem:[%s9 + $0x28] sm:$0xff]
        %v8533 = vld [vmem:[%s9 + $0x30] sm:$0xff]
        %v8534 = vld [vmem:[%s9 + $0x38] sm:$0xff]
        %v8535 = vld [vmem:[%s9 + $0x40] sm:$0xff]
        %v8536 = vld [vmem:[%s9 + $0x48] sm:$0xff]
        %v8537 = vld [vmem:[%s9 + $0x50] sm:$0xff]
        %v8538 = vld [vmem:[%s9 + $0x58] sm:$0xff]
        %v8539 = vld [vmem:[%s9 + $0x60] sm:$0xff]
        %v8540 = vld [vmem:[%s9 + $0x68] sm:$0xff]
        %v8541 = vld [vmem:[%s9 + $0x70] sm:$0xff]
        %v8542 = vld [vmem:[%s9 + $0x78] sm:$0xff]
        %8543 = vmatprep.subr.mxu0 0.0
        %v8544 = vand.u32 %v8527, 4294901760
        %8545 = vmatpush1.msra.mxu0 %v8544
        %8546 = vmatprep.subr.mxu0 0.0
        %v8547 = vand.u32 %v8528, 4294901760
        %8548 = vmatpush1.msra.mxu0 %v8547
        %8549 = vmatprep.subr.mxu0 0.0
        %v8550 = vand.u32 %v8529, 4294901760
        %8551 = vmatpush1.msra.mxu0 %v8550
        %8552 = vmatprep.subr.mxu0 0.0
        %v8553 = vand.u32 %v8530, 4294901760
        %8554 = vmatpush1.msra.mxu0 %v8553
        %8555 = vmatprep.subr.mxu0 0.0
        %v8556 = vand.u32 %v8531, 4294901760
        %8557 = vmatpush1.msra.mxu0 %v8556
        %8558 = vmatprep.subr.mxu0 0.0
        %v8559 = vand.u32 %v8532, 4294901760
        %8560 = vmatpush1.msra.mxu0 %v8559
        %8561 = vmatprep.subr.mxu0 0.0
        %v8562 = vand.u32 %v8533, 4294901760
        %8563 = vmatpush1.msra.mxu0 %v8562
        %8564 = vmatprep.subr.mxu0 0.0
        %v8565 = vand.u32 %v8534, 4294901760
        %8566 = vmatpush1.msra.mxu0 %v8565
        %8567 = vmatprep.subr.mxu0 0.0
        %v8568 = vand.u32 %v8535, 4294901760
        %8569 = vmatpush1.msra.mxu0 %v8568
        %8570 = vmatprep.subr.mxu0 0.0
        %v8571 = vand.u32 %v8536, 4294901760
        %8572 = vmatpush1.msra.mxu0 %v8571
        %8573 = vmatprep.subr.mxu0 0.0
        %v8574 = vand.u32 %v8537, 4294901760
        %8575 = vmatpush1.msra.mxu0 %v8574
        %8576 = vmatprep.subr.mxu0 0.0
        %v8577 = vand.u32 %v8538, 4294901760
        %8578 = vmatpush1.msra.mxu0 %v8577
        %8579 = vmatprep.subr.mxu0 0.0
        %v8580 = vand.u32 %v8539, 4294901760
        %8581 = vmatpush1.msra.mxu0 %v8580
        %8582 = vmatprep.subr.mxu0 0.0
        %v8583 = vand.u32 %v8540, 4294901760
        %8584 = vmatpush1.msra.mxu0 %v8583
        %8585 = vmatprep.subr.mxu0 0.0
        %v8586 = vand.u32 %v8541, 4294901760
        %8587 = vmatpush1.msra.mxu0 %v8586
        %8588 = vmatprep.subr.mxu0 0.0
        %v8589 = vand.u32 %v8542, 4294901760
        %8590 = vmatpush1.msra.mxu0 %v8589
        %8591 = vmatprep.subr.mxu0 0.0
        %8592 = vmatpush1.msra.mxu0 0.0
        %8593 = vmatprep.subr.mxu0 0.0
        %8594 = vmatpush1.msra.mxu0 0.0
        %8595 = vmatprep.subr.mxu0 0.0
        %8596 = vmatpush1.msra.mxu0 0.0
        %8597 = vmatprep.subr.mxu0 0.0
        %8598 = vmatpush1.msra.mxu0 0.0
        %8599 = vmatprep.subr.mxu0 0.0
        %8600 = vmatpush1.msra.mxu0 0.0
        %8601 = vmatprep.subr.mxu0 0.0
        %8602 = vmatpush1.msra.mxu0 0.0
        %8603 = vmatprep.subr.mxu0 0.0
        %8604 = vmatpush1.msra.mxu0 0.0
        %8605 = vmatprep.subr.mxu0 0.0
        %8606 = vmatpush1.msra.mxu0 0.0
        %8607 = vmatprep.subr.mxu0 0.0
        %8608 = vmatpush1.msra.mxu0 0.0
        %8609 = vmatprep.subr.mxu0 0.0
        %8610 = vmatpush1.msra.mxu0 0.0
        %8611 = vmatprep.subr.mxu0 0.0
        %8612 = vmatpush1.msra.mxu0 0.0
        %8613 = vmatprep.subr.mxu0 0.0
        %8614 = vmatpush1.msra.mxu0 0.0
        %8615 = vmatprep.subr.mxu0 0.0
        %8616 = vmatpush1.msra.mxu0 0.0
        %8617 = vmatprep.subr.mxu0 0.0
        %8618 = vmatpush1.msra.mxu0 0.0
        %8619 = vmatprep.subr.mxu0 0.0
        %8620 = vmatpush1.msra.mxu0 0.0
        %8621 = vmatprep.subr.mxu0 0.0
        %8622 = vmatpush1.msra.mxu0 0.0
        %8623 = vmatprep.mubr.f32.mxu0 0.0
        %v8624 = vand.u32 %v8525, 4294901760
        %v8625 = vsub.f32 %v8525, %v8624
        %v8626 = vand.u32 %v8625, 4294901760
        %v8627 = vsub.f32 %v8625, %v8626
        %v8628 = vand.u32 %v8627, 4294901760
        %8629 = vmatmul.mubr.f32.gmra.mrb[0].mxu0 %v8628
        %v8630 = vpop.f32.mrb[0].mxu0
        %v8631 = vadd.f32 0.0, %v8630
        %v8632 = vpop.f32.mrb[0].mxu0
        %8633 = vmatprep.mubr.f32.mxu0 0.0
        %v8634 = vand.u32 %v8526, 4294901760
        %v8635 = vsub.f32 %v8526, %v8634
        %v8636 = vand.u32 %v8635, 4294901760
        %v8637 = vsub.f32 %v8635, %v8636
        %v8638 = vand.u32 %v8637, 4294901760
        %8639 = vmatmul.mubr.f32.gmra.mrb[0].mxu0 %v8638
        %v8640 = vpop.f32.mrb[0].mxu0
        %v8641 = vadd.f32 0.0, %v8640
        %v8642 = vpop.f32.mrb[0].mxu0
        %8643 = vdwg.mxu0
        %8644 = vmatprep.subr.mxu0 0.0
        %v8645 = vand.u32 %v8527, 4294901760
        %v8646 = vsub.f32 %v8527, %v8645
        %v8647 = vand.u32 %v8646, 4294901760
        %v8648 = vsub.f32 %v8646, %v8647
        %v8649 = vand.u32 %v8648, 4294901760
        %8650 = vmatpush1.msra.mxu0 %v8649
        %8651 = vmatprep.subr.mxu0 0.0
        %v8652 = vand.u32 %v8528, 4294901760
        %v8653 = vsub.f32 %v8528, %v8652
        %v8654 = vand.u32 %v8653, 4294901760
        %v8655 = vsub.f32 %v8653, %v8654
        %v8656 = vand.u32 %v8655, 4294901760
        %8657 = vmatpush1.msra.mxu0 %v8656
        %8658 = vmatprep.subr.mxu0 0.0
        %v8659 = vand.u32 %v8529, 4294901760
        %v8660 = vsub.f32 %v8529, %v8659
        %v8661 = vand.u32 %v8660, 4294901760
        %v8662 = vsub.f32 %v8660, %v8661
        %v8663 = vand.u32 %v8662, 4294901760
        %8664 = vmatpush1.msra.mxu0 %v8663
        %8665 = vmatprep.subr.mxu0 0.0
        %v8666 = vand.u32 %v8530, 4294901760
        %v8667 = vsub.f32 %v8530, %v8666
        %v8668 = vand.u32 %v8667, 4294901760
        %v8669 = vsub.f32 %v8667, %v8668
        %v8670 = vand.u32 %v8669, 4294901760
        %8671 = vmatpush1.msra.mxu0 %v8670
        %8672 = vmatprep.subr.mxu0 0.0
        %v8673 = vand.u32 %v8531, 4294901760
        %v8674 = vsub.f32 %v8531, %v8673
        %v8675 = vand.u32 %v8674, 4294901760
        %v8676 = vsub.f32 %v8674, %v8675
        %v8677 = vand.u32 %v8676, 4294901760
        %8678 = vmatpush1.msra.mxu0 %v8677
        %8679 = vmatprep.subr.mxu0 0.0
        %v8680 = vand.u32 %v8532, 4294901760
        %v8681 = vsub.f32 %v8532, %v8680
        %v8682 = vand.u32 %v8681, 4294901760
        %v8683 = vsub.f32 %v8681, %v8682
        %v8684 = vand.u32 %v8683, 4294901760
        %8685 = vmatpush1.msra.mxu0 %v8684
        %8686 = vmatprep.subr.mxu0 0.0
        %v8687 = vand.u32 %v8533, 4294901760
        %v8688 = vsub.f32 %v8533, %v8687
        %v8689 = vand.u32 %v8688, 4294901760
        %v8690 = vsub.f32 %v8688, %v8689
        %v8691 = vand.u32 %v8690, 4294901760
        %8692 = vmatpush1.msra.mxu0 %v8691
        %8693 = vmatprep.subr.mxu0 0.0
        %v8694 = vand.u32 %v8534, 4294901760
        %v8695 = vsub.f32 %v8534, %v8694
        %v8696 = vand.u32 %v8695, 4294901760
        %v8697 = vsub.f32 %v8695, %v8696
        %v8698 = vand.u32 %v8697, 4294901760
        %8699 = vmatpush1.msra.mxu0 %v8698
        %8700 = vmatprep.subr.mxu0 0.0
        %v8701 = vand.u32 %v8535, 4294901760
        %v8702 = vsub.f32 %v8535, %v8701
        %v8703 = vand.u32 %v8702, 4294901760
        %v8704 = vsub.f32 %v8702, %v8703
        %v8705 = vand.u32 %v8704, 4294901760
        %8706 = vmatpush1.msra.mxu0 %v8705
        %8707 = vmatprep.subr.mxu0 0.0
        %v8708 = vand.u32 %v8536, 4294901760
        %v8709 = vsub.f32 %v8536, %v8708
        %v8710 = vand.u32 %v8709, 4294901760
        %v8711 = vsub.f32 %v8709, %v8710
        %v8712 = vand.u32 %v8711, 4294901760
        %8713 = vmatpush1.msra.mxu0 %v8712
        %8714 = vmatprep.subr.mxu0 0.0
        %v8715 = vand.u32 %v8537, 4294901760
        %v8716 = vsub.f32 %v8537, %v8715
        %v8717 = vand.u32 %v8716, 4294901760
        %v8718 = vsub.f32 %v8716, %v8717
        %v8719 = vand.u32 %v8718, 4294901760
        %8720 = vmatpush1.msra.mxu0 %v8719
        %8721 = vmatprep.subr.mxu0 0.0
        %v8722 = vand.u32 %v8538, 4294901760
        %v8723 = vsub.f32 %v8538, %v8722
        %v8724 = vand.u32 %v8723, 4294901760
        %v8725 = vsub.f32 %v8723, %v8724
        %v8726 = vand.u32 %v8725, 4294901760
        %8727 = vmatpush1.msra.mxu0 %v8726
        %8728 = vmatprep.subr.mxu0 0.0
        %v8729 = vand.u32 %v8539, 4294901760
        %v8730 = vsub.f32 %v8539, %v8729
        %v8731 = vand.u32 %v8730, 4294901760
        %v8732 = vsub.f32 %v8730, %v8731
        %v8733 = vand.u32 %v8732, 4294901760
        %8734 = vmatpush1.msra.mxu0 %v8733
        %8735 = vmatprep.subr.mxu0 0.0
        %v8736 = vand.u32 %v8540, 4294901760
        %v8737 = vsub.f32 %v8540, %v8736
        %v8738 = vand.u32 %v8737, 4294901760
        %v8739 = vsub.f32 %v8737, %v8738
        %v8740 = vand.u32 %v8739, 4294901760
        %8741 = vmatpush1.msra.mxu0 %v8740
        %8742 = vmatprep.subr.mxu0 0.0
        %v8743 = vand.u32 %v8541, 4294901760
        %v8744 = vsub.f32 %v8541, %v8743
        %v8745 = vand.u32 %v8744, 4294901760
        %v8746 = vsub.f32 %v8744, %v8745
        %v8747 = vand.u32 %v8746, 4294901760
        %8748 = vmatpush1.msra.mxu0 %v8747
        %8749 = vmatprep.subr.mxu0 0.0
        %v8750 = vand.u32 %v8542, 4294901760
        %v8751 = vsub.f32 %v8542, %v8750
        %v8752 = vand.u32 %v8751, 4294901760
        %v8753 = vsub.f32 %v8751, %v8752
        %v8754 = vand.u32 %v8753, 4294901760
        %8755 = vmatpush1.msra.mxu0 %v8754
        %8756 = vmatprep.subr.mxu0 0.0
        %8757 = vmatpush1.msra.mxu0 0.0
        %8758 = vmatprep.subr.mxu0 0.0
        %8759 = vmatpush1.msra.mxu0 0.0
        %8760 = vmatprep.subr.mxu0 0.0
        %8761 = vmatpush1.msra.mxu0 0.0
        %8762 = vmatprep.subr.mxu0 0.0
        %8763 = vmatpush1.msra.mxu0 0.0
        %8764 = vmatprep.subr.mxu0 0.0
        %8765 = vmatpush1.msra.mxu0 0.0
        %8766 = vmatprep.subr.mxu0 0.0
        %8767 = vmatpush1.msra.mxu0 0.0
        %8768 = vmatprep.subr.mxu0 0.0
        %8769 = vmatpush1.msra.mxu0 0.0
        %8770 = vmatprep.subr.mxu0 0.0
        %8771 = vmatpush1.msra.mxu0 0.0
        %8772 = vmatprep.subr.mxu0 0.0
        %8773 = vmatpush1.msra.mxu0 0.0
        %8774 = vmatprep.subr.mxu0 0.0
        %8775 = vmatpush1.msra.mxu0 0.0
        %8776 = vmatprep.subr.mxu0 0.0
        %8777 = vmatpush1.msra.mxu0 0.0
        %8778 = vmatprep.subr.mxu0 0.0
        %8779 = vmatpush1.msra.mxu0 0.0
        %8780 = vmatprep.subr.mxu0 0.0
        %8781 = vmatpush1.msra.mxu0 0.0
        %8782 = vmatprep.subr.mxu0 0.0
        %8783 = vmatpush1.msra.mxu0 0.0
        %8784 = vmatprep.subr.mxu0 0.0
        %8785 = vmatpush1.msra.mxu0 0.0
        %8786 = vmatprep.subr.mxu0 0.0
        %8787 = vmatpush1.msra.mxu0 0.0
        %8788 = vmatprep.mubr.f32.mxu0 0.0
        %v8789 = vand.u32 %v8525, 4294901760
        %8790 = vmatmul.mubr.f32.gmra.mrb[0].mxu0 %v8789
        %v8791 = vpop.f32.mrb[0].mxu0
        %v8792 = vadd.f32 %v8631, %v8791
        %v8793 = vpop.f32.mrb[0].mxu0
        %8794 = vmatprep.mubr.f32.mxu0 0.0
        %v8795 = vand.u32 %v8526, 4294901760
        %8796 = vmatmul.mubr.f32.gmra.mrb[0].mxu0 %v8795
        %v8797 = vpop.f32.mrb[0].mxu0
        %v8798 = vadd.f32 %v8641, %v8797
        %v8799 = vpop.f32.mrb[0].mxu0
        %8800 = vdwg.mxu0
        %8801 = vmatprep.subr.mxu0 0.0
        %v8802 = vand.u32 %v8527, 4294901760
        %v8803 = vsub.f32 %v8527, %v8802
        %8804 = vmatpush1.msra.mxu0 %v8803
        %8805 = vmatprep.subr.mxu0 0.0
        %v8806 = vand.u32 %v8528, 4294901760
        %v8807 = vsub.f32 %v8528, %v8806
        %8808 = vmatpush1.msra.mxu0 %v8807
        %8809 = vmatprep.subr.mxu0 0.0
        %v8810 = vand.u32 %v8529, 4294901760
        %v8811 = vsub.f32 %v8529, %v8810
        %8812 = vmatpush1.msra.mxu0 %v8811
        %8813 = vmatprep.subr.mxu0 0.0
        %v8814 = vand.u32 %v8530, 4294901760
        %v8815 = vsub.f32 %v8530, %v8814
        %8816 = vmatpush1.msra.mxu0 %v8815
        %8817 = vmatprep.subr.mxu0 0.0
        %v8818 = vand.u32 %v8531, 4294901760
        %v8819 = vsub.f32 %v8531, %v8818
        %8820 = vmatpush1.msra.mxu0 %v8819
        %8821 = vmatprep.subr.mxu0 0.0
        %v8822 = vand.u32 %v8532, 4294901760
        %v8823 = vsub.f32 %v8532, %v8822
        %8824 = vmatpush1.msra.mxu0 %v8823
        %8825 = vmatprep.subr.mxu0 0.0
        %v8826 = vand.u32 %v8533, 4294901760
        %v8827 = vsub.f32 %v8533, %v8826
        %8828 = vmatpush1.msra.mxu0 %v8827
        %8829 = vmatprep.subr.mxu0 0.0
        %v8830 = vand.u32 %v8534, 4294901760
        %v8831 = vsub.f32 %v8534, %v8830
        %8832 = vmatpush1.msra.mxu0 %v8831
        %8833 = vmatprep.subr.mxu0 0.0
        %v8834 = vand.u32 %v8535, 4294901760
        %v8835 = vsub.f32 %v8535, %v8834
        %8836 = vmatpush1.msra.mxu0 %v8835
        %8837 = vmatprep.subr.mxu0 0.0
        %v8838 = vand.u32 %v8536, 4294901760
        %v8839 = vsub.f32 %v8536, %v8838
        %8840 = vmatpush1.msra.mxu0 %v8839
        %8841 = vmatprep.subr.mxu0 0.0
        %v8842 = vand.u32 %v8537, 4294901760
        %v8843 = vsub.f32 %v8537, %v8842
        %8844 = vmatpush1.msra.mxu0 %v8843
        %8845 = vmatprep.subr.mxu0 0.0
        %v8846 = vand.u32 %v8538, 4294901760
        %v8847 = vsub.f32 %v8538, %v8846
        %8848 = vmatpush1.msra.mxu0 %v8847
        %8849 = vmatprep.subr.mxu0 0.0
        %v8850 = vand.u32 %v8539, 4294901760
        %v8851 = vsub.f32 %v8539, %v8850
        %8852 = vmatpush1.msra.mxu0 %v8851
        %8853 = vmatprep.subr.mxu0 0.0
        %v8854 = vand.u32 %v8540, 4294901760
        %v8855 = vsub.f32 %v8540, %v8854
        %8856 = vmatpush1.msra.mxu0 %v8855
        %8857 = vmatprep.subr.mxu0 0.0
        %v8858 = vand.u32 %v8541, 4294901760
        %v8859 = vsub.f32 %v8541, %v8858
        %8860 = vmatpush1.msra.mxu0 %v8859
        %8861 = vmatprep.subr.mxu0 0.0
        %v8862 = vand.u32 %v8542, 4294901760
        %v8863 = vsub.f32 %v8542, %v8862
        %8864 = vmatpush1.msra.mxu0 %v8863
        %8865 = vmatprep.subr.mxu0 0.0
        %8866 = vmatpush1.msra.mxu0 0.0
        %8867 = vmatprep.subr.mxu0 0.0
        %8868 = vmatpush1.msra.mxu0 0.0
        %8869 = vmatprep.subr.mxu0 0.0
        %8870 = vmatpush1.msra.mxu0 0.0
        %8871 = vmatprep.subr.mxu0 0.0
        %8872 = vmatpush1.msra.mxu0 0.0
        %8873 = vmatprep.subr.mxu0 0.0
        %8874 = vmatpush1.msra.mxu0 0.0
        %8875 = vmatprep.subr.mxu0 0.0
        %8876 = vmatpush1.msra.mxu0 0.0
        %8877 = vmatprep.subr.mxu0 0.0
        %8878 = vmatpush1.msra.mxu0 0.0
        %8879 = vmatprep.subr.mxu0 0.0
        %8880 = vmatpush1.msra.mxu0 0.0
        %8881 = vmatprep.subr.mxu0 0.0
        %8882 = vmatpush1.msra.mxu0 0.0
        %8883 = vmatprep.subr.mxu0 0.0
        %8884 = vmatpush1.msra.mxu0 0.0
        %8885 = vmatprep.subr.mxu0 0.0
        %8886 = vmatpush1.msra.mxu0 0.0
        %8887 = vmatprep.subr.mxu0 0.0
        %8888 = vmatpush1.msra.mxu0 0.0
        %8889 = vmatprep.subr.mxu0 0.0
        %8890 = vmatpush1.msra.mxu0 0.0
        %8891 = vmatprep.subr.mxu0 0.0
        %8892 = vmatpush1.msra.mxu0 0.0
        %8893 = vmatprep.subr.mxu0 0.0
        %8894 = vmatpush1.msra.mxu0 0.0
        %8895 = vmatprep.subr.mxu0 0.0
        %8896 = vmatpush1.msra.mxu0 0.0
        %8897 = vmatprep.mubr.f32.mxu0 0.0
        %v8898 = vand.u32 %v8525, 4294901760
        %v8899 = vsub.f32 %v8525, %v8898
        %8900 = vmatmul.mubr.f32.gmra.mrb[0].mxu0 %v8899
        %v8901 = vpop.f32.mrb[0].mxu0
        %v8902 = vadd.f32 %v8792, %v8901
        %v8903 = vpop.f32.mrb[0].mxu0
        %8904 = vmatprep.mubr.f32.mxu0 0.0
        %v8905 = vand.u32 %v8526, 4294901760
        %v8906 = vsub.f32 %v8526, %v8905
        %8907 = vmatmul.mubr.f32.gmra.mrb[0].mxu0 %v8906
        %v8908 = vpop.f32.mrb[0].mxu0
        %v8909 = vadd.f32 %v8798, %v8908
        %v8910 = vpop.f32.mrb[0].mxu0
        %8911 = vdwg.mxu0
        %8912 = vmatprep.subr.mxu0 0.0
        %v8913 = vand.u32 %v8527, 4294901760
        %8914 = vmatpush1.msra.mxu0 %v8913
        %8915 = vmatprep.subr.mxu0 0.0
        %v8916 = vand.u32 %v8528, 4294901760
        %8917 = vmatpush1.msra.mxu0 %v8916
        %8918 = vmatprep.subr.mxu0 0.0
        %v8919 = vand.u32 %v8529, 4294901760
        %8920 = vmatpush1.msra.mxu0 %v8919
        %8921 = vmatprep.subr.mxu0 0.0
        %v8922 = vand.u32 %v8530, 4294901760
        %8923 = vmatpush1.msra.mxu0 %v8922
        %8924 = vmatprep.subr.mxu0 0.0
        %v8925 = vand.u32 %v8531, 4294901760
        %8926 = vmatpush1.msra.mxu0 %v8925
        %8927 = vmatprep.subr.mxu0 0.0
        %v8928 = vand.u32 %v8532, 4294901760
        %8929 = vmatpush1.msra.mxu0 %v8928
        %8930 = vmatprep.subr.mxu0 0.0
        %v8931 = vand.u32 %v8533, 4294901760
        %8932 = vmatpush1.msra.mxu0 %v8931
        %8933 = vmatprep.subr.mxu0 0.0
        %v8934 = vand.u32 %v8534, 4294901760
        %8935 = vmatpush1.msra.mxu0 %v8934
        %8936 = vmatprep.subr.mxu0 0.0
        %v8937 = vand.u32 %v8535, 4294901760
        %8938 = vmatpush1.msra.mxu0 %v8937
        %8939 = vmatprep.subr.mxu0 0.0
        %v8940 = vand.u32 %v8536, 4294901760
        %8941 = vmatpush1.msra.mxu0 %v8940
        %8942 = vmatprep.subr.mxu0 0.0
        %v8943 = vand.u32 %v8537, 4294901760
        %8944 = vmatpush1.msra.mxu0 %v8943
        %8945 = vmatprep.subr.mxu0 0.0
        %v8946 = vand.u32 %v8538, 4294901760
        %8947 = vmatpush1.msra.mxu0 %v8946
        %8948 = vmatprep.subr.mxu0 0.0
        %v8949 = vand.u32 %v8539, 4294901760
        %8950 = vmatpush1.msra.mxu0 %v8949
        %8951 = vmatprep.subr.mxu0 0.0
        %v8952 = vand.u32 %v8540, 4294901760
        %8953 = vmatpush1.msra.mxu0 %v8952
        %8954 = vmatprep.subr.mxu0 0.0
        %v8955 = vand.u32 %v8541, 4294901760
        %8956 = vmatpush1.msra.mxu0 %v8955
        %8957 = vmatprep.subr.mxu0 0.0
        %v8958 = vand.u32 %v8542, 4294901760
        %8959 = vmatpush1.msra.mxu0 %v8958
        %8960 = vmatprep.subr.mxu0 0.0
        %8961 = vmatpush1.msra.mxu0 0.0
        %8962 = vmatprep.subr.mxu0 0.0
        %8963 = vmatpush1.msra.mxu0 0.0
        %8964 = vmatprep.subr.mxu0 0.0
        %8965 = vmatpush1.msra.mxu0 0.0
        %8966 = vmatprep.subr.mxu0 0.0
        %8967 = vmatpush1.msra.mxu0 0.0
        %8968 = vmatprep.subr.mxu0 0.0
        %8969 = vmatpush1.msra.mxu0 0.0
        %8970 = vmatprep.subr.mxu0 0.0
        %8971 = vmatpush1.msra.mxu0 0.0
        %8972 = vmatprep.subr.mxu0 0.0
        %8973 = vmatpush1.msra.mxu0 0.0
        %8974 = vmatprep.subr.mxu0 0.0
        %8975 = vmatpush1.msra.mxu0 0.0
        %8976 = vmatprep.subr.mxu0 0.0
        %8977 = vmatpush1.msra.mxu0 0.0
        %8978 = vmatprep.subr.mxu0 0.0
        %8979 = vmatpush1.msra.mxu0 0.0
        %8980 = vmatprep.subr.mxu0 0.0
        %8981 = vmatpush1.msra.mxu0 0.0
        %8982 = vmatprep.subr.mxu0 0.0
        %8983 = vmatpush1.msra.mxu0 0.0
        %8984 = vmatprep.subr.mxu0 0.0
        %8985 = vmatpush1.msra.mxu0 0.0
        %8986 = vmatprep.subr.mxu0 0.0
        %8987 = vmatpush1.msra.mxu0 0.0
        %8988 = vmatprep.subr.mxu0 0.0
        %8989 = vmatpush1.msra.mxu0 0.0
        %8990 = vmatprep.subr.mxu0 0.0
        %8991 = vmatpush1.msra.mxu0 0.0
        %8992 = vmatprep.mubr.f32.mxu0 0.0
        %v8993 = vand.u32 %v8525, 4294901760
        %v8994 = vsub.f32 %v8525, %v8993
        %v8995 = vand.u32 %v8994, 4294901760
        %8996 = vmatmul.mubr.f32.gmra.mrb[0].mxu0 %v8995
        %v8997 = vpop.f32.mrb[0].mxu0
        %v8998 = vadd.f32 %v8902, %v8997
        %v8999 = vpop.f32.mrb[0].mxu0
        %9000 = vmatprep.mubr.f32.mxu0 0.0
        %v9001 = vand.u32 %v8526, 4294901760
        %v9002 = vsub.f32 %v8526, %v9001
        %v9003 = vand.u32 %v9002, 4294901760
        %9004 = vmatmul.mubr.f32.gmra.mrb[0].mxu0 %v9003
        %v9005 = vpop.f32.mrb[0].mxu0
        %v9006 = vadd.f32 %v8909, %v9005
        %v9007 = vpop.f32.mrb[0].mxu0
        %9008 = vdwg.mxu0
        %9009 = vmatprep.subr.mxu0 0.0
        %v9010 = vand.u32 %v8527, 4294901760
        %v9011 = vsub.f32 %v8527, %v9010
        %v9012 = vand.u32 %v9011, 4294901760
        %9013 = vmatpush1.msra.mxu0 %v9012
        %9014 = vmatprep.subr.mxu0 0.0
        %v9015 = vand.u32 %v8528, 4294901760
        %v9016 = vsub.f32 %v8528, %v9015
        %v9017 = vand.u32 %v9016, 4294901760
        %9018 = vmatpush1.msra.mxu0 %v9017
        %9019 = vmatprep.subr.mxu0 0.0
        %v9020 = vand.u32 %v8529, 4294901760
        %v9021 = vsub.f32 %v8529, %v9020
        %v9022 = vand.u32 %v9021, 4294901760
        %9023 = vmatpush1.msra.mxu0 %v9022
        %9024 = vmatprep.subr.mxu0 0.0
        %v9025 = vand.u32 %v8530, 4294901760
        %v9026 = vsub.f32 %v8530, %v9025
        %v9027 = vand.u32 %v9026, 4294901760
        %9028 = vmatpush1.msra.mxu0 %v9027
        %9029 = vmatprep.subr.mxu0 0.0
        %v9030 = vand.u32 %v8531, 4294901760
        %v9031 = vsub.f32 %v8531, %v9030
        %v9032 = vand.u32 %v9031, 4294901760
        %9033 = vmatpush1.msra.mxu0 %v9032
        %9034 = vmatprep.subr.mxu0 0.0
        %v9035 = vand.u32 %v8532, 4294901760
        %v9036 = vsub.f32 %v8532, %v9035
        %v9037 = vand.u32 %v9036, 4294901760
        %9038 = vmatpush1.msra.mxu0 %v9037
        %9039 = vmatprep.subr.mxu0 0.0
        %v9040 = vand.u32 %v8533, 4294901760
        %v9041 = vsub.f32 %v8533, %v9040
        %v9042 = vand.u32 %v9041, 4294901760
        %9043 = vmatpush1.msra.mxu0 %v9042
        %9044 = vmatprep.subr.mxu0 0.0
        %v9045 = vand.u32 %v8534, 4294901760
        %v9046 = vsub.f32 %v8534, %v9045
        %v9047 = vand.u32 %v9046, 4294901760
        %9048 = vmatpush1.msra.mxu0 %v9047
        %9049 = vmatprep.subr.mxu0 0.0
        %v9050 = vand.u32 %v8535, 4294901760
        %v9051 = vsub.f32 %v8535, %v9050
        %v9052 = vand.u32 %v9051, 4294901760
        %9053 = vmatpush1.msra.mxu0 %v9052
        %9054 = vmatprep.subr.mxu0 0.0
        %v9055 = vand.u32 %v8536, 4294901760
        %v9056 = vsub.f32 %v8536, %v9055
        %v9057 = vand.u32 %v9056, 4294901760
        %9058 = vmatpush1.msra.mxu0 %v9057
        %9059 = vmatprep.subr.mxu0 0.0
        %v9060 = vand.u32 %v8537, 4294901760
        %v9061 = vsub.f32 %v8537, %v9060
        %v9062 = vand.u32 %v9061, 4294901760
        %9063 = vmatpush1.msra.mxu0 %v9062
        %9064 = vmatprep.subr.mxu0 0.0
        %v9065 = vand.u32 %v8538, 4294901760
        %v9066 = vsub.f32 %v8538, %v9065
        %v9067 = vand.u32 %v9066, 4294901760
        %9068 = vmatpush1.msra.mxu0 %v9067
        %9069 = vmatprep.subr.mxu0 0.0
        %v9070 = vand.u32 %v8539, 4294901760
        %v9071 = vsub.f32 %v8539, %v9070
        %v9072 = vand.u32 %v9071, 4294901760
        %9073 = vmatpush1.msra.mxu0 %v9072
        %9074 = vmatprep.subr.mxu0 0.0
        %v9075 = vand.u32 %v8540, 4294901760
        %v9076 = vsub.f32 %v8540, %v9075
        %v9077 = vand.u32 %v9076, 4294901760
        %9078 = vmatpush1.msra.mxu0 %v9077
        %9079 = vmatprep.subr.mxu0 0.0
        %v9080 = vand.u32 %v8541, 4294901760
        %v9081 = vsub.f32 %v8541, %v9080
        %v9082 = vand.u32 %v9081, 4294901760
        %9083 = vmatpush1.msra.mxu0 %v9082
        %9084 = vmatprep.subr.mxu0 0.0
        %v9085 = vand.u32 %v8542, 4294901760
        %v9086 = vsub.f32 %v8542, %v9085
        %v9087 = vand.u32 %v9086, 4294901760
        %9088 = vmatpush1.msra.mxu0 %v9087
        %9089 = vmatprep.subr.mxu0 0.0
        %9090 = vmatpush1.msra.mxu0 0.0
        %9091 = vmatprep.subr.mxu0 0.0
        %9092 = vmatpush1.msra.mxu0 0.0
        %9093 = vmatprep.subr.mxu0 0.0
        %9094 = vmatpush1.msra.mxu0 0.0
        %9095 = vmatprep.subr.mxu0 0.0
        %9096 = vmatpush1.msra.mxu0 0.0
        %9097 = vmatprep.subr.mxu0 0.0
        %9098 = vmatpush1.msra.mxu0 0.0
        %9099 = vmatprep.subr.mxu0 0.0
        %9100 = vmatpush1.msra.mxu0 0.0
        %9101 = vmatprep.subr.mxu0 0.0
        %9102 = vmatpush1.msra.mxu0 0.0
        %9103 = vmatprep.subr.mxu0 0.0
        %9104 = vmatpush1.msra.mxu0 0.0
        %9105 = vmatprep.subr.mxu0 0.0
        %9106 = vmatpush1.msra.mxu0 0.0
        %9107 = vmatprep.subr.mxu0 0.0
        %9108 = vmatpush1.msra.mxu0 0.0
        %9109 = vmatprep.subr.mxu0 0.0
        %9110 = vmatpush1.msra.mxu0 0.0
        %9111 = vmatprep.subr.mxu0 0.0
        %9112 = vmatpush1.msra.mxu0 0.0
        %9113 = vmatprep.subr.mxu0 0.0
        %9114 = vmatpush1.msra.mxu0 0.0
        %9115 = vmatprep.subr.mxu0 0.0
        %9116 = vmatpush1.msra.mxu0 0.0
        %9117 = vmatprep.subr.mxu0 0.0
        %9118 = vmatpush1.msra.mxu0 0.0
        %9119 = vmatprep.subr.mxu0 0.0
        %9120 = vmatpush1.msra.mxu0 0.0
        %9121 = vmatprep.mubr.f32.mxu0 0.0
        %v9122 = vand.u32 %v8525, 4294901760
        %9123 = vmatmul.mubr.f32.gmra.mrb[0].mxu0 %v9122
        %v9124 = vpop.f32.mrb[0].mxu0
        %v9125 = vadd.f32 %v8998, %v9124
        %v9126 = vpop.f32.mrb[0].mxu0
        %9127 = vmatprep.mubr.f32.mxu0 0.0
        %v9128 = vand.u32 %v8526, 4294901760
        %9129 = vmatmul.mubr.f32.gmra.mrb[0].mxu0 %v9128
        %v9130 = vpop.f32.mrb[0].mxu0
        %v9131 = vadd.f32 %v9006, %v9130
        %v9132 = vpop.f32.mrb[0].mxu0
        %9133 = vdwg.mxu0
        %9134 = vmatprep.subr.mxu0 0.0
        %v9135 = vand.u32 %v8527, 4294901760
        %9136 = vmatpush1.msra.mxu0 %v9135
        %9137 = vmatprep.subr.mxu0 0.0
        %v9138 = vand.u32 %v8528, 4294901760
        %9139 = vmatpush1.msra.mxu0 %v9138
        %9140 = vmatprep.subr.mxu0 0.0
        %v9141 = vand.u32 %v8529, 4294901760
        %9142 = vmatpush1.msra.mxu0 %v9141
        %9143 = vmatprep.subr.mxu0 0.0
        %v9144 = vand.u32 %v8530, 4294901760
        %9145 = vmatpush1.msra.mxu0 %v9144
        %9146 = vmatprep.subr.mxu0 0.0
        %v9147 = vand.u32 %v8531, 4294901760
        %9148 = vmatpush1.msra.mxu0 %v9147
        %9149 = vmatprep.subr.mxu0 0.0
        %v9150 = vand.u32 %v8532, 4294901760
        %9151 = vmatpush1.msra.mxu0 %v9150
        %9152 = vmatprep.subr.mxu0 0.0
        %v9153 = vand.u32 %v8533, 4294901760
        %9154 = vmatpush1.msra.mxu0 %v9153
        %9155 = vmatprep.subr.mxu0 0.0
        %v9156 = vand.u32 %v8534, 4294901760
        %9157 = vmatpush1.msra.mxu0 %v9156
        %9158 = vmatprep.subr.mxu0 0.0
        %v9159 = vand.u32 %v8535, 4294901760
        %9160 = vmatpush1.msra.mxu0 %v9159
        %9161 = vmatprep.subr.mxu0 0.0
        %v9162 = vand.u32 %v8536, 4294901760
        %9163 = vmatpush1.msra.mxu0 %v9162
        %9164 = vmatprep.subr.mxu0 0.0
        %v9165 = vand.u32 %v8537, 4294901760
        %9166 = vmatpush1.msra.mxu0 %v9165
        %9167 = vmatprep.subr.mxu0 0.0
        %v9168 = vand.u32 %v8538, 4294901760
        %9169 = vmatpush1.msra.mxu0 %v9168
        %9170 = vmatprep.subr.mxu0 0.0
        %v9171 = vand.u32 %v8539, 4294901760
        %9172 = vmatpush1.msra.mxu0 %v9171
        %9173 = vmatprep.subr.mxu0 0.0
        %v9174 = vand.u32 %v8540, 4294901760
        %9175 = vmatpush1.msra.mxu0 %v9174
        %9176 = vmatprep.subr.mxu0 0.0
        %v9177 = vand.u32 %v8541, 4294901760
        %9178 = vmatpush1.msra.mxu0 %v9177
        %9179 = vmatprep.subr.mxu0 0.0
        %v9180 = vand.u32 %v8542, 4294901760
        %9181 = vmatpush1.msra.mxu0 %v9180
        %9182 = vmatprep.subr.mxu0 0.0
        %9183 = vmatpush1.msra.mxu0 0.0
        %9184 = vmatprep.subr.mxu0 0.0
        %9185 = vmatpush1.msra.mxu0 0.0
        %9186 = vmatprep.subr.mxu0 0.0
        %9187 = vmatpush1.msra.mxu0 0.0
        %9188 = vmatprep.subr.mxu0 0.0
        %9189 = vmatpush1.msra.mxu0 0.0
        %9190 = vmatprep.subr.mxu0 0.0
        %9191 = vmatpush1.msra.mxu0 0.0
        %9192 = vmatprep.subr.mxu0 0.0
        %9193 = vmatpush1.msra.mxu0 0.0
        %9194 = vmatprep.subr.mxu0 0.0
        %9195 = vmatpush1.msra.mxu0 0.0
        %9196 = vmatprep.subr.mxu0 0.0
        %9197 = vmatpush1.msra.mxu0 0.0
        %9198 = vmatprep.subr.mxu0 0.0
        %9199 = vmatpush1.msra.mxu0 0.0
        %9200 = vmatprep.subr.mxu0 0.0
        %9201 = vmatpush1.msra.mxu0 0.0
        %9202 = vmatprep.subr.mxu0 0.0
        %9203 = vmatpush1.msra.mxu0 0.0
        %9204 = vmatprep.subr.mxu0 0.0
        %9205 = vmatpush1.msra.mxu0 0.0
        %9206 = vmatprep.subr.mxu0 0.0
        %9207 = vmatpush1.msra.mxu0 0.0
        %9208 = vmatprep.subr.mxu0 0.0
        %9209 = vmatpush1.msra.mxu0 0.0
        %9210 = vmatprep.subr.mxu0 0.0
        %9211 = vmatpush1.msra.mxu0 0.0
        %9212 = vmatprep.subr.mxu0 0.0
        %9213 = vmatpush1.msra.mxu0 0.0
        %9214 = vmatprep.mubr.f32.mxu0 0.0
        %v9215 = vand.u32 %v8525, 4294901760
        %9216 = vmatmul.mubr.f32.gmra.mrb[0].mxu0 %v9215
        %v9217 = vpop.f32.mrb[0].mxu0
        %v9218 = vadd.f32 %v9125, %v9217
        %v9219 = vpop.f32.mrb[0].mxu0
        %9220 = vmatprep.mubr.f32.mxu0 0.0
        %v9221 = vand.u32 %v8526, 4294901760
        %9222 = vmatmul.mubr.f32.gmra.mrb[0].mxu0 %v9221
        %v9223 = vpop.f32.mrb[0].mxu0
        %v9224 = vadd.f32 %v9131, %v9223
        %v9225 = vpop.f32.mrb[0].mxu0
        %9226 = vdwg.mxu0
        %vm9227 = vcmask 80896
        %v9228 = vsel %vm9227, %v9218, 0.0
        %v9229 = vsel %vm9227, %v9224, 0.0
        %v9230 = vadd.f32 %v9228, %v9229
        %v9231 = vrot.slane %v9230, 4
        %v9232 = vadd.f32 %v9230, %v9231
        %v9233 = vrot.slane %v9232, 2
        %v9234 = vadd.f32 %v9232, %v9233
        %v9235 = vrot.slane %v9234, 1
        %v9236 = vadd.f32 %v9234, %v9235
        %v9237 = vld [vmem:[%s10] sm:$0x1]
        %v9238 = vadd.f32 %v9236, %v9237
        %vm9239 = vcmask 73728
        %9240 = vst.msk [vmem:[%s413] sm:$0x1] %vm9239, %v9238
        %p9241 = scmp.lt.s32.totalorder %s27, 1
        %s9242 = scalar_select %p9241, %s27, 1
        %s9243 = smul.addr %s9242, 2
        %s9244 = smul.addr %s9243, 8
        %s9245 = scalar_lea.vmem %s11, %s9244
        %s9246 = sand.u32 %s297, 1
        %s9247 = scalar_lea.sflag [#allocation3], %s9246
        %s9248 = sand.u32 %s297, 1
        %s9249 = scalar_lea.vmem [#allocation2], %s9248
        // Predicated region
        $region65: #{complex_conv_net_denoise.1} parent=63 // pred_check
          %p9250 = pneg %p281
        $region66: #{complex_conv_net_denoise.1} parent=63 // pred_check_branch
          %9252 = sbr.rel (%p9250) target = $region68
        $region67: #{complex_conv_net_denoise.1} parent=63 // pred_region
          _
        $region68: #{complex_conv_net_denoise.1} parent=63 // pred_fallthru
          _
        // Predicated region
        $region69: #{complex_conv_net_denoise.1} parent=63 // pred_check
          %p9253 = pneg %p307
        $region70: #{complex_conv_net_denoise.1} parent=63 // pred_check_branch
          %9255 = sbr.rel (%p9253) target = $region72
        $region71: #{complex_conv_net_denoise.1} parent=63 // pred_region
          %s9257 = ssub.s32 16, 16
          %9258 = vsyncadd %s9247, %s9257
          %s9259 = smul.addr %s27, 16
          %s9260 = scalar_lea.hbm %s12, %s9259
          %s9262 = sshll.u32 %s9249, 4
          %s9263 = int_to_ptr.vmem [resolvable:$true] %s9262
          %9265 = dma.vmem_to_hbm [thread:$0]  %s9263, 16, %s9260, %s9247
        $region72: #{complex_conv_net_denoise.1} parent=63 // pred_fallthru
          _
      $region64: #{complex_conv_net_denoise.1} parent=5 // pred_fallthru
        _
      %p9266 = scmp.le.s32.totalorder 2, %s22
      // Predicated region
      $region73: #{complex_conv_net_denoise.1} parent=5 // pred_check
        %p9267 = pneg %p9266
      $region74: #{complex_conv_net_denoise.1} parent=5 // pred_check_branch
        %9269 = sbr.rel (%p9267) target = $region76
      $region75: #{complex_conv_net_denoise.1} parent=5 // pred_region
        %s9270 = ssub.s32 %s22, 2
        // Predicated region
        $region77: #{complex_conv_net_denoise.1} parent=75 // pred_check
          %p9271 = pneg %p287
        $region78: #{complex_conv_net_denoise.1} parent=75 // pred_check_branch
          %9273 = sbr.rel (%p9271) target = $region80
        $region79: #{complex_conv_net_denoise.1} parent=75 // pred_region
          %p9274 = scmp.lt.s32.totalorder %s28, 1
          %s9275 = scalar_select %p9274, %s28, 1
          %s9276 = smul.addr %s9275, 2
          %s9277 = smul.addr %s9276, 8
          %s9278 = scalar_lea.vmem %s11, %s9277
        $region80: #{complex_conv_net_denoise.1} parent=75 // pred_fallthru
          _
        // Predicated region
        $region81: #{complex_conv_net_denoise.1} parent=75 // pred_check
          %p9279 = pneg %p313
        $region82: #{complex_conv_net_denoise.1} parent=75 // pred_check_branch
          %9281 = sbr.rel (%p9279) target = $region84
        $region83: #{complex_conv_net_denoise.1} parent=75 // pred_region
          %s9282 = sand.u32 %s298, 1
          %s9283 = scalar_lea.sflag [#allocation3], %s9282
          %s9284 = sand.u32 %s298, 1
          %s9285 = scalar_lea.vmem [#allocation2], %s9284
          %9286 = dma.done %s9283, 16
        $region84: #{complex_conv_net_denoise.1} parent=75 // pred_fallthru
          _
      $region76: #{complex_conv_net_denoise.1} parent=5 // pred_fallthru
        _
    $region6: #{complex_conv_net_denoise.1} parent=1 // loop_footer
      %s26 = sadd.s32 1, %s22
    $region7: #{complex_conv_net_denoise.1} parent=1 // loop_footer_branch
      %21 = sbr.rel target = $region3
    $region8: #{complex_conv_net_denoise.1} parent=1 // loop_exit
      _
    %9287 = vsyncpa [#allocation3], 1
    %s9288 = scalar_lea.sflag [#allocation3], 1
    %9289 = vsyncpa %s9288, 1

</llo_original>
